<compile_context>
chip_gen: v7x
topology: tpu7x:2x2x1
jax: 0.10.0
libtpu: 0.0.40
codegen_flags: <defaults>
</compile_context>

<pallas_src>
import functools
from typing import NamedTuple

import numpy as np
import jax
import jax.numpy as jnp
from jax import lax
from jax.experimental import pallas as pl
from jax.experimental.pallas import tpu as pltpu

LEAK = 0.2
BN_EPS = 1e-5
KW = 4          # conv kernel size (fixed by the module)
PAD = 1         # conv padding (fixed by the module)


def _round_up(x, m):
    return ((x + m - 1) // m) * m


# ------------------------------- Pallas kernels ------------------------------- #

def _matmul_bias_act_kernel(p_ref, w_ref, b_ref, o_ref, *, leaky):
    # out = (leaky_relu)?(patches @ W + b);  bf16 operands, f32 accumulate/epilogue.
    y = jnp.dot(p_ref[...], w_ref[...], preferred_element_type=jnp.float32)
    y = y + b_ref[...]                       # (1, C) broadcasts over the M tile
    if leaky:
        y = jnp.where(y >= 0, y, LEAK * y)
    o_ref[...] = y.astype(o_ref.dtype)


def _matmul_stats_kernel(p_ref, w_ref, y_ref, s1_ref, s2_ref):
    # Pass 1 of BN layers: y tile = patches @ W (f32), plus per-channel sum / sum-of-
    # squares accumulated across the M grid axis (s1/s2 have a constant block index,
    # so they stay resident in VMEM; grid axis is "arbitrary").
    @pl.when(pl.program_id(0) == 0)
    def _():
        s1_ref[...] = jnp.zeros_like(s1_ref)
        s2_ref[...] = jnp.zeros_like(s2_ref)

    y = jnp.dot(p_ref[...], w_ref[...], preferred_element_type=jnp.float32)
    y_ref[...] = y
    s1_ref[...] += jnp.sum(y, axis=0, keepdims=True)
    s2_ref[...] += jnp.sum(y * y, axis=0, keepdims=True)


def _bn_act_kernel(y_ref, scale_ref, shift_ref, o_ref):
    # Pass 2 of BN layers: z = y * scale + shift, then LeakyReLU.
    z = y_ref[...] * scale_ref[...] + shift_ref[...]
    z = jnp.where(z >= 0, z, LEAK * z)
    o_ref[...] = z.astype(o_ref.dtype)


# ------------------------------ Tiling heuristics ------------------------------ #

_TM_CANDIDATES = (512, 256, 128, 64, 32, 16, 8)
# Conservative double-buffered footprint budget: safe for v7x (64 MiB physical VMEM,
# 32 MiB scoped default) while still allowing large tiles on v5e/v6e.
_VMEM_BUDGET = 24 << 20


def _tile_footprint(tm, k, coutp):
    return (2 * tm * k * 2          # bf16 patches tile, double-buffered
            + 2 * k * coutp * 2     # bf16 weights (constant index map)
            + 2 * tm * coutp * 4    # output tile, double-buffered (f32 upper bound)
            + 8 * coutp * 4)        # per-channel stat accumulators


def _choose_tm(m, k, coutp):
    m8 = _round_up(m, 8)
    for cand in _TM_CANDIDATES:
        tm = min(cand, m8)
        if _tile_footprint(tm, k, coutp) <= _VMEM_BUDGET:
            return tm
    return 8


def _vmem_limit(tm, k, coutp):
    return int(max(32 << 20, _tile_footprint(tm, k, coutp) + (8 << 20)))


# ------------------------------ JAX glue (im2col) ------------------------------ #

def _im2col(x_nhwc, stride):
    """(N,H,W,C) -> (N*Hout*Wout, 16*C), K ordered as (kh, kw, cin)."""
    x = jnp.pad(x_nhwc, ((0, 0), (PAD, PAD), (PAD, PAD), (0, 0)))
    n, h, w, c = x.shape
    hout = (h - KW) // stride + 1
    wout = (w - KW) // stride + 1
    taps = []
    for i in range(KW):
        for j in range(KW):
            taps.append(x[:, i:i + (hout - 1) * stride + 1:stride,
                          j:j + (wout - 1) * stride + 1:stride, :])
    p = jnp.stack(taps, axis=3)                     # (N, Hout, Wout, 16, C)
    p = p.reshape(n * hout * wout, KW * KW * c)
    return p, (n, hout, wout)


# ------------------------------ Model definition ------------------------------ #

class LayerCfg(NamedTuple):
    kind: str        # "first" | "bn" | "final"
    stride: int
    cin_pad: int     # padded input channels (K = 16 * cin_pad)
    cout: int        # true output channels
    cout_pad: int    # lane-padded output channels (final layer only)


def init_params(key, input_nc, ndf=64, n_layers=3):
    """Raw PyTorch-layout parameters; mirrors NLayerDiscriminator.__init__ bookkeeping."""
    layers = [(input_nc, ndf, 2, True, False)]          # (cin, cout, stride, bias, bn)
    nf_mult = 1
    for n in range(1, n_layers):
        nf_mult_prev, nf_mult = nf_mult, min(2 ** n, 8)
        layers.append((ndf * nf_mult_prev, ndf * nf_mult, 2, False, True))
    nf_mult_prev, nf_mult = nf_mult, min(2 ** n_layers, 8)
    layers.append((ndf * nf_mult_prev, ndf * nf_mult, 1, False, True))
    layers.append((ndf * nf_mult, 1, 1, True, False))

    params = []
    for (cin, cout, stride, has_bias, has_bn) in layers:
        key, k1, k2, k3, k4 = jax.random.split(key, 5)
        params.append(dict(
            w=0.02 * jax.random.normal(k1, (cout, cin, KW, KW), jnp.float32),
            b=(0.01 * jax.random.normal(k2, (cout,), jnp.float32) if has_bias else None),
            gamma=(1.0 + 0.1 * jax.random.normal(k3, (cout,), jnp.float32) if has_bn else None),
            beta=(0.1 * jax.random.normal(k4, (cout,), jnp.float32) if has_bn else None),
            stride=stride,
        ))
    return params


def prepare_params(raw_params):
    """Hoist all weight prep out of the forward path (pre-transposed, pre-padded,
    pre-cast bf16 weight matrices; (1, C) epilogue vectors)."""
    n_total = len(raw_params)
    cfgs, arrays = [], []
    for idx, lp in enumerate(raw_params):
        w = lp["w"]
        cout, cin = int(w.shape[0]), int(w.shape[1])
        is_final = idx == n_total - 1
        cin_pad = _round_up(cin, 8)                       # K = 16*cin_pad -> multiple of 128
        cout_pad = _round_up(cout, 128) if is_final else cout  # lane-dense final output
        kind = "bn" if lp["gamma"] is not None else ("final" if is_final else "first")

        wp = jnp.pad(w, ((0, cout_pad - cout), (0, cin_pad - cin), (0, 0), (0, 0)))
        w_mat = jnp.transpose(wp, (2, 3, 1, 0)).reshape(KW * KW * cin_pad, cout_pad)
        arr = dict(w_mat=w_mat.astype(jnp.bfloat16))
        if lp["b"] is not None:
            arr["b"] = jnp.pad(lp["b"], (0, cout_pad - cout)).reshape(1, cout_pad).astype(jnp.float32)
        if lp["gamma"] is not None:
            arr["gamma"] = lp["gamma"].reshape(1, cout).astype(jnp.float32)
            arr["beta"] = lp["beta"].reshape(1, cout).astype(jnp.float32)
        cfgs.append(LayerCfg(kind, int(lp["stride"]), cin_pad, cout, cout_pad))
        arrays.append(arr)
    return tuple(cfgs), arrays


# ------------------------------ Per-layer forward ------------------------------ #

def _conv_layer(x_nhwc, cfg: LayerCfg, arr):
    cin = x_nhwc.shape[-1]
    if cfg.cin_pad > cin:                                 # first layer: pad Cin with zeros
        x_nhwc = jnp.pad(x_nhwc, ((0, 0), (0, 0), (0, 0), (0, cfg.cin_pad - cin)))

    p, (n, ho, wo) = _im2col(x_nhwc, cfg.stride)
    m, k = p.shape
    coutp = cfg.cout_pad
    tm = _choose_tm(m, k, coutp)
    mp = _round_up(m, tm)
    if mp > m:                                            # zero rows -> zero conv outputs,
        p = jnp.pad(p, ((0, mp - m), (0, 0)))             # so BN sums stay exact
    p = p.astype(jnp.bfloat16)
    grid_m = mp // tm
    vl = _vmem_limit(tm, k, coutp)
    is_final = cfg.kind == "final"
    out_dtype = jnp.float32 if is_final else jnp.bfloat16

    p_spec = pl.BlockSpec((tm, k), lambda i: (i, 0))
    w_spec = pl.BlockSpec((k, coutp), lambda i: (0, 0))
    vec_spec = pl.BlockSpec((1, coutp), lambda i: (0, 0))
    tile_spec = pl.BlockSpec((tm, coutp), lambda i: (i, 0))

    if cfg.kind == "bn":
        # Pass 1: M-tiled MXU matmul + resident per-channel sum / sum-of-squares.
        y, s1, s2 = pl.pallas_call(
            _matmul_stats_kernel,
            grid=(grid_m,),
            in_specs=[p_spec, w_spec],
            out_specs=(tile_spec, vec_spec, vec_spec),
            out_shape=(jax.ShapeDtypeStruct((mp, coutp), jnp.float32),
                       jax.ShapeDtypeStruct((1, coutp), jnp.float32),
                       jax.ShapeDtypeStruct((1, coutp), jnp.float32)),
            compiler_params=pltpu.CompilerParams(
                dimension_semantics=("arbitrary",), vmem_limit_bytes=vl),
        )(p, arr["w_mat"])

        # Tiny per-channel finalize in f32 (padded rows contribute exact zeros -> true M).
        inv_m = 1.0 / float(m)
        mean = s1 * inv_m
        var = jnp.maximum(s2 * inv_m - mean * mean, 0.0)
        scale = arr["gamma"] * lax.rsqrt(var + BN_EPS)
        shift = arr["beta"] - mean * scale

        # Pass 2: normalize + LeakyReLU; M axis parallel (uses both TCs on v7x).
        out = pl.pallas_call(
            _bn_act_kernel,
            grid=(grid_m,),
            in_specs=[tile_spec, vec_spec, vec_spec],
            out_specs=tile_spec,
            out_shape=jax.ShapeDtypeStruct((mp, coutp), out_dtype),
            compiler_params=pltpu.CompilerParams(
                dimension_semantics=("parallel",), vmem_limit_bytes=vl),
        )(y, scale, shift)
    else:
        leaky = cfg.kind == "first"
        out = pl.pallas_call(
            functools.partial(_matmul_bias_act_kernel, leaky=leaky),
            grid=(grid_m,),
            in_specs=[p_spec, w_spec, vec_spec],
            out_specs=tile_spec,
            out_shape=jax.ShapeDtypeStruct((mp, coutp), out_dtype),
            compiler_params=pltpu.CompilerParams(
                dimension_semantics=("parallel",), vmem_limit_bytes=vl),
        )(p, arr["w_mat"], arr["b"])

    return out[:m, :cfg.cout].reshape(n, ho, wo, cfg.cout)


@functools.partial(jax.jit, static_argnums=(1,))
def discriminator_forward(x_nchw, cfgs, arrays):
    """Pallas-backed forward pass.  Input/output are NCHW like PyTorch."""
    x = jnp.transpose(x_nchw, (0, 2, 3, 1))               # NCHW -> NHWC
    for cfg, arr in zip(cfgs, arrays):
        x = _conv_layer(x, cfg, arr)
    return jnp.transpose(x, (0, 3, 1, 2)).astype(jnp.float32)


# ------------------------------ Pure-JAX reference ------------------------------ #

def reference_forward(x_nchw, raw_params):
    """Reference modelling the kernel numerics: bf16 conv operands, f32 accumulate,
    f32 bias/BN/LeakyReLU epilogue (matches the Pallas path up to accumulation order)."""
    x = jnp.transpose(x_nchw, (0, 2, 3, 1))
    n_total = len(raw_params)
    for idx, lp in enumerate(raw_params):
        xb = x.astype(jnp.bfloat16).astype(jnp.float32)
        wb = lp["w"].astype(jnp.bfloat16).astype(jnp.float32)
        w = jnp.transpose(wb, (2, 3, 1, 0))                # OIHW -> HWIO
        y = lax.conv_general_dilated(
            xb, w, (lp["stride"], lp["stride"]), ((PAD, PAD), (PAD, PAD)),
            dimension_numbers=("NHWC", "HWIO", "NHWC"),
            precision=lax.Precision.HIGHEST)
        if lp["b"] is not None:
            y = y + lp["b"]
        if lp["gamma"] is not None:
            mean = jnp.mean(y, axis=(0, 1, 2), keepdims=True)
            var = jnp.mean((y - mean) ** 2, axis=(0, 1, 2), keepdims=True)
            y = (y - mean) * lax.rsqrt(var + BN_EPS) * lp["gamma"] + lp["beta"]
        if idx < n_total - 1:
            y = jnp.where(y >= 0, y, LEAK * y)
        x = y
    return jnp.transpose(x, (0, 3, 1, 2))


# ------------------------------------ Main ------------------------------------- #

if __name__ == "__main__":
    key = jax.random.PRNGKey(0)
    kx, kp = jax.random.split(key)

    # Small but structurally faithful; 128x128 input so the M-tiled grid and the
    # multi-tile BN accumulator path are actually exercised (layer-0 grid=16, BN grid=4).
    input_nc, ndf, n_layers = 3, 8, 3
    x = jax.random.normal(kx, (2, input_nc, 128, 128), jnp.float32)

    raw_params = init_params(kp, input_nc, ndf=ndf, n_layers=n_layers)
    cfgs, arrays = prepare_params(raw_params)

    out = jax.block_until_ready(discriminator_forward(x, cfgs, arrays))
    ref = jax.block_until_ready(reference_forward(x, raw_params))

    # Spatial: 128 -> 64 -> 32 -> 16 -> 15 -> 14; single-channel PatchGAN logits map.
    assert out.shape == (2, 1, 14, 14), out.shape
    np.testing.assert_allclose(np.asarray(out), np.asarray(ref), rtol=2e-2, atol=2e-2)
    print("KERNEL_OK")
</pallas_src>

<mosaic_0001>
module attributes {stable_mosaic.version = 11 : i64} {
  func.func @_matmul_bias_act_kernel(%arg0: i32, %arg1: memref<512x128xbf16, #tpu.memory_space<vmem>>, %arg2: memref<128x8xbf16, #tpu.memory_space<vmem>>, %arg3: memref<1x8xf32, #tpu.memory_space<vmem>>, %arg4: memref<512x8xbf16, #tpu.memory_space<vmem>>) attributes {dimension_semantics = [#tpu.dimension_semantics<parallel>], iteration_bounds = array<i64: 16>, scalar_prefetch = 0 : i64, scratch_operands = 0 : i64, tpu.core_type = #tpu.core_type<tc>, window_params = [{transform_indices = @transform_0, window_bounds = array<i64: 512, 128>}, {pipeline_mode = #tpu.pipeline_mode<synchronous>, transform_indices = @transform_1, window_bounds = array<i64: 128, 8>}, {pipeline_mode = #tpu.pipeline_mode<synchronous>, transform_indices = @transform_2, window_bounds = array<i64: 1, 8>}, {transform_indices = @transform_3, window_bounds = array<i64: 512, 8>}]} {
    %c0 = arith.constant 0 : index
    %c0_0 = arith.constant 0 : index
    %0 = vector.load %arg1[%c0, %c0_0] : memref<512x128xbf16, #tpu.memory_space<vmem>>, vector<512x128xbf16>
    %c0_1 = arith.constant 0 : index
    %c0_2 = arith.constant 0 : index
    %1 = vector.load %arg2[%c0_1, %c0_2] : memref<128x8xbf16, #tpu.memory_space<vmem>>, vector<128x8xbf16>
    %cst = arith.constant dense<0.000000e+00> : vector<512x8xf32>
    %2 = tpu.matmul %0, %1, %cst {dimension_numbers = #tpu.dot_dimension_numbers<[1], [0], [0], [1], [0, 0, 1, 1], [], []>} : vector<512x128xbf16>, vector<128x8xbf16>, vector<512x8xf32> -> vector<512x8xf32>
    %c0_3 = arith.constant 0 : index
    %c0_4 = arith.constant 0 : index
    %3 = vector.load %arg3[%c0_3, %c0_4] : memref<1x8xf32, #tpu.memory_space<vmem>>, vector<1x8xf32>
    %4 = vector.broadcast %3 : vector<1x8xf32> to vector<512x8xf32>
    %5 = arith.addf %2, %4 : vector<512x8xf32>
    %cst_5 = arith.constant 0.000000e+00 : f32
    %6 = vector.broadcast %cst_5 : f32 to vector<512x8xf32>
    %7 = arith.cmpf oge, %5, %6 : vector<512x8xf32>
    %cst_6 = arith.constant 2.000000e-01 : f32
    %8 = vector.broadcast %cst_6 : f32 to vector<512x8xf32>
    %9 = arith.mulf %8, %5 : vector<512x8xf32>
    %10 = arith.select %7, %5, %9 : vector<512x8xi1>, vector<512x8xf32>
    %11 = arith.truncf %10 : vector<512x8xf32> to vector<512x8xbf16>
    %c0_7 = arith.constant 0 : index
    %c0_8 = arith.constant 0 : index
    %12 = vector.load %arg4[%c0_7, %c0_8] : memref<512x8xbf16, #tpu.memory_space<vmem>>, vector<512x8xbf16>
    tpu.vector_store %arg4[%c0_7, %c0_8], %11 {strides = array<i32>} : memref<512x8xbf16, #tpu.memory_space<vmem>>, vector<512x8xbf16>,
    return
  }
  func.func @transform_0(%arg0: i32) -> (i32, i32) {
    %c0_i32 = arith.constant 0 : i32
    %c0_i32_0 = arith.constant 0 : i32
    return %arg0, %c0_i32 : i32, i32
  }
  func.func @transform_1(%arg0: i32) -> (i32, i32) {
    %c0_i32 = arith.constant 0 : i32
    %c0_i32_0 = arith.constant 0 : i32
    %c0_i32_1 = arith.constant 0 : i32
    return %c0_i32, %c0_i32_0 : i32, i32
  }
  func.func @transform_2(%arg0: i32) -> (i32, i32) {
    %c0_i32 = arith.constant 0 : i32
    %c0_i32_0 = arith.constant 0 : i32
    %c0_i32_1 = arith.constant 0 : i32
    return %c0_i32, %c0_i32_0 : i32, i32
  }
  func.func @transform_3(%arg0: i32) -> (i32, i32) {
    %c0_i32 = arith.constant 0 : i32
    %c0_i32_0 = arith.constant 0 : i32
    return %arg0, %c0_i32 : i32, i32
  }
}

module attributes {stable_mosaic.version = 11 : i64} {
  func.func @_matmul_stats_kernel(%arg0: i32, %arg1: memref<512x128xbf16, #tpu.memory_space<vmem>>, %arg2: memref<128x16xbf16, #tpu.memory_space<vmem>>, %arg3: memref<512x16xf32, #tpu.memory_space<vmem>>, %arg4: memref<1x16xf32, #tpu.memory_space<vmem>>, %arg5: memref<1x16xf32, #tpu.memory_space<vmem>>) attributes {dimension_semantics = [#tpu.dimension_semantics<arbitrary>], iteration_bounds = array<i64: 4>, scalar_prefetch = 0 : i64, scratch_operands = 0 : i64, tpu.core_type = #tpu.core_type<tc>, window_params = [{transform_indices = @transform_0, window_bounds = array<i64: 512, 128>}, {pipeline_mode = #tpu.pipeline_mode<synchronous>, transform_indices = @transform_1, window_bounds = array<i64: 128, 16>}, {transform_indices = @transform_2, window_bounds = array<i64: 512, 16>}, {pipeline_mode = #tpu.pipeline_mode<synchronous>, transform_indices = @transform_3, window_bounds = array<i64: 1, 16>}, {pipeline_mode = #tpu.pipeline_mode<synchronous>, transform_indices = @transform_4, window_bounds = array<i64: 1, 16>}]} {
    %c0_i32 = arith.constant 0 : i32
    %0 = arith.cmpi eq, %arg0, %c0_i32 : i32
    %1 = arith.extui %0 : i1 to i32
    %c0_i32_0 = arith.constant 0 : i32
    %2 = arith.cmpi ne, %1, %c0_i32_0 : i32
    scf.if %2 {
      %cst_16 = arith.constant 0.000000e+00 : f32
      %18 = vector.broadcast %cst_16 : f32 to vector<1x16xf32>
      %c0_17 = arith.constant 0 : index
      %c0_18 = arith.constant 0 : index
      %19 = vector.load %arg4[%c0_17, %c0_18] : memref<1x16xf32, #tpu.memory_space<vmem>>, vector<1x16xf32>
      tpu.vector_store %arg4[%c0_17, %c0_18], %18 {strides = array<i32>} : memref<1x16xf32, #tpu.memory_space<vmem>>, vector<1x16xf32>,
      %cst_19 = arith.constant 0.000000e+00 : f32
      %20 = vector.broadcast %cst_19 : f32 to vector<1x16xf32>
      %c0_20 = arith.constant 0 : index
      %c0_21 = arith.constant 0 : index
      %21 = vector.load %arg5[%c0_20, %c0_21] : memref<1x16xf32, #tpu.memory_space<vmem>>, vector<1x16xf32>
      tpu.vector_store %arg5[%c0_20, %c0_21], %20 {strides = array<i32>} : memref<1x16xf32, #tpu.memory_space<vmem>>, vector<1x16xf32>,
    } else {
    }
    %c0 = arith.constant 0 : index
    %c0_1 = arith.constant 0 : index
    %3 = vector.load %arg1[%c0, %c0_1] : memref<512x128xbf16, #tpu.memory_space<vmem>>, vector<512x128xbf16>
    %c0_2 = arith.constant 0 : index
    %c0_3 = arith.constant 0 : index
    %4 = vector.load %arg2[%c0_2, %c0_3] : memref<128x16xbf16, #tpu.memory_space<vmem>>, vector<128x16xbf16>
    %cst = arith.constant dense<0.000000e+00> : vector<512x16xf32>
    %5 = tpu.matmul %3, %4, %cst {dimension_numbers = #tpu.dot_dimension_numbers<[1], [0], [0], [1], [0, 0, 1, 1], [], []>} : vector<512x128xbf16>, vector<128x16xbf16>, vector<512x16xf32> -> vector<512x16xf32>
    %c0_4 = arith.constant 0 : index
    %c0_5 = arith.constant 0 : index
    %6 = vector.load %arg3[%c0_4, %c0_5] : memref<512x16xf32, #tpu.memory_space<vmem>>, vector<512x16xf32>
    tpu.vector_store %arg3[%c0_4, %c0_5], %5 {strides = array<i32>} : memref<512x16xf32, #tpu.memory_space<vmem>>, vector<512x16xf32>,
    %c0_6 = arith.constant 0 : index
    %c0_7 = arith.constant 0 : index
    %7 = vector.load %arg4[%c0_6, %c0_7] : memref<1x16xf32, #tpu.memory_space<vmem>>, vector<1x16xf32>
    %cst_8 = arith.constant dense<0.000000e+00> : vector<16xf32>
    %8 = vector.multi_reduction <add>, %5, %cst_8 [0] : vector<512x16xf32> to vector<16xf32>
    %9 = vector.shape_cast %8 : vector<16xf32> to vector<1x16xf32>
    %10 = arith.addf %7, %9 : vector<1x16xf32>
    %c0_9 = arith.constant 0 : index
    %c0_10 = arith.constant 0 : index
    %11 = vector.load %arg4[%c0_9, %c0_10] : memref<1x16xf32, #tpu.memory_space<vmem>>, vector<1x16xf32>
    tpu.vector_store %arg4[%c0_9, %c0_10], %10 {strides = array<i32>} : memref<1x16xf32, #tpu.memory_space<vmem>>, vector<1x16xf32>,
    %c0_11 = arith.constant 0 : index
    %c0_12 = arith.constant 0 : index
    %12 = vector.load %arg5[%c0_11, %c0_12] : memref<1x16xf32, #tpu.memory_space<vmem>>, vector<1x16xf32>
    %13 = arith.mulf %5, %5 : vector<512x16xf32>
    %cst_13 = arith.constant dense<0.000000e+00> : vector<16xf32>
    %14 = vector.multi_reduction <add>, %13, %cst_13 [0] : vector<512x16xf32> to vector<16xf32>
    %15 = vector.shape_cast %14 : vector<16xf32> to vector<1x16xf32>
    %16 = arith.addf %12, %15 : vector<1x16xf32>
    %c0_14 = arith.constant 0 : index
    %c0_15 = arith.constant 0 : index
    %17 = vector.load %arg5[%c0_14, %c0_15] : memref<1x16xf32, #tpu.memory_space<vmem>>, vector<1x16xf32>
    tpu.vector_store %arg5[%c0_14, %c0_15], %16 {strides = array<i32>} : memref<1x16xf32, #tpu.memory_space<vmem>>, vector<1x16xf32>,
    return
  }
  func.func @transform_0(%arg0: i32) -> (i32, i32) {
    %c0_i32 = arith.constant 0 : i32
    %c0_i32_0 = arith.constant 0 : i32
    return %arg0, %c0_i32 : i32, i32
  }
  func.func @transform_1(%arg0: i32) -> (i32, i32) {
    %c0_i32 = arith.constant 0 : i32
    %c0_i32_0 = arith.constant 0 : i32
    %c0_i32_1 = arith.constant 0 : i32
    return %c0_i32, %c0_i32_0 : i32, i32
  }
  func.func @transform_2(%arg0: i32) -> (i32, i32) {
    %c0_i32 = arith.constant 0 : i32
    %c0_i32_0 = arith.constant 0 : i32
    return %arg0, %c0_i32 : i32, i32
  }
  func.func @transform_3(%arg0: i32) -> (i32, i32) {
    %c0_i32 = arith.constant 0 : i32
    %c0_i32_0 = arith.constant 0 : i32
    %c0_i32_1 = arith.constant 0 : i32
    return %c0_i32, %c0_i32_0 : i32, i32
  }
  func.func @transform_4(%arg0: i32) -> (i32, i32) {
    %c0_i32 = arith.constant 0 : i32
    %c0_i32_0 = arith.constant 0 : i32
    %c0_i32_1 = arith.constant 0 : i32
    return %c0_i32, %c0_i32_0 : i32, i32
  }
}

module attributes {stable_mosaic.version = 11 : i64} {
  func.func @_bn_act_kernel(%arg0: i32, %arg1: memref<512x16xf32, #tpu.memory_space<vmem>>, %arg2: memref<1x16xf32, #tpu.memory_space<vmem>>, %arg3: memref<1x16xf32, #tpu.memory_space<vmem>>, %arg4: memref<512x16xbf16, #tpu.memory_space<vmem>>) attributes {dimension_semantics = [#tpu.dimension_semantics<parallel>], iteration_bounds = array<i64: 4>, scalar_prefetch = 0 : i64, scratch_operands = 0 : i64, tpu.core_type = #tpu.core_type<tc>, window_params = [{transform_indices = @transform_0, window_bounds = array<i64: 512, 16>}, {pipeline_mode = #tpu.pipeline_mode<synchronous>, transform_indices = @transform_1, window_bounds = array<i64: 1, 16>}, {pipeline_mode = #tpu.pipeline_mode<synchronous>, transform_indices = @transform_2, window_bounds = array<i64: 1, 16>}, {transform_indices = @transform_3, window_bounds = array<i64: 512, 16>}]} {
    %c0 = arith.constant 0 : index
    %c0_0 = arith.constant 0 : index
    %0 = vector.load %arg1[%c0, %c0_0] : memref<512x16xf32, #tpu.memory_space<vmem>>, vector<512x16xf32>
    %c0_1 = arith.constant 0 : index
    %c0_2 = arith.constant 0 : index
    %1 = vector.load %arg2[%c0_1, %c0_2] : memref<1x16xf32, #tpu.memory_space<vmem>>, vector<1x16xf32>
    %2 = vector.broadcast %1 : vector<1x16xf32> to vector<512x16xf32>
    %3 = arith.mulf %0, %2 : vector<512x16xf32>
    %c0_3 = arith.constant 0 : index
    %c0_4 = arith.constant 0 : index
    %4 = vector.load %arg3[%c0_3, %c0_4] : memref<1x16xf32, #tpu.memory_space<vmem>>, vector<1x16xf32>
    %5 = vector.broadcast %4 : vector<1x16xf32> to vector<512x16xf32>
    %6 = arith.addf %3, %5 : vector<512x16xf32>
    %cst = arith.constant 0.000000e+00 : f32
    %7 = vector.broadcast %cst : f32 to vector<512x16xf32>
    %8 = arith.cmpf oge, %6, %7 : vector<512x16xf32>
    %cst_5 = arith.constant 2.000000e-01 : f32
    %9 = vector.broadcast %cst_5 : f32 to vector<512x16xf32>
    %10 = arith.mulf %9, %6 : vector<512x16xf32>
    %11 = arith.select %8, %6, %10 : vector<512x16xi1>, vector<512x16xf32>
    %12 = arith.truncf %11 : vector<512x16xf32> to vector<512x16xbf16>
    %c0_6 = arith.constant 0 : index
    %c0_7 = arith.constant 0 : index
    %13 = vector.load %arg4[%c0_6, %c0_7] : memref<512x16xbf16, #tpu.memory_space<vmem>>, vector<512x16xbf16>
    tpu.vector_store %arg4[%c0_6, %c0_7], %12 {strides = array<i32>} : memref<512x16xbf16, #tpu.memory_space<vmem>>, vector<512x16xbf16>,
    return
  }
  func.func @transform_0(%arg0: i32) -> (i32, i32) {
    %c0_i32 = arith.constant 0 : i32
    %c0_i32_0 = arith.constant 0 : i32
    return %arg0, %c0_i32 : i32, i32
  }
  func.func @transform_1(%arg0: i32) -> (i32, i32) {
    %c0_i32 = arith.constant 0 : i32
    %c0_i32_0 = arith.constant 0 : i32
    %c0_i32_1 = arith.constant 0 : i32
    return %c0_i32, %c0_i32_0 : i32, i32
  }
  func.func @transform_2(%arg0: i32) -> (i32, i32) {
    %c0_i32 = arith.constant 0 : i32
    %c0_i32_0 = arith.constant 0 : i32
    %c0_i32_1 = arith.constant 0 : i32
    return %c0_i32, %c0_i32_0 : i32, i32
  }
  func.func @transform_3(%arg0: i32) -> (i32, i32) {
    %c0_i32 = arith.constant 0 : i32
    %c0_i32_0 = arith.constant 0 : i32
    return %arg0, %c0_i32 : i32, i32
  }
}

module attributes {stable_mosaic.version = 11 : i64} {
  func.func @_matmul_stats_kernel(%arg0: i32, %arg1: memref<512x256xbf16, #tpu.memory_space<vmem>>, %arg2: memref<256x32xbf16, #tpu.memory_space<vmem>>, %arg3: memref<512x32xf32, #tpu.memory_space<vmem>>, %arg4: memref<1x32xf32, #tpu.memory_space<vmem>>, %arg5: memref<1x32xf32, #tpu.memory_space<vmem>>) attributes {dimension_semantics = [#tpu.dimension_semantics<arbitrary>], iteration_bounds = array<i64: 1>, scalar_prefetch = 0 : i64, scratch_operands = 0 : i64, tpu.core_type = #tpu.core_type<tc>, window_params = [{transform_indices = @transform_0, window_bounds = array<i64: 512, 256>}, {pipeline_mode = #tpu.pipeline_mode<synchronous>, transform_indices = @transform_1, window_bounds = array<i64: 256, 32>}, {transform_indices = @transform_2, window_bounds = array<i64: 512, 32>}, {pipeline_mode = #tpu.pipeline_mode<synchronous>, transform_indices = @transform_3, window_bounds = array<i64: 1, 32>}, {pipeline_mode = #tpu.pipeline_mode<synchronous>, transform_indices = @transform_4, window_bounds = array<i64: 1, 32>}]} {
    %c0_i32 = arith.constant 0 : i32
    %0 = arith.cmpi eq, %arg0, %c0_i32 : i32
    %1 = arith.extui %0 : i1 to i32
    %c0_i32_0 = arith.constant 0 : i32
    %2 = arith.cmpi ne, %1, %c0_i32_0 : i32
    scf.if %2 {
      %cst_16 = arith.constant 0.000000e+00 : f32
      %18 = vector.broadcast %cst_16 : f32 to vector<1x32xf32>
      %c0_17 = arith.constant 0 : index
      %c0_18 = arith.constant 0 : index
      %19 = vector.load %arg4[%c0_17, %c0_18] : memref<1x32xf32, #tpu.memory_space<vmem>>, vector<1x32xf32>
      tpu.vector_store %arg4[%c0_17, %c0_18], %18 {strides = array<i32>} : memref<1x32xf32, #tpu.memory_space<vmem>>, vector<1x32xf32>,
      %cst_19 = arith.constant 0.000000e+00 : f32
      %20 = vector.broadcast %cst_19 : f32 to vector<1x32xf32>
      %c0_20 = arith.constant 0 : index
      %c0_21 = arith.constant 0 : index
      %21 = vector.load %arg5[%c0_20, %c0_21] : memref<1x32xf32, #tpu.memory_space<vmem>>, vector<1x32xf32>
      tpu.vector_store %arg5[%c0_20, %c0_21], %20 {strides = array<i32>} : memref<1x32xf32, #tpu.memory_space<vmem>>, vector<1x32xf32>,
    } else {
    }
    %c0 = arith.constant 0 : index
    %c0_1 = arith.constant 0 : index
    %3 = vector.load %arg1[%c0, %c0_1] : memref<512x256xbf16, #tpu.memory_space<vmem>>, vector<512x256xbf16>
    %c0_2 = arith.constant 0 : index
    %c0_3 = arith.constant 0 : index
    %4 = vector.load %arg2[%c0_2, %c0_3] : memref<256x32xbf16, #tpu.memory_space<vmem>>, vector<256x32xbf16>
    %cst = arith.constant dense<0.000000e+00> : vector<512x32xf32>
    %5 = tpu.matmul %3, %4, %cst {dimension_numbers = #tpu.dot_dimension_numbers<[1], [0], [0], [1], [0, 0, 1, 1], [], []>} : vector<512x256xbf16>, vector<256x32xbf16>, vector<512x32xf32> -> vector<512x32xf32>
    %c0_4 = arith.constant 0 : index
    %c0_5 = arith.constant 0 : index
    %6 = vector.load %arg3[%c0_4, %c0_5] : memref<512x32xf32, #tpu.memory_space<vmem>>, vector<512x32xf32>
    tpu.vector_store %arg3[%c0_4, %c0_5], %5 {strides = array<i32>} : memref<512x32xf32, #tpu.memory_space<vmem>>, vector<512x32xf32>,
    %c0_6 = arith.constant 0 : index
    %c0_7 = arith.constant 0 : index
    %7 = vector.load %arg4[%c0_6, %c0_7] : memref<1x32xf32, #tpu.memory_space<vmem>>, vector<1x32xf32>
    %cst_8 = arith.constant dense<0.000000e+00> : vector<32xf32>
    %8 = vector.multi_reduction <add>, %5, %cst_8 [0] : vector<512x32xf32> to vector<32xf32>
    %9 = vector.shape_cast %8 : vector<32xf32> to vector<1x32xf32>
    %10 = arith.addf %7, %9 : vector<1x32xf32>
    %c0_9 = arith.constant 0 : index
    %c0_10 = arith.constant 0 : index
    %11 = vector.load %arg4[%c0_9, %c0_10] : memref<1x32xf32, #tpu.memory_space<vmem>>, vector<1x32xf32>
    tpu.vector_store %arg4[%c0_9, %c0_10], %10 {strides = array<i32>} : memref<1x32xf32, #tpu.memory_space<vmem>>, vector<1x32xf32>,
    %c0_11 = arith.constant 0 : index
    %c0_12 = arith.constant 0 : index
    %12 = vector.load %arg5[%c0_11, %c0_12] : memref<1x32xf32, #tpu.memory_space<vmem>>, vector<1x32xf32>
    %13 = arith.mulf %5, %5 : vector<512x32xf32>
    %cst_13 = arith.constant dense<0.000000e+00> : vector<32xf32>
    %14 = vector.multi_reduction <add>, %13, %cst_13 [0] : vector<512x32xf32> to vector<32xf32>
    %15 = vector.shape_cast %14 : vector<32xf32> to vector<1x32xf32>
    %16 = arith.addf %12, %15 : vector<1x32xf32>
    %c0_14 = arith.constant 0 : index
    %c0_15 = arith.constant 0 : index
    %17 = vector.load %arg5[%c0_14, %c0_15] : memref<1x32xf32, #tpu.memory_space<vmem>>, vector<1x32xf32>
    tpu.vector_store %arg5[%c0_14, %c0_15], %16 {strides = array<i32>} : memref<1x32xf32, #tpu.memory_space<vmem>>, vector<1x32xf32>,
    return
  }
  func.func @transform_0(%arg0: i32) -> (i32, i32) {
    %c0_i32 = arith.constant 0 : i32
    %c0_i32_0 = arith.constant 0 : i32
    return %arg0, %c0_i32 : i32, i32
  }
  func.func @transform_1(%arg0: i32) -> (i32, i32) {
    %c0_i32 = arith.constant 0 : i32
    %c0_i32_0 = arith.constant 0 : i32
    %c0_i32_1 = arith.constant 0 : i32
    return %c0_i32, %c0_i32_0 : i32, i32
  }
  func.func @transform_2(%arg0: i32) -> (i32, i32) {
    %c0_i32 = arith.constant 0 : i32
    %c0_i32_0 = arith.constant 0 : i32
    return %arg0, %c0_i32 : i32, i32
  }
  func.func @transform_3(%arg0: i32) -> (i32, i32) {
    %c0_i32 = arith.constant 0 : i32
    %c0_i32_0 = arith.constant 0 : i32
    %c0_i32_1 = arith.constant 0 : i32
    return %c0_i32, %c0_i32_0 : i32, i32
  }
  func.func @transform_4(%arg0: i32) -> (i32, i32) {
    %c0_i32 = arith.constant 0 : i32
    %c0_i32_0 = arith.constant 0 : i32
    %c0_i32_1 = arith.constant 0 : i32
    return %c0_i32, %c0_i32_0 : i32, i32
  }
}

module attributes {stable_mosaic.version = 11 : i64} {
  func.func @_bn_act_kernel(%arg0: i32, %arg1: memref<512x32xf32, #tpu.memory_space<vmem>>, %arg2: memref<1x32xf32, #tpu.memory_space<vmem>>, %arg3: memref<1x32xf32, #tpu.memory_space<vmem>>, %arg4: memref<512x32xbf16, #tpu.memory_space<vmem>>) attributes {dimension_semantics = [#tpu.dimension_semantics<parallel>], iteration_bounds = array<i64: 1>, scalar_prefetch = 0 : i64, scratch_operands = 0 : i64, tpu.core_type = #tpu.core_type<tc>, window_params = [{transform_indices = @transform_0, window_bounds = array<i64: 512, 32>}, {pipeline_mode = #tpu.pipeline_mode<synchronous>, transform_indices = @transform_1, window_bounds = array<i64: 1, 32>}, {pipeline_mode = #tpu.pipeline_mode<synchronous>, transform_indices = @transform_2, window_bounds = array<i64: 1, 32>}, {transform_indices = @transform_3, window_bounds = array<i64: 512, 32>}]} {
    %c0 = arith.constant 0 : index
    %c0_0 = arith.constant 0 : index
    %0 = vector.load %arg1[%c0, %c0_0] : memref<512x32xf32, #tpu.memory_space<vmem>>, vector<512x32xf32>
    %c0_1 = arith.constant 0 : index
    %c0_2 = arith.constant 0 : index
    %1 = vector.load %arg2[%c0_1, %c0_2] : memref<1x32xf32, #tpu.memory_space<vmem>>, vector<1x32xf32>
    %2 = vector.broadcast %1 : vector<1x32xf32> to vector<512x32xf32>
    %3 = arith.mulf %0, %2 : vector<512x32xf32>
    %c0_3 = arith.constant 0 : index
    %c0_4 = arith.constant 0 : index
    %4 = vector.load %arg3[%c0_3, %c0_4] : memref<1x32xf32, #tpu.memory_space<vmem>>, vector<1x32xf32>
    %5 = vector.broadcast %4 : vector<1x32xf32> to vector<512x32xf32>
    %6 = arith.addf %3, %5 : vector<512x32xf32>
    %cst = arith.constant 0.000000e+00 : f32
    %7 = vector.broadcast %cst : f32 to vector<512x32xf32>
    %8 = arith.cmpf oge, %6, %7 : vector<512x32xf32>
    %cst_5 = arith.constant 2.000000e-01 : f32
    %9 = vector.broadcast %cst_5 : f32 to vector<512x32xf32>
    %10 = arith.mulf %9, %6 : vector<512x32xf32>
    %11 = arith.select %8, %6, %10 : vector<512x32xi1>, vector<512x32xf32>
    %12 = arith.truncf %11 : vector<512x32xf32> to vector<512x32xbf16>
    %c0_6 = arith.constant 0 : index
    %c0_7 = arith.constant 0 : index
    %13 = vector.load %arg4[%c0_6, %c0_7] : memref<512x32xbf16, #tpu.memory_space<vmem>>, vector<512x32xbf16>
    tpu.vector_store %arg4[%c0_6, %c0_7], %12 {strides = array<i32>} : memref<512x32xbf16, #tpu.memory_space<vmem>>, vector<512x32xbf16>,
    return
  }
  func.func @transform_0(%arg0: i32) -> (i32, i32) {
    %c0_i32 = arith.constant 0 : i32
    %c0_i32_0 = arith.constant 0 : i32
    return %arg0, %c0_i32 : i32, i32
  }
  func.func @transform_1(%arg0: i32) -> (i32, i32) {
    %c0_i32 = arith.constant 0 : i32
    %c0_i32_0 = arith.constant 0 : i32
    %c0_i32_1 = arith.constant 0 : i32
    return %c0_i32, %c0_i32_0 : i32, i32
  }
  func.func @transform_2(%arg0: i32) -> (i32, i32) {
    %c0_i32 = arith.constant 0 : i32
    %c0_i32_0 = arith.constant 0 : i32
    %c0_i32_1 = arith.constant 0 : i32
    return %c0_i32, %c0_i32_0 : i32, i32
  }
  func.func @transform_3(%arg0: i32) -> (i32, i32) {
    %c0_i32 = arith.constant 0 : i32
    %c0_i32_0 = arith.constant 0 : i32
    return %arg0, %c0_i32 : i32, i32
  }
}

module attributes {stable_mosaic.version = 11 : i64} {
  func.func @_matmul_stats_kernel(%arg0: i32, %arg1: memref<456x512xbf16, #tpu.memory_space<vmem>>, %arg2: memref<512x64xbf16, #tpu.memory_space<vmem>>, %arg3: memref<456x64xf32, #tpu.memory_space<vmem>>, %arg4: memref<1x64xf32, #tpu.memory_space<vmem>>, %arg5: memref<1x64xf32, #tpu.memory_space<vmem>>) attributes {dimension_semantics = [#tpu.dimension_semantics<arbitrary>], iteration_bounds = array<i64: 1>, scalar_prefetch = 0 : i64, scratch_operands = 0 : i64, tpu.core_type = #tpu.core_type<tc>, window_params = [{transform_indices = @transform_0, window_bounds = array<i64: 456, 512>}, {pipeline_mode = #tpu.pipeline_mode<synchronous>, transform_indices = @transform_1, window_bounds = array<i64: 512, 64>}, {transform_indices = @transform_2, window_bounds = array<i64: 456, 64>}, {pipeline_mode = #tpu.pipeline_mode<synchronous>, transform_indices = @transform_3, window_bounds = array<i64: 1, 64>}, {pipeline_mode = #tpu.pipeline_mode<synchronous>, transform_indices = @transform_4, window_bounds = array<i64: 1, 64>}]} {
    %c0_i32 = arith.constant 0 : i32
    %0 = arith.cmpi eq, %arg0, %c0_i32 : i32
    %1 = arith.extui %0 : i1 to i32
    %c0_i32_0 = arith.constant 0 : i32
    %2 = arith.cmpi ne, %1, %c0_i32_0 : i32
    scf.if %2 {
      %cst_16 = arith.constant 0.000000e+00 : f32
      %18 = vector.broadcast %cst_16 : f32 to vector<1x64xf32>
      %c0_17 = arith.constant 0 : index
      %c0_18 = arith.constant 0 : index
      %19 = vector.load %arg4[%c0_17, %c0_18] : memref<1x64xf32, #tpu.memory_space<vmem>>, vector<1x64xf32>
      tpu.vector_store %arg4[%c0_17, %c0_18], %18 {strides = array<i32>} : memref<1x64xf32, #tpu.memory_space<vmem>>, vector<1x64xf32>,
      %cst_19 = arith.constant 0.000000e+00 : f32
      %20 = vector.broadcast %cst_19 : f32 to vector<1x64xf32>
      %c0_20 = arith.constant 0 : index
      %c0_21 = arith.constant 0 : index
      %21 = vector.load %arg5[%c0_20, %c0_21] : memref<1x64xf32, #tpu.memory_space<vmem>>, vector<1x64xf32>
      tpu.vector_store %arg5[%c0_20, %c0_21], %20 {strides = array<i32>} : memref<1x64xf32, #tpu.memory_space<vmem>>, vector<1x64xf32>,
    } else {
    }
    %c0 = arith.constant 0 : index
    %c0_1 = arith.constant 0 : index
    %3 = vector.load %arg1[%c0, %c0_1] : memref<456x512xbf16, #tpu.memory_space<vmem>>, vector<456x512xbf16>
    %c0_2 = arith.constant 0 : index
    %c0_3 = arith.constant 0 : index
    %4 = vector.load %arg2[%c0_2, %c0_3] : memref<512x64xbf16, #tpu.memory_space<vmem>>, vector<512x64xbf16>
    %cst = arith.constant dense<0.000000e+00> : vector<456x64xf32>
    %5 = tpu.matmul %3, %4, %cst {dimension_numbers = #tpu.dot_dimension_numbers<[1], [0], [0], [1], [0, 0, 1, 1], [], []>} : vector<456x512xbf16>, vector<512x64xbf16>, vector<456x64xf32> -> vector<456x64xf32>
    %c0_4 = arith.constant 0 : index
    %c0_5 = arith.constant 0 : index
    %6 = vector.load %arg3[%c0_4, %c0_5] : memref<456x64xf32, #tpu.memory_space<vmem>>, vector<456x64xf32>
    tpu.vector_store %arg3[%c0_4, %c0_5], %5 {strides = array<i32>} : memref<456x64xf32, #tpu.memory_space<vmem>>, vector<456x64xf32>,
    %c0_6 = arith.constant 0 : index
    %c0_7 = arith.constant 0 : index
    %7 = vector.load %arg4[%c0_6, %c0_7] : memref<1x64xf32, #tpu.memory_space<vmem>>, vector<1x64xf32>
    %cst_8 = arith.constant dense<0.000000e+00> : vector<64xf32>
    %8 = vector.multi_reduction <add>, %5, %cst_8 [0] : vector<456x64xf32> to vector<64xf32>
    %9 = vector.shape_cast %8 : vector<64xf32> to vector<1x64xf32>
    %10 = arith.addf %7, %9 : vector<1x64xf32>
    %c0_9 = arith.constant 0 : index
    %c0_10 = arith.constant 0 : index
    %11 = vector.load %arg4[%c0_9, %c0_10] : memref<1x64xf32, #tpu.memory_space<vmem>>, vector<1x64xf32>
    tpu.vector_store %arg4[%c0_9, %c0_10], %10 {strides = array<i32>} : memref<1x64xf32, #tpu.memory_space<vmem>>, vector<1x64xf32>,
    %c0_11 = arith.constant 0 : index
    %c0_12 = arith.constant 0 : index
    %12 = vector.load %arg5[%c0_11, %c0_12] : memref<1x64xf32, #tpu.memory_space<vmem>>, vector<1x64xf32>
    %13 = arith.mulf %5, %5 : vector<456x64xf32>
    %cst_13 = arith.constant dense<0.000000e+00> : vector<64xf32>
    %14 = vector.multi_reduction <add>, %13, %cst_13 [0] : vector<456x64xf32> to vector<64xf32>
    %15 = vector.shape_cast %14 : vector<64xf32> to vector<1x64xf32>
    %16 = arith.addf %12, %15 : vector<1x64xf32>
    %c0_14 = arith.constant 0 : index
    %c0_15 = arith.constant 0 : index
    %17 = vector.load %arg5[%c0_14, %c0_15] : memref<1x64xf32, #tpu.memory_space<vmem>>, vector<1x64xf32>
    tpu.vector_store %arg5[%c0_14, %c0_15], %16 {strides = array<i32>} : memref<1x64xf32, #tpu.memory_space<vmem>>, vector<1x64xf32>,
    return
  }
  func.func @transform_0(%arg0: i32) -> (i32, i32) {
    %c0_i32 = arith.constant 0 : i32
    %c0_i32_0 = arith.constant 0 : i32
    return %arg0, %c0_i32 : i32, i32
  }
  func.func @transform_1(%arg0: i32) -> (i32, i32) {
    %c0_i32 = arith.constant 0 : i32
    %c0_i32_0 = arith.constant 0 : i32
    %c0_i32_1 = arith.constant 0 : i32
    return %c0_i32, %c0_i32_0 : i32, i32
  }
  func.func @transform_2(%arg0: i32) -> (i32, i32) {
    %c0_i32 = arith.constant 0 : i32
    %c0_i32_0 = arith.constant 0 : i32
    return %arg0, %c0_i32 : i32, i32
  }
  func.func @transform_3(%arg0: i32) -> (i32, i32) {
    %c0_i32 = arith.constant 0 : i32
    %c0_i32_0 = arith.constant 0 : i32
    %c0_i32_1 = arith.constant 0 : i32
    return %c0_i32, %c0_i32_0 : i32, i32
  }
  func.func @transform_4(%arg0: i32) -> (i32, i32) {
    %c0_i32 = arith.constant 0 : i32
    %c0_i32_0 = arith.constant 0 : i32
    %c0_i32_1 = arith.constant 0 : i32
    return %c0_i32, %c0_i32_0 : i32, i32
  }
}

module attributes {stable_mosaic.version = 11 : i64} {
  func.func @_bn_act_kernel(%arg0: i32, %arg1: memref<456x64xf32, #tpu.memory_space<vmem>>, %arg2: memref<1x64xf32, #tpu.memory_space<vmem>>, %arg3: memref<1x64xf32, #tpu.memory_space<vmem>>, %arg4: memref<456x64xbf16, #tpu.memory_space<vmem>>) attributes {dimension_semantics = [#tpu.dimension_semantics<parallel>], iteration_bounds = array<i64: 1>, scalar_prefetch = 0 : i64, scratch_operands = 0 : i64, tpu.core_type = #tpu.core_type<tc>, window_params = [{transform_indices = @transform_0, window_bounds = array<i64: 456, 64>}, {pipeline_mode = #tpu.pipeline_mode<synchronous>, transform_indices = @transform_1, window_bounds = array<i64: 1, 64>}, {pipeline_mode = #tpu.pipeline_mode<synchronous>, transform_indices = @transform_2, window_bounds = array<i64: 1, 64>}, {transform_indices = @transform_3, window_bounds = array<i64: 456, 64>}]} {
    %c0 = arith.constant 0 : index
    %c0_0 = arith.constant 0 : index
    %0 = vector.load %arg1[%c0, %c0_0] : memref<456x64xf32, #tpu.memory_space<vmem>>, vector<456x64xf32>
    %c0_1 = arith.constant 0 : index
    %c0_2 = arith.constant 0 : index
    %1 = vector.load %arg2[%c0_1, %c0_2] : memref<1x64xf32, #tpu.memory_space<vmem>>, vector<1x64xf32>
    %2 = vector.broadcast %1 : vector<1x64xf32> to vector<456x64xf32>
    %3 = arith.mulf %0, %2 : vector<456x64xf32>
    %c0_3 = arith.constant 0 : index
    %c0_4 = arith.constant 0 : index
    %4 = vector.load %arg3[%c0_3, %c0_4] : memref<1x64xf32, #tpu.memory_space<vmem>>, vector<1x64xf32>
    %5 = vector.broadcast %4 : vector<1x64xf32> to vector<456x64xf32>
    %6 = arith.addf %3, %5 : vector<456x64xf32>
    %cst = arith.constant 0.000000e+00 : f32
    %7 = vector.broadcast %cst : f32 to vector<456x64xf32>
    %8 = arith.cmpf oge, %6, %7 : vector<456x64xf32>
    %cst_5 = arith.constant 2.000000e-01 : f32
    %9 = vector.broadcast %cst_5 : f32 to vector<456x64xf32>
    %10 = arith.mulf %9, %6 : vector<456x64xf32>
    %11 = arith.select %8, %6, %10 : vector<456x64xi1>, vector<456x64xf32>
    %12 = arith.truncf %11 : vector<456x64xf32> to vector<456x64xbf16>
    %c0_6 = arith.constant 0 : index
    %c0_7 = arith.constant 0 : index
    %13 = vector.load %arg4[%c0_6, %c0_7] : memref<456x64xbf16, #tpu.memory_space<vmem>>, vector<456x64xbf16>
    tpu.vector_store %arg4[%c0_6, %c0_7], %12 {strides = array<i32>} : memref<456x64xbf16, #tpu.memory_space<vmem>>, vector<456x64xbf16>,
    return
  }
  func.func @transform_0(%arg0: i32) -> (i32, i32) {
    %c0_i32 = arith.constant 0 : i32
    %c0_i32_0 = arith.constant 0 : i32
    return %arg0, %c0_i32 : i32, i32
  }
  func.func @transform_1(%arg0: i32) -> (i32, i32) {
    %c0_i32 = arith.constant 0 : i32
    %c0_i32_0 = arith.constant 0 : i32
    %c0_i32_1 = arith.constant 0 : i32
    return %c0_i32, %c0_i32_0 : i32, i32
  }
  func.func @transform_2(%arg0: i32) -> (i32, i32) {
    %c0_i32 = arith.constant 0 : i32
    %c0_i32_0 = arith.constant 0 : i32
    %c0_i32_1 = arith.constant 0 : i32
    return %c0_i32, %c0_i32_0 : i32, i32
  }
  func.func @transform_3(%arg0: i32) -> (i32, i32) {
    %c0_i32 = arith.constant 0 : i32
    %c0_i32_0 = arith.constant 0 : i32
    return %arg0, %c0_i32 : i32, i32
  }
}

module attributes {stable_mosaic.version = 11 : i64} {
  func.func @_matmul_bias_act_kernel(%arg0: i32, %arg1: memref<392x1024xbf16, #tpu.memory_space<vmem>>, %arg2: memref<1024x128xbf16, #tpu.memory_space<vmem>>, %arg3: memref<1x128xf32, #tpu.memory_space<vmem>>, %arg4: memref<392x128xf32, #tpu.memory_space<vmem>>) attributes {dimension_semantics = [#tpu.dimension_semantics<parallel>], iteration_bounds = array<i64: 1>, scalar_prefetch = 0 : i64, scratch_operands = 0 : i64, tpu.core_type = #tpu.core_type<tc>, window_params = [{transform_indices = @transform_0, window_bounds = array<i64: 392, 1024>}, {pipeline_mode = #tpu.pipeline_mode<synchronous>, transform_indices = @transform_1, window_bounds = array<i64: 1024, 128>}, {pipeline_mode = #tpu.pipeline_mode<synchronous>, transform_indices = @transform_2, window_bounds = array<i64: 1, 128>}, {transform_indices = @transform_3, window_bounds = array<i64: 392, 128>}]} {
    %c0 = arith.constant 0 : index
    %c0_0 = arith.constant 0 : index
    %0 = vector.load %arg1[%c0, %c0_0] : memref<392x1024xbf16, #tpu.memory_space<vmem>>, vector<392x1024xbf16>
    %c0_1 = arith.constant 0 : index
    %c0_2 = arith.constant 0 : index
    %1 = vector.load %arg2[%c0_1, %c0_2] : memref<1024x128xbf16, #tpu.memory_space<vmem>>, vector<1024x128xbf16>
    %cst = arith.constant dense<0.000000e+00> : vector<392x128xf32>
    %2 = tpu.matmul %0, %1, %cst {dimension_numbers = #tpu.dot_dimension_numbers<[1], [0], [0], [1], [0, 0, 1, 1], [], []>} : vector<392x1024xbf16>, vector<1024x128xbf16>, vector<392x128xf32> -> vector<392x128xf32>
    %c0_3 = arith.constant 0 : index
    %c0_4 = arith.constant 0 : index
    %3 = vector.load %arg3[%c0_3, %c0_4] : memref<1x128xf32, #tpu.memory_space<vmem>>, vector<1x128xf32>
    %4 = vector.broadcast %3 : vector<1x128xf32> to vector<392x128xf32>
    %5 = arith.addf %2, %4 : vector<392x128xf32>
    %c0_5 = arith.constant 0 : index
    %c0_6 = arith.constant 0 : index
    %6 = vector.load %arg4[%c0_5, %c0_6] : memref<392x128xf32, #tpu.memory_space<vmem>>, vector<392x128xf32>
    tpu.vector_store %arg4[%c0_5, %c0_6], %5 {strides = array<i32>} : memref<392x128xf32, #tpu.memory_space<vmem>>, vector<392x128xf32>,
    return
  }
  func.func @transform_0(%arg0: i32) -> (i32, i32) {
    %c0_i32 = arith.constant 0 : i32
    %c0_i32_0 = arith.constant 0 : i32
    return %arg0, %c0_i32 : i32, i32
  }
  func.func @transform_1(%arg0: i32) -> (i32, i32) {
    %c0_i32 = arith.constant 0 : i32
    %c0_i32_0 = arith.constant 0 : i32
    %c0_i32_1 = arith.constant 0 : i32
    return %c0_i32, %c0_i32_0 : i32, i32
  }
  func.func @transform_2(%arg0: i32) -> (i32, i32) {
    %c0_i32 = arith.constant 0 : i32
    %c0_i32_0 = arith.constant 0 : i32
    %c0_i32_1 = arith.constant 0 : i32
    return %c0_i32, %c0_i32_0 : i32, i32
  }
  func.func @transform_3(%arg0: i32) -> (i32, i32) {
    %c0_i32 = arith.constant 0 : i32
    %c0_i32_0 = arith.constant 0 : i32
    return %arg0, %c0_i32 : i32, i32
  }
}

</mosaic_0001>

<llo_original>
// kernel: discriminator_forward.8
$region0: #{discriminator_forward.8}
  #allocation0 [shape = 'u32[]', space=smem, size = 0x4, offset = 0x4, fixed_abs, tag = 'smem constant byte address 0x4 - core index']
  #allocation1 [shape = 'u32[144,128]{1,0:T(1,128)}', space=vmem, size = 0x12000, scoped, tag = 'internal scratch']
  %s0 = inlined_call_operand.vmem [shape: bf16[8192,128], index: 0, kind: input, shape index: {}]
  %s1 = inlined_call_operand.vmem [shape: bf16[128,8], index: 1, kind: input, shape index: {}]
  %s2 = inlined_call_operand.vmem [shape: f32[1,8], index: 2, kind: input, shape index: {}]
  %s3 = inlined_call_operand.vmem [shape: bf16[8192,8], index: 3, kind: output, shape index: {}]
  %s4 = sld [smem:[#allocation0]]
  $region45: #{discriminator_forward.8} parent=0
    _
  %s6 = ssub.s32 1, %s4
  %s7 = scalar_select 0, %s6, %s4
  loop: start=0, step=1, limit=18
  $region2: #{discriminator_forward.8} parent=0 // loop_pre_header
    _
  $region3: #{discriminator_forward.8} parent=0 // loop_header
    %s9 = sphi 0, %s13
    %p10 = scmp.ge.s32.totalorder %s9, 18
    %s19 = sphi 0, %s21
    %s22 = sphi 0, %s19
    %s23 = sphi 0, %s22
    %s39 = sphi 0, %s23
    %s43 = sphi 0, %s43
    %s45 = sphi 0, %s43
    %s46 = sphi 0, %s45
    %s60 = sphi 0, %s46
    %s64 = sphi 0, %s64
    %s66 = sphi 0, %s64
    %s67 = sphi 0, %s66
    %s81 = sphi 0, %s67
    %s87 = sphi 0, %s89
    %s90 = sphi 0, %s87
    %s91 = sphi 0, %s90
    %s107 = sphi 0, %s91
  $region4: #{discriminator_forward.8} parent=0 // loop_header_branch
    %12 = sbr.rel (%p10) target = $region8
  $region5: #{discriminator_forward.8} parent=0 // loop_body
    %s14 = ssub.s32 %s9, 1
    %s15 = ssub.s32 %s9, 2
    %s16 = sadd.s32 %s9, 1
    %s17 = ssub.s32 %s9, %s16
    %p18 = scmp.eq.s32.totalorder %s17, 0
    %s20 = sadd.s32 %s19, 1
    %s21 = scalar_select %p18, %s19, %s20
    %p24 = pneg %p18
    %p25 = scmp.eq.s32.totalorder %s9, 15
    %p26 = por %p24, %p25
    %p27 = scmp.ne.s32.totalorder %s19, %s22
    %p28 = scmp.eq.s32.totalorder %s9, 0
    %p29 = por %p27, %p28
    %p30 = scmp.ne.s32.totalorder %s19, %s22
    %p31 = scmp.eq.s32.totalorder %s14, 15
    %p32 = por %p30, %p31
    %p33 = scmp.ne.s32.totalorder %s22, %s23
    %p34 = scmp.eq.s32.totalorder %s14, 0
    %p35 = por %p33, %p34
    %p36 = scmp.ne.s32.totalorder %s22, %s23
    %p37 = scmp.eq.s32.totalorder %s15, 15
    %p38 = por %p36, %p37
    %p40 = scmp.ne.s32.totalorder %s23, %s39
    %p41 = scmp.eq.s32.totalorder %s15, 0
    %p42 = por %p40, %p41
    %s44 = sadd.s32 %s43, 1
    %p47 = scmp.eq.s32.totalorder %s9, 15
    %p48 = scmp.ne.s32.totalorder %s43, %s45
    %p49 = scmp.eq.s32.totalorder %s9, 0
    %p50 = por %p48, %p49
    %p51 = scmp.ne.s32.totalorder %s43, %s45
    %p52 = scmp.eq.s32.totalorder %s14, 15
    %p53 = por %p51, %p52
    %p54 = scmp.ne.s32.totalorder %s45, %s46
    %p55 = scmp.eq.s32.totalorder %s14, 0
    %p56 = por %p54, %p55
    %p57 = scmp.ne.s32.totalorder %s45, %s46
    %p58 = scmp.eq.s32.totalorder %s15, 15
    %p59 = por %p57, %p58
    %p61 = scmp.ne.s32.totalorder %s46, %s60
    %p62 = scmp.eq.s32.totalorder %s15, 0
    %p63 = por %p61, %p62
    %s65 = sadd.s32 %s64, 1
    %p68 = scmp.eq.s32.totalorder %s9, 15
    %p69 = scmp.ne.s32.totalorder %s64, %s66
    %p70 = scmp.eq.s32.totalorder %s9, 0
    %p71 = por %p69, %p70
    %p72 = scmp.ne.s32.totalorder %s64, %s66
    %p73 = scmp.eq.s32.totalorder %s14, 15
    %p74 = por %p72, %p73
    %p75 = scmp.ne.s32.totalorder %s66, %s67
    %p76 = scmp.eq.s32.totalorder %s14, 0
    %p77 = por %p75, %p76
    %p78 = scmp.ne.s32.totalorder %s66, %s67
    %p79 = scmp.eq.s32.totalorder %s15, 15
    %p80 = por %p78, %p79
    %p82 = scmp.ne.s32.totalorder %s67, %s81
    %p83 = scmp.eq.s32.totalorder %s15, 0
    %p84 = por %p82, %p83
    %s85 = ssub.s32 %s9, %s16
    %p86 = scmp.eq.s32.totalorder %s85, 0
    %s88 = sadd.s32 %s87, 1
    %s89 = scalar_select %p86, %s87, %s88
    %p92 = pneg %p86
    %p93 = scmp.eq.s32.totalorder %s9, 15
    %p94 = por %p92, %p93
    %p95 = scmp.ne.s32.totalorder %s87, %s90
    %p96 = scmp.eq.s32.totalorder %s9, 0
    %p97 = por %p95, %p96
    %p98 = scmp.ne.s32.totalorder %s87, %s90
    %p99 = scmp.eq.s32.totalorder %s14, 15
    %p100 = por %p98, %p99
    %p101 = scmp.ne.s32.totalorder %s90, %s91
    %p102 = scmp.eq.s32.totalorder %s14, 0
    %p103 = por %p101, %p102
    %p104 = scmp.ne.s32.totalorder %s90, %s91
    %p105 = scmp.eq.s32.totalorder %s15, 15
    %p106 = por %p104, %p105
    %p108 = scmp.ne.s32.totalorder %s91, %s107
    %p109 = scmp.eq.s32.totalorder %s15, 0
    %p110 = por %p108, %p109
    %p111 = scmp.le.s32.totalorder 1, %s9
    %p112 = scmp.lt.s32.totalorder %s9, 17
    %p113 = pnand %p111, %p112
    %p114 = pneg %p113
    // Predicated region
    $region9: #{discriminator_forward.8} parent=5 // pred_check
      _
    $region10: #{discriminator_forward.8} parent=5 // pred_check_branch
      %116 = sbr.rel (%p113) target = $region12
    $region11: #{discriminator_forward.8} parent=5 // pred_region
      %s117 = ssub.s32 %s9, 1
      // Predicated region
      $region13: #{discriminator_forward.8} parent=11 // pred_check
        %p118 = pneg %p56
      $region14: #{discriminator_forward.8} parent=11 // pred_check_branch
        %120 = sbr.rel (%p118) target = $region16
      $region15: #{discriminator_forward.8} parent=11 // pred_region
        _
      $region16: #{discriminator_forward.8} parent=11 // pred_fallthru
        _
      // Predicated region
      $region17: #{discriminator_forward.8} parent=11 // pred_check
        %p121 = pneg %p77
      $region18: #{discriminator_forward.8} parent=11 // pred_check_branch
        %123 = sbr.rel (%p121) target = $region20
      $region19: #{discriminator_forward.8} parent=11 // pred_region
        _
      $region20: #{discriminator_forward.8} parent=11 // pred_fallthru
        _
    $region12: #{discriminator_forward.8} parent=5 // pred_fallthru
      _
    %p124 = scmp.lt.s32.totalorder %s9, 16
    // Predicated region
    $region21: #{discriminator_forward.8} parent=5 // pred_check
      %p125 = pneg %p124
    $region22: #{discriminator_forward.8} parent=5 // pred_check_branch
      %127 = sbr.rel (%p125) target = $region24
    $region23: #{discriminator_forward.8} parent=5 // pred_region
      // Predicated region
      $region25: #{discriminator_forward.8} parent=23 // pred_check
        %p128 = pneg %p29
      $region26: #{discriminator_forward.8} parent=23 // pred_check_branch
        %130 = sbr.rel (%p128) target = $region28
      $region27: #{discriminator_forward.8} parent=23 // pred_region
        %s131 = smul.u32 64, %s9
        %p132 = scmp.lt.s32.totalorder %s131, 1023
        %s133 = scalar_select %p132, %s131, 1023
        %s134 = smul.addr %s133, 4
        %s135 = scalar_lea.vmem %s0, %s134
        %s136 = smul.u32 64, %s9
      $region28: #{discriminator_forward.8} parent=23 // pred_fallthru
        _
    $region24: #{discriminator_forward.8} parent=5 // pred_fallthru
      _
    %p137 = scmp.le.s32.totalorder 1, %s9
    %p138 = scmp.lt.s32.totalorder %s9, 17
    %p139 = pnand %p137, %p138
    %p140 = pneg %p139
    // Predicated region
    $region29: #{discriminator_forward.8} parent=5 // pred_check
      _
    $region30: #{discriminator_forward.8} parent=5 // pred_check_branch
      %142 = sbr.rel (%p139) target = $region32
    $region31: #{discriminator_forward.8} parent=5 // pred_region
      %s143 = ssub.s32 %s9, 1
      %s144 = smul.u32 64, %s14
      %p145 = scmp.lt.s32.totalorder %s144, 1023
      %s146 = scalar_select %p145, %s144, 1023
      %s147 = smul.addr %s146, 4
      %s148 = scalar_lea.vmem %s0, %s147
      %p149 = pneg %p35
      %p150 = pneg %p32
      %p151 = pneg %p56
      %p152 = pneg %p53
      %p153 = pneg %p77
      %p154 = pneg %p74
      %p155 = pneg %p103
      %p156 = pneg %p100
      %s157 = smul.u32 64, %s14
      %p158 = scmp.lt.s32.totalorder %s157, 1023
      %s159 = scalar_select %p158, %s157, 1023
      %s160 = smul.addr %s159, 4
      %s161 = scalar_lea.vmem %s3, %s160
      %s162 = smul.u32 64, %s14
      %p163 = scmp.lt.s32.totalorder %s162, 1023
      %s164 = scalar_select %p163, %s162, 1023
      %s165 = smul.addr %s164, 4
      %s166 = scalar_lea.vmem %s0, %s165
      %s167 = smul.u32 64, %s14
      %s168 = smul.u32 64, %s14
      %p169 = scmp.lt.s32.totalorder %s168, 1023
      %s170 = scalar_select %p169, %s168, 1023
      %s171 = smul.addr %s170, 4
      %s172 = scalar_lea.vmem %s3, %s171
      %s173 = smul.u32 64, %s14
      %v175 = vld [vmem:[%s166] sm:$0xf]
      %v176 = vld [vmem:[%s166 + $0x4] sm:$0xf]
      %v177 = vld [vmem:[%s166 + $0x8] sm:$0xf]
      %v178 = vld [vmem:[%s166 + $0xc] sm:$0xf]
      %v179 = vld [vmem:[%s166 + $0x10] sm:$0xf]
      %v180 = vld [vmem:[%s166 + $0x14] sm:$0xf]
      %v181 = vld [vmem:[%s166 + $0x18] sm:$0xf]
      %v182 = vld [vmem:[%s166 + $0x1c] sm:$0xf]
      %v183 = vld [vmem:[%s166 + $0x20] sm:$0xf]
      %v184 = vld [vmem:[%s166 + $0x24] sm:$0xf]
      %v185 = vld [vmem:[%s166 + $0x28] sm:$0xf]
      %v186 = vld [vmem:[%s166 + $0x2c] sm:$0xf]
      %v187 = vld [vmem:[%s166 + $0x30] sm:$0xf]
      %v188 = vld [vmem:[%s166 + $0x34] sm:$0xf]
      %v189 = vld [vmem:[%s166 + $0x38] sm:$0xf]
      %v190 = vld [vmem:[%s166 + $0x3c] sm:$0xf]
      %v191 = vld [vmem:[%s166 + $0x40] sm:$0xf]
      %v192 = vld [vmem:[%s166 + $0x44] sm:$0xf]
      %v193 = vld [vmem:[%s166 + $0x48] sm:$0xf]
      %v194 = vld [vmem:[%s166 + $0x4c] sm:$0xf]
      %v195 = vld [vmem:[%s166 + $0x50] sm:$0xf]
      %v196 = vld [vmem:[%s166 + $0x54] sm:$0xf]
      %v197 = vld [vmem:[%s166 + $0x58] sm:$0xf]
      %v198 = vld [vmem:[%s166 + $0x5c] sm:$0xf]
      %v199 = vld [vmem:[%s166 + $0x60] sm:$0xf]
      %v200 = vld [vmem:[%s166 + $0x64] sm:$0xf]
      %v201 = vld [vmem:[%s166 + $0x68] sm:$0xf]
      %v202 = vld [vmem:[%s166 + $0x6c] sm:$0xf]
      %v203 = vld [vmem:[%s166 + $0x70] sm:$0xf]
      %v204 = vld [vmem:[%s166 + $0x74] sm:$0xf]
      %v205 = vld [vmem:[%s166 + $0x78] sm:$0xf]
      %v206 = vld [vmem:[%s166 + $0x7c] sm:$0xf]
      %v207 = vld [vmem:[%s166 + $0x80] sm:$0xf]
      %v208 = vld [vmem:[%s166 + $0x84] sm:$0xf]
      %v209 = vld [vmem:[%s166 + $0x88] sm:$0xf]
      %v210 = vld [vmem:[%s166 + $0x8c] sm:$0xf]
      %v211 = vld [vmem:[%s166 + $0x90] sm:$0xf]
      %v212 = vld [vmem:[%s166 + $0x94] sm:$0xf]
      %v213 = vld [vmem:[%s166 + $0x98] sm:$0xf]
      %v214 = vld [vmem:[%s166 + $0x9c] sm:$0xf]
      %v215 = vld [vmem:[%s166 + $0xa0] sm:$0xf]
      %v216 = vld [vmem:[%s166 + $0xa4] sm:$0xf]
      %v217 = vld [vmem:[%s166 + $0xa8] sm:$0xf]
      %v218 = vld [vmem:[%s166 + $0xac] sm:$0xf]
      %v219 = vld [vmem:[%s166 + $0xb0] sm:$0xf]
      %v220 = vld [vmem:[%s166 + $0xb4] sm:$0xf]
      %v221 = vld [vmem:[%s166 + $0xb8] sm:$0xf]
      %v222 = vld [vmem:[%s166 + $0xbc] sm:$0xf]
      %v223 = vld [vmem:[%s166 + $0xc0] sm:$0xf]
      %v224 = vld [vmem:[%s166 + $0xc4] sm:$0xf]
      %v225 = vld [vmem:[%s166 + $0xc8] sm:$0xf]
      %v226 = vld [vmem:[%s166 + $0xcc] sm:$0xf]
      %v227 = vld [vmem:[%s166 + $0xd0] sm:$0xf]
      %v228 = vld [vmem:[%s166 + $0xd4] sm:$0xf]
      %v229 = vld [vmem:[%s166 + $0xd8] sm:$0xf]
      %v230 = vld [vmem:[%s166 + $0xdc] sm:$0xf]
      %v231 = vld [vmem:[%s166 + $0xe0] sm:$0xf]
      %v232 = vld [vmem:[%s166 + $0xe4] sm:$0xf]
      %v233 = vld [vmem:[%s166 + $0xe8] sm:$0xf]
      %v234 = vld [vmem:[%s166 + $0xec] sm:$0xf]
      %v235 = vld [vmem:[%s166 + $0xf0] sm:$0xf]
      %v236 = vld [vmem:[%s166 + $0xf4] sm:$0xf]
      %v237 = vld [vmem:[%s166 + $0xf8] sm:$0xf]
      %v238 = vld [vmem:[%s166 + $0xfc] sm:$0xf]
      %v239 = vld [vmem:[%s1] sm:$0xf]
      %v240 = vld [vmem:[%s1 + $0x4] sm:$0xf]
      %v241 = vld [vmem:[%s1 + $0x8] sm:$0xf]
      %v242 = vld [vmem:[%s1 + $0xc] sm:$0xf]
      %v243 = vld [vmem:[%s1 + $0x10] sm:$0xf]
      %v244 = vld [vmem:[%s1 + $0x14] sm:$0xf]
      %v245 = vld [vmem:[%s1 + $0x18] sm:$0xf]
      %v246 = vld [vmem:[%s1 + $0x1c] sm:$0xf]
      %v247 = vld [vmem:[%s1 + $0x20] sm:$0xf]
      %v248 = vld [vmem:[%s1 + $0x24] sm:$0xf]
      %v249 = vld [vmem:[%s1 + $0x28] sm:$0xf]
      %v250 = vld [vmem:[%s1 + $0x2c] sm:$0xf]
      %v251 = vld [vmem:[%s1 + $0x30] sm:$0xf]
      %v252 = vld [vmem:[%s1 + $0x34] sm:$0xf]
      %v253 = vld [vmem:[%s1 + $0x38] sm:$0xf]
      %v254 = vld [vmem:[%s1 + $0x3c] sm:$0xf]
      %v255 = vld [vmem:[%s2] sm:$0x1]
      %v257 = vlaneseq
      %v258 = vshrl.u32 %v257, 7
      %v259 = vsub.s32 0, %v258
      %v260 = vrot.slane %v255, %v259
      %v326 = vunpack.c.l.b16 %v175
      %v327 = vunpack.c.l.b16 %v176
      %v328 = vunpack.c.l.b16 %v177
      %v329 = vunpack.c.l.b16 %v178
      %v330 = vunpack.c.l.b16 %v179
      %v331 = vunpack.c.l.b16 %v180
      %v332 = vunpack.c.l.b16 %v181
      %v333 = vunpack.c.l.b16 %v182
      %v334 = vunpack.c.l.b16 %v183
      %v335 = vunpack.c.l.b16 %v184
      %v336 = vunpack.c.l.b16 %v185
      %v337 = vunpack.c.l.b16 %v186
      %v338 = vunpack.c.l.b16 %v187
      %v339 = vunpack.c.l.b16 %v188
      %v340 = vunpack.c.l.b16 %v189
      %v341 = vunpack.c.l.b16 %v190
      %v342 = vunpack.c.l.b16 %v191
      %v343 = vunpack.c.l.b16 %v192
      %v344 = vunpack.c.l.b16 %v193
      %v345 = vunpack.c.l.b16 %v194
      %v346 = vunpack.c.l.b16 %v195
      %v347 = vunpack.c.l.b16 %v196
      %v348 = vunpack.c.l.b16 %v197
      %v349 = vunpack.c.l.b16 %v198
      %v350 = vunpack.c.l.b16 %v199
      %v351 = vunpack.c.l.b16 %v200
      %v352 = vunpack.c.l.b16 %v201
      %v353 = vunpack.c.l.b16 %v202
      %v354 = vunpack.c.l.b16 %v203
      %v355 = vunpack.c.l.b16 %v204
      %v356 = vunpack.c.l.b16 %v205
      %v357 = vunpack.c.l.b16 %v206
      %v358 = vunpack.c.l.b16 %v207
      %v359 = vunpack.c.l.b16 %v208
      %v360 = vunpack.c.l.b16 %v209
      %v361 = vunpack.c.l.b16 %v210
      %v362 = vunpack.c.l.b16 %v211
      %v363 = vunpack.c.l.b16 %v212
      %v364 = vunpack.c.l.b16 %v213
      %v365 = vunpack.c.l.b16 %v214
      %v366 = vunpack.c.l.b16 %v215
      %v367 = vunpack.c.l.b16 %v216
      %v368 = vunpack.c.l.b16 %v217
      %v369 = vunpack.c.l.b16 %v218
      %v370 = vunpack.c.l.b16 %v219
      %v371 = vunpack.c.l.b16 %v220
      %v372 = vunpack.c.l.b16 %v221
      %v373 = vunpack.c.l.b16 %v222
      %v374 = vunpack.c.l.b16 %v223
      %v375 = vunpack.c.l.b16 %v224
      %v376 = vunpack.c.l.b16 %v225
      %v377 = vunpack.c.l.b16 %v226
      %v378 = vunpack.c.l.b16 %v227
      %v379 = vunpack.c.l.b16 %v228
      %v380 = vunpack.c.l.b16 %v229
      %v381 = vunpack.c.l.b16 %v230
      %v382 = vunpack.c.l.b16 %v231
      %v383 = vunpack.c.l.b16 %v232
      %v384 = vunpack.c.l.b16 %v233
      %v385 = vunpack.c.l.b16 %v234
      %v386 = vunpack.c.l.b16 %v235
      %v387 = vunpack.c.l.b16 %v236
      %v388 = vunpack.c.l.b16 %v237
      %v389 = vunpack.c.l.b16 %v238
      %v390 = vpack.c.b16 %v327, %v326
      %v391 = vpack.c.b16 %v329, %v328
      %v392 = vpack.c.b16 %v331, %v330
      %v393 = vpack.c.b16 %v333, %v332
      %v394 = vpack.c.b16 %v335, %v334
      %v395 = vpack.c.b16 %v337, %v336
      %v396 = vpack.c.b16 %v339, %v338
      %v397 = vpack.c.b16 %v341, %v340
      %v398 = vpack.c.b16 %v343, %v342
      %v399 = vpack.c.b16 %v345, %v344
      %v400 = vpack.c.b16 %v347, %v346
      %v401 = vpack.c.b16 %v349, %v348
      %v402 = vpack.c.b16 %v351, %v350
      %v403 = vpack.c.b16 %v353, %v352
      %v404 = vpack.c.b16 %v355, %v354
      %v405 = vpack.c.b16 %v357, %v356
      %v406 = vpack.c.b16 %v359, %v358
      %v407 = vpack.c.b16 %v361, %v360
      %v408 = vpack.c.b16 %v363, %v362
      %v409 = vpack.c.b16 %v365, %v364
      %v410 = vpack.c.b16 %v367, %v366
      %v411 = vpack.c.b16 %v369, %v368
      %v412 = vpack.c.b16 %v371, %v370
      %v413 = vpack.c.b16 %v373, %v372
      %v414 = vpack.c.b16 %v375, %v374
      %v415 = vpack.c.b16 %v377, %v376
      %v416 = vpack.c.b16 %v379, %v378
      %v417 = vpack.c.b16 %v381, %v380
      %v418 = vpack.c.b16 %v383, %v382
      %v419 = vpack.c.b16 %v385, %v384
      %v420 = vpack.c.b16 %v387, %v386
      %v421 = vpack.c.b16 %v389, %v388
      %v470 = vunpack.c.l.b16 %v239
      %v471 = vunpack.c.l.b16 %v240
      %v472 = vunpack.c.l.b16 %v241
      %v473 = vunpack.c.l.b16 %v242
      %v474 = vunpack.c.l.b16 %v243
      %v475 = vunpack.c.l.b16 %v244
      %v476 = vunpack.c.l.b16 %v245
      %v477 = vunpack.c.l.b16 %v246
      %v478 = vunpack.c.l.b16 %v247
      %v479 = vunpack.c.l.b16 %v248
      %v480 = vunpack.c.l.b16 %v249
      %v481 = vunpack.c.l.b16 %v250
      %v482 = vunpack.c.l.b16 %v251
      %v483 = vunpack.c.l.b16 %v252
      %v484 = vunpack.c.l.b16 %v253
      %v485 = vunpack.c.l.b16 %v254
      %v486 = vpack.c.b16 %v471, %v470
      %v487 = vpack.c.b16 %v473, %v472
      %v488 = vpack.c.b16 %v475, %v474
      %v489 = vpack.c.b16 %v477, %v476
      %v490 = vpack.c.b16 %v479, %v478
      %v491 = vpack.c.b16 %v481, %v480
      %v492 = vpack.c.b16 %v483, %v482
      %v493 = vpack.c.b16 %v485, %v484
      %502 = vmatprep.subr.bf16.mxu0 0
      %503 = vmatpush1.bf16.msra.mxu0 %v486
      %504 = vmatprep.subr.bf16.mxu0 0
      %505 = vmatpush1.bf16.msra.mxu0 %v487
      %506 = vmatprep.subr.bf16.mxu0 0
      %507 = vmatpush1.bf16.msra.mxu0 %v488
      %508 = vmatprep.subr.bf16.mxu0 0
      %509 = vmatpush1.bf16.msra.mxu0 %v489
      %510 = vmatprep.subr.bf16.mxu0 0
      %511 = vmatpush1.bf16.msra.mxu0 %v490
      %512 = vmatprep.subr.bf16.mxu0 0
      %513 = vmatpush1.bf16.msra.mxu0 %v491
      %514 = vmatprep.subr.bf16.mxu0 0
      %515 = vmatpush1.bf16.msra.mxu0 %v492
      %516 = vmatprep.subr.bf16.mxu0 0
      %517 = vmatpush1.bf16.msra.mxu0 %v493
      %518 = vmatprep.subr.bf16.mxu0 0
      %519 = vmatpush1.bf16.msra.mxu0 0
      %520 = vmatprep.subr.bf16.mxu0 0
      %521 = vmatpush1.bf16.msra.mxu0 0
      %522 = vmatprep.subr.bf16.mxu0 0
      %523 = vmatpush1.bf16.msra.mxu0 0
      %524 = vmatprep.subr.bf16.mxu0 0
      %525 = vmatpush1.bf16.msra.mxu0 0
      %526 = vmatprep.subr.bf16.mxu0 0
      %527 = vmatpush1.bf16.msra.mxu0 0
      %528 = vmatprep.subr.bf16.mxu0 0
      %529 = vmatpush1.bf16.msra.mxu0 0
      %530 = vmatprep.subr.bf16.mxu0 0
      %531 = vmatpush1.bf16.msra.mxu0 0
      %532 = vmatprep.subr.bf16.mxu0 0
      %533 = vmatpush1.bf16.msra.mxu0 0
      %534 = vmatprep.mubr.bf16.mxu0 0
      %535 = vmatmul.mubr.bf16.gmra.mrb[0].mxu0 %v390
      %v536 = vpop.f32.mrb[0].mxu0
      %v537 = vadd.f32 %v260, %v536
      %v538 = vpop.f32.mrb[0].mxu0
      %v539 = vpop.f32.mrb[0].mxu0
      %v540 = vadd.f32 %v260, %v539
      %v541 = vpop.f32.mrb[0].mxu0
      %542 = vmatprep.mubr.bf16.mxu0 0
      %543 = vmatmul.mubr.bf16.gmra.mrb[0].mxu0 %v391
      %v544 = vpop.f32.mrb[0].mxu0
      %v545 = vadd.f32 %v260, %v544
      %v546 = vpop.f32.mrb[0].mxu0
      %v547 = vpop.f32.mrb[0].mxu0
      %v548 = vadd.f32 %v260, %v547
      %v549 = vpop.f32.mrb[0].mxu0
      %550 = vmatprep.mubr.bf16.mxu0 0
      %551 = vmatmul.mubr.bf16.gmra.mrb[0].mxu0 %v392
      %v552 = vpop.f32.mrb[0].mxu0
      %v553 = vadd.f32 %v260, %v552
      %v554 = vpop.f32.mrb[0].mxu0
      %v555 = vpop.f32.mrb[0].mxu0
      %v556 = vadd.f32 %v260, %v555
      %v557 = vpop.f32.mrb[0].mxu0
      %558 = vmatprep.mubr.bf16.mxu0 0
      %559 = vmatmul.mubr.bf16.gmra.mrb[0].mxu0 %v393
      %v560 = vpop.f32.mrb[0].mxu0
      %v561 = vadd.f32 %v260, %v560
      %v562 = vpop.f32.mrb[0].mxu0
      %v563 = vpop.f32.mrb[0].mxu0
      %v564 = vadd.f32 %v260, %v563
      %v565 = vpop.f32.mrb[0].mxu0
      %566 = vmatprep.mubr.bf16.mxu0 0
      %567 = vmatmul.mubr.bf16.gmra.mrb[0].mxu0 %v394
      %v568 = vpop.f32.mrb[0].mxu0
      %v569 = vadd.f32 %v260, %v568
      %v570 = vpop.f32.mrb[0].mxu0
      %v571 = vpop.f32.mrb[0].mxu0
      %v572 = vadd.f32 %v260, %v571
      %v573 = vpop.f32.mrb[0].mxu0
      %574 = vmatprep.mubr.bf16.mxu0 0
      %575 = vmatmul.mubr.bf16.gmra.mrb[0].mxu0 %v395
      %v576 = vpop.f32.mrb[0].mxu0
      %v577 = vadd.f32 %v260, %v576
      %v578 = vpop.f32.mrb[0].mxu0
      %v579 = vpop.f32.mrb[0].mxu0
      %v580 = vadd.f32 %v260, %v579
      %v581 = vpop.f32.mrb[0].mxu0
      %582 = vmatprep.mubr.bf16.mxu0 0
      %583 = vmatmul.mubr.bf16.gmra.mrb[0].mxu0 %v396
      %v584 = vpop.f32.mrb[0].mxu0
      %v585 = vadd.f32 %v260, %v584
      %v586 = vpop.f32.mrb[0].mxu0
      %v587 = vpop.f32.mrb[0].mxu0
      %v588 = vadd.f32 %v260, %v587
      %v589 = vpop.f32.mrb[0].mxu0
      %590 = vmatprep.mubr.bf16.mxu0 0
      %591 = vmatmul.mubr.bf16.gmra.mrb[0].mxu0 %v397
      %v592 = vpop.f32.mrb[0].mxu0
      %v593 = vadd.f32 %v260, %v592
      %v594 = vpop.f32.mrb[0].mxu0
      %v595 = vpop.f32.mrb[0].mxu0
      %v596 = vadd.f32 %v260, %v595
      %v597 = vpop.f32.mrb[0].mxu0
      %598 = vmatprep.mubr.bf16.mxu0 0
      %599 = vmatmul.mubr.bf16.gmra.mrb[0].mxu0 %v398
      %v600 = vpop.f32.mrb[0].mxu0
      %v601 = vadd.f32 %v260, %v600
      %v602 = vpop.f32.mrb[0].mxu0
      %v603 = vpop.f32.mrb[0].mxu0
      %v604 = vadd.f32 %v260, %v603
      %v605 = vpop.f32.mrb[0].mxu0
      %606 = vmatprep.mubr.bf16.mxu0 0
      %607 = vmatmul.mubr.bf16.gmra.mrb[0].mxu0 %v399
      %v608 = vpop.f32.mrb[0].mxu0
      %v609 = vadd.f32 %v260, %v608
      %v610 = vpop.f32.mrb[0].mxu0
      %v611 = vpop.f32.mrb[0].mxu0
      %v612 = vadd.f32 %v260, %v611
      %v613 = vpop.f32.mrb[0].mxu0
      %614 = vmatprep.mubr.bf16.mxu0 0
      %615 = vmatmul.mubr.bf16.gmra.mrb[0].mxu0 %v400
      %v616 = vpop.f32.mrb[0].mxu0
      %v617 = vadd.f32 %v260, %v616
      %v618 = vpop.f32.mrb[0].mxu0
      %v619 = vpop.f32.mrb[0].mxu0
      %v620 = vadd.f32 %v260, %v619
      %v621 = vpop.f32.mrb[0].mxu0
      %622 = vmatprep.mubr.bf16.mxu0 0
      %623 = vmatmul.mubr.bf16.gmra.mrb[0].mxu0 %v401
      %v624 = vpop.f32.mrb[0].mxu0
      %v625 = vadd.f32 %v260, %v624
      %v626 = vpop.f32.mrb[0].mxu0
      %v627 = vpop.f32.mrb[0].mxu0
      %v628 = vadd.f32 %v260, %v627
      %v629 = vpop.f32.mrb[0].mxu0
      %630 = vmatprep.mubr.bf16.mxu0 0
      %631 = vmatmul.mubr.bf16.gmra.mrb[0].mxu0 %v402
      %v632 = vpop.f32.mrb[0].mxu0
      %v633 = vadd.f32 %v260, %v632
      %v634 = vpop.f32.mrb[0].mxu0
      %v635 = vpop.f32.mrb[0].mxu0
      %v636 = vadd.f32 %v260, %v635
      %v637 = vpop.f32.mrb[0].mxu0
      %638 = vmatprep.mubr.bf16.mxu0 0
      %639 = vmatmul.mubr.bf16.gmra.mrb[0].mxu0 %v403
      %v640 = vpop.f32.mrb[0].mxu0
      %v641 = vadd.f32 %v260, %v640
      %v642 = vpop.f32.mrb[0].mxu0
      %v643 = vpop.f32.mrb[0].mxu0
      %v644 = vadd.f32 %v260, %v643
      %v645 = vpop.f32.mrb[0].mxu0
      %646 = vmatprep.mubr.bf16.mxu0 0
      %647 = vmatmul.mubr.bf16.gmra.mrb[0].mxu0 %v404
      %v648 = vpop.f32.mrb[0].mxu0
      %v649 = vadd.f32 %v260, %v648
      %v650 = vpop.f32.mrb[0].mxu0
      %v651 = vpop.f32.mrb[0].mxu0
      %v652 = vadd.f32 %v260, %v651
      %v653 = vpop.f32.mrb[0].mxu0
      %654 = vmatprep.mubr.bf16.mxu0 0
      %655 = vmatmul.mubr.bf16.gmra.mrb[0].mxu0 %v405
      %v656 = vpop.f32.mrb[0].mxu0
      %v657 = vadd.f32 %v260, %v656
      %v658 = vpop.f32.mrb[0].mxu0
      %v659 = vpop.f32.mrb[0].mxu0
      %v660 = vadd.f32 %v260, %v659
      %v661 = vpop.f32.mrb[0].mxu0
      %662 = vmatprep.mubr.bf16.mxu0 0
      %663 = vmatmul.mubr.bf16.gmra.mrb[0].mxu0 %v406
      %v664 = vpop.f32.mrb[0].mxu0
      %v665 = vadd.f32 %v260, %v664
      %v666 = vpop.f32.mrb[0].mxu0
      %v667 = vpop.f32.mrb[0].mxu0
      %v668 = vadd.f32 %v260, %v667
      %v669 = vpop.f32.mrb[0].mxu0
      %670 = vmatprep.mubr.bf16.mxu0 0
      %671 = vmatmul.mubr.bf16.gmra.mrb[0].mxu0 %v407
      %v672 = vpop.f32.mrb[0].mxu0
      %v673 = vadd.f32 %v260, %v672
      %v674 = vpop.f32.mrb[0].mxu0
      %v675 = vpop.f32.mrb[0].mxu0
      %v676 = vadd.f32 %v260, %v675
      %v677 = vpop.f32.mrb[0].mxu0
      %678 = vmatprep.mubr.bf16.mxu0 0
      %679 = vmatmul.mubr.bf16.gmra.mrb[0].mxu0 %v408
      %v680 = vpop.f32.mrb[0].mxu0
      %v681 = vadd.f32 %v260, %v680
      %v682 = vpop.f32.mrb[0].mxu0
      %v683 = vpop.f32.mrb[0].mxu0
      %v684 = vadd.f32 %v260, %v683
      %v685 = vpop.f32.mrb[0].mxu0
      %686 = vmatprep.mubr.bf16.mxu0 0
      %687 = vmatmul.mubr.bf16.gmra.mrb[0].mxu0 %v409
      %v688 = vpop.f32.mrb[0].mxu0
      %v689 = vadd.f32 %v260, %v688
      %v690 = vpop.f32.mrb[0].mxu0
      %v691 = vpop.f32.mrb[0].mxu0
      %v692 = vadd.f32 %v260, %v691
      %v693 = vpop.f32.mrb[0].mxu0
      %694 = vmatprep.mubr.bf16.mxu0 0
      %695 = vmatmul.mubr.bf16.gmra.mrb[0].mxu0 %v410
      %v696 = vpop.f32.mrb[0].mxu0
      %v697 = vadd.f32 %v260, %v696
      %v698 = vpop.f32.mrb[0].mxu0
      %v699 = vpop.f32.mrb[0].mxu0
      %v700 = vadd.f32 %v260, %v699
      %v701 = vpop.f32.mrb[0].mxu0
      %702 = vmatprep.mubr.bf16.mxu0 0
      %703 = vmatmul.mubr.bf16.gmra.mrb[0].mxu0 %v411
      %v704 = vpop.f32.mrb[0].mxu0
      %v705 = vadd.f32 %v260, %v704
      %v706 = vpop.f32.mrb[0].mxu0
      %v707 = vpop.f32.mrb[0].mxu0
      %v708 = vadd.f32 %v260, %v707
      %v709 = vpop.f32.mrb[0].mxu0
      %710 = vmatprep.mubr.bf16.mxu0 0
      %711 = vmatmul.mubr.bf16.gmra.mrb[0].mxu0 %v412
      %v712 = vpop.f32.mrb[0].mxu0
      %v713 = vadd.f32 %v260, %v712
      %v714 = vpop.f32.mrb[0].mxu0
      %v715 = vpop.f32.mrb[0].mxu0
      %v716 = vadd.f32 %v260, %v715
      %v717 = vpop.f32.mrb[0].mxu0
      %718 = vmatprep.mubr.bf16.mxu0 0
      %719 = vmatmul.mubr.bf16.gmra.mrb[0].mxu0 %v413
      %v720 = vpop.f32.mrb[0].mxu0
      %v721 = vadd.f32 %v260, %v720
      %v722 = vpop.f32.mrb[0].mxu0
      %v723 = vpop.f32.mrb[0].mxu0
      %v724 = vadd.f32 %v260, %v723
      %v725 = vpop.f32.mrb[0].mxu0
      %726 = vmatprep.mubr.bf16.mxu0 0
      %727 = vmatmul.mubr.bf16.gmra.mrb[0].mxu0 %v414
      %v728 = vpop.f32.mrb[0].mxu0
      %v729 = vadd.f32 %v260, %v728
      %v730 = vpop.f32.mrb[0].mxu0
      %v731 = vpop.f32.mrb[0].mxu0
      %v732 = vadd.f32 %v260, %v731
      %v733 = vpop.f32.mrb[0].mxu0
      %734 = vmatprep.mubr.bf16.mxu0 0
      %735 = vmatmul.mubr.bf16.gmra.mrb[0].mxu0 %v415
      %v736 = vpop.f32.mrb[0].mxu0
      %v737 = vadd.f32 %v260, %v736
      %v738 = vpop.f32.mrb[0].mxu0
      %v739 = vpop.f32.mrb[0].mxu0
      %v740 = vadd.f32 %v260, %v739
      %v741 = vpop.f32.mrb[0].mxu0
      %742 = vmatprep.mubr.bf16.mxu0 0
      %743 = vmatmul.mubr.bf16.gmra.mrb[0].mxu0 %v416
      %v744 = vpop.f32.mrb[0].mxu0
      %v745 = vadd.f32 %v260, %v744
      %v746 = vpop.f32.mrb[0].mxu0
      %v747 = vpop.f32.mrb[0].mxu0
      %v748 = vadd.f32 %v260, %v747
      %v749 = vpop.f32.mrb[0].mxu0
      %750 = vmatprep.mubr.bf16.mxu0 0
      %751 = vmatmul.mubr.bf16.gmra.mrb[0].mxu0 %v417
      %v752 = vpop.f32.mrb[0].mxu0
      %v753 = vadd.f32 %v260, %v752
      %v754 = vpop.f32.mrb[0].mxu0
      %v755 = vpop.f32.mrb[0].mxu0
      %v756 = vadd.f32 %v260, %v755
      %v757 = vpop.f32.mrb[0].mxu0
      %758 = vmatprep.mubr.bf16.mxu0 0
      %759 = vmatmul.mubr.bf16.gmra.mrb[0].mxu0 %v418
      %v760 = vpop.f32.mrb[0].mxu0
      %v761 = vadd.f32 %v260, %v760
      %v762 = vpop.f32.mrb[0].mxu0
      %v763 = vpop.f32.mrb[0].mxu0
      %v764 = vadd.f32 %v260, %v763
      %v765 = vpop.f32.mrb[0].mxu0
      %766 = vmatprep.mubr.bf16.mxu0 0
      %767 = vmatmul.mubr.bf16.gmra.mrb[0].mxu0 %v419
      %v768 = vpop.f32.mrb[0].mxu0
      %v769 = vadd.f32 %v260, %v768
      %v770 = vpop.f32.mrb[0].mxu0
      %v771 = vpop.f32.mrb[0].mxu0
      %v772 = vadd.f32 %v260, %v771
      %v773 = vpop.f32.mrb[0].mxu0
      %774 = vmatprep.mubr.bf16.mxu0 0
      %775 = vmatmul.mubr.bf16.gmra.mrb[0].mxu0 %v420
      %v776 = vpop.f32.mrb[0].mxu0
      %v777 = vadd.f32 %v260, %v776
      %v778 = vpop.f32.mrb[0].mxu0
      %v779 = vpop.f32.mrb[0].mxu0
      %v780 = vadd.f32 %v260, %v779
      %v781 = vpop.f32.mrb[0].mxu0
      %782 = vmatprep.mubr.bf16.mxu0 0
      %783 = vmatmul.mubr.bf16.gmra.mrb[0].mxu0 %v421
      %v784 = vpop.f32.mrb[0].mxu0
      %v785 = vadd.f32 %v260, %v784
      %v786 = vpop.f32.mrb[0].mxu0
      %v787 = vpop.f32.mrb[0].mxu0
      %v788 = vadd.f32 %v260, %v787
      %v789 = vpop.f32.mrb[0].mxu0
      %790 = vdwg.mxu0
      %vm791 = vcmp.ge.f32.partialorder %v537, 0.0
      %vm792 = vcmp.ge.f32.partialorder %v540, 0.0
      %vm793 = vcmp.ge.f32.partialorder %v545, 0.0
      %vm794 = vcmp.ge.f32.partialorder %v548, 0.0
      %vm795 = vcmp.ge.f32.partialorder %v553, 0.0
      %vm796 = vcmp.ge.f32.partialorder %v556, 0.0
      %vm797 = vcmp.ge.f32.partialorder %v561, 0.0
      %vm798 = vcmp.ge.f32.partialorder %v564, 0.0
      %vm799 = vcmp.ge.f32.partialorder %v569, 0.0
      %vm800 = vcmp.ge.f32.partialorder %v572, 0.0
      %vm801 = vcmp.ge.f32.partialorder %v577, 0.0
      %vm802 = vcmp.ge.f32.partialorder %v580, 0.0
      %vm803 = vcmp.ge.f32.partialorder %v585, 0.0
      %vm804 = vcmp.ge.f32.partialorder %v588, 0.0
      %vm805 = vcmp.ge.f32.partialorder %v593, 0.0
      %vm806 = vcmp.ge.f32.partialorder %v596, 0.0
      %vm807 = vcmp.ge.f32.partialorder %v601, 0.0
      %vm808 = vcmp.ge.f32.partialorder %v604, 0.0
      %vm809 = vcmp.ge.f32.partialorder %v609, 0.0
      %vm810 = vcmp.ge.f32.partialorder %v612, 0.0
      %vm811 = vcmp.ge.f32.partialorder %v617, 0.0
      %vm812 = vcmp.ge.f32.partialorder %v620, 0.0
      %vm813 = vcmp.ge.f32.partialorder %v625, 0.0
      %vm814 = vcmp.ge.f32.partialorder %v628, 0.0
      %vm815 = vcmp.ge.f32.partialorder %v633, 0.0
      %vm816 = vcmp.ge.f32.partialorder %v636, 0.0
      %vm817 = vcmp.ge.f32.partialorder %v641, 0.0
      %vm818 = vcmp.ge.f32.partialorder %v644, 0.0
      %vm819 = vcmp.ge.f32.partialorder %v649, 0.0
      %vm820 = vcmp.ge.f32.partialorder %v652, 0.0
      %vm821 = vcmp.ge.f32.partialorder %v657, 0.0
      %vm822 = vcmp.ge.f32.partialorder %v660, 0.0
      %vm823 = vcmp.ge.f32.partialorder %v665, 0.0
      %vm824 = vcmp.ge.f32.partialorder %v668, 0.0
      %vm825 = vcmp.ge.f32.partialorder %v673, 0.0
      %vm826 = vcmp.ge.f32.partialorder %v676, 0.0
      %vm827 = vcmp.ge.f32.partialorder %v681, 0.0
      %vm828 = vcmp.ge.f32.partialorder %v684, 0.0
      %vm829 = vcmp.ge.f32.partialorder %v689, 0.0
      %vm830 = vcmp.ge.f32.partialorder %v692, 0.0
      %vm831 = vcmp.ge.f32.partialorder %v697, 0.0
      %vm832 = vcmp.ge.f32.partialorder %v700, 0.0
      %vm833 = vcmp.ge.f32.partialorder %v705, 0.0
      %vm834 = vcmp.ge.f32.partialorder %v708, 0.0
      %vm835 = vcmp.ge.f32.partialorder %v713, 0.0
      %vm836 = vcmp.ge.f32.partialorder %v716, 0.0
      %vm837 = vcmp.ge.f32.partialorder %v721, 0.0
      %vm838 = vcmp.ge.f32.partialorder %v724, 0.0
      %vm839 = vcmp.ge.f32.partialorder %v729, 0.0
      %vm840 = vcmp.ge.f32.partialorder %v732, 0.0
      %vm841 = vcmp.ge.f32.partialorder %v737, 0.0
      %vm842 = vcmp.ge.f32.partialorder %v740, 0.0
      %vm843 = vcmp.ge.f32.partialorder %v745, 0.0
      %vm844 = vcmp.ge.f32.partialorder %v748, 0.0
      %vm845 = vcmp.ge.f32.partialorder %v753, 0.0
      %vm846 = vcmp.ge.f32.partialorder %v756, 0.0
      %vm847 = vcmp.ge.f32.partialorder %v761, 0.0
      %vm848 = vcmp.ge.f32.partialorder %v764, 0.0
      %vm849 = vcmp.ge.f32.partialorder %v769, 0.0
      %vm850 = vcmp.ge.f32.partialorder %v772, 0.0
      %vm851 = vcmp.ge.f32.partialorder %v777, 0.0
      %vm852 = vcmp.ge.f32.partialorder %v780, 0.0
      %vm853 = vcmp.ge.f32.partialorder %v785, 0.0
      %vm854 = vcmp.ge.f32.partialorder %v788, 0.0
      %v855 = vmul.f32 %v537, 0.2
      %v856 = vmul.f32 %v540, 0.2
      %v857 = vmul.f32 %v545, 0.2
      %v858 = vmul.f32 %v548, 0.2
      %v859 = vmul.f32 %v553, 0.2
      %v860 = vmul.f32 %v556, 0.2
      %v861 = vmul.f32 %v561, 0.2
      %v862 = vmul.f32 %v564, 0.2
      %v863 = vmul.f32 %v569, 0.2
      %v864 = vmul.f32 %v572, 0.2
      %v865 = vmul.f32 %v577, 0.2
      %v866 = vmul.f32 %v580, 0.2
      %v867 = vmul.f32 %v585, 0.2
      %v868 = vmul.f32 %v588, 0.2
      %v869 = vmul.f32 %v593, 0.2
      %v870 = vmul.f32 %v596, 0.2
      %v871 = vmul.f32 %v601, 0.2
      %v872 = vmul.f32 %v604, 0.2
      %v873 = vmul.f32 %v609, 0.2
      %v874 = vmul.f32 %v612, 0.2
      %v875 = vmul.f32 %v617, 0.2
      %v876 = vmul.f32 %v620, 0.2
      %v877 = vmul.f32 %v625, 0.2
      %v878 = vmul.f32 %v628, 0.2
      %v879 = vmul.f32 %v633, 0.2
      %v880 = vmul.f32 %v636, 0.2
      %v881 = vmul.f32 %v641, 0.2
      %v882 = vmul.f32 %v644, 0.2
      %v883 = vmul.f32 %v649, 0.2
      %v884 = vmul.f32 %v652, 0.2
      %v885 = vmul.f32 %v657, 0.2
      %v886 = vmul.f32 %v660, 0.2
      %v887 = vmul.f32 %v665, 0.2
      %v888 = vmul.f32 %v668, 0.2
      %v889 = vmul.f32 %v673, 0.2
      %v890 = vmul.f32 %v676, 0.2
      %v891 = vmul.f32 %v681, 0.2
      %v892 = vmul.f32 %v684, 0.2
      %v893 = vmul.f32 %v689, 0.2
      %v894 = vmul.f32 %v692, 0.2
      %v895 = vmul.f32 %v697, 0.2
      %v896 = vmul.f32 %v700, 0.2
      %v897 = vmul.f32 %v705, 0.2
      %v898 = vmul.f32 %v708, 0.2
      %v899 = vmul.f32 %v713, 0.2
      %v900 = vmul.f32 %v716, 0.2
      %v901 = vmul.f32 %v721, 0.2
      %v902 = vmul.f32 %v724, 0.2
      %v903 = vmul.f32 %v729, 0.2
      %v904 = vmul.f32 %v732, 0.2
      %v905 = vmul.f32 %v737, 0.2
      %v906 = vmul.f32 %v740, 0.2
      %v907 = vmul.f32 %v745, 0.2
      %v908 = vmul.f32 %v748, 0.2
      %v909 = vmul.f32 %v753, 0.2
      %v910 = vmul.f32 %v756, 0.2
      %v911 = vmul.f32 %v761, 0.2
      %v912 = vmul.f32 %v764, 0.2
      %v913 = vmul.f32 %v769, 0.2
      %v914 = vmul.f32 %v772, 0.2
      %v915 = vmul.f32 %v777, 0.2
      %v916 = vmul.f32 %v780, 0.2
      %v917 = vmul.f32 %v785, 0.2
      %v918 = vmul.f32 %v788, 0.2
      %v919 = vsel %vm791, %v537, %v855
      %v920 = vsel %vm792, %v540, %v856
      %v921 = vsel %vm793, %v545, %v857
      %v922 = vsel %vm794, %v548, %v858
      %v923 = vsel %vm795, %v553, %v859
      %v924 = vsel %vm796, %v556, %v860
      %v925 = vsel %vm797, %v561, %v861
      %v926 = vsel %vm798, %v564, %v862
      %v927 = vsel %vm799, %v569, %v863
      %v928 = vsel %vm800, %v572, %v864
      %v929 = vsel %vm801, %v577, %v865
      %v930 = vsel %vm802, %v580, %v866
      %v931 = vsel %vm803, %v585, %v867
      %v932 = vsel %vm804, %v588, %v868
      %v933 = vsel %vm805, %v593, %v869
      %v934 = vsel %vm806, %v596, %v870
      %v935 = vsel %vm807, %v601, %v871
      %v936 = vsel %vm808, %v604, %v872
      %v937 = vsel %vm809, %v609, %v873
      %v938 = vsel %vm810, %v612, %v874
      %v939 = vsel %vm811, %v617, %v875
      %v940 = vsel %vm812, %v620, %v876
      %v941 = vsel %vm813, %v625, %v877
      %v942 = vsel %vm814, %v628, %v878
      %v943 = vsel %vm815, %v633, %v879
      %v944 = vsel %vm816, %v636, %v880
      %v945 = vsel %vm817, %v641, %v881
      %v946 = vsel %vm818, %v644, %v882
      %v947 = vsel %vm819, %v649, %v883
      %v948 = vsel %vm820, %v652, %v884
      %v949 = vsel %vm821, %v657, %v885
      %v950 = vsel %vm822, %v660, %v886
      %v951 = vsel %vm823, %v665, %v887
      %v952 = vsel %vm824, %v668, %v888
      %v953 = vsel %vm825, %v673, %v889
      %v954 = vsel %vm826, %v676, %v890
      %v955 = vsel %vm827, %v681, %v891
      %v956 = vsel %vm828, %v684, %v892
      %v957 = vsel %vm829, %v689, %v893
      %v958 = vsel %vm830, %v692, %v894
      %v959 = vsel %vm831, %v697, %v895
      %v960 = vsel %vm832, %v700, %v896
      %v961 = vsel %vm833, %v705, %v897
      %v962 = vsel %vm834, %v708, %v898
      %v963 = vsel %vm835, %v713, %v899
      %v964 = vsel %vm836, %v716, %v900
      %v965 = vsel %vm837, %v721, %v901
      %v966 = vsel %vm838, %v724, %v902
      %v967 = vsel %vm839, %v729, %v903
      %v968 = vsel %vm840, %v732, %v904
      %v969 = vsel %vm841, %v737, %v905
      %v970 = vsel %vm842, %v740, %v906
      %v971 = vsel %vm843, %v745, %v907
      %v972 = vsel %vm844, %v748, %v908
      %v973 = vsel %vm845, %v753, %v909
      %v974 = vsel %vm846, %v756, %v910
      %v975 = vsel %vm847, %v761, %v911
      %v976 = vsel %vm848, %v764, %v912
      %v977 = vsel %vm849, %v769, %v913
      %v978 = vsel %vm850, %v772, %v914
      %v979 = vsel %vm851, %v777, %v915
      %v980 = vsel %vm852, %v780, %v916
      %v981 = vsel %vm853, %v785, %v917
      %v982 = vsel %vm854, %v788, %v918
      %v983 = vpack.c.bf16 %v920, %v919
      %v984 = vpack.c.bf16 %v922, %v921
      %v985 = vpack.c.bf16 %v924, %v923
      %v986 = vpack.c.bf16 %v926, %v925
      %v987 = vpack.c.bf16 %v928, %v927
      %v988 = vpack.c.bf16 %v930, %v929
      %v989 = vpack.c.bf16 %v932, %v931
      %v990 = vpack.c.bf16 %v934, %v933
      %v991 = vpack.c.bf16 %v936, %v935
      %v992 = vpack.c.bf16 %v938, %v937
      %v993 = vpack.c.bf16 %v940, %v939
      %v994 = vpack.c.bf16 %v942, %v941
      %v995 = vpack.c.bf16 %v944, %v943
      %v996 = vpack.c.bf16 %v946, %v945
      %v997 = vpack.c.bf16 %v948, %v947
      %v998 = vpack.c.bf16 %v950, %v949
      %v999 = vpack.c.bf16 %v952, %v951
      %v1000 = vpack.c.bf16 %v954, %v953
      %v1001 = vpack.c.bf16 %v956, %v955
      %v1002 = vpack.c.bf16 %v958, %v957
      %v1003 = vpack.c.bf16 %v960, %v959
      %v1004 = vpack.c.bf16 %v962, %v961
      %v1005 = vpack.c.bf16 %v964, %v963
      %v1006 = vpack.c.bf16 %v966, %v965
      %v1007 = vpack.c.bf16 %v968, %v967
      %v1008 = vpack.c.bf16 %v970, %v969
      %v1009 = vpack.c.bf16 %v972, %v971
      %v1010 = vpack.c.bf16 %v974, %v973
      %v1011 = vpack.c.bf16 %v976, %v975
      %v1012 = vpack.c.bf16 %v978, %v977
      %v1013 = vpack.c.bf16 %v980, %v979
      %v1014 = vpack.c.bf16 %v982, %v981
      %v1047 = vunpack.c.l.b16 %v983
      %v1048 = vunpack.c.h.b16 %v983
      %v1049 = vunpack.c.l.b16 %v984
      %v1050 = vunpack.c.h.b16 %v984
      %v1051 = vunpack.c.l.b16 %v985
      %v1052 = vunpack.c.h.b16 %v985
      %v1053 = vunpack.c.l.b16 %v986
      %v1054 = vunpack.c.h.b16 %v986
      %v1055 = vunpack.c.l.b16 %v987
      %v1056 = vunpack.c.h.b16 %v987
      %v1057 = vunpack.c.l.b16 %v988
      %v1058 = vunpack.c.h.b16 %v988
      %v1059 = vunpack.c.l.b16 %v989
      %v1060 = vunpack.c.h.b16 %v989
      %v1061 = vunpack.c.l.b16 %v990
      %v1062 = vunpack.c.h.b16 %v990
      %v1063 = vunpack.c.l.b16 %v991
      %v1064 = vunpack.c.h.b16 %v991
      %v1065 = vunpack.c.l.b16 %v992
      %v1066 = vunpack.c.h.b16 %v992
      %v1067 = vunpack.c.l.b16 %v993
      %v1068 = vunpack.c.h.b16 %v993
      %v1069 = vunpack.c.l.b16 %v994
      %v1070 = vunpack.c.h.b16 %v994
      %v1071 = vunpack.c.l.b16 %v995
      %v1072 = vunpack.c.h.b16 %v995
      %v1073 = vunpack.c.l.b16 %v996
      %v1074 = vunpack.c.h.b16 %v996
      %v1075 = vunpack.c.l.b16 %v997
      %v1076 = vunpack.c.h.b16 %v997
      %v1077 = vunpack.c.l.b16 %v998
      %v1078 = vunpack.c.h.b16 %v998
      %v1079 = vunpack.c.l.b16 %v999
      %v1080 = vunpack.c.h.b16 %v999
      %v1081 = vunpack.c.l.b16 %v1000
      %v1082 = vunpack.c.h.b16 %v1000
      %v1083 = vunpack.c.l.b16 %v1001
      %v1084 = vunpack.c.h.b16 %v1001
      %v1085 = vunpack.c.l.b16 %v1002
      %v1086 = vunpack.c.h.b16 %v1002
      %v1087 = vunpack.c.l.b16 %v1003
      %v1088 = vunpack.c.h.b16 %v1003
      %v1089 = vunpack.c.l.b16 %v1004
      %v1090 = vunpack.c.h.b16 %v1004
      %v1091 = vunpack.c.l.b16 %v1005
      %v1092 = vunpack.c.h.b16 %v1005
      %v1093 = vunpack.c.l.b16 %v1006
      %v1094 = vunpack.c.h.b16 %v1006
      %v1095 = vunpack.c.l.b16 %v1007
      %v1096 = vunpack.c.h.b16 %v1007
      %v1097 = vunpack.c.l.b16 %v1008
      %v1098 = vunpack.c.h.b16 %v1008
      %v1099 = vunpack.c.l.b16 %v1009
      %v1100 = vunpack.c.h.b16 %v1009
      %v1101 = vunpack.c.l.b16 %v1010
      %v1102 = vunpack.c.h.b16 %v1010
      %v1103 = vunpack.c.l.b16 %v1011
      %v1104 = vunpack.c.h.b16 %v1011
      %v1105 = vunpack.c.l.b16 %v1012
      %v1106 = vunpack.c.h.b16 %v1012
      %v1107 = vunpack.c.l.b16 %v1013
      %v1108 = vunpack.c.h.b16 %v1013
      %v1109 = vunpack.c.l.b16 %v1014
      %v1110 = vunpack.c.h.b16 %v1014
      %v1111 = vpack.c.b16 %v1047, %v1047
      %v1112 = vpack.c.b16 %v1048, %v1048
      %v1113 = vpack.c.b16 %v1049, %v1049
      %v1114 = vpack.c.b16 %v1050, %v1050
      %v1115 = vpack.c.b16 %v1051, %v1051
      %v1116 = vpack.c.b16 %v1052, %v1052
      %v1117 = vpack.c.b16 %v1053, %v1053
      %v1118 = vpack.c.b16 %v1054, %v1054
      %v1119 = vpack.c.b16 %v1055, %v1055
      %v1120 = vpack.c.b16 %v1056, %v1056
      %v1121 = vpack.c.b16 %v1057, %v1057
      %v1122 = vpack.c.b16 %v1058, %v1058
      %v1123 = vpack.c.b16 %v1059, %v1059
      %v1124 = vpack.c.b16 %v1060, %v1060
      %v1125 = vpack.c.b16 %v1061, %v1061
      %v1126 = vpack.c.b16 %v1062, %v1062
      %v1127 = vpack.c.b16 %v1063, %v1063
      %v1128 = vpack.c.b16 %v1064, %v1064
      %v1129 = vpack.c.b16 %v1065, %v1065
      %v1130 = vpack.c.b16 %v1066, %v1066
      %v1131 = vpack.c.b16 %v1067, %v1067
      %v1132 = vpack.c.b16 %v1068, %v1068
      %v1133 = vpack.c.b16 %v1069, %v1069
      %v1134 = vpack.c.b16 %v1070, %v1070
      %v1135 = vpack.c.b16 %v1071, %v1071
      %v1136 = vpack.c.b16 %v1072, %v1072
      %v1137 = vpack.c.b16 %v1073, %v1073
      %v1138 = vpack.c.b16 %v1074, %v1074
      %v1139 = vpack.c.b16 %v1075, %v1075
      %v1140 = vpack.c.b16 %v1076, %v1076
      %v1141 = vpack.c.b16 %v1077, %v1077
      %v1142 = vpack.c.b16 %v1078, %v1078
      %v1143 = vpack.c.b16 %v1079, %v1079
      %v1144 = vpack.c.b16 %v1080, %v1080
      %v1145 = vpack.c.b16 %v1081, %v1081
      %v1146 = vpack.c.b16 %v1082, %v1082
      %v1147 = vpack.c.b16 %v1083, %v1083
      %v1148 = vpack.c.b16 %v1084, %v1084
      %v1149 = vpack.c.b16 %v1085, %v1085
      %v1150 = vpack.c.b16 %v1086, %v1086
      %v1151 = vpack.c.b16 %v1087, %v1087
      %v1152 = vpack.c.b16 %v1088, %v1088
      %v1153 = vpack.c.b16 %v1089, %v1089
      %v1154 = vpack.c.b16 %v1090, %v1090
      %v1155 = vpack.c.b16 %v1091, %v1091
      %v1156 = vpack.c.b16 %v1092, %v1092
      %v1157 = vpack.c.b16 %v1093, %v1093
      %v1158 = vpack.c.b16 %v1094, %v1094
      %v1159 = vpack.c.b16 %v1095, %v1095
      %v1160 = vpack.c.b16 %v1096, %v1096
      %v1161 = vpack.c.b16 %v1097, %v1097
      %v1162 = vpack.c.b16 %v1098, %v1098
      %v1163 = vpack.c.b16 %v1099, %v1099
      %v1164 = vpack.c.b16 %v1100, %v1100
      %v1165 = vpack.c.b16 %v1101, %v1101
      %v1166 = vpack.c.b16 %v1102, %v1102
      %v1167 = vpack.c.b16 %v1103, %v1103
      %v1168 = vpack.c.b16 %v1104, %v1104
      %v1169 = vpack.c.b16 %v1105, %v1105
      %v1170 = vpack.c.b16 %v1106, %v1106
      %v1171 = vpack.c.b16 %v1107, %v1107
      %v1172 = vpack.c.b16 %v1108, %v1108
      %v1173 = vpack.c.b16 %v1109, %v1109
      %v1174 = vpack.c.b16 %v1110, %v1110
      %vm1239 = vcmask 60416
      %1240 = vst.msk [vmem:[%s172] sm:$0xf] %vm1239, %v1111
      %1241 = vst.msk [vmem:[%s172 + $0x4] sm:$0xf] %vm1239, %v1112
      %1242 = vst.msk [vmem:[%s172 + $0x8] sm:$0xf] %vm1239, %v1113
      %1243 = vst.msk [vmem:[%s172 + $0xc] sm:$0xf] %vm1239, %v1114
      %1244 = vst.msk [vmem:[%s172 + $0x10] sm:$0xf] %vm1239, %v1115
      %1245 = vst.msk [vmem:[%s172 + $0x14] sm:$0xf] %vm1239, %v1116
      %1246 = vst.msk [vmem:[%s172 + $0x18] sm:$0xf] %vm1239, %v1117
      %1247 = vst.msk [vmem:[%s172 + $0x1c] sm:$0xf] %vm1239, %v1118
      %1248 = vst.msk [vmem:[%s172 + $0x20] sm:$0xf] %vm1239, %v1119
      %1249 = vst.msk [vmem:[%s172 + $0x24] sm:$0xf] %vm1239, %v1120
      %1250 = vst.msk [vmem:[%s172 + $0x28] sm:$0xf] %vm1239, %v1121
      %1251 = vst.msk [vmem:[%s172 + $0x2c] sm:$0xf] %vm1239, %v1122
      %1252 = vst.msk [vmem:[%s172 + $0x30] sm:$0xf] %vm1239, %v1123
      %1253 = vst.msk [vmem:[%s172 + $0x34] sm:$0xf] %vm1239, %v1124
      %1254 = vst.msk [vmem:[%s172 + $0x38] sm:$0xf] %vm1239, %v1125
      %1255 = vst.msk [vmem:[%s172 + $0x3c] sm:$0xf] %vm1239, %v1126
      %1256 = vst.msk [vmem:[%s172 + $0x40] sm:$0xf] %vm1239, %v1127
      %1257 = vst.msk [vmem:[%s172 + $0x44] sm:$0xf] %vm1239, %v1128
      %1258 = vst.msk [vmem:[%s172 + $0x48] sm:$0xf] %vm1239, %v1129
      %1259 = vst.msk [vmem:[%s172 + $0x4c] sm:$0xf] %vm1239, %v1130
      %1260 = vst.msk [vmem:[%s172 + $0x50] sm:$0xf] %vm1239, %v1131
      %1261 = vst.msk [vmem:[%s172 + $0x54] sm:$0xf] %vm1239, %v1132
      %1262 = vst.msk [vmem:[%s172 + $0x58] sm:$0xf] %vm1239, %v1133
      %1263 = vst.msk [vmem:[%s172 + $0x5c] sm:$0xf] %vm1239, %v1134
      %1264 = vst.msk [vmem:[%s172 + $0x60] sm:$0xf] %vm1239, %v1135
      %1265 = vst.msk [vmem:[%s172 + $0x64] sm:$0xf] %vm1239, %v1136
      %1266 = vst.msk [vmem:[%s172 + $0x68] sm:$0xf] %vm1239, %v1137
      %1267 = vst.msk [vmem:[%s172 + $0x6c] sm:$0xf] %vm1239, %v1138
      %1268 = vst.msk [vmem:[%s172 + $0x70] sm:$0xf] %vm1239, %v1139
      %1269 = vst.msk [vmem:[%s172 + $0x74] sm:$0xf] %vm1239, %v1140
      %1270 = vst.msk [vmem:[%s172 + $0x78] sm:$0xf] %vm1239, %v1141
      %1271 = vst.msk [vmem:[%s172 + $0x7c] sm:$0xf] %vm1239, %v1142
      %1272 = vst.msk [vmem:[%s172 + $0x80] sm:$0xf] %vm1239, %v1143
      %1273 = vst.msk [vmem:[%s172 + $0x84] sm:$0xf] %vm1239, %v1144
      %1274 = vst.msk [vmem:[%s172 + $0x88] sm:$0xf] %vm1239, %v1145
      %1275 = vst.msk [vmem:[%s172 + $0x8c] sm:$0xf] %vm1239, %v1146
      %1276 = vst.msk [vmem:[%s172 + $0x90] sm:$0xf] %vm1239, %v1147
      %1277 = vst.msk [vmem:[%s172 + $0x94] sm:$0xf] %vm1239, %v1148
      %1278 = vst.msk [vmem:[%s172 + $0x98] sm:$0xf] %vm1239, %v1149
      %1279 = vst.msk [vmem:[%s172 + $0x9c] sm:$0xf] %vm1239, %v1150
      %1280 = vst.msk [vmem:[%s172 + $0xa0] sm:$0xf] %vm1239, %v1151
      %1281 = vst.msk [vmem:[%s172 + $0xa4] sm:$0xf] %vm1239, %v1152
      %1282 = vst.msk [vmem:[%s172 + $0xa8] sm:$0xf] %vm1239, %v1153
      %1283 = vst.msk [vmem:[%s172 + $0xac] sm:$0xf] %vm1239, %v1154
      %1284 = vst.msk [vmem:[%s172 + $0xb0] sm:$0xf] %vm1239, %v1155
      %1285 = vst.msk [vmem:[%s172 + $0xb4] sm:$0xf] %vm1239, %v1156
      %1286 = vst.msk [vmem:[%s172 + $0xb8] sm:$0xf] %vm1239, %v1157
      %1287 = vst.msk [vmem:[%s172 + $0xbc] sm:$0xf] %vm1239, %v1158
      %1288 = vst.msk [vmem:[%s172 + $0xc0] sm:$0xf] %vm1239, %v1159
      %1289 = vst.msk [vmem:[%s172 + $0xc4] sm:$0xf] %vm1239, %v1160
      %1290 = vst.msk [vmem:[%s172 + $0xc8] sm:$0xf] %vm1239, %v1161
      %1291 = vst.msk [vmem:[%s172 + $0xcc] sm:$0xf] %vm1239, %v1162
      %1292 = vst.msk [vmem:[%s172 + $0xd0] sm:$0xf] %vm1239, %v1163
      %1293 = vst.msk [vmem:[%s172 + $0xd4] sm:$0xf] %vm1239, %v1164
      %1294 = vst.msk [vmem:[%s172 + $0xd8] sm:$0xf] %vm1239, %v1165
      %1295 = vst.msk [vmem:[%s172 + $0xdc] sm:$0xf] %vm1239, %v1166
      %1296 = vst.msk [vmem:[%s172 + $0xe0] sm:$0xf] %vm1239, %v1167
      %1297 = vst.msk [vmem:[%s172 + $0xe4] sm:$0xf] %vm1239, %v1168
      %1298 = vst.msk [vmem:[%s172 + $0xe8] sm:$0xf] %vm1239, %v1169
      %1299 = vst.msk [vmem:[%s172 + $0xec] sm:$0xf] %vm1239, %v1170
      %1300 = vst.msk [vmem:[%s172 + $0xf0] sm:$0xf] %vm1239, %v1171
      %1301 = vst.msk [vmem:[%s172 + $0xf4] sm:$0xf] %vm1239, %v1172
      %1302 = vst.msk [vmem:[%s172 + $0xf8] sm:$0xf] %vm1239, %v1173
      %1303 = vst.msk [vmem:[%s172 + $0xfc] sm:$0xf] %vm1239, %v1174
      %s1304 = smul.u32 64, %s14
      %p1305 = scmp.lt.s32.totalorder %s1304, 1023
      %s1306 = scalar_select %p1305, %s1304, 1023
      %s1307 = smul.addr %s1306, 4
      %s1308 = scalar_lea.vmem %s3, %s1307
      // Predicated region
      $region33: #{discriminator_forward.8} parent=31 // pred_check
        %p1309 = pneg %p100
      $region34: #{discriminator_forward.8} parent=31 // pred_check_branch
        %1311 = sbr.rel (%p1309) target = $region36
      $region35: #{discriminator_forward.8} parent=31 // pred_region
        %s1312 = smul.u32 64, %s14
      $region36: #{discriminator_forward.8} parent=31 // pred_fallthru
        _
    $region32: #{discriminator_forward.8} parent=5 // pred_fallthru
      _
    %p1313 = scmp.le.s32.totalorder 2, %s9
    // Predicated region
    $region37: #{discriminator_forward.8} parent=5 // pred_check
      %p1314 = pneg %p1313
    $region38: #{discriminator_forward.8} parent=5 // pred_check_branch
      %1316 = sbr.rel (%p1314) target = $region40
    $region39: #{discriminator_forward.8} parent=5 // pred_region
      %s1317 = ssub.s32 %s9, 2
      // Predicated region
      $region41: #{discriminator_forward.8} parent=39 // pred_check
        %p1318 = pneg %p106
      $region42: #{discriminator_forward.8} parent=39 // pred_check_branch
        %1320 = sbr.rel (%p1318) target = $region44
      $region43: #{discriminator_forward.8} parent=39 // pred_region
        %s1321 = smul.u32 64, %s15
        %p1322 = scmp.lt.s32.totalorder %s1321, 1023
        %s1323 = scalar_select %p1322, %s1321, 1023
        %s1324 = smul.addr %s1323, 4
        %s1325 = scalar_lea.vmem %s3, %s1324
      $region44: #{discriminator_forward.8} parent=39 // pred_fallthru
        _
    $region40: #{discriminator_forward.8} parent=5 // pred_fallthru
      _
  $region6: #{discriminator_forward.8} parent=0 // loop_footer
    %s13 = sadd.s32 1, %s9
  $region7: #{discriminator_forward.8} parent=0 // loop_footer_branch
    %8 = sbr.rel target = $region3
  $region8: #{discriminator_forward.8} parent=0 // loop_exit
    _

// kernel: discriminator_forward.9
$region0: #{discriminator_forward.9}
  #allocation0 [shape = 'u32[]', space=smem, size = 0x4, offset = 0x4, fixed_abs, tag = 'smem constant byte address 0x4 - core index']
  #allocation1 [shape = 'u32[144,128]{1,0:T(1,128)}', space=vmem, size = 0x12000, scoped, tag = 'internal scratch']
  %s0 = inlined_call_operand.vmem [shape: bf16[2048,128], index: 0, kind: input, shape index: {}]
  %s1 = inlined_call_operand.vmem [shape: bf16[128,16], index: 1, kind: input, shape index: {}]
  %s2 = inlined_call_operand.vmem [shape: f32[2048,16], index: 2, kind: output, shape index: {0}]
  %s3 = inlined_call_operand.vmem [shape: f32[1,16], index: 3, kind: output, shape index: {1}]
  %s4 = inlined_call_operand.vmem [shape: f32[1,16], index: 4, kind: output, shape index: {2}]
  %5 = xla_tuple %s2, %s3, %s4
  %s6 = sld [smem:[#allocation0]]
  $region61: #{discriminator_forward.9} parent=0
    _
  %s8 = ssub.s32 1, %s6
  %s9 = scalar_select 0, %s8, %s6
  loop: start=0, step=1, limit=6
  $region2: #{discriminator_forward.9} parent=0 // loop_pre_header
    _
  $region3: #{discriminator_forward.9} parent=0 // loop_header
    %s11 = sphi 0, %s15
    %p12 = scmp.ge.s32.totalorder %s11, 6
    %s21 = sphi 0, %s23
    %s24 = sphi 0, %s21
    %s25 = sphi 0, %s24
    %s41 = sphi 0, %s25
    %s45 = sphi 0, %s45
    %s47 = sphi 0, %s45
    %s48 = sphi 0, %s47
    %s62 = sphi 0, %s48
    %s68 = sphi 0, %s70
    %s71 = sphi 0, %s68
    %s72 = sphi 0, %s71
    %s88 = sphi 0, %s72
    %s92 = sphi 0, %s92
    %s94 = sphi 0, %s92
    %s95 = sphi 0, %s94
    %s109 = sphi 0, %s95
    %s113 = sphi 0, %s113
    %s115 = sphi 0, %s113
    %s116 = sphi 0, %s115
    %s130 = sphi 0, %s116
  $region4: #{discriminator_forward.9} parent=0 // loop_header_branch
    %14 = sbr.rel (%p12) target = $region8
  $region5: #{discriminator_forward.9} parent=0 // loop_body
    %s16 = ssub.s32 %s11, 1
    %s17 = ssub.s32 %s11, 2
    %s18 = sadd.s32 %s11, 1
    %s19 = ssub.s32 %s11, %s18
    %p20 = scmp.eq.s32.totalorder %s19, 0
    %s22 = sadd.s32 %s21, 1
    %s23 = scalar_select %p20, %s21, %s22
    %p26 = pneg %p20
    %p27 = scmp.eq.s32.totalorder %s11, 3
    %p28 = por %p26, %p27
    %p29 = scmp.ne.s32.totalorder %s21, %s24
    %p30 = scmp.eq.s32.totalorder %s11, 0
    %p31 = por %p29, %p30
    %p32 = scmp.ne.s32.totalorder %s21, %s24
    %p33 = scmp.eq.s32.totalorder %s16, 3
    %p34 = por %p32, %p33
    %p35 = scmp.ne.s32.totalorder %s24, %s25
    %p36 = scmp.eq.s32.totalorder %s16, 0
    %p37 = por %p35, %p36
    %p38 = scmp.ne.s32.totalorder %s24, %s25
    %p39 = scmp.eq.s32.totalorder %s17, 3
    %p40 = por %p38, %p39
    %p42 = scmp.ne.s32.totalorder %s25, %s41
    %p43 = scmp.eq.s32.totalorder %s17, 0
    %p44 = por %p42, %p43
    %s46 = sadd.s32 %s45, 1
    %p49 = scmp.eq.s32.totalorder %s11, 3
    %p50 = scmp.ne.s32.totalorder %s45, %s47
    %p51 = scmp.eq.s32.totalorder %s11, 0
    %p52 = por %p50, %p51
    %p53 = scmp.ne.s32.totalorder %s45, %s47
    %p54 = scmp.eq.s32.totalorder %s16, 3
    %p55 = por %p53, %p54
    %p56 = scmp.ne.s32.totalorder %s47, %s48
    %p57 = scmp.eq.s32.totalorder %s16, 0
    %p58 = por %p56, %p57
    %p59 = scmp.ne.s32.totalorder %s47, %s48
    %p60 = scmp.eq.s32.totalorder %s17, 3
    %p61 = por %p59, %p60
    %p63 = scmp.ne.s32.totalorder %s48, %s62
    %p64 = scmp.eq.s32.totalorder %s17, 0
    %p65 = por %p63, %p64
    %s66 = ssub.s32 %s11, %s18
    %p67 = scmp.eq.s32.totalorder %s66, 0
    %s69 = sadd.s32 %s68, 1
    %s70 = scalar_select %p67, %s68, %s69
    %p73 = pneg %p67
    %p74 = scmp.eq.s32.totalorder %s11, 3
    %p75 = por %p73, %p74
    %p76 = scmp.ne.s32.totalorder %s68, %s71
    %p77 = scmp.eq.s32.totalorder %s11, 0
    %p78 = por %p76, %p77
    %p79 = scmp.ne.s32.totalorder %s68, %s71
    %p80 = scmp.eq.s32.totalorder %s16, 3
    %p81 = por %p79, %p80
    %p82 = scmp.ne.s32.totalorder %s71, %s72
    %p83 = scmp.eq.s32.totalorder %s16, 0
    %p84 = por %p82, %p83
    %p85 = scmp.ne.s32.totalorder %s71, %s72
    %p86 = scmp.eq.s32.totalorder %s17, 3
    %p87 = por %p85, %p86
    %p89 = scmp.ne.s32.totalorder %s72, %s88
    %p90 = scmp.eq.s32.totalorder %s17, 0
    %p91 = por %p89, %p90
    %s93 = sadd.s32 %s92, 1
    %p96 = scmp.eq.s32.totalorder %s11, 3
    %p97 = scmp.ne.s32.totalorder %s92, %s94
    %p98 = scmp.eq.s32.totalorder %s11, 0
    %p99 = por %p97, %p98
    %p100 = scmp.ne.s32.totalorder %s92, %s94
    %p101 = scmp.eq.s32.totalorder %s16, 3
    %p102 = por %p100, %p101
    %p103 = scmp.ne.s32.totalorder %s94, %s95
    %p104 = scmp.eq.s32.totalorder %s16, 0
    %p105 = por %p103, %p104
    %p106 = scmp.ne.s32.totalorder %s94, %s95
    %p107 = scmp.eq.s32.totalorder %s17, 3
    %p108 = por %p106, %p107
    %p110 = scmp.ne.s32.totalorder %s95, %s109
    %p111 = scmp.eq.s32.totalorder %s17, 0
    %p112 = por %p110, %p111
    %s114 = sadd.s32 %s113, 1
    %p117 = scmp.eq.s32.totalorder %s11, 3
    %p118 = scmp.ne.s32.totalorder %s113, %s115
    %p119 = scmp.eq.s32.totalorder %s11, 0
    %p120 = por %p118, %p119
    %p121 = scmp.ne.s32.totalorder %s113, %s115
    %p122 = scmp.eq.s32.totalorder %s16, 3
    %p123 = por %p121, %p122
    %p124 = scmp.ne.s32.totalorder %s115, %s116
    %p125 = scmp.eq.s32.totalorder %s16, 0
    %p126 = por %p124, %p125
    %p127 = scmp.ne.s32.totalorder %s115, %s116
    %p128 = scmp.eq.s32.totalorder %s17, 3
    %p129 = por %p127, %p128
    %p131 = scmp.ne.s32.totalorder %s116, %s130
    %p132 = scmp.eq.s32.totalorder %s17, 0
    %p133 = por %p131, %p132
    %p134 = scmp.le.s32.totalorder 1, %s11
    %p135 = scmp.lt.s32.totalorder %s11, 5
    %p136 = pnand %p134, %p135
    %p137 = pneg %p136
    // Predicated region
    $region9: #{discriminator_forward.9} parent=5 // pred_check
      _
    $region10: #{discriminator_forward.9} parent=5 // pred_check_branch
      %139 = sbr.rel (%p136) target = $region12
    $region11: #{discriminator_forward.9} parent=5 // pred_region
      %s140 = ssub.s32 %s11, 1
      // Predicated region
      $region13: #{discriminator_forward.9} parent=11 // pred_check
        %p141 = pneg %p58
      $region14: #{discriminator_forward.9} parent=11 // pred_check_branch
        %143 = sbr.rel (%p141) target = $region16
      $region15: #{discriminator_forward.9} parent=11 // pred_region
        _
      $region16: #{discriminator_forward.9} parent=11 // pred_fallthru
        _
    $region12: #{discriminator_forward.9} parent=5 // pred_fallthru
      _
    %p144 = scmp.lt.s32.totalorder %s11, 4
    // Predicated region
    $region17: #{discriminator_forward.9} parent=5 // pred_check
      %p145 = pneg %p144
    $region18: #{discriminator_forward.9} parent=5 // pred_check_branch
      %147 = sbr.rel (%p145) target = $region20
    $region19: #{discriminator_forward.9} parent=5 // pred_region
      // Predicated region
      $region21: #{discriminator_forward.9} parent=19 // pred_check
        %p148 = pneg %p31
      $region22: #{discriminator_forward.9} parent=19 // pred_check_branch
        %150 = sbr.rel (%p148) target = $region24
      $region23: #{discriminator_forward.9} parent=19 // pred_region
        %s151 = smul.u32 64, %s11
        %p152 = scmp.lt.s32.totalorder %s151, 255
        %s153 = scalar_select %p152, %s151, 255
        %s154 = smul.addr %s153, 4
        %s155 = scalar_lea.vmem %s0, %s154
        %s156 = smul.u32 64, %s11
      $region24: #{discriminator_forward.9} parent=19 // pred_fallthru
        _
    $region20: #{discriminator_forward.9} parent=5 // pred_fallthru
      _
    %p157 = scmp.le.s32.totalorder 1, %s11
    %p158 = scmp.lt.s32.totalorder %s11, 5
    %p159 = pnand %p157, %p158
    %p160 = pneg %p159
    // Predicated region
    $region25: #{discriminator_forward.9} parent=5 // pred_check
      _
    $region26: #{discriminator_forward.9} parent=5 // pred_check_branch
      %162 = sbr.rel (%p159) target = $region28
    $region27: #{discriminator_forward.9} parent=5 // pred_region
      %s163 = ssub.s32 %s11, 1
      %s164 = smul.u32 64, %s16
      %p165 = scmp.lt.s32.totalorder %s164, 255
      %s166 = scalar_select %p165, %s164, 255
      %s167 = smul.addr %s166, 4
      %s168 = scalar_lea.vmem %s0, %s167
      %p169 = pneg %p37
      %p170 = pneg %p34
      %p171 = pneg %p58
      %p172 = pneg %p55
      %p173 = pneg %p84
      %p174 = pneg %p81
      %s175 = smul.u32 64, %s16
      %p176 = scmp.lt.s32.totalorder %s175, 255
      %s177 = scalar_select %p176, %s175, 255
      %s178 = smul.addr %s177, 8
      %s179 = scalar_lea.vmem %s2, %s178
      %p180 = pneg %p105
      %p181 = pneg %p102
      %p182 = pneg %p126
      %p183 = pneg %p123
      %s184 = smul.u32 64, %s16
      %p185 = scmp.lt.s32.totalorder %s184, 255
      %s186 = scalar_select %p185, %s184, 255
      %s187 = smul.addr %s186, 4
      %s188 = scalar_lea.vmem %s0, %s187
      %s189 = smul.u32 64, %s16
      %s190 = smul.u32 64, %s16
      %p191 = scmp.lt.s32.totalorder %s190, 255
      %s192 = scalar_select %p191, %s190, 255
      %s193 = smul.addr %s192, 8
      %s194 = scalar_lea.vmem %s2, %s193
      %s195 = smul.u32 64, %s16
      %p197 = scmp.eq.s32.totalorder %s16, 0
      // Predicated region
      $region29: #{discriminator_forward.9} parent=27 // pred_check
        %p198 = pneg %p197
      $region30: #{discriminator_forward.9} parent=27 // pred_check_branch
        %200 = sbr.rel (%p198) target = $region32
      $region31: #{discriminator_forward.9} parent=27 // pred_region
        %vm201 = vcmask 122880
        %202 = vst.msk [vmem:[%s3] sm:$0x1] %vm201, 0.0
        %203 = vst.msk [vmem:[%s4] sm:$0x1] %vm201, 0.0
      $region32: #{discriminator_forward.9} parent=27 // pred_fallthru
        _
      %v204 = vld [vmem:[%s188] sm:$0xf]
      %v205 = vld [vmem:[%s188 + $0x4] sm:$0xf]
      %v206 = vld [vmem:[%s188 + $0x8] sm:$0xf]
      %v207 = vld [vmem:[%s188 + $0xc] sm:$0xf]
      %v208 = vld [vmem:[%s188 + $0x10] sm:$0xf]
      %v209 = vld [vmem:[%s188 + $0x14] sm:$0xf]
      %v210 = vld [vmem:[%s188 + $0x18] sm:$0xf]
      %v211 = vld [vmem:[%s188 + $0x1c] sm:$0xf]
      %v212 = vld [vmem:[%s188 + $0x20] sm:$0xf]
      %v213 = vld [vmem:[%s188 + $0x24] sm:$0xf]
      %v214 = vld [vmem:[%s188 + $0x28] sm:$0xf]
      %v215 = vld [vmem:[%s188 + $0x2c] sm:$0xf]
      %v216 = vld [vmem:[%s188 + $0x30] sm:$0xf]
      %v217 = vld [vmem:[%s188 + $0x34] sm:$0xf]
      %v218 = vld [vmem:[%s188 + $0x38] sm:$0xf]
      %v219 = vld [vmem:[%s188 + $0x3c] sm:$0xf]
      %v220 = vld [vmem:[%s188 + $0x40] sm:$0xf]
      %v221 = vld [vmem:[%s188 + $0x44] sm:$0xf]
      %v222 = vld [vmem:[%s188 + $0x48] sm:$0xf]
      %v223 = vld [vmem:[%s188 + $0x4c] sm:$0xf]
      %v224 = vld [vmem:[%s188 + $0x50] sm:$0xf]
      %v225 = vld [vmem:[%s188 + $0x54] sm:$0xf]
      %v226 = vld [vmem:[%s188 + $0x58] sm:$0xf]
      %v227 = vld [vmem:[%s188 + $0x5c] sm:$0xf]
      %v228 = vld [vmem:[%s188 + $0x60] sm:$0xf]
      %v229 = vld [vmem:[%s188 + $0x64] sm:$0xf]
      %v230 = vld [vmem:[%s188 + $0x68] sm:$0xf]
      %v231 = vld [vmem:[%s188 + $0x6c] sm:$0xf]
      %v232 = vld [vmem:[%s188 + $0x70] sm:$0xf]
      %v233 = vld [vmem:[%s188 + $0x74] sm:$0xf]
      %v234 = vld [vmem:[%s188 + $0x78] sm:$0xf]
      %v235 = vld [vmem:[%s188 + $0x7c] sm:$0xf]
      %v236 = vld [vmem:[%s188 + $0x80] sm:$0xf]
      %v237 = vld [vmem:[%s188 + $0x84] sm:$0xf]
      %v238 = vld [vmem:[%s188 + $0x88] sm:$0xf]
      %v239 = vld [vmem:[%s188 + $0x8c] sm:$0xf]
      %v240 = vld [vmem:[%s188 + $0x90] sm:$0xf]
      %v241 = vld [vmem:[%s188 + $0x94] sm:$0xf]
      %v242 = vld [vmem:[%s188 + $0x98] sm:$0xf]
      %v243 = vld [vmem:[%s188 + $0x9c] sm:$0xf]
      %v244 = vld [vmem:[%s188 + $0xa0] sm:$0xf]
      %v245 = vld [vmem:[%s188 + $0xa4] sm:$0xf]
      %v246 = vld [vmem:[%s188 + $0xa8] sm:$0xf]
      %v247 = vld [vmem:[%s188 + $0xac] sm:$0xf]
      %v248 = vld [vmem:[%s188 + $0xb0] sm:$0xf]
      %v249 = vld [vmem:[%s188 + $0xb4] sm:$0xf]
      %v250 = vld [vmem:[%s188 + $0xb8] sm:$0xf]
      %v251 = vld [vmem:[%s188 + $0xbc] sm:$0xf]
      %v252 = vld [vmem:[%s188 + $0xc0] sm:$0xf]
      %v253 = vld [vmem:[%s188 + $0xc4] sm:$0xf]
      %v254 = vld [vmem:[%s188 + $0xc8] sm:$0xf]
      %v255 = vld [vmem:[%s188 + $0xcc] sm:$0xf]
      %v256 = vld [vmem:[%s188 + $0xd0] sm:$0xf]
      %v257 = vld [vmem:[%s188 + $0xd4] sm:$0xf]
      %v258 = vld [vmem:[%s188 + $0xd8] sm:$0xf]
      %v259 = vld [vmem:[%s188 + $0xdc] sm:$0xf]
      %v260 = vld [vmem:[%s188 + $0xe0] sm:$0xf]
      %v261 = vld [vmem:[%s188 + $0xe4] sm:$0xf]
      %v262 = vld [vmem:[%s188 + $0xe8] sm:$0xf]
      %v263 = vld [vmem:[%s188 + $0xec] sm:$0xf]
      %v264 = vld [vmem:[%s188 + $0xf0] sm:$0xf]
      %v265 = vld [vmem:[%s188 + $0xf4] sm:$0xf]
      %v266 = vld [vmem:[%s188 + $0xf8] sm:$0xf]
      %v267 = vld [vmem:[%s188 + $0xfc] sm:$0xf]
      %v268 = vld [vmem:[%s1] sm:$0xf]
      %v269 = vld [vmem:[%s1 + $0x4] sm:$0xf]
      %v270 = vld [vmem:[%s1 + $0x8] sm:$0xf]
      %v271 = vld [vmem:[%s1 + $0xc] sm:$0xf]
      %v272 = vld [vmem:[%s1 + $0x10] sm:$0xf]
      %v273 = vld [vmem:[%s1 + $0x14] sm:$0xf]
      %v274 = vld [vmem:[%s1 + $0x18] sm:$0xf]
      %v275 = vld [vmem:[%s1 + $0x1c] sm:$0xf]
      %v276 = vld [vmem:[%s1 + $0x20] sm:$0xf]
      %v277 = vld [vmem:[%s1 + $0x24] sm:$0xf]
      %v278 = vld [vmem:[%s1 + $0x28] sm:$0xf]
      %v279 = vld [vmem:[%s1 + $0x2c] sm:$0xf]
      %v280 = vld [vmem:[%s1 + $0x30] sm:$0xf]
      %v281 = vld [vmem:[%s1 + $0x34] sm:$0xf]
      %v282 = vld [vmem:[%s1 + $0x38] sm:$0xf]
      %v283 = vld [vmem:[%s1 + $0x3c] sm:$0xf]
      %v348 = vunpack.c.l.b16 %v204
      %v349 = vunpack.c.l.b16 %v205
      %v350 = vunpack.c.l.b16 %v206
      %v351 = vunpack.c.l.b16 %v207
      %v352 = vunpack.c.l.b16 %v208
      %v353 = vunpack.c.l.b16 %v209
      %v354 = vunpack.c.l.b16 %v210
      %v355 = vunpack.c.l.b16 %v211
      %v356 = vunpack.c.l.b16 %v212
      %v357 = vunpack.c.l.b16 %v213
      %v358 = vunpack.c.l.b16 %v214
      %v359 = vunpack.c.l.b16 %v215
      %v360 = vunpack.c.l.b16 %v216
      %v361 = vunpack.c.l.b16 %v217
      %v362 = vunpack.c.l.b16 %v218
      %v363 = vunpack.c.l.b16 %v219
      %v364 = vunpack.c.l.b16 %v220
      %v365 = vunpack.c.l.b16 %v221
      %v366 = vunpack.c.l.b16 %v222
      %v367 = vunpack.c.l.b16 %v223
      %v368 = vunpack.c.l.b16 %v224
      %v369 = vunpack.c.l.b16 %v225
      %v370 = vunpack.c.l.b16 %v226
      %v371 = vunpack.c.l.b16 %v227
      %v372 = vunpack.c.l.b16 %v228
      %v373 = vunpack.c.l.b16 %v229
      %v374 = vunpack.c.l.b16 %v230
      %v375 = vunpack.c.l.b16 %v231
      %v376 = vunpack.c.l.b16 %v232
      %v377 = vunpack.c.l.b16 %v233
      %v378 = vunpack.c.l.b16 %v234
      %v379 = vunpack.c.l.b16 %v235
      %v380 = vunpack.c.l.b16 %v236
      %v381 = vunpack.c.l.b16 %v237
      %v382 = vunpack.c.l.b16 %v238
      %v383 = vunpack.c.l.b16 %v239
      %v384 = vunpack.c.l.b16 %v240
      %v385 = vunpack.c.l.b16 %v241
      %v386 = vunpack.c.l.b16 %v242
      %v387 = vunpack.c.l.b16 %v243
      %v388 = vunpack.c.l.b16 %v244
      %v389 = vunpack.c.l.b16 %v245
      %v390 = vunpack.c.l.b16 %v246
      %v391 = vunpack.c.l.b16 %v247
      %v392 = vunpack.c.l.b16 %v248
      %v393 = vunpack.c.l.b16 %v249
      %v394 = vunpack.c.l.b16 %v250
      %v395 = vunpack.c.l.b16 %v251
      %v396 = vunpack.c.l.b16 %v252
      %v397 = vunpack.c.l.b16 %v253
      %v398 = vunpack.c.l.b16 %v254
      %v399 = vunpack.c.l.b16 %v255
      %v400 = vunpack.c.l.b16 %v256
      %v401 = vunpack.c.l.b16 %v257
      %v402 = vunpack.c.l.b16 %v258
      %v403 = vunpack.c.l.b16 %v259
      %v404 = vunpack.c.l.b16 %v260
      %v405 = vunpack.c.l.b16 %v261
      %v406 = vunpack.c.l.b16 %v262
      %v407 = vunpack.c.l.b16 %v263
      %v408 = vunpack.c.l.b16 %v264
      %v409 = vunpack.c.l.b16 %v265
      %v410 = vunpack.c.l.b16 %v266
      %v411 = vunpack.c.l.b16 %v267
      %v412 = vpack.c.b16 %v349, %v348
      %v413 = vpack.c.b16 %v351, %v350
      %v414 = vpack.c.b16 %v353, %v352
      %v415 = vpack.c.b16 %v355, %v354
      %v416 = vpack.c.b16 %v357, %v356
      %v417 = vpack.c.b16 %v359, %v358
      %v418 = vpack.c.b16 %v361, %v360
      %v419 = vpack.c.b16 %v363, %v362
      %v420 = vpack.c.b16 %v365, %v364
      %v421 = vpack.c.b16 %v367, %v366
      %v422 = vpack.c.b16 %v369, %v368
      %v423 = vpack.c.b16 %v371, %v370
      %v424 = vpack.c.b16 %v373, %v372
      %v425 = vpack.c.b16 %v375, %v374
      %v426 = vpack.c.b16 %v377, %v376
      %v427 = vpack.c.b16 %v379, %v378
      %v428 = vpack.c.b16 %v381, %v380
      %v429 = vpack.c.b16 %v383, %v382
      %v430 = vpack.c.b16 %v385, %v384
      %v431 = vpack.c.b16 %v387, %v386
      %v432 = vpack.c.b16 %v389, %v388
      %v433 = vpack.c.b16 %v391, %v390
      %v434 = vpack.c.b16 %v393, %v392
      %v435 = vpack.c.b16 %v395, %v394
      %v436 = vpack.c.b16 %v397, %v396
      %v437 = vpack.c.b16 %v399, %v398
      %v438 = vpack.c.b16 %v401, %v400
      %v439 = vpack.c.b16 %v403, %v402
      %v440 = vpack.c.b16 %v405, %v404
      %v441 = vpack.c.b16 %v407, %v406
      %v442 = vpack.c.b16 %v409, %v408
      %v443 = vpack.c.b16 %v411, %v410
      %v492 = vunpack.c.l.b16 %v268
      %v493 = vunpack.c.l.b16 %v269
      %v494 = vunpack.c.l.b16 %v270
      %v495 = vunpack.c.l.b16 %v271
      %v496 = vunpack.c.l.b16 %v272
      %v497 = vunpack.c.l.b16 %v273
      %v498 = vunpack.c.l.b16 %v274
      %v499 = vunpack.c.l.b16 %v275
      %v500 = vunpack.c.l.b16 %v276
      %v501 = vunpack.c.l.b16 %v277
      %v502 = vunpack.c.l.b16 %v278
      %v503 = vunpack.c.l.b16 %v279
      %v504 = vunpack.c.l.b16 %v280
      %v505 = vunpack.c.l.b16 %v281
      %v506 = vunpack.c.l.b16 %v282
      %v507 = vunpack.c.l.b16 %v283
      %v508 = vpack.c.b16 %v493, %v492
      %v509 = vpack.c.b16 %v495, %v494
      %v510 = vpack.c.b16 %v497, %v496
      %v511 = vpack.c.b16 %v499, %v498
      %v512 = vpack.c.b16 %v501, %v500
      %v513 = vpack.c.b16 %v503, %v502
      %v514 = vpack.c.b16 %v505, %v504
      %v515 = vpack.c.b16 %v507, %v506
      %524 = vmatprep.subr.bf16.mxu0 0
      %525 = vmatpush1.bf16.msra.mxu0 %v508
      %526 = vmatprep.subr.bf16.mxu0 0
      %527 = vmatpush1.bf16.msra.mxu0 %v509
      %528 = vmatprep.subr.bf16.mxu0 0
      %529 = vmatpush1.bf16.msra.mxu0 %v510
      %530 = vmatprep.subr.bf16.mxu0 0
      %531 = vmatpush1.bf16.msra.mxu0 %v511
      %532 = vmatprep.subr.bf16.mxu0 0
      %533 = vmatpush1.bf16.msra.mxu0 %v512
      %534 = vmatprep.subr.bf16.mxu0 0
      %535 = vmatpush1.bf16.msra.mxu0 %v513
      %536 = vmatprep.subr.bf16.mxu0 0
      %537 = vmatpush1.bf16.msra.mxu0 %v514
      %538 = vmatprep.subr.bf16.mxu0 0
      %539 = vmatpush1.bf16.msra.mxu0 %v515
      %540 = vmatprep.subr.bf16.mxu0 0
      %541 = vmatpush1.bf16.msra.mxu0 0
      %542 = vmatprep.subr.bf16.mxu0 0
      %543 = vmatpush1.bf16.msra.mxu0 0
      %544 = vmatprep.subr.bf16.mxu0 0
      %545 = vmatpush1.bf16.msra.mxu0 0
      %546 = vmatprep.subr.bf16.mxu0 0
      %547 = vmatpush1.bf16.msra.mxu0 0
      %548 = vmatprep.subr.bf16.mxu0 0
      %549 = vmatpush1.bf16.msra.mxu0 0
      %550 = vmatprep.subr.bf16.mxu0 0
      %551 = vmatpush1.bf16.msra.mxu0 0
      %552 = vmatprep.subr.bf16.mxu0 0
      %553 = vmatpush1.bf16.msra.mxu0 0
      %554 = vmatprep.subr.bf16.mxu0 0
      %555 = vmatpush1.bf16.msra.mxu0 0
      %556 = vmatprep.mubr.bf16.mxu0 0
      %557 = vmatmul.mubr.bf16.gmra.mrb[0].mxu0 %v412
      %v558 = vpop.f32.mrb[0].mxu0
      %v559 = vadd.f32 0.0, %v558
      %v560 = vpop.f32.mrb[0].mxu0
      %v561 = vpop.f32.mrb[0].mxu0
      %v562 = vadd.f32 0.0, %v561
      %v563 = vpop.f32.mrb[0].mxu0
      %564 = vmatprep.mubr.bf16.mxu0 0
      %565 = vmatmul.mubr.bf16.gmra.mrb[0].mxu0 %v413
      %v566 = vpop.f32.mrb[0].mxu0
      %v567 = vadd.f32 0.0, %v566
      %v568 = vpop.f32.mrb[0].mxu0
      %v569 = vpop.f32.mrb[0].mxu0
      %v570 = vadd.f32 0.0, %v569
      %v571 = vpop.f32.mrb[0].mxu0
      %572 = vmatprep.mubr.bf16.mxu0 0
      %573 = vmatmul.mubr.bf16.gmra.mrb[0].mxu0 %v414
      %v574 = vpop.f32.mrb[0].mxu0
      %v575 = vadd.f32 0.0, %v574
      %v576 = vpop.f32.mrb[0].mxu0
      %v577 = vpop.f32.mrb[0].mxu0
      %v578 = vadd.f32 0.0, %v577
      %v579 = vpop.f32.mrb[0].mxu0
      %580 = vmatprep.mubr.bf16.mxu0 0
      %581 = vmatmul.mubr.bf16.gmra.mrb[0].mxu0 %v415
      %v582 = vpop.f32.mrb[0].mxu0
      %v583 = vadd.f32 0.0, %v582
      %v584 = vpop.f32.mrb[0].mxu0
      %v585 = vpop.f32.mrb[0].mxu0
      %v586 = vadd.f32 0.0, %v585
      %v587 = vpop.f32.mrb[0].mxu0
      %588 = vmatprep.mubr.bf16.mxu0 0
      %589 = vmatmul.mubr.bf16.gmra.mrb[0].mxu0 %v416
      %v590 = vpop.f32.mrb[0].mxu0
      %v591 = vadd.f32 0.0, %v590
      %v592 = vpop.f32.mrb[0].mxu0
      %v593 = vpop.f32.mrb[0].mxu0
      %v594 = vadd.f32 0.0, %v593
      %v595 = vpop.f32.mrb[0].mxu0
      %596 = vmatprep.mubr.bf16.mxu0 0
      %597 = vmatmul.mubr.bf16.gmra.mrb[0].mxu0 %v417
      %v598 = vpop.f32.mrb[0].mxu0
      %v599 = vadd.f32 0.0, %v598
      %v600 = vpop.f32.mrb[0].mxu0
      %v601 = vpop.f32.mrb[0].mxu0
      %v602 = vadd.f32 0.0, %v601
      %v603 = vpop.f32.mrb[0].mxu0
      %604 = vmatprep.mubr.bf16.mxu0 0
      %605 = vmatmul.mubr.bf16.gmra.mrb[0].mxu0 %v418
      %v606 = vpop.f32.mrb[0].mxu0
      %v607 = vadd.f32 0.0, %v606
      %v608 = vpop.f32.mrb[0].mxu0
      %v609 = vpop.f32.mrb[0].mxu0
      %v610 = vadd.f32 0.0, %v609
      %v611 = vpop.f32.mrb[0].mxu0
      %612 = vmatprep.mubr.bf16.mxu0 0
      %613 = vmatmul.mubr.bf16.gmra.mrb[0].mxu0 %v419
      %v614 = vpop.f32.mrb[0].mxu0
      %v615 = vadd.f32 0.0, %v614
      %v616 = vpop.f32.mrb[0].mxu0
      %v617 = vpop.f32.mrb[0].mxu0
      %v618 = vadd.f32 0.0, %v617
      %v619 = vpop.f32.mrb[0].mxu0
      %620 = vmatprep.mubr.bf16.mxu0 0
      %621 = vmatmul.mubr.bf16.gmra.mrb[0].mxu0 %v420
      %v622 = vpop.f32.mrb[0].mxu0
      %v623 = vadd.f32 0.0, %v622
      %v624 = vpop.f32.mrb[0].mxu0
      %v625 = vpop.f32.mrb[0].mxu0
      %v626 = vadd.f32 0.0, %v625
      %v627 = vpop.f32.mrb[0].mxu0
      %628 = vmatprep.mubr.bf16.mxu0 0
      %629 = vmatmul.mubr.bf16.gmra.mrb[0].mxu0 %v421
      %v630 = vpop.f32.mrb[0].mxu0
      %v631 = vadd.f32 0.0, %v630
      %v632 = vpop.f32.mrb[0].mxu0
      %v633 = vpop.f32.mrb[0].mxu0
      %v634 = vadd.f32 0.0, %v633
      %v635 = vpop.f32.mrb[0].mxu0
      %636 = vmatprep.mubr.bf16.mxu0 0
      %637 = vmatmul.mubr.bf16.gmra.mrb[0].mxu0 %v422
      %v638 = vpop.f32.mrb[0].mxu0
      %v639 = vadd.f32 0.0, %v638
      %v640 = vpop.f32.mrb[0].mxu0
      %v641 = vpop.f32.mrb[0].mxu0
      %v642 = vadd.f32 0.0, %v641
      %v643 = vpop.f32.mrb[0].mxu0
      %644 = vmatprep.mubr.bf16.mxu0 0
      %645 = vmatmul.mubr.bf16.gmra.mrb[0].mxu0 %v423
      %v646 = vpop.f32.mrb[0].mxu0
      %v647 = vadd.f32 0.0, %v646
      %v648 = vpop.f32.mrb[0].mxu0
      %v649 = vpop.f32.mrb[0].mxu0
      %v650 = vadd.f32 0.0, %v649
      %v651 = vpop.f32.mrb[0].mxu0
      %652 = vmatprep.mubr.bf16.mxu0 0
      %653 = vmatmul.mubr.bf16.gmra.mrb[0].mxu0 %v424
      %v654 = vpop.f32.mrb[0].mxu0
      %v655 = vadd.f32 0.0, %v654
      %v656 = vpop.f32.mrb[0].mxu0
      %v657 = vpop.f32.mrb[0].mxu0
      %v658 = vadd.f32 0.0, %v657
      %v659 = vpop.f32.mrb[0].mxu0
      %660 = vmatprep.mubr.bf16.mxu0 0
      %661 = vmatmul.mubr.bf16.gmra.mrb[0].mxu0 %v425
      %v662 = vpop.f32.mrb[0].mxu0
      %v663 = vadd.f32 0.0, %v662
      %v664 = vpop.f32.mrb[0].mxu0
      %v665 = vpop.f32.mrb[0].mxu0
      %v666 = vadd.f32 0.0, %v665
      %v667 = vpop.f32.mrb[0].mxu0
      %668 = vmatprep.mubr.bf16.mxu0 0
      %669 = vmatmul.mubr.bf16.gmra.mrb[0].mxu0 %v426
      %v670 = vpop.f32.mrb[0].mxu0
      %v671 = vadd.f32 0.0, %v670
      %v672 = vpop.f32.mrb[0].mxu0
      %v673 = vpop.f32.mrb[0].mxu0
      %v674 = vadd.f32 0.0, %v673
      %v675 = vpop.f32.mrb[0].mxu0
      %676 = vmatprep.mubr.bf16.mxu0 0
      %677 = vmatmul.mubr.bf16.gmra.mrb[0].mxu0 %v427
      %v678 = vpop.f32.mrb[0].mxu0
      %v679 = vadd.f32 0.0, %v678
      %v680 = vpop.f32.mrb[0].mxu0
      %v681 = vpop.f32.mrb[0].mxu0
      %v682 = vadd.f32 0.0, %v681
      %v683 = vpop.f32.mrb[0].mxu0
      %684 = vmatprep.mubr.bf16.mxu0 0
      %685 = vmatmul.mubr.bf16.gmra.mrb[0].mxu0 %v428
      %v686 = vpop.f32.mrb[0].mxu0
      %v687 = vadd.f32 0.0, %v686
      %v688 = vpop.f32.mrb[0].mxu0
      %v689 = vpop.f32.mrb[0].mxu0
      %v690 = vadd.f32 0.0, %v689
      %v691 = vpop.f32.mrb[0].mxu0
      %692 = vmatprep.mubr.bf16.mxu0 0
      %693 = vmatmul.mubr.bf16.gmra.mrb[0].mxu0 %v429
      %v694 = vpop.f32.mrb[0].mxu0
      %v695 = vadd.f32 0.0, %v694
      %v696 = vpop.f32.mrb[0].mxu0
      %v697 = vpop.f32.mrb[0].mxu0
      %v698 = vadd.f32 0.0, %v697
      %v699 = vpop.f32.mrb[0].mxu0
      %700 = vmatprep.mubr.bf16.mxu0 0
      %701 = vmatmul.mubr.bf16.gmra.mrb[0].mxu0 %v430
      %v702 = vpop.f32.mrb[0].mxu0
      %v703 = vadd.f32 0.0, %v702
      %v704 = vpop.f32.mrb[0].mxu0
      %v705 = vpop.f32.mrb[0].mxu0
      %v706 = vadd.f32 0.0, %v705
      %v707 = vpop.f32.mrb[0].mxu0
      %708 = vmatprep.mubr.bf16.mxu0 0
      %709 = vmatmul.mubr.bf16.gmra.mrb[0].mxu0 %v431
      %v710 = vpop.f32.mrb[0].mxu0
      %v711 = vadd.f32 0.0, %v710
      %v712 = vpop.f32.mrb[0].mxu0
      %v713 = vpop.f32.mrb[0].mxu0
      %v714 = vadd.f32 0.0, %v713
      %v715 = vpop.f32.mrb[0].mxu0
      %716 = vmatprep.mubr.bf16.mxu0 0
      %717 = vmatmul.mubr.bf16.gmra.mrb[0].mxu0 %v432
      %v718 = vpop.f32.mrb[0].mxu0
      %v719 = vadd.f32 0.0, %v718
      %v720 = vpop.f32.mrb[0].mxu0
      %v721 = vpop.f32.mrb[0].mxu0
      %v722 = vadd.f32 0.0, %v721
      %v723 = vpop.f32.mrb[0].mxu0
      %724 = vmatprep.mubr.bf16.mxu0 0
      %725 = vmatmul.mubr.bf16.gmra.mrb[0].mxu0 %v433
      %v726 = vpop.f32.mrb[0].mxu0
      %v727 = vadd.f32 0.0, %v726
      %v728 = vpop.f32.mrb[0].mxu0
      %v729 = vpop.f32.mrb[0].mxu0
      %v730 = vadd.f32 0.0, %v729
      %v731 = vpop.f32.mrb[0].mxu0
      %732 = vmatprep.mubr.bf16.mxu0 0
      %733 = vmatmul.mubr.bf16.gmra.mrb[0].mxu0 %v434
      %v734 = vpop.f32.mrb[0].mxu0
      %v735 = vadd.f32 0.0, %v734
      %v736 = vpop.f32.mrb[0].mxu0
      %v737 = vpop.f32.mrb[0].mxu0
      %v738 = vadd.f32 0.0, %v737
      %v739 = vpop.f32.mrb[0].mxu0
      %740 = vmatprep.mubr.bf16.mxu0 0
      %741 = vmatmul.mubr.bf16.gmra.mrb[0].mxu0 %v435
      %v742 = vpop.f32.mrb[0].mxu0
      %v743 = vadd.f32 0.0, %v742
      %v744 = vpop.f32.mrb[0].mxu0
      %v745 = vpop.f32.mrb[0].mxu0
      %v746 = vadd.f32 0.0, %v745
      %v747 = vpop.f32.mrb[0].mxu0
      %748 = vmatprep.mubr.bf16.mxu0 0
      %749 = vmatmul.mubr.bf16.gmra.mrb[0].mxu0 %v436
      %v750 = vpop.f32.mrb[0].mxu0
      %v751 = vadd.f32 0.0, %v750
      %v752 = vpop.f32.mrb[0].mxu0
      %v753 = vpop.f32.mrb[0].mxu0
      %v754 = vadd.f32 0.0, %v753
      %v755 = vpop.f32.mrb[0].mxu0
      %756 = vmatprep.mubr.bf16.mxu0 0
      %757 = vmatmul.mubr.bf16.gmra.mrb[0].mxu0 %v437
      %v758 = vpop.f32.mrb[0].mxu0
      %v759 = vadd.f32 0.0, %v758
      %v760 = vpop.f32.mrb[0].mxu0
      %v761 = vpop.f32.mrb[0].mxu0
      %v762 = vadd.f32 0.0, %v761
      %v763 = vpop.f32.mrb[0].mxu0
      %764 = vmatprep.mubr.bf16.mxu0 0
      %765 = vmatmul.mubr.bf16.gmra.mrb[0].mxu0 %v438
      %v766 = vpop.f32.mrb[0].mxu0
      %v767 = vadd.f32 0.0, %v766
      %v768 = vpop.f32.mrb[0].mxu0
      %v769 = vpop.f32.mrb[0].mxu0
      %v770 = vadd.f32 0.0, %v769
      %v771 = vpop.f32.mrb[0].mxu0
      %772 = vmatprep.mubr.bf16.mxu0 0
      %773 = vmatmul.mubr.bf16.gmra.mrb[0].mxu0 %v439
      %v774 = vpop.f32.mrb[0].mxu0
      %v775 = vadd.f32 0.0, %v774
      %v776 = vpop.f32.mrb[0].mxu0
      %v777 = vpop.f32.mrb[0].mxu0
      %v778 = vadd.f32 0.0, %v777
      %v779 = vpop.f32.mrb[0].mxu0
      %780 = vmatprep.mubr.bf16.mxu0 0
      %781 = vmatmul.mubr.bf16.gmra.mrb[0].mxu0 %v440
      %v782 = vpop.f32.mrb[0].mxu0
      %v783 = vadd.f32 0.0, %v782
      %v784 = vpop.f32.mrb[0].mxu0
      %v785 = vpop.f32.mrb[0].mxu0
      %v786 = vadd.f32 0.0, %v785
      %v787 = vpop.f32.mrb[0].mxu0
      %788 = vmatprep.mubr.bf16.mxu0 0
      %789 = vmatmul.mubr.bf16.gmra.mrb[0].mxu0 %v441
      %v790 = vpop.f32.mrb[0].mxu0
      %v791 = vadd.f32 0.0, %v790
      %v792 = vpop.f32.mrb[0].mxu0
      %v793 = vpop.f32.mrb[0].mxu0
      %v794 = vadd.f32 0.0, %v793
      %v795 = vpop.f32.mrb[0].mxu0
      %796 = vmatprep.mubr.bf16.mxu0 0
      %797 = vmatmul.mubr.bf16.gmra.mrb[0].mxu0 %v442
      %v798 = vpop.f32.mrb[0].mxu0
      %v799 = vadd.f32 0.0, %v798
      %v800 = vpop.f32.mrb[0].mxu0
      %v801 = vpop.f32.mrb[0].mxu0
      %v802 = vadd.f32 0.0, %v801
      %v803 = vpop.f32.mrb[0].mxu0
      %804 = vmatprep.mubr.bf16.mxu0 0
      %805 = vmatmul.mubr.bf16.gmra.mrb[0].mxu0 %v443
      %v806 = vpop.f32.mrb[0].mxu0
      %v807 = vadd.f32 0.0, %v806
      %v808 = vpop.f32.mrb[0].mxu0
      %v809 = vpop.f32.mrb[0].mxu0
      %v810 = vadd.f32 0.0, %v809
      %v811 = vpop.f32.mrb[0].mxu0
      %812 = vdwg.mxu0
      %vm813 = vcmask 130048
      %814 = vst.msk [vmem:[%s194] sm:$0xff] %vm813, %v559
      %815 = vst.msk [vmem:[%s194 + $0x8] sm:$0xff] %vm813, %v562
      %816 = vst.msk [vmem:[%s194 + $0x10] sm:$0xff] %vm813, %v567
      %817 = vst.msk [vmem:[%s194 + $0x18] sm:$0xff] %vm813, %v570
      %818 = vst.msk [vmem:[%s194 + $0x20] sm:$0xff] %vm813, %v575
      %819 = vst.msk [vmem:[%s194 + $0x28] sm:$0xff] %vm813, %v578
      %820 = vst.msk [vmem:[%s194 + $0x30] sm:$0xff] %vm813, %v583
      %821 = vst.msk [vmem:[%s194 + $0x38] sm:$0xff] %vm813, %v586
      %822 = vst.msk [vmem:[%s194 + $0x40] sm:$0xff] %vm813, %v591
      %823 = vst.msk [vmem:[%s194 + $0x48] sm:$0xff] %vm813, %v594
      %824 = vst.msk [vmem:[%s194 + $0x50] sm:$0xff] %vm813, %v599
      %825 = vst.msk [vmem:[%s194 + $0x58] sm:$0xff] %vm813, %v602
      %826 = vst.msk [vmem:[%s194 + $0x60] sm:$0xff] %vm813, %v607
      %827 = vst.msk [vmem:[%s194 + $0x68] sm:$0xff] %vm813, %v610
      %828 = vst.msk [vmem:[%s194 + $0x70] sm:$0xff] %vm813, %v615
      %829 = vst.msk [vmem:[%s194 + $0x78] sm:$0xff] %vm813, %v618
      %830 = vst.msk [vmem:[%s194 + $0x80] sm:$0xff] %vm813, %v623
      %831 = vst.msk [vmem:[%s194 + $0x88] sm:$0xff] %vm813, %v626
      %832 = vst.msk [vmem:[%s194 + $0x90] sm:$0xff] %vm813, %v631
      %833 = vst.msk [vmem:[%s194 + $0x98] sm:$0xff] %vm813, %v634
      %834 = vst.msk [vmem:[%s194 + $0xa0] sm:$0xff] %vm813, %v639
      %835 = vst.msk [vmem:[%s194 + $0xa8] sm:$0xff] %vm813, %v642
      %836 = vst.msk [vmem:[%s194 + $0xb0] sm:$0xff] %vm813, %v647
      %837 = vst.msk [vmem:[%s194 + $0xb8] sm:$0xff] %vm813, %v650
      %838 = vst.msk [vmem:[%s194 + $0xc0] sm:$0xff] %vm813, %v655
      %839 = vst.msk [vmem:[%s194 + $0xc8] sm:$0xff] %vm813, %v658
      %840 = vst.msk [vmem:[%s194 + $0xd0] sm:$0xff] %vm813, %v663
      %841 = vst.msk [vmem:[%s194 + $0xd8] sm:$0xff] %vm813, %v666
      %842 = vst.msk [vmem:[%s194 + $0xe0] sm:$0xff] %vm813, %v671
      %843 = vst.msk [vmem:[%s194 + $0xe8] sm:$0xff] %vm813, %v674
      %844 = vst.msk [vmem:[%s194 + $0xf0] sm:$0xff] %vm813, %v679
      %845 = vst.msk [vmem:[%s194 + $0xf8] sm:$0xff] %vm813, %v682
      %846 = vst.msk [vmem:[%s194 + $0x100] sm:$0xff] %vm813, %v687
      %847 = vst.msk [vmem:[%s194 + $0x108] sm:$0xff] %vm813, %v690
      %848 = vst.msk [vmem:[%s194 + $0x110] sm:$0xff] %vm813, %v695
      %849 = vst.msk [vmem:[%s194 + $0x118] sm:$0xff] %vm813, %v698
      %850 = vst.msk [vmem:[%s194 + $0x120] sm:$0xff] %vm813, %v703
      %851 = vst.msk [vmem:[%s194 + $0x128] sm:$0xff] %vm813, %v706
      %852 = vst.msk [vmem:[%s194 + $0x130] sm:$0xff] %vm813, %v711
      %853 = vst.msk [vmem:[%s194 + $0x138] sm:$0xff] %vm813, %v714
      %854 = vst.msk [vmem:[%s194 + $0x140] sm:$0xff] %vm813, %v719
      %855 = vst.msk [vmem:[%s194 + $0x148] sm:$0xff] %vm813, %v722
      %856 = vst.msk [vmem:[%s194 + $0x150] sm:$0xff] %vm813, %v727
      %857 = vst.msk [vmem:[%s194 + $0x158] sm:$0xff] %vm813, %v730
      %858 = vst.msk [vmem:[%s194 + $0x160] sm:$0xff] %vm813, %v735
      %859 = vst.msk [vmem:[%s194 + $0x168] sm:$0xff] %vm813, %v738
      %860 = vst.msk [vmem:[%s194 + $0x170] sm:$0xff] %vm813, %v743
      %861 = vst.msk [vmem:[%s194 + $0x178] sm:$0xff] %vm813, %v746
      %862 = vst.msk [vmem:[%s194 + $0x180] sm:$0xff] %vm813, %v751
      %863 = vst.msk [vmem:[%s194 + $0x188] sm:$0xff] %vm813, %v754
      %864 = vst.msk [vmem:[%s194 + $0x190] sm:$0xff] %vm813, %v759
      %865 = vst.msk [vmem:[%s194 + $0x198] sm:$0xff] %vm813, %v762
      %866 = vst.msk [vmem:[%s194 + $0x1a0] sm:$0xff] %vm813, %v767
      %867 = vst.msk [vmem:[%s194 + $0x1a8] sm:$0xff] %vm813, %v770
      %868 = vst.msk [vmem:[%s194 + $0x1b0] sm:$0xff] %vm813, %v775
      %869 = vst.msk [vmem:[%s194 + $0x1b8] sm:$0xff] %vm813, %v778
      %870 = vst.msk [vmem:[%s194 + $0x1c0] sm:$0xff] %vm813, %v783
      %871 = vst.msk [vmem:[%s194 + $0x1c8] sm:$0xff] %vm813, %v786
      %872 = vst.msk [vmem:[%s194 + $0x1d0] sm:$0xff] %vm813, %v791
      %873 = vst.msk [vmem:[%s194 + $0x1d8] sm:$0xff] %vm813, %v794
      %874 = vst.msk [vmem:[%s194 + $0x1e0] sm:$0xff] %vm813, %v799
      %875 = vst.msk [vmem:[%s194 + $0x1e8] sm:$0xff] %vm813, %v802
      %876 = vst.msk [vmem:[%s194 + $0x1f0] sm:$0xff] %vm813, %v807
      %877 = vst.msk [vmem:[%s194 + $0x1f8] sm:$0xff] %vm813, %v810
      %v878 = vld [vmem:[%s3] sm:$0x1]
      %v879 = vsel %vm813, %v559, 0.0
      %v880 = vsel %vm813, %v562, 0.0
      %v881 = vadd.f32 %v879, %v880
      %v882 = vsel %vm813, %v567, 0.0
      %v883 = vadd.f32 %v881, %v882
      %v884 = vsel %vm813, %v570, 0.0
      %v885 = vadd.f32 %v883, %v884
      %v886 = vsel %vm813, %v575, 0.0
      %v887 = vadd.f32 %v885, %v886
      %v888 = vsel %vm813, %v578, 0.0
      %v889 = vadd.f32 %v887, %v888
      %v890 = vsel %vm813, %v583, 0.0
      %v891 = vadd.f32 %v889, %v890
      %v892 = vsel %vm813, %v586, 0.0
      %v893 = vadd.f32 %v891, %v892
      %v894 = vsel %vm813, %v591, 0.0
      %v895 = vadd.f32 %v893, %v894
      %v896 = vsel %vm813, %v594, 0.0
      %v897 = vadd.f32 %v895, %v896
      %v898 = vsel %vm813, %v599, 0.0
      %v899 = vadd.f32 %v897, %v898
      %v900 = vsel %vm813, %v602, 0.0
      %v901 = vadd.f32 %v899, %v900
      %v902 = vsel %vm813, %v607, 0.0
      %v903 = vadd.f32 %v901, %v902
      %v904 = vsel %vm813, %v610, 0.0
      %v905 = vadd.f32 %v903, %v904
      %v906 = vsel %vm813, %v615, 0.0
      %v907 = vadd.f32 %v905, %v906
      %v908 = vsel %vm813, %v618, 0.0
      %v909 = vadd.f32 %v907, %v908
      %v910 = vsel %vm813, %v623, 0.0
      %v911 = vadd.f32 %v909, %v910
      %v912 = vsel %vm813, %v626, 0.0
      %v913 = vadd.f32 %v911, %v912
      %v914 = vsel %vm813, %v631, 0.0
      %v915 = vadd.f32 %v913, %v914
      %v916 = vsel %vm813, %v634, 0.0
      %v917 = vadd.f32 %v915, %v916
      %v918 = vsel %vm813, %v639, 0.0
      %v919 = vadd.f32 %v917, %v918
      %v920 = vsel %vm813, %v642, 0.0
      %v921 = vadd.f32 %v919, %v920
      %v922 = vsel %vm813, %v647, 0.0
      %v923 = vadd.f32 %v921, %v922
      %v924 = vsel %vm813, %v650, 0.0
      %v925 = vadd.f32 %v923, %v924
      %v926 = vsel %vm813, %v655, 0.0
      %v927 = vadd.f32 %v925, %v926
      %v928 = vsel %vm813, %v658, 0.0
      %v929 = vadd.f32 %v927, %v928
      %v930 = vsel %vm813, %v663, 0.0
      %v931 = vadd.f32 %v929, %v930
      %v932 = vsel %vm813, %v666, 0.0
      %v933 = vadd.f32 %v931, %v932
      %v934 = vsel %vm813, %v671, 0.0
      %v935 = vadd.f32 %v933, %v934
      %v936 = vsel %vm813, %v674, 0.0
      %v937 = vadd.f32 %v935, %v936
      %v938 = vsel %vm813, %v679, 0.0
      %v939 = vadd.f32 %v937, %v938
      %v940 = vsel %vm813, %v682, 0.0
      %v941 = vadd.f32 %v939, %v940
      %v942 = vsel %vm813, %v687, 0.0
      %v943 = vadd.f32 %v941, %v942
      %v944 = vsel %vm813, %v690, 0.0
      %v945 = vadd.f32 %v943, %v944
      %v946 = vsel %vm813, %v695, 0.0
      %v947 = vadd.f32 %v945, %v946
      %v948 = vsel %vm813, %v698, 0.0
      %v949 = vadd.f32 %v947, %v948
      %v950 = vsel %vm813, %v703, 0.0
      %v951 = vadd.f32 %v949, %v950
      %v952 = vsel %vm813, %v706, 0.0
      %v953 = vadd.f32 %v951, %v952
      %v954 = vsel %vm813, %v711, 0.0
      %v955 = vadd.f32 %v953, %v954
      %v956 = vsel %vm813, %v714, 0.0
      %v957 = vadd.f32 %v955, %v956
      %v958 = vsel %vm813, %v719, 0.0
      %v959 = vadd.f32 %v957, %v958
      %v960 = vsel %vm813, %v722, 0.0
      %v961 = vadd.f32 %v959, %v960
      %v962 = vsel %vm813, %v727, 0.0
      %v963 = vadd.f32 %v961, %v962
      %v964 = vsel %vm813, %v730, 0.0
      %v965 = vadd.f32 %v963, %v964
      %v966 = vsel %vm813, %v735, 0.0
      %v967 = vadd.f32 %v965, %v966
      %v968 = vsel %vm813, %v738, 0.0
      %v969 = vadd.f32 %v967, %v968
      %v970 = vsel %vm813, %v743, 0.0
      %v971 = vadd.f32 %v969, %v970
      %v972 = vsel %vm813, %v746, 0.0
      %v973 = vadd.f32 %v971, %v972
      %v974 = vsel %vm813, %v751, 0.0
      %v975 = vadd.f32 %v973, %v974
      %v976 = vsel %vm813, %v754, 0.0
      %v977 = vadd.f32 %v975, %v976
      %v978 = vsel %vm813, %v759, 0.0
      %v979 = vadd.f32 %v977, %v978
      %v980 = vsel %vm813, %v762, 0.0
      %v981 = vadd.f32 %v979, %v980
      %v982 = vsel %vm813, %v767, 0.0
      %v983 = vadd.f32 %v981, %v982
      %v984 = vsel %vm813, %v770, 0.0
      %v985 = vadd.f32 %v983, %v984
      %v986 = vsel %vm813, %v775, 0.0
      %v987 = vadd.f32 %v985, %v986
      %v988 = vsel %vm813, %v778, 0.0
      %v989 = vadd.f32 %v987, %v988
      %v990 = vsel %vm813, %v783, 0.0
      %v991 = vadd.f32 %v989, %v990
      %v992 = vsel %vm813, %v786, 0.0
      %v993 = vadd.f32 %v991, %v992
      %v994 = vsel %vm813, %v791, 0.0
      %v995 = vadd.f32 %v993, %v994
      %v996 = vsel %vm813, %v794, 0.0
      %v997 = vadd.f32 %v995, %v996
      %v998 = vsel %vm813, %v799, 0.0
      %v999 = vadd.f32 %v997, %v998
      %v1000 = vsel %vm813, %v802, 0.0
      %v1001 = vadd.f32 %v999, %v1000
      %v1002 = vsel %vm813, %v807, 0.0
      %v1003 = vadd.f32 %v1001, %v1002
      %v1004 = vsel %vm813, %v810, 0.0
      %v1005 = vadd.f32 %v1003, %v1004
      %v1006 = vrot.slane %v1005, 4
      %v1007 = vadd.f32 %v1005, %v1006
      %v1008 = vrot.slane %v1007, 2
      %v1009 = vadd.f32 %v1007, %v1008
      %v1010 = vrot.slane %v1009, 1
      %v1011 = vadd.f32 %v1009, %v1010
      %v1012 = vadd.f32 %v878, %v1011
      %vm1013 = vcmask 122880
      %1014 = vst.msk [vmem:[%s3] sm:$0x1] %vm1013, %v1012
      %v1015 = vld [vmem:[%s4] sm:$0x1]
      %v1016 = vmul.f32 %v559, %v559
      %v1017 = vmul.f32 %v562, %v562
      %v1018 = vmul.f32 %v567, %v567
      %v1019 = vmul.f32 %v570, %v570
      %v1020 = vmul.f32 %v575, %v575
      %v1021 = vmul.f32 %v578, %v578
      %v1022 = vmul.f32 %v583, %v583
      %v1023 = vmul.f32 %v586, %v586
      %v1024 = vmul.f32 %v591, %v591
      %v1025 = vmul.f32 %v594, %v594
      %v1026 = vmul.f32 %v599, %v599
      %v1027 = vmul.f32 %v602, %v602
      %v1028 = vmul.f32 %v607, %v607
      %v1029 = vmul.f32 %v610, %v610
      %v1030 = vmul.f32 %v615, %v615
      %v1031 = vmul.f32 %v618, %v618
      %v1032 = vmul.f32 %v623, %v623
      %v1033 = vmul.f32 %v626, %v626
      %v1034 = vmul.f32 %v631, %v631
      %v1035 = vmul.f32 %v634, %v634
      %v1036 = vmul.f32 %v639, %v639
      %v1037 = vmul.f32 %v642, %v642
      %v1038 = vmul.f32 %v647, %v647
      %v1039 = vmul.f32 %v650, %v650
      %v1040 = vmul.f32 %v655, %v655
      %v1041 = vmul.f32 %v658, %v658
      %v1042 = vmul.f32 %v663, %v663
      %v1043 = vmul.f32 %v666, %v666
      %v1044 = vmul.f32 %v671, %v671
      %v1045 = vmul.f32 %v674, %v674
      %v1046 = vmul.f32 %v679, %v679
      %v1047 = vmul.f32 %v682, %v682
      %v1048 = vmul.f32 %v687, %v687
      %v1049 = vmul.f32 %v690, %v690
      %v1050 = vmul.f32 %v695, %v695
      %v1051 = vmul.f32 %v698, %v698
      %v1052 = vmul.f32 %v703, %v703
      %v1053 = vmul.f32 %v706, %v706
      %v1054 = vmul.f32 %v711, %v711
      %v1055 = vmul.f32 %v714, %v714
      %v1056 = vmul.f32 %v719, %v719
      %v1057 = vmul.f32 %v722, %v722
      %v1058 = vmul.f32 %v727, %v727
      %v1059 = vmul.f32 %v730, %v730
      %v1060 = vmul.f32 %v735, %v735
      %v1061 = vmul.f32 %v738, %v738
      %v1062 = vmul.f32 %v743, %v743
      %v1063 = vmul.f32 %v746, %v746
      %v1064 = vmul.f32 %v751, %v751
      %v1065 = vmul.f32 %v754, %v754
      %v1066 = vmul.f32 %v759, %v759
      %v1067 = vmul.f32 %v762, %v762
      %v1068 = vmul.f32 %v767, %v767
      %v1069 = vmul.f32 %v770, %v770
      %v1070 = vmul.f32 %v775, %v775
      %v1071 = vmul.f32 %v778, %v778
      %v1072 = vmul.f32 %v783, %v783
      %v1073 = vmul.f32 %v786, %v786
      %v1074 = vmul.f32 %v791, %v791
      %v1075 = vmul.f32 %v794, %v794
      %v1076 = vmul.f32 %v799, %v799
      %v1077 = vmul.f32 %v802, %v802
      %v1078 = vmul.f32 %v807, %v807
      %v1079 = vmul.f32 %v810, %v810
      %v1080 = vsel %vm813, %v1016, 0.0
      %v1081 = vsel %vm813, %v1017, 0.0
      %v1082 = vadd.f32 %v1080, %v1081
      %v1083 = vsel %vm813, %v1018, 0.0
      %v1084 = vadd.f32 %v1082, %v1083
      %v1085 = vsel %vm813, %v1019, 0.0
      %v1086 = vadd.f32 %v1084, %v1085
      %v1087 = vsel %vm813, %v1020, 0.0
      %v1088 = vadd.f32 %v1086, %v1087
      %v1089 = vsel %vm813, %v1021, 0.0
      %v1090 = vadd.f32 %v1088, %v1089
      %v1091 = vsel %vm813, %v1022, 0.0
      %v1092 = vadd.f32 %v1090, %v1091
      %v1093 = vsel %vm813, %v1023, 0.0
      %v1094 = vadd.f32 %v1092, %v1093
      %v1095 = vsel %vm813, %v1024, 0.0
      %v1096 = vadd.f32 %v1094, %v1095
      %v1097 = vsel %vm813, %v1025, 0.0
      %v1098 = vadd.f32 %v1096, %v1097
      %v1099 = vsel %vm813, %v1026, 0.0
      %v1100 = vadd.f32 %v1098, %v1099
      %v1101 = vsel %vm813, %v1027, 0.0
      %v1102 = vadd.f32 %v1100, %v1101
      %v1103 = vsel %vm813, %v1028, 0.0
      %v1104 = vadd.f32 %v1102, %v1103
      %v1105 = vsel %vm813, %v1029, 0.0
      %v1106 = vadd.f32 %v1104, %v1105
      %v1107 = vsel %vm813, %v1030, 0.0
      %v1108 = vadd.f32 %v1106, %v1107
      %v1109 = vsel %vm813, %v1031, 0.0
      %v1110 = vadd.f32 %v1108, %v1109
      %v1111 = vsel %vm813, %v1032, 0.0
      %v1112 = vadd.f32 %v1110, %v1111
      %v1113 = vsel %vm813, %v1033, 0.0
      %v1114 = vadd.f32 %v1112, %v1113
      %v1115 = vsel %vm813, %v1034, 0.0
      %v1116 = vadd.f32 %v1114, %v1115
      %v1117 = vsel %vm813, %v1035, 0.0
      %v1118 = vadd.f32 %v1116, %v1117
      %v1119 = vsel %vm813, %v1036, 0.0
      %v1120 = vadd.f32 %v1118, %v1119
      %v1121 = vsel %vm813, %v1037, 0.0
      %v1122 = vadd.f32 %v1120, %v1121
      %v1123 = vsel %vm813, %v1038, 0.0
      %v1124 = vadd.f32 %v1122, %v1123
      %v1125 = vsel %vm813, %v1039, 0.0
      %v1126 = vadd.f32 %v1124, %v1125
      %v1127 = vsel %vm813, %v1040, 0.0
      %v1128 = vadd.f32 %v1126, %v1127
      %v1129 = vsel %vm813, %v1041, 0.0
      %v1130 = vadd.f32 %v1128, %v1129
      %v1131 = vsel %vm813, %v1042, 0.0
      %v1132 = vadd.f32 %v1130, %v1131
      %v1133 = vsel %vm813, %v1043, 0.0
      %v1134 = vadd.f32 %v1132, %v1133
      %v1135 = vsel %vm813, %v1044, 0.0
      %v1136 = vadd.f32 %v1134, %v1135
      %v1137 = vsel %vm813, %v1045, 0.0
      %v1138 = vadd.f32 %v1136, %v1137
      %v1139 = vsel %vm813, %v1046, 0.0
      %v1140 = vadd.f32 %v1138, %v1139
      %v1141 = vsel %vm813, %v1047, 0.0
      %v1142 = vadd.f32 %v1140, %v1141
      %v1143 = vsel %vm813, %v1048, 0.0
      %v1144 = vadd.f32 %v1142, %v1143
      %v1145 = vsel %vm813, %v1049, 0.0
      %v1146 = vadd.f32 %v1144, %v1145
      %v1147 = vsel %vm813, %v1050, 0.0
      %v1148 = vadd.f32 %v1146, %v1147
      %v1149 = vsel %vm813, %v1051, 0.0
      %v1150 = vadd.f32 %v1148, %v1149
      %v1151 = vsel %vm813, %v1052, 0.0
      %v1152 = vadd.f32 %v1150, %v1151
      %v1153 = vsel %vm813, %v1053, 0.0
      %v1154 = vadd.f32 %v1152, %v1153
      %v1155 = vsel %vm813, %v1054, 0.0
      %v1156 = vadd.f32 %v1154, %v1155
      %v1157 = vsel %vm813, %v1055, 0.0
      %v1158 = vadd.f32 %v1156, %v1157
      %v1159 = vsel %vm813, %v1056, 0.0
      %v1160 = vadd.f32 %v1158, %v1159
      %v1161 = vsel %vm813, %v1057, 0.0
      %v1162 = vadd.f32 %v1160, %v1161
      %v1163 = vsel %vm813, %v1058, 0.0
      %v1164 = vadd.f32 %v1162, %v1163
      %v1165 = vsel %vm813, %v1059, 0.0
      %v1166 = vadd.f32 %v1164, %v1165
      %v1167 = vsel %vm813, %v1060, 0.0
      %v1168 = vadd.f32 %v1166, %v1167
      %v1169 = vsel %vm813, %v1061, 0.0
      %v1170 = vadd.f32 %v1168, %v1169
      %v1171 = vsel %vm813, %v1062, 0.0
      %v1172 = vadd.f32 %v1170, %v1171
      %v1173 = vsel %vm813, %v1063, 0.0
      %v1174 = vadd.f32 %v1172, %v1173
      %v1175 = vsel %vm813, %v1064, 0.0
      %v1176 = vadd.f32 %v1174, %v1175
      %v1177 = vsel %vm813, %v1065, 0.0
      %v1178 = vadd.f32 %v1176, %v1177
      %v1179 = vsel %vm813, %v1066, 0.0
      %v1180 = vadd.f32 %v1178, %v1179
      %v1181 = vsel %vm813, %v1067, 0.0
      %v1182 = vadd.f32 %v1180, %v1181
      %v1183 = vsel %vm813, %v1068, 0.0
      %v1184 = vadd.f32 %v1182, %v1183
      %v1185 = vsel %vm813, %v1069, 0.0
      %v1186 = vadd.f32 %v1184, %v1185
      %v1187 = vsel %vm813, %v1070, 0.0
      %v1188 = vadd.f32 %v1186, %v1187
      %v1189 = vsel %vm813, %v1071, 0.0
      %v1190 = vadd.f32 %v1188, %v1189
      %v1191 = vsel %vm813, %v1072, 0.0
      %v1192 = vadd.f32 %v1190, %v1191
      %v1193 = vsel %vm813, %v1073, 0.0
      %v1194 = vadd.f32 %v1192, %v1193
      %v1195 = vsel %vm813, %v1074, 0.0
      %v1196 = vadd.f32 %v1194, %v1195
      %v1197 = vsel %vm813, %v1075, 0.0
      %v1198 = vadd.f32 %v1196, %v1197
      %v1199 = vsel %vm813, %v1076, 0.0
      %v1200 = vadd.f32 %v1198, %v1199
      %v1201 = vsel %vm813, %v1077, 0.0
      %v1202 = vadd.f32 %v1200, %v1201
      %v1203 = vsel %vm813, %v1078, 0.0
      %v1204 = vadd.f32 %v1202, %v1203
      %v1205 = vsel %vm813, %v1079, 0.0
      %v1206 = vadd.f32 %v1204, %v1205
      %v1207 = vrot.slane %v1206, 4
      %v1208 = vadd.f32 %v1206, %v1207
      %v1209 = vrot.slane %v1208, 2
      %v1210 = vadd.f32 %v1208, %v1209
      %v1211 = vrot.slane %v1210, 1
      %v1212 = vadd.f32 %v1210, %v1211
      %v1213 = vadd.f32 %v1015, %v1212
      %1214 = vst.msk [vmem:[%s4] sm:$0x1] %vm1013, %v1213
      %s1215 = smul.u32 64, %s16
      %p1216 = scmp.lt.s32.totalorder %s1215, 255
      %s1217 = scalar_select %p1216, %s1215, 255
      %s1218 = smul.addr %s1217, 8
      %s1219 = scalar_lea.vmem %s2, %s1218
      // Predicated region
      $region33: #{discriminator_forward.9} parent=27 // pred_check
        %p1220 = pneg %p81
      $region34: #{discriminator_forward.9} parent=27 // pred_check_branch
        %1222 = sbr.rel (%p1220) target = $region36
      $region35: #{discriminator_forward.9} parent=27 // pred_region
        %s1223 = smul.u32 64, %s16
      $region36: #{discriminator_forward.9} parent=27 // pred_fallthru
        _
      // Predicated region
      $region37: #{discriminator_forward.9} parent=27 // pred_check
        %p1224 = pneg %p102
      $region38: #{discriminator_forward.9} parent=27 // pred_check_branch
        %1226 = sbr.rel (%p1224) target = $region40
      $region39: #{discriminator_forward.9} parent=27 // pred_region
        _
      $region40: #{discriminator_forward.9} parent=27 // pred_fallthru
        _
      // Predicated region
      $region41: #{discriminator_forward.9} parent=27 // pred_check
        %p1227 = pneg %p123
      $region42: #{discriminator_forward.9} parent=27 // pred_check_branch
        %1229 = sbr.rel (%p1227) target = $region44
      $region43: #{discriminator_forward.9} parent=27 // pred_region
        _
      $region44: #{discriminator_forward.9} parent=27 // pred_fallthru
        _
      // Predicated region
      $region45: #{discriminator_forward.9} parent=27 // pred_check
        %p1230 = pneg %p102
      $region46: #{discriminator_forward.9} parent=27 // pred_check_branch
        %1232 = sbr.rel (%p1230) target = $region48
      $region47: #{discriminator_forward.9} parent=27 // pred_region
        _
      $region48: #{discriminator_forward.9} parent=27 // pred_fallthru
        _
      // Predicated region
      $region49: #{discriminator_forward.9} parent=27 // pred_check
        %p1233 = pneg %p123
      $region50: #{discriminator_forward.9} parent=27 // pred_check_branch
        %1235 = sbr.rel (%p1233) target = $region52
      $region51: #{discriminator_forward.9} parent=27 // pred_region
        _
      $region52: #{discriminator_forward.9} parent=27 // pred_fallthru
        _
    $region28: #{discriminator_forward.9} parent=5 // pred_fallthru
      _
    %p1236 = scmp.le.s32.totalorder 2, %s11
    // Predicated region
    $region53: #{discriminator_forward.9} parent=5 // pred_check
      %p1237 = pneg %p1236
    $region54: #{discriminator_forward.9} parent=5 // pred_check_branch
      %1239 = sbr.rel (%p1237) target = $region56
    $region55: #{discriminator_forward.9} parent=5 // pred_region
      %s1240 = ssub.s32 %s11, 2
      // Predicated region
      $region57: #{discriminator_forward.9} parent=55 // pred_check
        %p1241 = pneg %p87
      $region58: #{discriminator_forward.9} parent=55 // pred_check_branch
        %1243 = sbr.rel (%p1241) target = $region60
      $region59: #{discriminator_forward.9} parent=55 // pred_region
        %s1244 = smul.u32 64, %s17
        %p1245 = scmp.lt.s32.totalorder %s1244, 255
        %s1246 = scalar_select %p1245, %s1244, 255
        %s1247 = smul.addr %s1246, 8
        %s1248 = scalar_lea.vmem %s2, %s1247
      $region60: #{discriminator_forward.9} parent=55 // pred_fallthru
        _
    $region56: #{discriminator_forward.9} parent=5 // pred_fallthru
      _
  $region6: #{discriminator_forward.9} parent=0 // loop_footer
    %s15 = sadd.s32 1, %s11
  $region7: #{discriminator_forward.9} parent=0 // loop_footer_branch
    %10 = sbr.rel target = $region3
  $region8: #{discriminator_forward.9} parent=0 // loop_exit
    _

// kernel: discriminator_forward.10
$region0: #{discriminator_forward.10}
  #allocation0 [shape = 'u32[]', space=smem, size = 0x4, offset = 0x4, fixed_abs, tag = 'smem constant byte address 0x4 - core index']
  #allocation1 [shape = 'u32[144,128]{1,0:T(1,128)}', space=vmem, size = 0x12000, scoped, tag = 'internal scratch']
  %s0 = inlined_call_operand.vmem [shape: f32[2048,16], index: 0, kind: input, shape index: {}]
  %s1 = inlined_call_operand.vmem [shape: f32[1,16], index: 1, kind: input, shape index: {}]
  %s2 = inlined_call_operand.vmem [shape: f32[1,16], index: 2, kind: input, shape index: {}]
  %s3 = inlined_call_operand.vmem [shape: bf16[2048,16], index: 3, kind: output, shape index: {}]
  %s4 = sld [smem:[#allocation0]]
  $region45: #{discriminator_forward.10} parent=0
    _
  %s6 = ssub.s32 1, %s4
  %s7 = scalar_select 0, %s6, %s4
  loop: start=0, step=1, limit=6
  $region2: #{discriminator_forward.10} parent=0 // loop_pre_header
    _
  $region3: #{discriminator_forward.10} parent=0 // loop_header
    %s9 = sphi 0, %s13
    %p10 = scmp.ge.s32.totalorder %s9, 6
    %s19 = sphi 0, %s21
    %s22 = sphi 0, %s19
    %s23 = sphi 0, %s22
    %s39 = sphi 0, %s23
    %s43 = sphi 0, %s43
    %s45 = sphi 0, %s43
    %s46 = sphi 0, %s45
    %s60 = sphi 0, %s46
    %s64 = sphi 0, %s64
    %s66 = sphi 0, %s64
    %s67 = sphi 0, %s66
    %s81 = sphi 0, %s67
    %s87 = sphi 0, %s89
    %s90 = sphi 0, %s87
    %s91 = sphi 0, %s90
    %s107 = sphi 0, %s91
  $region4: #{discriminator_forward.10} parent=0 // loop_header_branch
    %12 = sbr.rel (%p10) target = $region8
  $region5: #{discriminator_forward.10} parent=0 // loop_body
    %s14 = ssub.s32 %s9, 1
    %s15 = ssub.s32 %s9, 2
    %s16 = sadd.s32 %s9, 1
    %s17 = ssub.s32 %s9, %s16
    %p18 = scmp.eq.s32.totalorder %s17, 0
    %s20 = sadd.s32 %s19, 1
    %s21 = scalar_select %p18, %s19, %s20
    %p24 = pneg %p18
    %p25 = scmp.eq.s32.totalorder %s9, 3
    %p26 = por %p24, %p25
    %p27 = scmp.ne.s32.totalorder %s19, %s22
    %p28 = scmp.eq.s32.totalorder %s9, 0
    %p29 = por %p27, %p28
    %p30 = scmp.ne.s32.totalorder %s19, %s22
    %p31 = scmp.eq.s32.totalorder %s14, 3
    %p32 = por %p30, %p31
    %p33 = scmp.ne.s32.totalorder %s22, %s23
    %p34 = scmp.eq.s32.totalorder %s14, 0
    %p35 = por %p33, %p34
    %p36 = scmp.ne.s32.totalorder %s22, %s23
    %p37 = scmp.eq.s32.totalorder %s15, 3
    %p38 = por %p36, %p37
    %p40 = scmp.ne.s32.totalorder %s23, %s39
    %p41 = scmp.eq.s32.totalorder %s15, 0
    %p42 = por %p40, %p41
    %s44 = sadd.s32 %s43, 1
    %p47 = scmp.eq.s32.totalorder %s9, 3
    %p48 = scmp.ne.s32.totalorder %s43, %s45
    %p49 = scmp.eq.s32.totalorder %s9, 0
    %p50 = por %p48, %p49
    %p51 = scmp.ne.s32.totalorder %s43, %s45
    %p52 = scmp.eq.s32.totalorder %s14, 3
    %p53 = por %p51, %p52
    %p54 = scmp.ne.s32.totalorder %s45, %s46
    %p55 = scmp.eq.s32.totalorder %s14, 0
    %p56 = por %p54, %p55
    %p57 = scmp.ne.s32.totalorder %s45, %s46
    %p58 = scmp.eq.s32.totalorder %s15, 3
    %p59 = por %p57, %p58
    %p61 = scmp.ne.s32.totalorder %s46, %s60
    %p62 = scmp.eq.s32.totalorder %s15, 0
    %p63 = por %p61, %p62
    %s65 = sadd.s32 %s64, 1
    %p68 = scmp.eq.s32.totalorder %s9, 3
    %p69 = scmp.ne.s32.totalorder %s64, %s66
    %p70 = scmp.eq.s32.totalorder %s9, 0
    %p71 = por %p69, %p70
    %p72 = scmp.ne.s32.totalorder %s64, %s66
    %p73 = scmp.eq.s32.totalorder %s14, 3
    %p74 = por %p72, %p73
    %p75 = scmp.ne.s32.totalorder %s66, %s67
    %p76 = scmp.eq.s32.totalorder %s14, 0
    %p77 = por %p75, %p76
    %p78 = scmp.ne.s32.totalorder %s66, %s67
    %p79 = scmp.eq.s32.totalorder %s15, 3
    %p80 = por %p78, %p79
    %p82 = scmp.ne.s32.totalorder %s67, %s81
    %p83 = scmp.eq.s32.totalorder %s15, 0
    %p84 = por %p82, %p83
    %s85 = ssub.s32 %s9, %s16
    %p86 = scmp.eq.s32.totalorder %s85, 0
    %s88 = sadd.s32 %s87, 1
    %s89 = scalar_select %p86, %s87, %s88
    %p92 = pneg %p86
    %p93 = scmp.eq.s32.totalorder %s9, 3
    %p94 = por %p92, %p93
    %p95 = scmp.ne.s32.totalorder %s87, %s90
    %p96 = scmp.eq.s32.totalorder %s9, 0
    %p97 = por %p95, %p96
    %p98 = scmp.ne.s32.totalorder %s87, %s90
    %p99 = scmp.eq.s32.totalorder %s14, 3
    %p100 = por %p98, %p99
    %p101 = scmp.ne.s32.totalorder %s90, %s91
    %p102 = scmp.eq.s32.totalorder %s14, 0
    %p103 = por %p101, %p102
    %p104 = scmp.ne.s32.totalorder %s90, %s91
    %p105 = scmp.eq.s32.totalorder %s15, 3
    %p106 = por %p104, %p105
    %p108 = scmp.ne.s32.totalorder %s91, %s107
    %p109 = scmp.eq.s32.totalorder %s15, 0
    %p110 = por %p108, %p109
    %p111 = scmp.le.s32.totalorder 1, %s9
    %p112 = scmp.lt.s32.totalorder %s9, 5
    %p113 = pnand %p111, %p112
    %p114 = pneg %p113
    // Predicated region
    $region9: #{discriminator_forward.10} parent=5 // pred_check
      _
    $region10: #{discriminator_forward.10} parent=5 // pred_check_branch
      %116 = sbr.rel (%p113) target = $region12
    $region11: #{discriminator_forward.10} parent=5 // pred_region
      %s117 = ssub.s32 %s9, 1
      // Predicated region
      $region13: #{discriminator_forward.10} parent=11 // pred_check
        %p118 = pneg %p56
      $region14: #{discriminator_forward.10} parent=11 // pred_check_branch
        %120 = sbr.rel (%p118) target = $region16
      $region15: #{discriminator_forward.10} parent=11 // pred_region
        _
      $region16: #{discriminator_forward.10} parent=11 // pred_fallthru
        _
      // Predicated region
      $region17: #{discriminator_forward.10} parent=11 // pred_check
        %p121 = pneg %p77
      $region18: #{discriminator_forward.10} parent=11 // pred_check_branch
        %123 = sbr.rel (%p121) target = $region20
      $region19: #{discriminator_forward.10} parent=11 // pred_region
        _
      $region20: #{discriminator_forward.10} parent=11 // pred_fallthru
        _
    $region12: #{discriminator_forward.10} parent=5 // pred_fallthru
      _
    %p124 = scmp.lt.s32.totalorder %s9, 4
    // Predicated region
    $region21: #{discriminator_forward.10} parent=5 // pred_check
      %p125 = pneg %p124
    $region22: #{discriminator_forward.10} parent=5 // pred_check_branch
      %127 = sbr.rel (%p125) target = $region24
    $region23: #{discriminator_forward.10} parent=5 // pred_region
      // Predicated region
      $region25: #{discriminator_forward.10} parent=23 // pred_check
        %p128 = pneg %p29
      $region26: #{discriminator_forward.10} parent=23 // pred_check_branch
        %130 = sbr.rel (%p128) target = $region28
      $region27: #{discriminator_forward.10} parent=23 // pred_region
        %s131 = smul.u32 64, %s9
        %p132 = scmp.lt.s32.totalorder %s131, 255
        %s133 = scalar_select %p132, %s131, 255
        %s134 = smul.addr %s133, 8
        %s135 = scalar_lea.vmem %s0, %s134
        %s136 = smul.u32 64, %s9
      $region28: #{discriminator_forward.10} parent=23 // pred_fallthru
        _
    $region24: #{discriminator_forward.10} parent=5 // pred_fallthru
      _
    %p137 = scmp.le.s32.totalorder 1, %s9
    %p138 = scmp.lt.s32.totalorder %s9, 5
    %p139 = pnand %p137, %p138
    %p140 = pneg %p139
    // Predicated region
    $region29: #{discriminator_forward.10} parent=5 // pred_check
      _
    $region30: #{discriminator_forward.10} parent=5 // pred_check_branch
      %142 = sbr.rel (%p139) target = $region32
    $region31: #{discriminator_forward.10} parent=5 // pred_region
      %s143 = ssub.s32 %s9, 1
      %s144 = smul.u32 64, %s14
      %p145 = scmp.lt.s32.totalorder %s144, 255
      %s146 = scalar_select %p145, %s144, 255
      %s147 = smul.addr %s146, 8
      %s148 = scalar_lea.vmem %s0, %s147
      %p149 = pneg %p35
      %p150 = pneg %p32
      %p151 = pneg %p56
      %p152 = pneg %p53
      %p153 = pneg %p77
      %p154 = pneg %p74
      %p155 = pneg %p103
      %p156 = pneg %p100
      %s157 = smul.u32 64, %s14
      %p158 = scmp.lt.s32.totalorder %s157, 255
      %s159 = scalar_select %p158, %s157, 255
      %s160 = smul.addr %s159, 4
      %s161 = scalar_lea.vmem %s3, %s160
      %s162 = smul.u32 64, %s14
      %p163 = scmp.lt.s32.totalorder %s162, 255
      %s164 = scalar_select %p163, %s162, 255
      %s165 = smul.addr %s164, 8
      %s166 = scalar_lea.vmem %s0, %s165
      %s167 = smul.u32 64, %s14
      %s168 = smul.u32 64, %s14
      %p169 = scmp.lt.s32.totalorder %s168, 255
      %s170 = scalar_select %p169, %s168, 255
      %s171 = smul.addr %s170, 4
      %s172 = scalar_lea.vmem %s3, %s171
      %s173 = smul.u32 64, %s14
      %v174 = vld [vmem:[%s166] sm:$0xff]
      %v175 = vld [vmem:[%s166 + $0x8] sm:$0xff]
      %v176 = vld [vmem:[%s166 + $0x10] sm:$0xff]
      %v177 = vld [vmem:[%s166 + $0x18] sm:$0xff]
      %v178 = vld [vmem:[%s166 + $0x20] sm:$0xff]
      %v179 = vld [vmem:[%s166 + $0x28] sm:$0xff]
      %v180 = vld [vmem:[%s166 + $0x30] sm:$0xff]
      %v181 = vld [vmem:[%s166 + $0x38] sm:$0xff]
      %v182 = vld [vmem:[%s166 + $0x40] sm:$0xff]
      %v183 = vld [vmem:[%s166 + $0x48] sm:$0xff]
      %v184 = vld [vmem:[%s166 + $0x50] sm:$0xff]
      %v185 = vld [vmem:[%s166 + $0x58] sm:$0xff]
      %v186 = vld [vmem:[%s166 + $0x60] sm:$0xff]
      %v187 = vld [vmem:[%s166 + $0x68] sm:$0xff]
      %v188 = vld [vmem:[%s166 + $0x70] sm:$0xff]
      %v189 = vld [vmem:[%s166 + $0x78] sm:$0xff]
      %v190 = vld [vmem:[%s166 + $0x80] sm:$0xff]
      %v191 = vld [vmem:[%s166 + $0x88] sm:$0xff]
      %v192 = vld [vmem:[%s166 + $0x90] sm:$0xff]
      %v193 = vld [vmem:[%s166 + $0x98] sm:$0xff]
      %v194 = vld [vmem:[%s166 + $0xa0] sm:$0xff]
      %v195 = vld [vmem:[%s166 + $0xa8] sm:$0xff]
      %v196 = vld [vmem:[%s166 + $0xb0] sm:$0xff]
      %v197 = vld [vmem:[%s166 + $0xb8] sm:$0xff]
      %v198 = vld [vmem:[%s166 + $0xc0] sm:$0xff]
      %v199 = vld [vmem:[%s166 + $0xc8] sm:$0xff]
      %v200 = vld [vmem:[%s166 + $0xd0] sm:$0xff]
      %v201 = vld [vmem:[%s166 + $0xd8] sm:$0xff]
      %v202 = vld [vmem:[%s166 + $0xe0] sm:$0xff]
      %v203 = vld [vmem:[%s166 + $0xe8] sm:$0xff]
      %v204 = vld [vmem:[%s166 + $0xf0] sm:$0xff]
      %v205 = vld [vmem:[%s166 + $0xf8] sm:$0xff]
      %v206 = vld [vmem:[%s166 + $0x100] sm:$0xff]
      %v207 = vld [vmem:[%s166 + $0x108] sm:$0xff]
      %v208 = vld [vmem:[%s166 + $0x110] sm:$0xff]
      %v209 = vld [vmem:[%s166 + $0x118] sm:$0xff]
      %v210 = vld [vmem:[%s166 + $0x120] sm:$0xff]
      %v211 = vld [vmem:[%s166 + $0x128] sm:$0xff]
      %v212 = vld [vmem:[%s166 + $0x130] sm:$0xff]
      %v213 = vld [vmem:[%s166 + $0x138] sm:$0xff]
      %v214 = vld [vmem:[%s166 + $0x140] sm:$0xff]
      %v215 = vld [vmem:[%s166 + $0x148] sm:$0xff]
      %v216 = vld [vmem:[%s166 + $0x150] sm:$0xff]
      %v217 = vld [vmem:[%s166 + $0x158] sm:$0xff]
      %v218 = vld [vmem:[%s166 + $0x160] sm:$0xff]
      %v219 = vld [vmem:[%s166 + $0x168] sm:$0xff]
      %v220 = vld [vmem:[%s166 + $0x170] sm:$0xff]
      %v221 = vld [vmem:[%s166 + $0x178] sm:$0xff]
      %v222 = vld [vmem:[%s166 + $0x180] sm:$0xff]
      %v223 = vld [vmem:[%s166 + $0x188] sm:$0xff]
      %v224 = vld [vmem:[%s166 + $0x190] sm:$0xff]
      %v225 = vld [vmem:[%s166 + $0x198] sm:$0xff]
      %v226 = vld [vmem:[%s166 + $0x1a0] sm:$0xff]
      %v227 = vld [vmem:[%s166 + $0x1a8] sm:$0xff]
      %v228 = vld [vmem:[%s166 + $0x1b0] sm:$0xff]
      %v229 = vld [vmem:[%s166 + $0x1b8] sm:$0xff]
      %v230 = vld [vmem:[%s166 + $0x1c0] sm:$0xff]
      %v231 = vld [vmem:[%s166 + $0x1c8] sm:$0xff]
      %v232 = vld [vmem:[%s166 + $0x1d0] sm:$0xff]
      %v233 = vld [vmem:[%s166 + $0x1d8] sm:$0xff]
      %v234 = vld [vmem:[%s166 + $0x1e0] sm:$0xff]
      %v235 = vld [vmem:[%s166 + $0x1e8] sm:$0xff]
      %v236 = vld [vmem:[%s166 + $0x1f0] sm:$0xff]
      %v237 = vld [vmem:[%s166 + $0x1f8] sm:$0xff]
      %v238 = vld [vmem:[%s1] sm:$0x1]
      %v240 = vlaneseq
      %v241 = vshrl.u32 %v240, 7
      %v242 = vsub.s32 0, %v241
      %v243 = vrot.slane %v238, %v242
      %v245 = vmul.f32 %v174, %v243
      %v246 = vmul.f32 %v175, %v243
      %v247 = vmul.f32 %v176, %v243
      %v248 = vmul.f32 %v177, %v243
      %v249 = vmul.f32 %v178, %v243
      %v250 = vmul.f32 %v179, %v243
      %v251 = vmul.f32 %v180, %v243
      %v252 = vmul.f32 %v181, %v243
      %v253 = vmul.f32 %v182, %v243
      %v254 = vmul.f32 %v183, %v243
      %v255 = vmul.f32 %v184, %v243
      %v256 = vmul.f32 %v185, %v243
      %v257 = vmul.f32 %v186, %v243
      %v258 = vmul.f32 %v187, %v243
      %v259 = vmul.f32 %v188, %v243
      %v260 = vmul.f32 %v189, %v243
      %v261 = vmul.f32 %v190, %v243
      %v262 = vmul.f32 %v191, %v243
      %v263 = vmul.f32 %v192, %v243
      %v264 = vmul.f32 %v193, %v243
      %v265 = vmul.f32 %v194, %v243
      %v266 = vmul.f32 %v195, %v243
      %v267 = vmul.f32 %v196, %v243
      %v268 = vmul.f32 %v197, %v243
      %v269 = vmul.f32 %v198, %v243
      %v270 = vmul.f32 %v199, %v243
      %v271 = vmul.f32 %v200, %v243
      %v272 = vmul.f32 %v201, %v243
      %v273 = vmul.f32 %v202, %v243
      %v274 = vmul.f32 %v203, %v243
      %v275 = vmul.f32 %v204, %v243
      %v276 = vmul.f32 %v205, %v243
      %v277 = vmul.f32 %v206, %v243
      %v278 = vmul.f32 %v207, %v243
      %v279 = vmul.f32 %v208, %v243
      %v280 = vmul.f32 %v209, %v243
      %v281 = vmul.f32 %v210, %v243
      %v282 = vmul.f32 %v211, %v243
      %v283 = vmul.f32 %v212, %v243
      %v284 = vmul.f32 %v213, %v243
      %v285 = vmul.f32 %v214, %v243
      %v286 = vmul.f32 %v215, %v243
      %v287 = vmul.f32 %v216, %v243
      %v288 = vmul.f32 %v217, %v243
      %v289 = vmul.f32 %v218, %v243
      %v290 = vmul.f32 %v219, %v243
      %v291 = vmul.f32 %v220, %v243
      %v292 = vmul.f32 %v221, %v243
      %v293 = vmul.f32 %v222, %v243
      %v294 = vmul.f32 %v223, %v243
      %v295 = vmul.f32 %v224, %v243
      %v296 = vmul.f32 %v225, %v243
      %v297 = vmul.f32 %v226, %v243
      %v298 = vmul.f32 %v227, %v243
      %v299 = vmul.f32 %v228, %v243
      %v300 = vmul.f32 %v229, %v243
      %v301 = vmul.f32 %v230, %v243
      %v302 = vmul.f32 %v231, %v243
      %v303 = vmul.f32 %v232, %v243
      %v304 = vmul.f32 %v233, %v243
      %v305 = vmul.f32 %v234, %v243
      %v306 = vmul.f32 %v235, %v243
      %v307 = vmul.f32 %v236, %v243
      %v308 = vmul.f32 %v237, %v243
      %v309 = vld [vmem:[%s2] sm:$0x1]
      %v311 = vlaneseq
      %v312 = vshrl.u32 %v311, 7
      %v313 = vsub.s32 0, %v312
      %v314 = vrot.slane %v309, %v313
      %v316 = vadd.f32 %v245, %v314
      %v317 = vadd.f32 %v246, %v314
      %v318 = vadd.f32 %v247, %v314
      %v319 = vadd.f32 %v248, %v314
      %v320 = vadd.f32 %v249, %v314
      %v321 = vadd.f32 %v250, %v314
      %v322 = vadd.f32 %v251, %v314
      %v323 = vadd.f32 %v252, %v314
      %v324 = vadd.f32 %v253, %v314
      %v325 = vadd.f32 %v254, %v314
      %v326 = vadd.f32 %v255, %v314
      %v327 = vadd.f32 %v256, %v314
      %v328 = vadd.f32 %v257, %v314
      %v329 = vadd.f32 %v258, %v314
      %v330 = vadd.f32 %v259, %v314
      %v331 = vadd.f32 %v260, %v314
      %v332 = vadd.f32 %v261, %v314
      %v333 = vadd.f32 %v262, %v314
      %v334 = vadd.f32 %v263, %v314
      %v335 = vadd.f32 %v264, %v314
      %v336 = vadd.f32 %v265, %v314
      %v337 = vadd.f32 %v266, %v314
      %v338 = vadd.f32 %v267, %v314
      %v339 = vadd.f32 %v268, %v314
      %v340 = vadd.f32 %v269, %v314
      %v341 = vadd.f32 %v270, %v314
      %v342 = vadd.f32 %v271, %v314
      %v343 = vadd.f32 %v272, %v314
      %v344 = vadd.f32 %v273, %v314
      %v345 = vadd.f32 %v274, %v314
      %v346 = vadd.f32 %v275, %v314
      %v347 = vadd.f32 %v276, %v314
      %v348 = vadd.f32 %v277, %v314
      %v349 = vadd.f32 %v278, %v314
      %v350 = vadd.f32 %v279, %v314
      %v351 = vadd.f32 %v280, %v314
      %v352 = vadd.f32 %v281, %v314
      %v353 = vadd.f32 %v282, %v314
      %v354 = vadd.f32 %v283, %v314
      %v355 = vadd.f32 %v284, %v314
      %v356 = vadd.f32 %v285, %v314
      %v357 = vadd.f32 %v286, %v314
      %v358 = vadd.f32 %v287, %v314
      %v359 = vadd.f32 %v288, %v314
      %v360 = vadd.f32 %v289, %v314
      %v361 = vadd.f32 %v290, %v314
      %v362 = vadd.f32 %v291, %v314
      %v363 = vadd.f32 %v292, %v314
      %v364 = vadd.f32 %v293, %v314
      %v365 = vadd.f32 %v294, %v314
      %v366 = vadd.f32 %v295, %v314
      %v367 = vadd.f32 %v296, %v314
      %v368 = vadd.f32 %v297, %v314
      %v369 = vadd.f32 %v298, %v314
      %v370 = vadd.f32 %v299, %v314
      %v371 = vadd.f32 %v300, %v314
      %v372 = vadd.f32 %v301, %v314
      %v373 = vadd.f32 %v302, %v314
      %v374 = vadd.f32 %v303, %v314
      %v375 = vadd.f32 %v304, %v314
      %v376 = vadd.f32 %v305, %v314
      %v377 = vadd.f32 %v306, %v314
      %v378 = vadd.f32 %v307, %v314
      %v379 = vadd.f32 %v308, %v314
      %vm380 = vcmp.ge.f32.partialorder %v316, 0.0
      %vm381 = vcmp.ge.f32.partialorder %v317, 0.0
      %vm382 = vcmp.ge.f32.partialorder %v318, 0.0
      %vm383 = vcmp.ge.f32.partialorder %v319, 0.0
      %vm384 = vcmp.ge.f32.partialorder %v320, 0.0
      %vm385 = vcmp.ge.f32.partialorder %v321, 0.0
      %vm386 = vcmp.ge.f32.partialorder %v322, 0.0
      %vm387 = vcmp.ge.f32.partialorder %v323, 0.0
      %vm388 = vcmp.ge.f32.partialorder %v324, 0.0
      %vm389 = vcmp.ge.f32.partialorder %v325, 0.0
      %vm390 = vcmp.ge.f32.partialorder %v326, 0.0
      %vm391 = vcmp.ge.f32.partialorder %v327, 0.0
      %vm392 = vcmp.ge.f32.partialorder %v328, 0.0
      %vm393 = vcmp.ge.f32.partialorder %v329, 0.0
      %vm394 = vcmp.ge.f32.partialorder %v330, 0.0
      %vm395 = vcmp.ge.f32.partialorder %v331, 0.0
      %vm396 = vcmp.ge.f32.partialorder %v332, 0.0
      %vm397 = vcmp.ge.f32.partialorder %v333, 0.0
      %vm398 = vcmp.ge.f32.partialorder %v334, 0.0
      %vm399 = vcmp.ge.f32.partialorder %v335, 0.0
      %vm400 = vcmp.ge.f32.partialorder %v336, 0.0
      %vm401 = vcmp.ge.f32.partialorder %v337, 0.0
      %vm402 = vcmp.ge.f32.partialorder %v338, 0.0
      %vm403 = vcmp.ge.f32.partialorder %v339, 0.0
      %vm404 = vcmp.ge.f32.partialorder %v340, 0.0
      %vm405 = vcmp.ge.f32.partialorder %v341, 0.0
      %vm406 = vcmp.ge.f32.partialorder %v342, 0.0
      %vm407 = vcmp.ge.f32.partialorder %v343, 0.0
      %vm408 = vcmp.ge.f32.partialorder %v344, 0.0
      %vm409 = vcmp.ge.f32.partialorder %v345, 0.0
      %vm410 = vcmp.ge.f32.partialorder %v346, 0.0
      %vm411 = vcmp.ge.f32.partialorder %v347, 0.0
      %vm412 = vcmp.ge.f32.partialorder %v348, 0.0
      %vm413 = vcmp.ge.f32.partialorder %v349, 0.0
      %vm414 = vcmp.ge.f32.partialorder %v350, 0.0
      %vm415 = vcmp.ge.f32.partialorder %v351, 0.0
      %vm416 = vcmp.ge.f32.partialorder %v352, 0.0
      %vm417 = vcmp.ge.f32.partialorder %v353, 0.0
      %vm418 = vcmp.ge.f32.partialorder %v354, 0.0
      %vm419 = vcmp.ge.f32.partialorder %v355, 0.0
      %vm420 = vcmp.ge.f32.partialorder %v356, 0.0
      %vm421 = vcmp.ge.f32.partialorder %v357, 0.0
      %vm422 = vcmp.ge.f32.partialorder %v358, 0.0
      %vm423 = vcmp.ge.f32.partialorder %v359, 0.0
      %vm424 = vcmp.ge.f32.partialorder %v360, 0.0
      %vm425 = vcmp.ge.f32.partialorder %v361, 0.0
      %vm426 = vcmp.ge.f32.partialorder %v362, 0.0
      %vm427 = vcmp.ge.f32.partialorder %v363, 0.0
      %vm428 = vcmp.ge.f32.partialorder %v364, 0.0
      %vm429 = vcmp.ge.f32.partialorder %v365, 0.0
      %vm430 = vcmp.ge.f32.partialorder %v366, 0.0
      %vm431 = vcmp.ge.f32.partialorder %v367, 0.0
      %vm432 = vcmp.ge.f32.partialorder %v368, 0.0
      %vm433 = vcmp.ge.f32.partialorder %v369, 0.0
      %vm434 = vcmp.ge.f32.partialorder %v370, 0.0
      %vm435 = vcmp.ge.f32.partialorder %v371, 0.0
      %vm436 = vcmp.ge.f32.partialorder %v372, 0.0
      %vm437 = vcmp.ge.f32.partialorder %v373, 0.0
      %vm438 = vcmp.ge.f32.partialorder %v374, 0.0
      %vm439 = vcmp.ge.f32.partialorder %v375, 0.0
      %vm440 = vcmp.ge.f32.partialorder %v376, 0.0
      %vm441 = vcmp.ge.f32.partialorder %v377, 0.0
      %vm442 = vcmp.ge.f32.partialorder %v378, 0.0
      %vm443 = vcmp.ge.f32.partialorder %v379, 0.0
      %v444 = vmul.f32 %v316, 0.2
      %v445 = vmul.f32 %v317, 0.2
      %v446 = vmul.f32 %v318, 0.2
      %v447 = vmul.f32 %v319, 0.2
      %v448 = vmul.f32 %v320, 0.2
      %v449 = vmul.f32 %v321, 0.2
      %v450 = vmul.f32 %v322, 0.2
      %v451 = vmul.f32 %v323, 0.2
      %v452 = vmul.f32 %v324, 0.2
      %v453 = vmul.f32 %v325, 0.2
      %v454 = vmul.f32 %v326, 0.2
      %v455 = vmul.f32 %v327, 0.2
      %v456 = vmul.f32 %v328, 0.2
      %v457 = vmul.f32 %v329, 0.2
      %v458 = vmul.f32 %v330, 0.2
      %v459 = vmul.f32 %v331, 0.2
      %v460 = vmul.f32 %v332, 0.2
      %v461 = vmul.f32 %v333, 0.2
      %v462 = vmul.f32 %v334, 0.2
      %v463 = vmul.f32 %v335, 0.2
      %v464 = vmul.f32 %v336, 0.2
      %v465 = vmul.f32 %v337, 0.2
      %v466 = vmul.f32 %v338, 0.2
      %v467 = vmul.f32 %v339, 0.2
      %v468 = vmul.f32 %v340, 0.2
      %v469 = vmul.f32 %v341, 0.2
      %v470 = vmul.f32 %v342, 0.2
      %v471 = vmul.f32 %v343, 0.2
      %v472 = vmul.f32 %v344, 0.2
      %v473 = vmul.f32 %v345, 0.2
      %v474 = vmul.f32 %v346, 0.2
      %v475 = vmul.f32 %v347, 0.2
      %v476 = vmul.f32 %v348, 0.2
      %v477 = vmul.f32 %v349, 0.2
      %v478 = vmul.f32 %v350, 0.2
      %v479 = vmul.f32 %v351, 0.2
      %v480 = vmul.f32 %v352, 0.2
      %v481 = vmul.f32 %v353, 0.2
      %v482 = vmul.f32 %v354, 0.2
      %v483 = vmul.f32 %v355, 0.2
      %v484 = vmul.f32 %v356, 0.2
      %v485 = vmul.f32 %v357, 0.2
      %v486 = vmul.f32 %v358, 0.2
      %v487 = vmul.f32 %v359, 0.2
      %v488 = vmul.f32 %v360, 0.2
      %v489 = vmul.f32 %v361, 0.2
      %v490 = vmul.f32 %v362, 0.2
      %v491 = vmul.f32 %v363, 0.2
      %v492 = vmul.f32 %v364, 0.2
      %v493 = vmul.f32 %v365, 0.2
      %v494 = vmul.f32 %v366, 0.2
      %v495 = vmul.f32 %v367, 0.2
      %v496 = vmul.f32 %v368, 0.2
      %v497 = vmul.f32 %v369, 0.2
      %v498 = vmul.f32 %v370, 0.2
      %v499 = vmul.f32 %v371, 0.2
      %v500 = vmul.f32 %v372, 0.2
      %v501 = vmul.f32 %v373, 0.2
      %v502 = vmul.f32 %v374, 0.2
      %v503 = vmul.f32 %v375, 0.2
      %v504 = vmul.f32 %v376, 0.2
      %v505 = vmul.f32 %v377, 0.2
      %v506 = vmul.f32 %v378, 0.2
      %v507 = vmul.f32 %v379, 0.2
      %v508 = vsel %vm380, %v316, %v444
      %v509 = vsel %vm381, %v317, %v445
      %v510 = vsel %vm382, %v318, %v446
      %v511 = vsel %vm383, %v319, %v447
      %v512 = vsel %vm384, %v320, %v448
      %v513 = vsel %vm385, %v321, %v449
      %v514 = vsel %vm386, %v322, %v450
      %v515 = vsel %vm387, %v323, %v451
      %v516 = vsel %vm388, %v324, %v452
      %v517 = vsel %vm389, %v325, %v453
      %v518 = vsel %vm390, %v326, %v454
      %v519 = vsel %vm391, %v327, %v455
      %v520 = vsel %vm392, %v328, %v456
      %v521 = vsel %vm393, %v329, %v457
      %v522 = vsel %vm394, %v330, %v458
      %v523 = vsel %vm395, %v331, %v459
      %v524 = vsel %vm396, %v332, %v460
      %v525 = vsel %vm397, %v333, %v461
      %v526 = vsel %vm398, %v334, %v462
      %v527 = vsel %vm399, %v335, %v463
      %v528 = vsel %vm400, %v336, %v464
      %v529 = vsel %vm401, %v337, %v465
      %v530 = vsel %vm402, %v338, %v466
      %v531 = vsel %vm403, %v339, %v467
      %v532 = vsel %vm404, %v340, %v468
      %v533 = vsel %vm405, %v341, %v469
      %v534 = vsel %vm406, %v342, %v470
      %v535 = vsel %vm407, %v343, %v471
      %v536 = vsel %vm408, %v344, %v472
      %v537 = vsel %vm409, %v345, %v473
      %v538 = vsel %vm410, %v346, %v474
      %v539 = vsel %vm411, %v347, %v475
      %v540 = vsel %vm412, %v348, %v476
      %v541 = vsel %vm413, %v349, %v477
      %v542 = vsel %vm414, %v350, %v478
      %v543 = vsel %vm415, %v351, %v479
      %v544 = vsel %vm416, %v352, %v480
      %v545 = vsel %vm417, %v353, %v481
      %v546 = vsel %vm418, %v354, %v482
      %v547 = vsel %vm419, %v355, %v483
      %v548 = vsel %vm420, %v356, %v484
      %v549 = vsel %vm421, %v357, %v485
      %v550 = vsel %vm422, %v358, %v486
      %v551 = vsel %vm423, %v359, %v487
      %v552 = vsel %vm424, %v360, %v488
      %v553 = vsel %vm425, %v361, %v489
      %v554 = vsel %vm426, %v362, %v490
      %v555 = vsel %vm427, %v363, %v491
      %v556 = vsel %vm428, %v364, %v492
      %v557 = vsel %vm429, %v365, %v493
      %v558 = vsel %vm430, %v366, %v494
      %v559 = vsel %vm431, %v367, %v495
      %v560 = vsel %vm432, %v368, %v496
      %v561 = vsel %vm433, %v369, %v497
      %v562 = vsel %vm434, %v370, %v498
      %v563 = vsel %vm435, %v371, %v499
      %v564 = vsel %vm436, %v372, %v500
      %v565 = vsel %vm437, %v373, %v501
      %v566 = vsel %vm438, %v374, %v502
      %v567 = vsel %vm439, %v375, %v503
      %v568 = vsel %vm440, %v376, %v504
      %v569 = vsel %vm441, %v377, %v505
      %v570 = vsel %vm442, %v378, %v506
      %v571 = vsel %vm443, %v379, %v507
      %v572 = vpack.c.bf16 %v509, %v508
      %v573 = vpack.c.bf16 %v511, %v510
      %v574 = vpack.c.bf16 %v513, %v512
      %v575 = vpack.c.bf16 %v515, %v514
      %v576 = vpack.c.bf16 %v517, %v516
      %v577 = vpack.c.bf16 %v519, %v518
      %v578 = vpack.c.bf16 %v521, %v520
      %v579 = vpack.c.bf16 %v523, %v522
      %v580 = vpack.c.bf16 %v525, %v524
      %v581 = vpack.c.bf16 %v527, %v526
      %v582 = vpack.c.bf16 %v529, %v528
      %v583 = vpack.c.bf16 %v531, %v530
      %v584 = vpack.c.bf16 %v533, %v532
      %v585 = vpack.c.bf16 %v535, %v534
      %v586 = vpack.c.bf16 %v537, %v536
      %v587 = vpack.c.bf16 %v539, %v538
      %v588 = vpack.c.bf16 %v541, %v540
      %v589 = vpack.c.bf16 %v543, %v542
      %v590 = vpack.c.bf16 %v545, %v544
      %v591 = vpack.c.bf16 %v547, %v546
      %v592 = vpack.c.bf16 %v549, %v548
      %v593 = vpack.c.bf16 %v551, %v550
      %v594 = vpack.c.bf16 %v553, %v552
      %v595 = vpack.c.bf16 %v555, %v554
      %v596 = vpack.c.bf16 %v557, %v556
      %v597 = vpack.c.bf16 %v559, %v558
      %v598 = vpack.c.bf16 %v561, %v560
      %v599 = vpack.c.bf16 %v563, %v562
      %v600 = vpack.c.bf16 %v565, %v564
      %v601 = vpack.c.bf16 %v567, %v566
      %v602 = vpack.c.bf16 %v569, %v568
      %v603 = vpack.c.bf16 %v571, %v570
      %v636 = vunpack.c.l.b16 %v572
      %v637 = vunpack.c.h.b16 %v572
      %v638 = vunpack.c.l.b16 %v573
      %v639 = vunpack.c.h.b16 %v573
      %v640 = vunpack.c.l.b16 %v574
      %v641 = vunpack.c.h.b16 %v574
      %v642 = vunpack.c.l.b16 %v575
      %v643 = vunpack.c.h.b16 %v575
      %v644 = vunpack.c.l.b16 %v576
      %v645 = vunpack.c.h.b16 %v576
      %v646 = vunpack.c.l.b16 %v577
      %v647 = vunpack.c.h.b16 %v577
      %v648 = vunpack.c.l.b16 %v578
      %v649 = vunpack.c.h.b16 %v578
      %v650 = vunpack.c.l.b16 %v579
      %v651 = vunpack.c.h.b16 %v579
      %v652 = vunpack.c.l.b16 %v580
      %v653 = vunpack.c.h.b16 %v580
      %v654 = vunpack.c.l.b16 %v581
      %v655 = vunpack.c.h.b16 %v581
      %v656 = vunpack.c.l.b16 %v582
      %v657 = vunpack.c.h.b16 %v582
      %v658 = vunpack.c.l.b16 %v583
      %v659 = vunpack.c.h.b16 %v583
      %v660 = vunpack.c.l.b16 %v584
      %v661 = vunpack.c.h.b16 %v584
      %v662 = vunpack.c.l.b16 %v585
      %v663 = vunpack.c.h.b16 %v585
      %v664 = vunpack.c.l.b16 %v586
      %v665 = vunpack.c.h.b16 %v586
      %v666 = vunpack.c.l.b16 %v587
      %v667 = vunpack.c.h.b16 %v587
      %v668 = vunpack.c.l.b16 %v588
      %v669 = vunpack.c.h.b16 %v588
      %v670 = vunpack.c.l.b16 %v589
      %v671 = vunpack.c.h.b16 %v589
      %v672 = vunpack.c.l.b16 %v590
      %v673 = vunpack.c.h.b16 %v590
      %v674 = vunpack.c.l.b16 %v591
      %v675 = vunpack.c.h.b16 %v591
      %v676 = vunpack.c.l.b16 %v592
      %v677 = vunpack.c.h.b16 %v592
      %v678 = vunpack.c.l.b16 %v593
      %v679 = vunpack.c.h.b16 %v593
      %v680 = vunpack.c.l.b16 %v594
      %v681 = vunpack.c.h.b16 %v594
      %v682 = vunpack.c.l.b16 %v595
      %v683 = vunpack.c.h.b16 %v595
      %v684 = vunpack.c.l.b16 %v596
      %v685 = vunpack.c.h.b16 %v596
      %v686 = vunpack.c.l.b16 %v597
      %v687 = vunpack.c.h.b16 %v597
      %v688 = vunpack.c.l.b16 %v598
      %v689 = vunpack.c.h.b16 %v598
      %v690 = vunpack.c.l.b16 %v599
      %v691 = vunpack.c.h.b16 %v599
      %v692 = vunpack.c.l.b16 %v600
      %v693 = vunpack.c.h.b16 %v600
      %v694 = vunpack.c.l.b16 %v601
      %v695 = vunpack.c.h.b16 %v601
      %v696 = vunpack.c.l.b16 %v602
      %v697 = vunpack.c.h.b16 %v602
      %v698 = vunpack.c.l.b16 %v603
      %v699 = vunpack.c.h.b16 %v603
      %v700 = vpack.c.b16 %v636, %v636
      %v701 = vpack.c.b16 %v637, %v637
      %v702 = vpack.c.b16 %v638, %v638
      %v703 = vpack.c.b16 %v639, %v639
      %v704 = vpack.c.b16 %v640, %v640
      %v705 = vpack.c.b16 %v641, %v641
      %v706 = vpack.c.b16 %v642, %v642
      %v707 = vpack.c.b16 %v643, %v643
      %v708 = vpack.c.b16 %v644, %v644
      %v709 = vpack.c.b16 %v645, %v645
      %v710 = vpack.c.b16 %v646, %v646
      %v711 = vpack.c.b16 %v647, %v647
      %v712 = vpack.c.b16 %v648, %v648
      %v713 = vpack.c.b16 %v649, %v649
      %v714 = vpack.c.b16 %v650, %v650
      %v715 = vpack.c.b16 %v651, %v651
      %v716 = vpack.c.b16 %v652, %v652
      %v717 = vpack.c.b16 %v653, %v653
      %v718 = vpack.c.b16 %v654, %v654
      %v719 = vpack.c.b16 %v655, %v655
      %v720 = vpack.c.b16 %v656, %v656
      %v721 = vpack.c.b16 %v657, %v657
      %v722 = vpack.c.b16 %v658, %v658
      %v723 = vpack.c.b16 %v659, %v659
      %v724 = vpack.c.b16 %v660, %v660
      %v725 = vpack.c.b16 %v661, %v661
      %v726 = vpack.c.b16 %v662, %v662
      %v727 = vpack.c.b16 %v663, %v663
      %v728 = vpack.c.b16 %v664, %v664
      %v729 = vpack.c.b16 %v665, %v665
      %v730 = vpack.c.b16 %v666, %v666
      %v731 = vpack.c.b16 %v667, %v667
      %v732 = vpack.c.b16 %v668, %v668
      %v733 = vpack.c.b16 %v669, %v669
      %v734 = vpack.c.b16 %v670, %v670
      %v735 = vpack.c.b16 %v671, %v671
      %v736 = vpack.c.b16 %v672, %v672
      %v737 = vpack.c.b16 %v673, %v673
      %v738 = vpack.c.b16 %v674, %v674
      %v739 = vpack.c.b16 %v675, %v675
      %v740 = vpack.c.b16 %v676, %v676
      %v741 = vpack.c.b16 %v677, %v677
      %v742 = vpack.c.b16 %v678, %v678
      %v743 = vpack.c.b16 %v679, %v679
      %v744 = vpack.c.b16 %v680, %v680
      %v745 = vpack.c.b16 %v681, %v681
      %v746 = vpack.c.b16 %v682, %v682
      %v747 = vpack.c.b16 %v683, %v683
      %v748 = vpack.c.b16 %v684, %v684
      %v749 = vpack.c.b16 %v685, %v685
      %v750 = vpack.c.b16 %v686, %v686
      %v751 = vpack.c.b16 %v687, %v687
      %v752 = vpack.c.b16 %v688, %v688
      %v753 = vpack.c.b16 %v689, %v689
      %v754 = vpack.c.b16 %v690, %v690
      %v755 = vpack.c.b16 %v691, %v691
      %v756 = vpack.c.b16 %v692, %v692
      %v757 = vpack.c.b16 %v693, %v693
      %v758 = vpack.c.b16 %v694, %v694
      %v759 = vpack.c.b16 %v695, %v695
      %v760 = vpack.c.b16 %v696, %v696
      %v761 = vpack.c.b16 %v697, %v697
      %v762 = vpack.c.b16 %v698, %v698
      %v763 = vpack.c.b16 %v699, %v699
      %vm828 = vcmask 125952
      %829 = vst.msk [vmem:[%s172] sm:$0xf] %vm828, %v700
      %830 = vst.msk [vmem:[%s172 + $0x4] sm:$0xf] %vm828, %v701
      %831 = vst.msk [vmem:[%s172 + $0x8] sm:$0xf] %vm828, %v702
      %832 = vst.msk [vmem:[%s172 + $0xc] sm:$0xf] %vm828, %v703
      %833 = vst.msk [vmem:[%s172 + $0x10] sm:$0xf] %vm828, %v704
      %834 = vst.msk [vmem:[%s172 + $0x14] sm:$0xf] %vm828, %v705
      %835 = vst.msk [vmem:[%s172 + $0x18] sm:$0xf] %vm828, %v706
      %836 = vst.msk [vmem:[%s172 + $0x1c] sm:$0xf] %vm828, %v707
      %837 = vst.msk [vmem:[%s172 + $0x20] sm:$0xf] %vm828, %v708
      %838 = vst.msk [vmem:[%s172 + $0x24] sm:$0xf] %vm828, %v709
      %839 = vst.msk [vmem:[%s172 + $0x28] sm:$0xf] %vm828, %v710
      %840 = vst.msk [vmem:[%s172 + $0x2c] sm:$0xf] %vm828, %v711
      %841 = vst.msk [vmem:[%s172 + $0x30] sm:$0xf] %vm828, %v712
      %842 = vst.msk [vmem:[%s172 + $0x34] sm:$0xf] %vm828, %v713
      %843 = vst.msk [vmem:[%s172 + $0x38] sm:$0xf] %vm828, %v714
      %844 = vst.msk [vmem:[%s172 + $0x3c] sm:$0xf] %vm828, %v715
      %845 = vst.msk [vmem:[%s172 + $0x40] sm:$0xf] %vm828, %v716
      %846 = vst.msk [vmem:[%s172 + $0x44] sm:$0xf] %vm828, %v717
      %847 = vst.msk [vmem:[%s172 + $0x48] sm:$0xf] %vm828, %v718
      %848 = vst.msk [vmem:[%s172 + $0x4c] sm:$0xf] %vm828, %v719
      %849 = vst.msk [vmem:[%s172 + $0x50] sm:$0xf] %vm828, %v720
      %850 = vst.msk [vmem:[%s172 + $0x54] sm:$0xf] %vm828, %v721
      %851 = vst.msk [vmem:[%s172 + $0x58] sm:$0xf] %vm828, %v722
      %852 = vst.msk [vmem:[%s172 + $0x5c] sm:$0xf] %vm828, %v723
      %853 = vst.msk [vmem:[%s172 + $0x60] sm:$0xf] %vm828, %v724
      %854 = vst.msk [vmem:[%s172 + $0x64] sm:$0xf] %vm828, %v725
      %855 = vst.msk [vmem:[%s172 + $0x68] sm:$0xf] %vm828, %v726
      %856 = vst.msk [vmem:[%s172 + $0x6c] sm:$0xf] %vm828, %v727
      %857 = vst.msk [vmem:[%s172 + $0x70] sm:$0xf] %vm828, %v728
      %858 = vst.msk [vmem:[%s172 + $0x74] sm:$0xf] %vm828, %v729
      %859 = vst.msk [vmem:[%s172 + $0x78] sm:$0xf] %vm828, %v730
      %860 = vst.msk [vmem:[%s172 + $0x7c] sm:$0xf] %vm828, %v731
      %861 = vst.msk [vmem:[%s172 + $0x80] sm:$0xf] %vm828, %v732
      %862 = vst.msk [vmem:[%s172 + $0x84] sm:$0xf] %vm828, %v733
      %863 = vst.msk [vmem:[%s172 + $0x88] sm:$0xf] %vm828, %v734
      %864 = vst.msk [vmem:[%s172 + $0x8c] sm:$0xf] %vm828, %v735
      %865 = vst.msk [vmem:[%s172 + $0x90] sm:$0xf] %vm828, %v736
      %866 = vst.msk [vmem:[%s172 + $0x94] sm:$0xf] %vm828, %v737
      %867 = vst.msk [vmem:[%s172 + $0x98] sm:$0xf] %vm828, %v738
      %868 = vst.msk [vmem:[%s172 + $0x9c] sm:$0xf] %vm828, %v739
      %869 = vst.msk [vmem:[%s172 + $0xa0] sm:$0xf] %vm828, %v740
      %870 = vst.msk [vmem:[%s172 + $0xa4] sm:$0xf] %vm828, %v741
      %871 = vst.msk [vmem:[%s172 + $0xa8] sm:$0xf] %vm828, %v742
      %872 = vst.msk [vmem:[%s172 + $0xac] sm:$0xf] %vm828, %v743
      %873 = vst.msk [vmem:[%s172 + $0xb0] sm:$0xf] %vm828, %v744
      %874 = vst.msk [vmem:[%s172 + $0xb4] sm:$0xf] %vm828, %v745
      %875 = vst.msk [vmem:[%s172 + $0xb8] sm:$0xf] %vm828, %v746
      %876 = vst.msk [vmem:[%s172 + $0xbc] sm:$0xf] %vm828, %v747
      %877 = vst.msk [vmem:[%s172 + $0xc0] sm:$0xf] %vm828, %v748
      %878 = vst.msk [vmem:[%s172 + $0xc4] sm:$0xf] %vm828, %v749
      %879 = vst.msk [vmem:[%s172 + $0xc8] sm:$0xf] %vm828, %v750
      %880 = vst.msk [vmem:[%s172 + $0xcc] sm:$0xf] %vm828, %v751
      %881 = vst.msk [vmem:[%s172 + $0xd0] sm:$0xf] %vm828, %v752
      %882 = vst.msk [vmem:[%s172 + $0xd4] sm:$0xf] %vm828, %v753
      %883 = vst.msk [vmem:[%s172 + $0xd8] sm:$0xf] %vm828, %v754
      %884 = vst.msk [vmem:[%s172 + $0xdc] sm:$0xf] %vm828, %v755
      %885 = vst.msk [vmem:[%s172 + $0xe0] sm:$0xf] %vm828, %v756
      %886 = vst.msk [vmem:[%s172 + $0xe4] sm:$0xf] %vm828, %v757
      %887 = vst.msk [vmem:[%s172 + $0xe8] sm:$0xf] %vm828, %v758
      %888 = vst.msk [vmem:[%s172 + $0xec] sm:$0xf] %vm828, %v759
      %889 = vst.msk [vmem:[%s172 + $0xf0] sm:$0xf] %vm828, %v760
      %890 = vst.msk [vmem:[%s172 + $0xf4] sm:$0xf] %vm828, %v761
      %891 = vst.msk [vmem:[%s172 + $0xf8] sm:$0xf] %vm828, %v762
      %892 = vst.msk [vmem:[%s172 + $0xfc] sm:$0xf] %vm828, %v763
      %s893 = smul.u32 64, %s14
      %p894 = scmp.lt.s32.totalorder %s893, 255
      %s895 = scalar_select %p894, %s893, 255
      %s896 = smul.addr %s895, 4
      %s897 = scalar_lea.vmem %s3, %s896
      // Predicated region
      $region33: #{discriminator_forward.10} parent=31 // pred_check
        %p898 = pneg %p100
      $region34: #{discriminator_forward.10} parent=31 // pred_check_branch
        %900 = sbr.rel (%p898) target = $region36
      $region35: #{discriminator_forward.10} parent=31 // pred_region
        %s901 = smul.u32 64, %s14
      $region36: #{discriminator_forward.10} parent=31 // pred_fallthru
        _
    $region32: #{discriminator_forward.10} parent=5 // pred_fallthru
      _
    %p902 = scmp.le.s32.totalorder 2, %s9
    // Predicated region
    $region37: #{discriminator_forward.10} parent=5 // pred_check
      %p903 = pneg %p902
    $region38: #{discriminator_forward.10} parent=5 // pred_check_branch
      %905 = sbr.rel (%p903) target = $region40
    $region39: #{discriminator_forward.10} parent=5 // pred_region
      %s906 = ssub.s32 %s9, 2
      // Predicated region
      $region41: #{discriminator_forward.10} parent=39 // pred_check
        %p907 = pneg %p106
      $region42: #{discriminator_forward.10} parent=39 // pred_check_branch
        %909 = sbr.rel (%p907) target = $region44
      $region43: #{discriminator_forward.10} parent=39 // pred_region
        %s910 = smul.u32 64, %s15
        %p911 = scmp.lt.s32.totalorder %s910, 255
        %s912 = scalar_select %p911, %s910, 255
        %s913 = smul.addr %s912, 4
        %s914 = scalar_lea.vmem %s3, %s913
      $region44: #{discriminator_forward.10} parent=39 // pred_fallthru
        _
    $region40: #{discriminator_forward.10} parent=5 // pred_fallthru
      _
  $region6: #{discriminator_forward.10} parent=0 // loop_footer
    %s13 = sadd.s32 1, %s9
  $region7: #{discriminator_forward.10} parent=0 // loop_footer_branch
    %8 = sbr.rel target = $region3
  $region8: #{discriminator_forward.10} parent=0 // loop_exit
    _

// kernel: discriminator_forward.11
$region0: #{discriminator_forward.11}
  #allocation0 [shape = 'u32[]', space=smem, size = 0x4, offset = 0x4, fixed_abs, tag = 'smem constant byte address 0x4 - core index']
  #allocation1 [shape = 'u32[144,128]{1,0:T(1,128)}', space=vmem, size = 0x12000, scoped, tag = 'internal scratch']
  %s0 = inlined_call_operand.vmem [shape: bf16[512,256], index: 0, kind: input, shape index: {}]
  %s1 = inlined_call_operand.vmem [shape: bf16[256,32], index: 1, kind: input, shape index: {}]
  %s2 = inlined_call_operand.vmem [shape: f32[512,32], index: 2, kind: output, shape index: {0}]
  %s3 = inlined_call_operand.vmem [shape: f32[1,32], index: 3, kind: output, shape index: {1}]
  %s4 = inlined_call_operand.vmem [shape: f32[1,32], index: 4, kind: output, shape index: {2}]
  %5 = xla_tuple %s2, %s3, %s4
  %s6 = sld [smem:[#allocation0]]
  $region38: #{discriminator_forward.11} parent=0
    _
  %s8 = ssub.s32 1, %s6
  %s9 = scalar_select 0, %s8, %s6
  // Predicated region
  $region2: #{discriminator_forward.11} parent=0 // pred_check
    _
  $region3: #{discriminator_forward.11} parent=0 // pred_check_branch
    %11 = sbr.rel (0) target = $region5
  $region4: #{discriminator_forward.11} parent=0 // pred_region
    _
  $region5: #{discriminator_forward.11} parent=0 // pred_fallthru
    _
  // Predicated region
  $region6: #{discriminator_forward.11} parent=0 // pred_check
    _
  $region7: #{discriminator_forward.11} parent=0 // pred_check_branch
    %13 = sbr.rel (0) target = $region9
  $region8: #{discriminator_forward.11} parent=0 // pred_region
    _
  $region9: #{discriminator_forward.11} parent=0 // pred_fallthru
    _
  %p15 = scmp.eq.s32.totalorder 0, 0
  // Predicated region
  $region10: #{discriminator_forward.11} parent=0 // pred_check
    %p16 = pneg %p15
  $region11: #{discriminator_forward.11} parent=0 // pred_check_branch
    %18 = sbr.rel (%p16) target = $region13
  $region12: #{discriminator_forward.11} parent=0 // pred_region
    %vm19 = vcmask 253952
    %20 = vst.msk [vmem:[%s3] sm:$0x1] %vm19, 0.0
    %21 = vst.msk [vmem:[%s4] sm:$0x1] %vm19, 0.0
  $region13: #{discriminator_forward.11} parent=0 // pred_fallthru
    _
  %v22 = vld [vmem:[%s0] sm:$0xff]
  %v23 = vld [vmem:[%s0 + $0x8] sm:$0xff]
  %v24 = vld [vmem:[%s0 + $0x10] sm:$0xff]
  %v25 = vld [vmem:[%s0 + $0x18] sm:$0xff]
  %v26 = vld [vmem:[%s0 + $0x20] sm:$0xff]
  %v27 = vld [vmem:[%s0 + $0x28] sm:$0xff]
  %v28 = vld [vmem:[%s0 + $0x30] sm:$0xff]
  %v29 = vld [vmem:[%s0 + $0x38] sm:$0xff]
  %v30 = vld [vmem:[%s0 + $0x40] sm:$0xff]
  %v31 = vld [vmem:[%s0 + $0x48] sm:$0xff]
  %v32 = vld [vmem:[%s0 + $0x50] sm:$0xff]
  %v33 = vld [vmem:[%s0 + $0x58] sm:$0xff]
  %v34 = vld [vmem:[%s0 + $0x60] sm:$0xff]
  %v35 = vld [vmem:[%s0 + $0x68] sm:$0xff]
  %v36 = vld [vmem:[%s0 + $0x70] sm:$0xff]
  %v37 = vld [vmem:[%s0 + $0x78] sm:$0xff]
  %v38 = vld [vmem:[%s0 + $0x80] sm:$0xff]
  %v39 = vld [vmem:[%s0 + $0x88] sm:$0xff]
  %v40 = vld [vmem:[%s0 + $0x90] sm:$0xff]
  %v41 = vld [vmem:[%s0 + $0x98] sm:$0xff]
  %v42 = vld [vmem:[%s0 + $0xa0] sm:$0xff]
  %v43 = vld [vmem:[%s0 + $0xa8] sm:$0xff]
  %v44 = vld [vmem:[%s0 + $0xb0] sm:$0xff]
  %v45 = vld [vmem:[%s0 + $0xb8] sm:$0xff]
  %v46 = vld [vmem:[%s0 + $0xc0] sm:$0xff]
  %v47 = vld [vmem:[%s0 + $0xc8] sm:$0xff]
  %v48 = vld [vmem:[%s0 + $0xd0] sm:$0xff]
  %v49 = vld [vmem:[%s0 + $0xd8] sm:$0xff]
  %v50 = vld [vmem:[%s0 + $0xe0] sm:$0xff]
  %v51 = vld [vmem:[%s0 + $0xe8] sm:$0xff]
  %v52 = vld [vmem:[%s0 + $0xf0] sm:$0xff]
  %v53 = vld [vmem:[%s0 + $0xf8] sm:$0xff]
  %v54 = vld [vmem:[%s0 + $0x100] sm:$0xff]
  %v55 = vld [vmem:[%s0 + $0x108] sm:$0xff]
  %v56 = vld [vmem:[%s0 + $0x110] sm:$0xff]
  %v57 = vld [vmem:[%s0 + $0x118] sm:$0xff]
  %v58 = vld [vmem:[%s0 + $0x120] sm:$0xff]
  %v59 = vld [vmem:[%s0 + $0x128] sm:$0xff]
  %v60 = vld [vmem:[%s0 + $0x130] sm:$0xff]
  %v61 = vld [vmem:[%s0 + $0x138] sm:$0xff]
  %v62 = vld [vmem:[%s0 + $0x140] sm:$0xff]
  %v63 = vld [vmem:[%s0 + $0x148] sm:$0xff]
  %v64 = vld [vmem:[%s0 + $0x150] sm:$0xff]
  %v65 = vld [vmem:[%s0 + $0x158] sm:$0xff]
  %v66 = vld [vmem:[%s0 + $0x160] sm:$0xff]
  %v67 = vld [vmem:[%s0 + $0x168] sm:$0xff]
  %v68 = vld [vmem:[%s0 + $0x170] sm:$0xff]
  %v69 = vld [vmem:[%s0 + $0x178] sm:$0xff]
  %v70 = vld [vmem:[%s0 + $0x180] sm:$0xff]
  %v71 = vld [vmem:[%s0 + $0x188] sm:$0xff]
  %v72 = vld [vmem:[%s0 + $0x190] sm:$0xff]
  %v73 = vld [vmem:[%s0 + $0x198] sm:$0xff]
  %v74 = vld [vmem:[%s0 + $0x1a0] sm:$0xff]
  %v75 = vld [vmem:[%s0 + $0x1a8] sm:$0xff]
  %v76 = vld [vmem:[%s0 + $0x1b0] sm:$0xff]
  %v77 = vld [vmem:[%s0 + $0x1b8] sm:$0xff]
  %v78 = vld [vmem:[%s0 + $0x1c0] sm:$0xff]
  %v79 = vld [vmem:[%s0 + $0x1c8] sm:$0xff]
  %v80 = vld [vmem:[%s0 + $0x1d0] sm:$0xff]
  %v81 = vld [vmem:[%s0 + $0x1d8] sm:$0xff]
  %v82 = vld [vmem:[%s0 + $0x1e0] sm:$0xff]
  %v83 = vld [vmem:[%s0 + $0x1e8] sm:$0xff]
  %v84 = vld [vmem:[%s0 + $0x1f0] sm:$0xff]
  %v85 = vld [vmem:[%s0 + $0x1f8] sm:$0xff]
  %v86 = vld [vmem:[%s1] sm:$0xf]
  %v87 = vld [vmem:[%s1 + $0x4] sm:$0xf]
  %v88 = vld [vmem:[%s1 + $0x8] sm:$0xf]
  %v89 = vld [vmem:[%s1 + $0xc] sm:$0xf]
  %v90 = vld [vmem:[%s1 + $0x10] sm:$0xf]
  %v91 = vld [vmem:[%s1 + $0x14] sm:$0xf]
  %v92 = vld [vmem:[%s1 + $0x18] sm:$0xf]
  %v93 = vld [vmem:[%s1 + $0x1c] sm:$0xf]
  %v94 = vld [vmem:[%s1 + $0x20] sm:$0xf]
  %v95 = vld [vmem:[%s1 + $0x24] sm:$0xf]
  %v96 = vld [vmem:[%s1 + $0x28] sm:$0xf]
  %v97 = vld [vmem:[%s1 + $0x2c] sm:$0xf]
  %v98 = vld [vmem:[%s1 + $0x30] sm:$0xf]
  %v99 = vld [vmem:[%s1 + $0x34] sm:$0xf]
  %v100 = vld [vmem:[%s1 + $0x38] sm:$0xf]
  %v101 = vld [vmem:[%s1 + $0x3c] sm:$0xf]
  %v102 = vld [vmem:[%s1 + $0x40] sm:$0xf]
  %v103 = vld [vmem:[%s1 + $0x44] sm:$0xf]
  %v104 = vld [vmem:[%s1 + $0x48] sm:$0xf]
  %v105 = vld [vmem:[%s1 + $0x4c] sm:$0xf]
  %v106 = vld [vmem:[%s1 + $0x50] sm:$0xf]
  %v107 = vld [vmem:[%s1 + $0x54] sm:$0xf]
  %v108 = vld [vmem:[%s1 + $0x58] sm:$0xf]
  %v109 = vld [vmem:[%s1 + $0x5c] sm:$0xf]
  %v110 = vld [vmem:[%s1 + $0x60] sm:$0xf]
  %v111 = vld [vmem:[%s1 + $0x64] sm:$0xf]
  %v112 = vld [vmem:[%s1 + $0x68] sm:$0xf]
  %v113 = vld [vmem:[%s1 + $0x6c] sm:$0xf]
  %v114 = vld [vmem:[%s1 + $0x70] sm:$0xf]
  %v115 = vld [vmem:[%s1 + $0x74] sm:$0xf]
  %v116 = vld [vmem:[%s1 + $0x78] sm:$0xf]
  %v117 = vld [vmem:[%s1 + $0x7c] sm:$0xf]
  %v182 = vunpack.c.l.b16 %v22
  %v183 = vunpack.c.h.b16 %v22
  %v184 = vunpack.c.l.b16 %v23
  %v185 = vunpack.c.h.b16 %v23
  %v186 = vunpack.c.l.b16 %v24
  %v187 = vunpack.c.h.b16 %v24
  %v188 = vunpack.c.l.b16 %v25
  %v189 = vunpack.c.h.b16 %v25
  %v190 = vunpack.c.l.b16 %v26
  %v191 = vunpack.c.h.b16 %v26
  %v192 = vunpack.c.l.b16 %v27
  %v193 = vunpack.c.h.b16 %v27
  %v194 = vunpack.c.l.b16 %v28
  %v195 = vunpack.c.h.b16 %v28
  %v196 = vunpack.c.l.b16 %v29
  %v197 = vunpack.c.h.b16 %v29
  %v198 = vunpack.c.l.b16 %v30
  %v199 = vunpack.c.h.b16 %v30
  %v200 = vunpack.c.l.b16 %v31
  %v201 = vunpack.c.h.b16 %v31
  %v202 = vunpack.c.l.b16 %v32
  %v203 = vunpack.c.h.b16 %v32
  %v204 = vunpack.c.l.b16 %v33
  %v205 = vunpack.c.h.b16 %v33
  %v206 = vunpack.c.l.b16 %v34
  %v207 = vunpack.c.h.b16 %v34
  %v208 = vunpack.c.l.b16 %v35
  %v209 = vunpack.c.h.b16 %v35
  %v210 = vunpack.c.l.b16 %v36
  %v211 = vunpack.c.h.b16 %v36
  %v212 = vunpack.c.l.b16 %v37
  %v213 = vunpack.c.h.b16 %v37
  %v214 = vunpack.c.l.b16 %v38
  %v215 = vunpack.c.h.b16 %v38
  %v216 = vunpack.c.l.b16 %v39
  %v217 = vunpack.c.h.b16 %v39
  %v218 = vunpack.c.l.b16 %v40
  %v219 = vunpack.c.h.b16 %v40
  %v220 = vunpack.c.l.b16 %v41
  %v221 = vunpack.c.h.b16 %v41
  %v222 = vunpack.c.l.b16 %v42
  %v223 = vunpack.c.h.b16 %v42
  %v224 = vunpack.c.l.b16 %v43
  %v225 = vunpack.c.h.b16 %v43
  %v226 = vunpack.c.l.b16 %v44
  %v227 = vunpack.c.h.b16 %v44
  %v228 = vunpack.c.l.b16 %v45
  %v229 = vunpack.c.h.b16 %v45
  %v230 = vunpack.c.l.b16 %v46
  %v231 = vunpack.c.h.b16 %v46
  %v232 = vunpack.c.l.b16 %v47
  %v233 = vunpack.c.h.b16 %v47
  %v234 = vunpack.c.l.b16 %v48
  %v235 = vunpack.c.h.b16 %v48
  %v236 = vunpack.c.l.b16 %v49
  %v237 = vunpack.c.h.b16 %v49
  %v238 = vunpack.c.l.b16 %v50
  %v239 = vunpack.c.h.b16 %v50
  %v240 = vunpack.c.l.b16 %v51
  %v241 = vunpack.c.h.b16 %v51
  %v242 = vunpack.c.l.b16 %v52
  %v243 = vunpack.c.h.b16 %v52
  %v244 = vunpack.c.l.b16 %v53
  %v245 = vunpack.c.h.b16 %v53
  %v246 = vunpack.c.l.b16 %v54
  %v247 = vunpack.c.h.b16 %v54
  %v248 = vunpack.c.l.b16 %v55
  %v249 = vunpack.c.h.b16 %v55
  %v250 = vunpack.c.l.b16 %v56
  %v251 = vunpack.c.h.b16 %v56
  %v252 = vunpack.c.l.b16 %v57
  %v253 = vunpack.c.h.b16 %v57
  %v254 = vunpack.c.l.b16 %v58
  %v255 = vunpack.c.h.b16 %v58
  %v256 = vunpack.c.l.b16 %v59
  %v257 = vunpack.c.h.b16 %v59
  %v258 = vunpack.c.l.b16 %v60
  %v259 = vunpack.c.h.b16 %v60
  %v260 = vunpack.c.l.b16 %v61
  %v261 = vunpack.c.h.b16 %v61
  %v262 = vunpack.c.l.b16 %v62
  %v263 = vunpack.c.h.b16 %v62
  %v264 = vunpack.c.l.b16 %v63
  %v265 = vunpack.c.h.b16 %v63
  %v266 = vunpack.c.l.b16 %v64
  %v267 = vunpack.c.h.b16 %v64
  %v268 = vunpack.c.l.b16 %v65
  %v269 = vunpack.c.h.b16 %v65
  %v270 = vunpack.c.l.b16 %v66
  %v271 = vunpack.c.h.b16 %v66
  %v272 = vunpack.c.l.b16 %v67
  %v273 = vunpack.c.h.b16 %v67
  %v274 = vunpack.c.l.b16 %v68
  %v275 = vunpack.c.h.b16 %v68
  %v276 = vunpack.c.l.b16 %v69
  %v277 = vunpack.c.h.b16 %v69
  %v278 = vunpack.c.l.b16 %v70
  %v279 = vunpack.c.h.b16 %v70
  %v280 = vunpack.c.l.b16 %v71
  %v281 = vunpack.c.h.b16 %v71
  %v282 = vunpack.c.l.b16 %v72
  %v283 = vunpack.c.h.b16 %v72
  %v284 = vunpack.c.l.b16 %v73
  %v285 = vunpack.c.h.b16 %v73
  %v286 = vunpack.c.l.b16 %v74
  %v287 = vunpack.c.h.b16 %v74
  %v288 = vunpack.c.l.b16 %v75
  %v289 = vunpack.c.h.b16 %v75
  %v290 = vunpack.c.l.b16 %v76
  %v291 = vunpack.c.h.b16 %v76
  %v292 = vunpack.c.l.b16 %v77
  %v293 = vunpack.c.h.b16 %v77
  %v294 = vunpack.c.l.b16 %v78
  %v295 = vunpack.c.h.b16 %v78
  %v296 = vunpack.c.l.b16 %v79
  %v297 = vunpack.c.h.b16 %v79
  %v298 = vunpack.c.l.b16 %v80
  %v299 = vunpack.c.h.b16 %v80
  %v300 = vunpack.c.l.b16 %v81
  %v301 = vunpack.c.h.b16 %v81
  %v302 = vunpack.c.l.b16 %v82
  %v303 = vunpack.c.h.b16 %v82
  %v304 = vunpack.c.l.b16 %v83
  %v305 = vunpack.c.h.b16 %v83
  %v306 = vunpack.c.l.b16 %v84
  %v307 = vunpack.c.h.b16 %v84
  %v308 = vunpack.c.l.b16 %v85
  %v309 = vunpack.c.h.b16 %v85
  %v310 = vpack.c.b16 %v184, %v182
  %v311 = vpack.c.b16 %v185, %v183
  %v312 = vpack.c.b16 %v188, %v186
  %v313 = vpack.c.b16 %v189, %v187
  %v314 = vpack.c.b16 %v192, %v190
  %v315 = vpack.c.b16 %v193, %v191
  %v316 = vpack.c.b16 %v196, %v194
  %v317 = vpack.c.b16 %v197, %v195
  %v318 = vpack.c.b16 %v200, %v198
  %v319 = vpack.c.b16 %v201, %v199
  %v320 = vpack.c.b16 %v204, %v202
  %v321 = vpack.c.b16 %v205, %v203
  %v322 = vpack.c.b16 %v208, %v206
  %v323 = vpack.c.b16 %v209, %v207
  %v324 = vpack.c.b16 %v212, %v210
  %v325 = vpack.c.b16 %v213, %v211
  %v326 = vpack.c.b16 %v216, %v214
  %v327 = vpack.c.b16 %v217, %v215
  %v328 = vpack.c.b16 %v220, %v218
  %v329 = vpack.c.b16 %v221, %v219
  %v330 = vpack.c.b16 %v224, %v222
  %v331 = vpack.c.b16 %v225, %v223
  %v332 = vpack.c.b16 %v228, %v226
  %v333 = vpack.c.b16 %v229, %v227
  %v334 = vpack.c.b16 %v232, %v230
  %v335 = vpack.c.b16 %v233, %v231
  %v336 = vpack.c.b16 %v236, %v234
  %v337 = vpack.c.b16 %v237, %v235
  %v338 = vpack.c.b16 %v240, %v238
  %v339 = vpack.c.b16 %v241, %v239
  %v340 = vpack.c.b16 %v244, %v242
  %v341 = vpack.c.b16 %v245, %v243
  %v342 = vpack.c.b16 %v248, %v246
  %v343 = vpack.c.b16 %v249, %v247
  %v344 = vpack.c.b16 %v252, %v250
  %v345 = vpack.c.b16 %v253, %v251
  %v346 = vpack.c.b16 %v256, %v254
  %v347 = vpack.c.b16 %v257, %v255
  %v348 = vpack.c.b16 %v260, %v258
  %v349 = vpack.c.b16 %v261, %v259
  %v350 = vpack.c.b16 %v264, %v262
  %v351 = vpack.c.b16 %v265, %v263
  %v352 = vpack.c.b16 %v268, %v266
  %v353 = vpack.c.b16 %v269, %v267
  %v354 = vpack.c.b16 %v272, %v270
  %v355 = vpack.c.b16 %v273, %v271
  %v356 = vpack.c.b16 %v276, %v274
  %v357 = vpack.c.b16 %v277, %v275
  %v358 = vpack.c.b16 %v280, %v278
  %v359 = vpack.c.b16 %v281, %v279
  %v360 = vpack.c.b16 %v284, %v282
  %v361 = vpack.c.b16 %v285, %v283
  %v362 = vpack.c.b16 %v288, %v286
  %v363 = vpack.c.b16 %v289, %v287
  %v364 = vpack.c.b16 %v292, %v290
  %v365 = vpack.c.b16 %v293, %v291
  %v366 = vpack.c.b16 %v296, %v294
  %v367 = vpack.c.b16 %v297, %v295
  %v368 = vpack.c.b16 %v300, %v298
  %v369 = vpack.c.b16 %v301, %v299
  %v370 = vpack.c.b16 %v304, %v302
  %v371 = vpack.c.b16 %v305, %v303
  %v372 = vpack.c.b16 %v308, %v306
  %v373 = vpack.c.b16 %v309, %v307
  %v470 = vunpack.c.l.b16 %v86
  %v471 = vunpack.c.l.b16 %v87
  %v472 = vunpack.c.l.b16 %v88
  %v473 = vunpack.c.l.b16 %v89
  %v474 = vunpack.c.l.b16 %v90
  %v475 = vunpack.c.l.b16 %v91
  %v476 = vunpack.c.l.b16 %v92
  %v477 = vunpack.c.l.b16 %v93
  %v478 = vunpack.c.l.b16 %v94
  %v479 = vunpack.c.l.b16 %v95
  %v480 = vunpack.c.l.b16 %v96
  %v481 = vunpack.c.l.b16 %v97
  %v482 = vunpack.c.l.b16 %v98
  %v483 = vunpack.c.l.b16 %v99
  %v484 = vunpack.c.l.b16 %v100
  %v485 = vunpack.c.l.b16 %v101
  %v486 = vunpack.c.l.b16 %v102
  %v487 = vunpack.c.l.b16 %v103
  %v488 = vunpack.c.l.b16 %v104
  %v489 = vunpack.c.l.b16 %v105
  %v490 = vunpack.c.l.b16 %v106
  %v491 = vunpack.c.l.b16 %v107
  %v492 = vunpack.c.l.b16 %v108
  %v493 = vunpack.c.l.b16 %v109
  %v494 = vunpack.c.l.b16 %v110
  %v495 = vunpack.c.l.b16 %v111
  %v496 = vunpack.c.l.b16 %v112
  %v497 = vunpack.c.l.b16 %v113
  %v498 = vunpack.c.l.b16 %v114
  %v499 = vunpack.c.l.b16 %v115
  %v500 = vunpack.c.l.b16 %v116
  %v501 = vunpack.c.l.b16 %v117
  %v502 = vpack.c.b16 %v471, %v470
  %v503 = vpack.c.b16 %v473, %v472
  %v504 = vpack.c.b16 %v475, %v474
  %v505 = vpack.c.b16 %v477, %v476
  %v506 = vpack.c.b16 %v479, %v478
  %v507 = vpack.c.b16 %v481, %v480
  %v508 = vpack.c.b16 %v483, %v482
  %v509 = vpack.c.b16 %v485, %v484
  %v510 = vpack.c.b16 %v487, %v486
  %v511 = vpack.c.b16 %v489, %v488
  %v512 = vpack.c.b16 %v491, %v490
  %v513 = vpack.c.b16 %v493, %v492
  %v514 = vpack.c.b16 %v495, %v494
  %v515 = vpack.c.b16 %v497, %v496
  %v516 = vpack.c.b16 %v499, %v498
  %v517 = vpack.c.b16 %v501, %v500
  %534 = vmatprep.subr.bf16.mxu0 0
  %535 = vmatpush1.bf16.msra.mxu0 %v502
  %536 = vmatprep.subr.bf16.mxu0 0
  %537 = vmatpush1.bf16.msra.mxu0 %v503
  %538 = vmatprep.subr.bf16.mxu0 0
  %539 = vmatpush1.bf16.msra.mxu0 %v504
  %540 = vmatprep.subr.bf16.mxu0 0
  %541 = vmatpush1.bf16.msra.mxu0 %v505
  %542 = vmatprep.subr.bf16.mxu0 0
  %543 = vmatpush1.bf16.msra.mxu0 %v506
  %544 = vmatprep.subr.bf16.mxu0 0
  %545 = vmatpush1.bf16.msra.mxu0 %v507
  %546 = vmatprep.subr.bf16.mxu0 0
  %547 = vmatpush1.bf16.msra.mxu0 %v508
  %548 = vmatprep.subr.bf16.mxu0 0
  %549 = vmatpush1.bf16.msra.mxu0 %v509
  %550 = vmatprep.subr.bf16.mxu0 0
  %551 = vmatpush1.bf16.msra.mxu0 %v510
  %552 = vmatprep.subr.bf16.mxu0 0
  %553 = vmatpush1.bf16.msra.mxu0 %v511
  %554 = vmatprep.subr.bf16.mxu0 0
  %555 = vmatpush1.bf16.msra.mxu0 %v512
  %556 = vmatprep.subr.bf16.mxu0 0
  %557 = vmatpush1.bf16.msra.mxu0 %v513
  %558 = vmatprep.subr.bf16.mxu0 0
  %559 = vmatpush1.bf16.msra.mxu0 %v514
  %560 = vmatprep.subr.bf16.mxu0 0
  %561 = vmatpush1.bf16.msra.mxu0 %v515
  %562 = vmatprep.subr.bf16.mxu0 0
  %563 = vmatpush1.bf16.msra.mxu0 %v516
  %564 = vmatprep.subr.bf16.mxu0 0
  %565 = vmatpush1.bf16.msra.mxu0 %v517
  %566 = vmatprep.mubr.bf16.mxu0 %v311
  %567 = vmatmul.mubr.bf16.gmra.mrb[0].mxu0 %v310
  %v568 = vpop.f32.mrb[0].mxu0
  %v569 = vadd.f32 0.0, %v568
  %v570 = vpop.f32.mrb[0].mxu0
  %v571 = vpop.f32.mrb[0].mxu0
  %v572 = vadd.f32 0.0, %v571
  %v573 = vpop.f32.mrb[0].mxu0
  %574 = vmatprep.mubr.bf16.mxu0 %v313
  %575 = vmatmul.mubr.bf16.gmra.mrb[0].mxu0 %v312
  %v576 = vpop.f32.mrb[0].mxu0
  %v577 = vadd.f32 0.0, %v576
  %v578 = vpop.f32.mrb[0].mxu0
  %v579 = vpop.f32.mrb[0].mxu0
  %v580 = vadd.f32 0.0, %v579
  %v581 = vpop.f32.mrb[0].mxu0
  %582 = vmatprep.mubr.bf16.mxu0 %v315
  %583 = vmatmul.mubr.bf16.gmra.mrb[0].mxu0 %v314
  %v584 = vpop.f32.mrb[0].mxu0
  %v585 = vadd.f32 0.0, %v584
  %v586 = vpop.f32.mrb[0].mxu0
  %v587 = vpop.f32.mrb[0].mxu0
  %v588 = vadd.f32 0.0, %v587
  %v589 = vpop.f32.mrb[0].mxu0
  %590 = vmatprep.mubr.bf16.mxu0 %v317
  %591 = vmatmul.mubr.bf16.gmra.mrb[0].mxu0 %v316
  %v592 = vpop.f32.mrb[0].mxu0
  %v593 = vadd.f32 0.0, %v592
  %v594 = vpop.f32.mrb[0].mxu0
  %v595 = vpop.f32.mrb[0].mxu0
  %v596 = vadd.f32 0.0, %v595
  %v597 = vpop.f32.mrb[0].mxu0
  %598 = vmatprep.mubr.bf16.mxu0 %v319
  %599 = vmatmul.mubr.bf16.gmra.mrb[0].mxu0 %v318
  %v600 = vpop.f32.mrb[0].mxu0
  %v601 = vadd.f32 0.0, %v600
  %v602 = vpop.f32.mrb[0].mxu0
  %v603 = vpop.f32.mrb[0].mxu0
  %v604 = vadd.f32 0.0, %v603
  %v605 = vpop.f32.mrb[0].mxu0
  %606 = vmatprep.mubr.bf16.mxu0 %v321
  %607 = vmatmul.mubr.bf16.gmra.mrb[0].mxu0 %v320
  %v608 = vpop.f32.mrb[0].mxu0
  %v609 = vadd.f32 0.0, %v608
  %v610 = vpop.f32.mrb[0].mxu0
  %v611 = vpop.f32.mrb[0].mxu0
  %v612 = vadd.f32 0.0, %v611
  %v613 = vpop.f32.mrb[0].mxu0
  %614 = vmatprep.mubr.bf16.mxu0 %v323
  %615 = vmatmul.mubr.bf16.gmra.mrb[0].mxu0 %v322
  %v616 = vpop.f32.mrb[0].mxu0
  %v617 = vadd.f32 0.0, %v616
  %v618 = vpop.f32.mrb[0].mxu0
  %v619 = vpop.f32.mrb[0].mxu0
  %v620 = vadd.f32 0.0, %v619
  %v621 = vpop.f32.mrb[0].mxu0
  %622 = vmatprep.mubr.bf16.mxu0 %v325
  %623 = vmatmul.mubr.bf16.gmra.mrb[0].mxu0 %v324
  %v624 = vpop.f32.mrb[0].mxu0
  %v625 = vadd.f32 0.0, %v624
  %v626 = vpop.f32.mrb[0].mxu0
  %v627 = vpop.f32.mrb[0].mxu0
  %v628 = vadd.f32 0.0, %v627
  %v629 = vpop.f32.mrb[0].mxu0
  %630 = vmatprep.mubr.bf16.mxu0 %v327
  %631 = vmatmul.mubr.bf16.gmra.mrb[0].mxu0 %v326
  %v632 = vpop.f32.mrb[0].mxu0
  %v633 = vadd.f32 0.0, %v632
  %v634 = vpop.f32.mrb[0].mxu0
  %v635 = vpop.f32.mrb[0].mxu0
  %v636 = vadd.f32 0.0, %v635
  %v637 = vpop.f32.mrb[0].mxu0
  %638 = vmatprep.mubr.bf16.mxu0 %v329
  %639 = vmatmul.mubr.bf16.gmra.mrb[0].mxu0 %v328
  %v640 = vpop.f32.mrb[0].mxu0
  %v641 = vadd.f32 0.0, %v640
  %v642 = vpop.f32.mrb[0].mxu0
  %v643 = vpop.f32.mrb[0].mxu0
  %v644 = vadd.f32 0.0, %v643
  %v645 = vpop.f32.mrb[0].mxu0
  %646 = vmatprep.mubr.bf16.mxu0 %v331
  %647 = vmatmul.mubr.bf16.gmra.mrb[0].mxu0 %v330
  %v648 = vpop.f32.mrb[0].mxu0
  %v649 = vadd.f32 0.0, %v648
  %v650 = vpop.f32.mrb[0].mxu0
  %v651 = vpop.f32.mrb[0].mxu0
  %v652 = vadd.f32 0.0, %v651
  %v653 = vpop.f32.mrb[0].mxu0
  %654 = vmatprep.mubr.bf16.mxu0 %v333
  %655 = vmatmul.mubr.bf16.gmra.mrb[0].mxu0 %v332
  %v656 = vpop.f32.mrb[0].mxu0
  %v657 = vadd.f32 0.0, %v656
  %v658 = vpop.f32.mrb[0].mxu0
  %v659 = vpop.f32.mrb[0].mxu0
  %v660 = vadd.f32 0.0, %v659
  %v661 = vpop.f32.mrb[0].mxu0
  %662 = vmatprep.mubr.bf16.mxu0 %v335
  %663 = vmatmul.mubr.bf16.gmra.mrb[0].mxu0 %v334
  %v664 = vpop.f32.mrb[0].mxu0
  %v665 = vadd.f32 0.0, %v664
  %v666 = vpop.f32.mrb[0].mxu0
  %v667 = vpop.f32.mrb[0].mxu0
  %v668 = vadd.f32 0.0, %v667
  %v669 = vpop.f32.mrb[0].mxu0
  %670 = vmatprep.mubr.bf16.mxu0 %v337
  %671 = vmatmul.mubr.bf16.gmra.mrb[0].mxu0 %v336
  %v672 = vpop.f32.mrb[0].mxu0
  %v673 = vadd.f32 0.0, %v672
  %v674 = vpop.f32.mrb[0].mxu0
  %v675 = vpop.f32.mrb[0].mxu0
  %v676 = vadd.f32 0.0, %v675
  %v677 = vpop.f32.mrb[0].mxu0
  %678 = vmatprep.mubr.bf16.mxu0 %v339
  %679 = vmatmul.mubr.bf16.gmra.mrb[0].mxu0 %v338
  %v680 = vpop.f32.mrb[0].mxu0
  %v681 = vadd.f32 0.0, %v680
  %v682 = vpop.f32.mrb[0].mxu0
  %v683 = vpop.f32.mrb[0].mxu0
  %v684 = vadd.f32 0.0, %v683
  %v685 = vpop.f32.mrb[0].mxu0
  %686 = vmatprep.mubr.bf16.mxu0 %v341
  %687 = vmatmul.mubr.bf16.gmra.mrb[0].mxu0 %v340
  %v688 = vpop.f32.mrb[0].mxu0
  %v689 = vadd.f32 0.0, %v688
  %v690 = vpop.f32.mrb[0].mxu0
  %v691 = vpop.f32.mrb[0].mxu0
  %v692 = vadd.f32 0.0, %v691
  %v693 = vpop.f32.mrb[0].mxu0
  %694 = vmatprep.mubr.bf16.mxu0 %v343
  %695 = vmatmul.mubr.bf16.gmra.mrb[0].mxu0 %v342
  %v696 = vpop.f32.mrb[0].mxu0
  %v697 = vadd.f32 0.0, %v696
  %v698 = vpop.f32.mrb[0].mxu0
  %v699 = vpop.f32.mrb[0].mxu0
  %v700 = vadd.f32 0.0, %v699
  %v701 = vpop.f32.mrb[0].mxu0
  %702 = vmatprep.mubr.bf16.mxu0 %v345
  %703 = vmatmul.mubr.bf16.gmra.mrb[0].mxu0 %v344
  %v704 = vpop.f32.mrb[0].mxu0
  %v705 = vadd.f32 0.0, %v704
  %v706 = vpop.f32.mrb[0].mxu0
  %v707 = vpop.f32.mrb[0].mxu0
  %v708 = vadd.f32 0.0, %v707
  %v709 = vpop.f32.mrb[0].mxu0
  %710 = vmatprep.mubr.bf16.mxu0 %v347
  %711 = vmatmul.mubr.bf16.gmra.mrb[0].mxu0 %v346
  %v712 = vpop.f32.mrb[0].mxu0
  %v713 = vadd.f32 0.0, %v712
  %v714 = vpop.f32.mrb[0].mxu0
  %v715 = vpop.f32.mrb[0].mxu0
  %v716 = vadd.f32 0.0, %v715
  %v717 = vpop.f32.mrb[0].mxu0
  %718 = vmatprep.mubr.bf16.mxu0 %v349
  %719 = vmatmul.mubr.bf16.gmra.mrb[0].mxu0 %v348
  %v720 = vpop.f32.mrb[0].mxu0
  %v721 = vadd.f32 0.0, %v720
  %v722 = vpop.f32.mrb[0].mxu0
  %v723 = vpop.f32.mrb[0].mxu0
  %v724 = vadd.f32 0.0, %v723
  %v725 = vpop.f32.mrb[0].mxu0
  %726 = vmatprep.mubr.bf16.mxu0 %v351
  %727 = vmatmul.mubr.bf16.gmra.mrb[0].mxu0 %v350
  %v728 = vpop.f32.mrb[0].mxu0
  %v729 = vadd.f32 0.0, %v728
  %v730 = vpop.f32.mrb[0].mxu0
  %v731 = vpop.f32.mrb[0].mxu0
  %v732 = vadd.f32 0.0, %v731
  %v733 = vpop.f32.mrb[0].mxu0
  %734 = vmatprep.mubr.bf16.mxu0 %v353
  %735 = vmatmul.mubr.bf16.gmra.mrb[0].mxu0 %v352
  %v736 = vpop.f32.mrb[0].mxu0
  %v737 = vadd.f32 0.0, %v736
  %v738 = vpop.f32.mrb[0].mxu0
  %v739 = vpop.f32.mrb[0].mxu0
  %v740 = vadd.f32 0.0, %v739
  %v741 = vpop.f32.mrb[0].mxu0
  %742 = vmatprep.mubr.bf16.mxu0 %v355
  %743 = vmatmul.mubr.bf16.gmra.mrb[0].mxu0 %v354
  %v744 = vpop.f32.mrb[0].mxu0
  %v745 = vadd.f32 0.0, %v744
  %v746 = vpop.f32.mrb[0].mxu0
  %v747 = vpop.f32.mrb[0].mxu0
  %v748 = vadd.f32 0.0, %v747
  %v749 = vpop.f32.mrb[0].mxu0
  %750 = vmatprep.mubr.bf16.mxu0 %v357
  %751 = vmatmul.mubr.bf16.gmra.mrb[0].mxu0 %v356
  %v752 = vpop.f32.mrb[0].mxu0
  %v753 = vadd.f32 0.0, %v752
  %v754 = vpop.f32.mrb[0].mxu0
  %v755 = vpop.f32.mrb[0].mxu0
  %v756 = vadd.f32 0.0, %v755
  %v757 = vpop.f32.mrb[0].mxu0
  %758 = vmatprep.mubr.bf16.mxu0 %v359
  %759 = vmatmul.mubr.bf16.gmra.mrb[0].mxu0 %v358
  %v760 = vpop.f32.mrb[0].mxu0
  %v761 = vadd.f32 0.0, %v760
  %v762 = vpop.f32.mrb[0].mxu0
  %v763 = vpop.f32.mrb[0].mxu0
  %v764 = vadd.f32 0.0, %v763
  %v765 = vpop.f32.mrb[0].mxu0
  %766 = vmatprep.mubr.bf16.mxu0 %v361
  %767 = vmatmul.mubr.bf16.gmra.mrb[0].mxu0 %v360
  %v768 = vpop.f32.mrb[0].mxu0
  %v769 = vadd.f32 0.0, %v768
  %v770 = vpop.f32.mrb[0].mxu0
  %v771 = vpop.f32.mrb[0].mxu0
  %v772 = vadd.f32 0.0, %v771
  %v773 = vpop.f32.mrb[0].mxu0
  %774 = vmatprep.mubr.bf16.mxu0 %v363
  %775 = vmatmul.mubr.bf16.gmra.mrb[0].mxu0 %v362
  %v776 = vpop.f32.mrb[0].mxu0
  %v777 = vadd.f32 0.0, %v776
  %v778 = vpop.f32.mrb[0].mxu0
  %v779 = vpop.f32.mrb[0].mxu0
  %v780 = vadd.f32 0.0, %v779
  %v781 = vpop.f32.mrb[0].mxu0
  %782 = vmatprep.mubr.bf16.mxu0 %v365
  %783 = vmatmul.mubr.bf16.gmra.mrb[0].mxu0 %v364
  %v784 = vpop.f32.mrb[0].mxu0
  %v785 = vadd.f32 0.0, %v784
  %v786 = vpop.f32.mrb[0].mxu0
  %v787 = vpop.f32.mrb[0].mxu0
  %v788 = vadd.f32 0.0, %v787
  %v789 = vpop.f32.mrb[0].mxu0
  %790 = vmatprep.mubr.bf16.mxu0 %v367
  %791 = vmatmul.mubr.bf16.gmra.mrb[0].mxu0 %v366
  %v792 = vpop.f32.mrb[0].mxu0
  %v793 = vadd.f32 0.0, %v792
  %v794 = vpop.f32.mrb[0].mxu0
  %v795 = vpop.f32.mrb[0].mxu0
  %v796 = vadd.f32 0.0, %v795
  %v797 = vpop.f32.mrb[0].mxu0
  %798 = vmatprep.mubr.bf16.mxu0 %v369
  %799 = vmatmul.mubr.bf16.gmra.mrb[0].mxu0 %v368
  %v800 = vpop.f32.mrb[0].mxu0
  %v801 = vadd.f32 0.0, %v800
  %v802 = vpop.f32.mrb[0].mxu0
  %v803 = vpop.f32.mrb[0].mxu0
  %v804 = vadd.f32 0.0, %v803
  %v805 = vpop.f32.mrb[0].mxu0
  %806 = vmatprep.mubr.bf16.mxu0 %v371
  %807 = vmatmul.mubr.bf16.gmra.mrb[0].mxu0 %v370
  %v808 = vpop.f32.mrb[0].mxu0
  %v809 = vadd.f32 0.0, %v808
  %v810 = vpop.f32.mrb[0].mxu0
  %v811 = vpop.f32.mrb[0].mxu0
  %v812 = vadd.f32 0.0, %v811
  %v813 = vpop.f32.mrb[0].mxu0
  %814 = vmatprep.mubr.bf16.mxu0 %v373
  %815 = vmatmul.mubr.bf16.gmra.mrb[0].mxu0 %v372
  %v816 = vpop.f32.mrb[0].mxu0
  %v817 = vadd.f32 0.0, %v816
  %v818 = vpop.f32.mrb[0].mxu0
  %v819 = vpop.f32.mrb[0].mxu0
  %v820 = vadd.f32 0.0, %v819
  %v821 = vpop.f32.mrb[0].mxu0
  %822 = vdwg.mxu0
  %vm823 = vcmask 261120
  %824 = vst.msk [vmem:[%s2] sm:$0xff] %vm823, %v569
  %825 = vst.msk [vmem:[%s2 + $0x8] sm:$0xff] %vm823, %v572
  %826 = vst.msk [vmem:[%s2 + $0x10] sm:$0xff] %vm823, %v577
  %827 = vst.msk [vmem:[%s2 + $0x18] sm:$0xff] %vm823, %v580
  %828 = vst.msk [vmem:[%s2 + $0x20] sm:$0xff] %vm823, %v585
  %829 = vst.msk [vmem:[%s2 + $0x28] sm:$0xff] %vm823, %v588
  %830 = vst.msk [vmem:[%s2 + $0x30] sm:$0xff] %vm823, %v593
  %831 = vst.msk [vmem:[%s2 + $0x38] sm:$0xff] %vm823, %v596
  %832 = vst.msk [vmem:[%s2 + $0x40] sm:$0xff] %vm823, %v601
  %833 = vst.msk [vmem:[%s2 + $0x48] sm:$0xff] %vm823, %v604
  %834 = vst.msk [vmem:[%s2 + $0x50] sm:$0xff] %vm823, %v609
  %835 = vst.msk [vmem:[%s2 + $0x58] sm:$0xff] %vm823, %v612
  %836 = vst.msk [vmem:[%s2 + $0x60] sm:$0xff] %vm823, %v617
  %837 = vst.msk [vmem:[%s2 + $0x68] sm:$0xff] %vm823, %v620
  %838 = vst.msk [vmem:[%s2 + $0x70] sm:$0xff] %vm823, %v625
  %839 = vst.msk [vmem:[%s2 + $0x78] sm:$0xff] %vm823, %v628
  %840 = vst.msk [vmem:[%s2 + $0x80] sm:$0xff] %vm823, %v633
  %841 = vst.msk [vmem:[%s2 + $0x88] sm:$0xff] %vm823, %v636
  %842 = vst.msk [vmem:[%s2 + $0x90] sm:$0xff] %vm823, %v641
  %843 = vst.msk [vmem:[%s2 + $0x98] sm:$0xff] %vm823, %v644
  %844 = vst.msk [vmem:[%s2 + $0xa0] sm:$0xff] %vm823, %v649
  %845 = vst.msk [vmem:[%s2 + $0xa8] sm:$0xff] %vm823, %v652
  %846 = vst.msk [vmem:[%s2 + $0xb0] sm:$0xff] %vm823, %v657
  %847 = vst.msk [vmem:[%s2 + $0xb8] sm:$0xff] %vm823, %v660
  %848 = vst.msk [vmem:[%s2 + $0xc0] sm:$0xff] %vm823, %v665
  %849 = vst.msk [vmem:[%s2 + $0xc8] sm:$0xff] %vm823, %v668
  %850 = vst.msk [vmem:[%s2 + $0xd0] sm:$0xff] %vm823, %v673
  %851 = vst.msk [vmem:[%s2 + $0xd8] sm:$0xff] %vm823, %v676
  %852 = vst.msk [vmem:[%s2 + $0xe0] sm:$0xff] %vm823, %v681
  %853 = vst.msk [vmem:[%s2 + $0xe8] sm:$0xff] %vm823, %v684
  %854 = vst.msk [vmem:[%s2 + $0xf0] sm:$0xff] %vm823, %v689
  %855 = vst.msk [vmem:[%s2 + $0xf8] sm:$0xff] %vm823, %v692
  %856 = vst.msk [vmem:[%s2 + $0x100] sm:$0xff] %vm823, %v697
  %857 = vst.msk [vmem:[%s2 + $0x108] sm:$0xff] %vm823, %v700
  %858 = vst.msk [vmem:[%s2 + $0x110] sm:$0xff] %vm823, %v705
  %859 = vst.msk [vmem:[%s2 + $0x118] sm:$0xff] %vm823, %v708
  %860 = vst.msk [vmem:[%s2 + $0x120] sm:$0xff] %vm823, %v713
  %861 = vst.msk [vmem:[%s2 + $0x128] sm:$0xff] %vm823, %v716
  %862 = vst.msk [vmem:[%s2 + $0x130] sm:$0xff] %vm823, %v721
  %863 = vst.msk [vmem:[%s2 + $0x138] sm:$0xff] %vm823, %v724
  %864 = vst.msk [vmem:[%s2 + $0x140] sm:$0xff] %vm823, %v729
  %865 = vst.msk [vmem:[%s2 + $0x148] sm:$0xff] %vm823, %v732
  %866 = vst.msk [vmem:[%s2 + $0x150] sm:$0xff] %vm823, %v737
  %867 = vst.msk [vmem:[%s2 + $0x158] sm:$0xff] %vm823, %v740
  %868 = vst.msk [vmem:[%s2 + $0x160] sm:$0xff] %vm823, %v745
  %869 = vst.msk [vmem:[%s2 + $0x168] sm:$0xff] %vm823, %v748
  %870 = vst.msk [vmem:[%s2 + $0x170] sm:$0xff] %vm823, %v753
  %871 = vst.msk [vmem:[%s2 + $0x178] sm:$0xff] %vm823, %v756
  %872 = vst.msk [vmem:[%s2 + $0x180] sm:$0xff] %vm823, %v761
  %873 = vst.msk [vmem:[%s2 + $0x188] sm:$0xff] %vm823, %v764
  %874 = vst.msk [vmem:[%s2 + $0x190] sm:$0xff] %vm823, %v769
  %875 = vst.msk [vmem:[%s2 + $0x198] sm:$0xff] %vm823, %v772
  %876 = vst.msk [vmem:[%s2 + $0x1a0] sm:$0xff] %vm823, %v777
  %877 = vst.msk [vmem:[%s2 + $0x1a8] sm:$0xff] %vm823, %v780
  %878 = vst.msk [vmem:[%s2 + $0x1b0] sm:$0xff] %vm823, %v785
  %879 = vst.msk [vmem:[%s2 + $0x1b8] sm:$0xff] %vm823, %v788
  %880 = vst.msk [vmem:[%s2 + $0x1c0] sm:$0xff] %vm823, %v793
  %881 = vst.msk [vmem:[%s2 + $0x1c8] sm:$0xff] %vm823, %v796
  %882 = vst.msk [vmem:[%s2 + $0x1d0] sm:$0xff] %vm823, %v801
  %883 = vst.msk [vmem:[%s2 + $0x1d8] sm:$0xff] %vm823, %v804
  %884 = vst.msk [vmem:[%s2 + $0x1e0] sm:$0xff] %vm823, %v809
  %885 = vst.msk [vmem:[%s2 + $0x1e8] sm:$0xff] %vm823, %v812
  %886 = vst.msk [vmem:[%s2 + $0x1f0] sm:$0xff] %vm823, %v817
  %887 = vst.msk [vmem:[%s2 + $0x1f8] sm:$0xff] %vm823, %v820
  %v888 = vld [vmem:[%s3] sm:$0x1]
  %v889 = vsel %vm823, %v569, 0.0
  %v890 = vsel %vm823, %v572, 0.0
  %v891 = vadd.f32 %v889, %v890
  %v892 = vsel %vm823, %v577, 0.0
  %v893 = vadd.f32 %v891, %v892
  %v894 = vsel %vm823, %v580, 0.0
  %v895 = vadd.f32 %v893, %v894
  %v896 = vsel %vm823, %v585, 0.0
  %v897 = vadd.f32 %v895, %v896
  %v898 = vsel %vm823, %v588, 0.0
  %v899 = vadd.f32 %v897, %v898
  %v900 = vsel %vm823, %v593, 0.0
  %v901 = vadd.f32 %v899, %v900
  %v902 = vsel %vm823, %v596, 0.0
  %v903 = vadd.f32 %v901, %v902
  %v904 = vsel %vm823, %v601, 0.0
  %v905 = vadd.f32 %v903, %v904
  %v906 = vsel %vm823, %v604, 0.0
  %v907 = vadd.f32 %v905, %v906
  %v908 = vsel %vm823, %v609, 0.0
  %v909 = vadd.f32 %v907, %v908
  %v910 = vsel %vm823, %v612, 0.0
  %v911 = vadd.f32 %v909, %v910
  %v912 = vsel %vm823, %v617, 0.0
  %v913 = vadd.f32 %v911, %v912
  %v914 = vsel %vm823, %v620, 0.0
  %v915 = vadd.f32 %v913, %v914
  %v916 = vsel %vm823, %v625, 0.0
  %v917 = vadd.f32 %v915, %v916
  %v918 = vsel %vm823, %v628, 0.0
  %v919 = vadd.f32 %v917, %v918
  %v920 = vsel %vm823, %v633, 0.0
  %v921 = vadd.f32 %v919, %v920
  %v922 = vsel %vm823, %v636, 0.0
  %v923 = vadd.f32 %v921, %v922
  %v924 = vsel %vm823, %v641, 0.0
  %v925 = vadd.f32 %v923, %v924
  %v926 = vsel %vm823, %v644, 0.0
  %v927 = vadd.f32 %v925, %v926
  %v928 = vsel %vm823, %v649, 0.0
  %v929 = vadd.f32 %v927, %v928
  %v930 = vsel %vm823, %v652, 0.0
  %v931 = vadd.f32 %v929, %v930
  %v932 = vsel %vm823, %v657, 0.0
  %v933 = vadd.f32 %v931, %v932
  %v934 = vsel %vm823, %v660, 0.0
  %v935 = vadd.f32 %v933, %v934
  %v936 = vsel %vm823, %v665, 0.0
  %v937 = vadd.f32 %v935, %v936
  %v938 = vsel %vm823, %v668, 0.0
  %v939 = vadd.f32 %v937, %v938
  %v940 = vsel %vm823, %v673, 0.0
  %v941 = vadd.f32 %v939, %v940
  %v942 = vsel %vm823, %v676, 0.0
  %v943 = vadd.f32 %v941, %v942
  %v944 = vsel %vm823, %v681, 0.0
  %v945 = vadd.f32 %v943, %v944
  %v946 = vsel %vm823, %v684, 0.0
  %v947 = vadd.f32 %v945, %v946
  %v948 = vsel %vm823, %v689, 0.0
  %v949 = vadd.f32 %v947, %v948
  %v950 = vsel %vm823, %v692, 0.0
  %v951 = vadd.f32 %v949, %v950
  %v952 = vsel %vm823, %v697, 0.0
  %v953 = vadd.f32 %v951, %v952
  %v954 = vsel %vm823, %v700, 0.0
  %v955 = vadd.f32 %v953, %v954
  %v956 = vsel %vm823, %v705, 0.0
  %v957 = vadd.f32 %v955, %v956
  %v958 = vsel %vm823, %v708, 0.0
  %v959 = vadd.f32 %v957, %v958
  %v960 = vsel %vm823, %v713, 0.0
  %v961 = vadd.f32 %v959, %v960
  %v962 = vsel %vm823, %v716, 0.0
  %v963 = vadd.f32 %v961, %v962
  %v964 = vsel %vm823, %v721, 0.0
  %v965 = vadd.f32 %v963, %v964
  %v966 = vsel %vm823, %v724, 0.0
  %v967 = vadd.f32 %v965, %v966
  %v968 = vsel %vm823, %v729, 0.0
  %v969 = vadd.f32 %v967, %v968
  %v970 = vsel %vm823, %v732, 0.0
  %v971 = vadd.f32 %v969, %v970
  %v972 = vsel %vm823, %v737, 0.0
  %v973 = vadd.f32 %v971, %v972
  %v974 = vsel %vm823, %v740, 0.0
  %v975 = vadd.f32 %v973, %v974
  %v976 = vsel %vm823, %v745, 0.0
  %v977 = vadd.f32 %v975, %v976
  %v978 = vsel %vm823, %v748, 0.0
  %v979 = vadd.f32 %v977, %v978
  %v980 = vsel %vm823, %v753, 0.0
  %v981 = vadd.f32 %v979, %v980
  %v982 = vsel %vm823, %v756, 0.0
  %v983 = vadd.f32 %v981, %v982
  %v984 = vsel %vm823, %v761, 0.0
  %v985 = vadd.f32 %v983, %v984
  %v986 = vsel %vm823, %v764, 0.0
  %v987 = vadd.f32 %v985, %v986
  %v988 = vsel %vm823, %v769, 0.0
  %v989 = vadd.f32 %v987, %v988
  %v990 = vsel %vm823, %v772, 0.0
  %v991 = vadd.f32 %v989, %v990
  %v992 = vsel %vm823, %v777, 0.0
  %v993 = vadd.f32 %v991, %v992
  %v994 = vsel %vm823, %v780, 0.0
  %v995 = vadd.f32 %v993, %v994
  %v996 = vsel %vm823, %v785, 0.0
  %v997 = vadd.f32 %v995, %v996
  %v998 = vsel %vm823, %v788, 0.0
  %v999 = vadd.f32 %v997, %v998
  %v1000 = vsel %vm823, %v793, 0.0
  %v1001 = vadd.f32 %v999, %v1000
  %v1002 = vsel %vm823, %v796, 0.0
  %v1003 = vadd.f32 %v1001, %v1002
  %v1004 = vsel %vm823, %v801, 0.0
  %v1005 = vadd.f32 %v1003, %v1004
  %v1006 = vsel %vm823, %v804, 0.0
  %v1007 = vadd.f32 %v1005, %v1006
  %v1008 = vsel %vm823, %v809, 0.0
  %v1009 = vadd.f32 %v1007, %v1008
  %v1010 = vsel %vm823, %v812, 0.0
  %v1011 = vadd.f32 %v1009, %v1010
  %v1012 = vsel %vm823, %v817, 0.0
  %v1013 = vadd.f32 %v1011, %v1012
  %v1014 = vsel %vm823, %v820, 0.0
  %v1015 = vadd.f32 %v1013, %v1014
  %v1016 = vrot.slane %v1015, 4
  %v1017 = vadd.f32 %v1015, %v1016
  %v1018 = vrot.slane %v1017, 2
  %v1019 = vadd.f32 %v1017, %v1018
  %v1020 = vrot.slane %v1019, 1
  %v1021 = vadd.f32 %v1019, %v1020
  %v1022 = vadd.f32 %v888, %v1021
  %vm1023 = vcmask 253952
  %1024 = vst.msk [vmem:[%s3] sm:$0x1] %vm1023, %v1022
  %v1025 = vld [vmem:[%s4] sm:$0x1]
  %v1026 = vmul.f32 %v569, %v569
  %v1027 = vmul.f32 %v572, %v572
  %v1028 = vmul.f32 %v577, %v577
  %v1029 = vmul.f32 %v580, %v580
  %v1030 = vmul.f32 %v585, %v585
  %v1031 = vmul.f32 %v588, %v588
  %v1032 = vmul.f32 %v593, %v593
  %v1033 = vmul.f32 %v596, %v596
  %v1034 = vmul.f32 %v601, %v601
  %v1035 = vmul.f32 %v604, %v604
  %v1036 = vmul.f32 %v609, %v609
  %v1037 = vmul.f32 %v612, %v612
  %v1038 = vmul.f32 %v617, %v617
  %v1039 = vmul.f32 %v620, %v620
  %v1040 = vmul.f32 %v625, %v625
  %v1041 = vmul.f32 %v628, %v628
  %v1042 = vmul.f32 %v633, %v633
  %v1043 = vmul.f32 %v636, %v636
  %v1044 = vmul.f32 %v641, %v641
  %v1045 = vmul.f32 %v644, %v644
  %v1046 = vmul.f32 %v649, %v649
  %v1047 = vmul.f32 %v652, %v652
  %v1048 = vmul.f32 %v657, %v657
  %v1049 = vmul.f32 %v660, %v660
  %v1050 = vmul.f32 %v665, %v665
  %v1051 = vmul.f32 %v668, %v668
  %v1052 = vmul.f32 %v673, %v673
  %v1053 = vmul.f32 %v676, %v676
  %v1054 = vmul.f32 %v681, %v681
  %v1055 = vmul.f32 %v684, %v684
  %v1056 = vmul.f32 %v689, %v689
  %v1057 = vmul.f32 %v692, %v692
  %v1058 = vmul.f32 %v697, %v697
  %v1059 = vmul.f32 %v700, %v700
  %v1060 = vmul.f32 %v705, %v705
  %v1061 = vmul.f32 %v708, %v708
  %v1062 = vmul.f32 %v713, %v713
  %v1063 = vmul.f32 %v716, %v716
  %v1064 = vmul.f32 %v721, %v721
  %v1065 = vmul.f32 %v724, %v724
  %v1066 = vmul.f32 %v729, %v729
  %v1067 = vmul.f32 %v732, %v732
  %v1068 = vmul.f32 %v737, %v737
  %v1069 = vmul.f32 %v740, %v740
  %v1070 = vmul.f32 %v745, %v745
  %v1071 = vmul.f32 %v748, %v748
  %v1072 = vmul.f32 %v753, %v753
  %v1073 = vmul.f32 %v756, %v756
  %v1074 = vmul.f32 %v761, %v761
  %v1075 = vmul.f32 %v764, %v764
  %v1076 = vmul.f32 %v769, %v769
  %v1077 = vmul.f32 %v772, %v772
  %v1078 = vmul.f32 %v777, %v777
  %v1079 = vmul.f32 %v780, %v780
  %v1080 = vmul.f32 %v785, %v785
  %v1081 = vmul.f32 %v788, %v788
  %v1082 = vmul.f32 %v793, %v793
  %v1083 = vmul.f32 %v796, %v796
  %v1084 = vmul.f32 %v801, %v801
  %v1085 = vmul.f32 %v804, %v804
  %v1086 = vmul.f32 %v809, %v809
  %v1087 = vmul.f32 %v812, %v812
  %v1088 = vmul.f32 %v817, %v817
  %v1089 = vmul.f32 %v820, %v820
  %v1090 = vsel %vm823, %v1026, 0.0
  %v1091 = vsel %vm823, %v1027, 0.0
  %v1092 = vadd.f32 %v1090, %v1091
  %v1093 = vsel %vm823, %v1028, 0.0
  %v1094 = vadd.f32 %v1092, %v1093
  %v1095 = vsel %vm823, %v1029, 0.0
  %v1096 = vadd.f32 %v1094, %v1095
  %v1097 = vsel %vm823, %v1030, 0.0
  %v1098 = vadd.f32 %v1096, %v1097
  %v1099 = vsel %vm823, %v1031, 0.0
  %v1100 = vadd.f32 %v1098, %v1099
  %v1101 = vsel %vm823, %v1032, 0.0
  %v1102 = vadd.f32 %v1100, %v1101
  %v1103 = vsel %vm823, %v1033, 0.0
  %v1104 = vadd.f32 %v1102, %v1103
  %v1105 = vsel %vm823, %v1034, 0.0
  %v1106 = vadd.f32 %v1104, %v1105
  %v1107 = vsel %vm823, %v1035, 0.0
  %v1108 = vadd.f32 %v1106, %v1107
  %v1109 = vsel %vm823, %v1036, 0.0
  %v1110 = vadd.f32 %v1108, %v1109
  %v1111 = vsel %vm823, %v1037, 0.0
  %v1112 = vadd.f32 %v1110, %v1111
  %v1113 = vsel %vm823, %v1038, 0.0
  %v1114 = vadd.f32 %v1112, %v1113
  %v1115 = vsel %vm823, %v1039, 0.0
  %v1116 = vadd.f32 %v1114, %v1115
  %v1117 = vsel %vm823, %v1040, 0.0
  %v1118 = vadd.f32 %v1116, %v1117
  %v1119 = vsel %vm823, %v1041, 0.0
  %v1120 = vadd.f32 %v1118, %v1119
  %v1121 = vsel %vm823, %v1042, 0.0
  %v1122 = vadd.f32 %v1120, %v1121
  %v1123 = vsel %vm823, %v1043, 0.0
  %v1124 = vadd.f32 %v1122, %v1123
  %v1125 = vsel %vm823, %v1044, 0.0
  %v1126 = vadd.f32 %v1124, %v1125
  %v1127 = vsel %vm823, %v1045, 0.0
  %v1128 = vadd.f32 %v1126, %v1127
  %v1129 = vsel %vm823, %v1046, 0.0
  %v1130 = vadd.f32 %v1128, %v1129
  %v1131 = vsel %vm823, %v1047, 0.0
  %v1132 = vadd.f32 %v1130, %v1131
  %v1133 = vsel %vm823, %v1048, 0.0
  %v1134 = vadd.f32 %v1132, %v1133
  %v1135 = vsel %vm823, %v1049, 0.0
  %v1136 = vadd.f32 %v1134, %v1135
  %v1137 = vsel %vm823, %v1050, 0.0
  %v1138 = vadd.f32 %v1136, %v1137
  %v1139 = vsel %vm823, %v1051, 0.0
  %v1140 = vadd.f32 %v1138, %v1139
  %v1141 = vsel %vm823, %v1052, 0.0
  %v1142 = vadd.f32 %v1140, %v1141
  %v1143 = vsel %vm823, %v1053, 0.0
  %v1144 = vadd.f32 %v1142, %v1143
  %v1145 = vsel %vm823, %v1054, 0.0
  %v1146 = vadd.f32 %v1144, %v1145
  %v1147 = vsel %vm823, %v1055, 0.0
  %v1148 = vadd.f32 %v1146, %v1147
  %v1149 = vsel %vm823, %v1056, 0.0
  %v1150 = vadd.f32 %v1148, %v1149
  %v1151 = vsel %vm823, %v1057, 0.0
  %v1152 = vadd.f32 %v1150, %v1151
  %v1153 = vsel %vm823, %v1058, 0.0
  %v1154 = vadd.f32 %v1152, %v1153
  %v1155 = vsel %vm823, %v1059, 0.0
  %v1156 = vadd.f32 %v1154, %v1155
  %v1157 = vsel %vm823, %v1060, 0.0
  %v1158 = vadd.f32 %v1156, %v1157
  %v1159 = vsel %vm823, %v1061, 0.0
  %v1160 = vadd.f32 %v1158, %v1159
  %v1161 = vsel %vm823, %v1062, 0.0
  %v1162 = vadd.f32 %v1160, %v1161
  %v1163 = vsel %vm823, %v1063, 0.0
  %v1164 = vadd.f32 %v1162, %v1163
  %v1165 = vsel %vm823, %v1064, 0.0
  %v1166 = vadd.f32 %v1164, %v1165
  %v1167 = vsel %vm823, %v1065, 0.0
  %v1168 = vadd.f32 %v1166, %v1167
  %v1169 = vsel %vm823, %v1066, 0.0
  %v1170 = vadd.f32 %v1168, %v1169
  %v1171 = vsel %vm823, %v1067, 0.0
  %v1172 = vadd.f32 %v1170, %v1171
  %v1173 = vsel %vm823, %v1068, 0.0
  %v1174 = vadd.f32 %v1172, %v1173
  %v1175 = vsel %vm823, %v1069, 0.0
  %v1176 = vadd.f32 %v1174, %v1175
  %v1177 = vsel %vm823, %v1070, 0.0
  %v1178 = vadd.f32 %v1176, %v1177
  %v1179 = vsel %vm823, %v1071, 0.0
  %v1180 = vadd.f32 %v1178, %v1179
  %v1181 = vsel %vm823, %v1072, 0.0
  %v1182 = vadd.f32 %v1180, %v1181
  %v1183 = vsel %vm823, %v1073, 0.0
  %v1184 = vadd.f32 %v1182, %v1183
  %v1185 = vsel %vm823, %v1074, 0.0
  %v1186 = vadd.f32 %v1184, %v1185
  %v1187 = vsel %vm823, %v1075, 0.0
  %v1188 = vadd.f32 %v1186, %v1187
  %v1189 = vsel %vm823, %v1076, 0.0
  %v1190 = vadd.f32 %v1188, %v1189
  %v1191 = vsel %vm823, %v1077, 0.0
  %v1192 = vadd.f32 %v1190, %v1191
  %v1193 = vsel %vm823, %v1078, 0.0
  %v1194 = vadd.f32 %v1192, %v1193
  %v1195 = vsel %vm823, %v1079, 0.0
  %v1196 = vadd.f32 %v1194, %v1195
  %v1197 = vsel %vm823, %v1080, 0.0
  %v1198 = vadd.f32 %v1196, %v1197
  %v1199 = vsel %vm823, %v1081, 0.0
  %v1200 = vadd.f32 %v1198, %v1199
  %v1201 = vsel %vm823, %v1082, 0.0
  %v1202 = vadd.f32 %v1200, %v1201
  %v1203 = vsel %vm823, %v1083, 0.0
  %v1204 = vadd.f32 %v1202, %v1203
  %v1205 = vsel %vm823, %v1084, 0.0
  %v1206 = vadd.f32 %v1204, %v1205
  %v1207 = vsel %vm823, %v1085, 0.0
  %v1208 = vadd.f32 %v1206, %v1207
  %v1209 = vsel %vm823, %v1086, 0.0
  %v1210 = vadd.f32 %v1208, %v1209
  %v1211 = vsel %vm823, %v1087, 0.0
  %v1212 = vadd.f32 %v1210, %v1211
  %v1213 = vsel %vm823, %v1088, 0.0
  %v1214 = vadd.f32 %v1212, %v1213
  %v1215 = vsel %vm823, %v1089, 0.0
  %v1216 = vadd.f32 %v1214, %v1215
  %v1217 = vrot.slane %v1216, 4
  %v1218 = vadd.f32 %v1216, %v1217
  %v1219 = vrot.slane %v1218, 2
  %v1220 = vadd.f32 %v1218, %v1219
  %v1221 = vrot.slane %v1220, 1
  %v1222 = vadd.f32 %v1220, %v1221
  %v1223 = vadd.f32 %v1025, %v1222
  %1224 = vst.msk [vmem:[%s4] sm:$0x1] %vm1023, %v1223
  // Predicated region
  $region14: #{discriminator_forward.11} parent=0 // pred_check
    _
  $region15: #{discriminator_forward.11} parent=0 // pred_check_branch
    %1226 = sbr.rel (0) target = $region17
  $region16: #{discriminator_forward.11} parent=0 // pred_region
    _
  $region17: #{discriminator_forward.11} parent=0 // pred_fallthru
    _
  // Predicated region
  $region18: #{discriminator_forward.11} parent=0 // pred_check
    _
  $region19: #{discriminator_forward.11} parent=0 // pred_check_branch
    %1228 = sbr.rel (0) target = $region21
  $region20: #{discriminator_forward.11} parent=0 // pred_region
    _
  $region21: #{discriminator_forward.11} parent=0 // pred_fallthru
    _
  // Predicated region
  $region22: #{discriminator_forward.11} parent=0 // pred_check
    _
  $region23: #{discriminator_forward.11} parent=0 // pred_check_branch
    %1230 = sbr.rel (0) target = $region25
  $region24: #{discriminator_forward.11} parent=0 // pred_region
    _
  $region25: #{discriminator_forward.11} parent=0 // pred_fallthru
    _
  // Predicated region
  $region26: #{discriminator_forward.11} parent=0 // pred_check
    _
  $region27: #{discriminator_forward.11} parent=0 // pred_check_branch
    %1232 = sbr.rel (0) target = $region29
  $region28: #{discriminator_forward.11} parent=0 // pred_region
    _
  $region29: #{discriminator_forward.11} parent=0 // pred_fallthru
    _
  // Predicated region
  $region30: #{discriminator_forward.11} parent=0 // pred_check
    _
  $region31: #{discriminator_forward.11} parent=0 // pred_check_branch
    %1234 = sbr.rel (0) target = $region33
  $region32: #{discriminator_forward.11} parent=0 // pred_region
    _
  $region33: #{discriminator_forward.11} parent=0 // pred_fallthru
    _
  // Predicated region
  $region34: #{discriminator_forward.11} parent=0 // pred_check
    _
  $region35: #{discriminator_forward.11} parent=0 // pred_check_branch
    %1236 = sbr.rel (0) target = $region37
  $region36: #{discriminator_forward.11} parent=0 // pred_region
    _
  $region37: #{discriminator_forward.11} parent=0 // pred_fallthru
    _

// kernel: discriminator_forward.12
$region0: #{discriminator_forward.12}
  #allocation0 [shape = 'u32[]', space=smem, size = 0x4, offset = 0x4, fixed_abs, tag = 'smem constant byte address 0x4 - core index']
  #allocation1 [shape = 'u32[144,128]{1,0:T(1,128)}', space=vmem, size = 0x12000, scoped, tag = 'internal scratch']
  %s0 = inlined_call_operand.vmem [shape: f32[512,32], index: 0, kind: input, shape index: {}]
  %s1 = inlined_call_operand.vmem [shape: f32[1,32], index: 1, kind: input, shape index: {}]
  %s2 = inlined_call_operand.vmem [shape: f32[1,32], index: 2, kind: input, shape index: {}]
  %s3 = inlined_call_operand.vmem [shape: bf16[512,32], index: 3, kind: output, shape index: {}]
  %s4 = sld [smem:[#allocation0]]
  $region22: #{discriminator_forward.12} parent=0
    _
  %s6 = ssub.s32 1, %s4
  %s7 = scalar_select 0, %s6, %s4
  // Predicated region
  $region2: #{discriminator_forward.12} parent=0 // pred_check
    _
  $region3: #{discriminator_forward.12} parent=0 // pred_check_branch
    %9 = sbr.rel (0) target = $region5
  $region4: #{discriminator_forward.12} parent=0 // pred_region
    _
  $region5: #{discriminator_forward.12} parent=0 // pred_fallthru
    _
  // Predicated region
  $region6: #{discriminator_forward.12} parent=0 // pred_check
    _
  $region7: #{discriminator_forward.12} parent=0 // pred_check_branch
    %11 = sbr.rel (0) target = $region9
  $region8: #{discriminator_forward.12} parent=0 // pred_region
    _
  $region9: #{discriminator_forward.12} parent=0 // pred_fallthru
    _
  // Predicated region
  $region10: #{discriminator_forward.12} parent=0 // pred_check
    _
  $region11: #{discriminator_forward.12} parent=0 // pred_check_branch
    %13 = sbr.rel (0) target = $region13
  $region12: #{discriminator_forward.12} parent=0 // pred_region
    _
  $region13: #{discriminator_forward.12} parent=0 // pred_fallthru
    _
  %v14 = vld [vmem:[%s0] sm:$0xff]
  %v15 = vld [vmem:[%s0 + $0x8] sm:$0xff]
  %v16 = vld [vmem:[%s0 + $0x10] sm:$0xff]
  %v17 = vld [vmem:[%s0 + $0x18] sm:$0xff]
  %v18 = vld [vmem:[%s0 + $0x20] sm:$0xff]
  %v19 = vld [vmem:[%s0 + $0x28] sm:$0xff]
  %v20 = vld [vmem:[%s0 + $0x30] sm:$0xff]
  %v21 = vld [vmem:[%s0 + $0x38] sm:$0xff]
  %v22 = vld [vmem:[%s0 + $0x40] sm:$0xff]
  %v23 = vld [vmem:[%s0 + $0x48] sm:$0xff]
  %v24 = vld [vmem:[%s0 + $0x50] sm:$0xff]
  %v25 = vld [vmem:[%s0 + $0x58] sm:$0xff]
  %v26 = vld [vmem:[%s0 + $0x60] sm:$0xff]
  %v27 = vld [vmem:[%s0 + $0x68] sm:$0xff]
  %v28 = vld [vmem:[%s0 + $0x70] sm:$0xff]
  %v29 = vld [vmem:[%s0 + $0x78] sm:$0xff]
  %v30 = vld [vmem:[%s0 + $0x80] sm:$0xff]
  %v31 = vld [vmem:[%s0 + $0x88] sm:$0xff]
  %v32 = vld [vmem:[%s0 + $0x90] sm:$0xff]
  %v33 = vld [vmem:[%s0 + $0x98] sm:$0xff]
  %v34 = vld [vmem:[%s0 + $0xa0] sm:$0xff]
  %v35 = vld [vmem:[%s0 + $0xa8] sm:$0xff]
  %v36 = vld [vmem:[%s0 + $0xb0] sm:$0xff]
  %v37 = vld [vmem:[%s0 + $0xb8] sm:$0xff]
  %v38 = vld [vmem:[%s0 + $0xc0] sm:$0xff]
  %v39 = vld [vmem:[%s0 + $0xc8] sm:$0xff]
  %v40 = vld [vmem:[%s0 + $0xd0] sm:$0xff]
  %v41 = vld [vmem:[%s0 + $0xd8] sm:$0xff]
  %v42 = vld [vmem:[%s0 + $0xe0] sm:$0xff]
  %v43 = vld [vmem:[%s0 + $0xe8] sm:$0xff]
  %v44 = vld [vmem:[%s0 + $0xf0] sm:$0xff]
  %v45 = vld [vmem:[%s0 + $0xf8] sm:$0xff]
  %v46 = vld [vmem:[%s0 + $0x100] sm:$0xff]
  %v47 = vld [vmem:[%s0 + $0x108] sm:$0xff]
  %v48 = vld [vmem:[%s0 + $0x110] sm:$0xff]
  %v49 = vld [vmem:[%s0 + $0x118] sm:$0xff]
  %v50 = vld [vmem:[%s0 + $0x120] sm:$0xff]
  %v51 = vld [vmem:[%s0 + $0x128] sm:$0xff]
  %v52 = vld [vmem:[%s0 + $0x130] sm:$0xff]
  %v53 = vld [vmem:[%s0 + $0x138] sm:$0xff]
  %v54 = vld [vmem:[%s0 + $0x140] sm:$0xff]
  %v55 = vld [vmem:[%s0 + $0x148] sm:$0xff]
  %v56 = vld [vmem:[%s0 + $0x150] sm:$0xff]
  %v57 = vld [vmem:[%s0 + $0x158] sm:$0xff]
  %v58 = vld [vmem:[%s0 + $0x160] sm:$0xff]
  %v59 = vld [vmem:[%s0 + $0x168] sm:$0xff]
  %v60 = vld [vmem:[%s0 + $0x170] sm:$0xff]
  %v61 = vld [vmem:[%s0 + $0x178] sm:$0xff]
  %v62 = vld [vmem:[%s0 + $0x180] sm:$0xff]
  %v63 = vld [vmem:[%s0 + $0x188] sm:$0xff]
  %v64 = vld [vmem:[%s0 + $0x190] sm:$0xff]
  %v65 = vld [vmem:[%s0 + $0x198] sm:$0xff]
  %v66 = vld [vmem:[%s0 + $0x1a0] sm:$0xff]
  %v67 = vld [vmem:[%s0 + $0x1a8] sm:$0xff]
  %v68 = vld [vmem:[%s0 + $0x1b0] sm:$0xff]
  %v69 = vld [vmem:[%s0 + $0x1b8] sm:$0xff]
  %v70 = vld [vmem:[%s0 + $0x1c0] sm:$0xff]
  %v71 = vld [vmem:[%s0 + $0x1c8] sm:$0xff]
  %v72 = vld [vmem:[%s0 + $0x1d0] sm:$0xff]
  %v73 = vld [vmem:[%s0 + $0x1d8] sm:$0xff]
  %v74 = vld [vmem:[%s0 + $0x1e0] sm:$0xff]
  %v75 = vld [vmem:[%s0 + $0x1e8] sm:$0xff]
  %v76 = vld [vmem:[%s0 + $0x1f0] sm:$0xff]
  %v77 = vld [vmem:[%s0 + $0x1f8] sm:$0xff]
  %v78 = vld [vmem:[%s1] sm:$0x1]
  %v80 = vlaneseq
  %v81 = vshrl.u32 %v80, 7
  %v82 = vsub.s32 0, %v81
  %v83 = vrot.slane %v78, %v82
  %v85 = vmul.f32 %v14, %v83
  %v86 = vmul.f32 %v15, %v83
  %v87 = vmul.f32 %v16, %v83
  %v88 = vmul.f32 %v17, %v83
  %v89 = vmul.f32 %v18, %v83
  %v90 = vmul.f32 %v19, %v83
  %v91 = vmul.f32 %v20, %v83
  %v92 = vmul.f32 %v21, %v83
  %v93 = vmul.f32 %v22, %v83
  %v94 = vmul.f32 %v23, %v83
  %v95 = vmul.f32 %v24, %v83
  %v96 = vmul.f32 %v25, %v83
  %v97 = vmul.f32 %v26, %v83
  %v98 = vmul.f32 %v27, %v83
  %v99 = vmul.f32 %v28, %v83
  %v100 = vmul.f32 %v29, %v83
  %v101 = vmul.f32 %v30, %v83
  %v102 = vmul.f32 %v31, %v83
  %v103 = vmul.f32 %v32, %v83
  %v104 = vmul.f32 %v33, %v83
  %v105 = vmul.f32 %v34, %v83
  %v106 = vmul.f32 %v35, %v83
  %v107 = vmul.f32 %v36, %v83
  %v108 = vmul.f32 %v37, %v83
  %v109 = vmul.f32 %v38, %v83
  %v110 = vmul.f32 %v39, %v83
  %v111 = vmul.f32 %v40, %v83
  %v112 = vmul.f32 %v41, %v83
  %v113 = vmul.f32 %v42, %v83
  %v114 = vmul.f32 %v43, %v83
  %v115 = vmul.f32 %v44, %v83
  %v116 = vmul.f32 %v45, %v83
  %v117 = vmul.f32 %v46, %v83
  %v118 = vmul.f32 %v47, %v83
  %v119 = vmul.f32 %v48, %v83
  %v120 = vmul.f32 %v49, %v83
  %v121 = vmul.f32 %v50, %v83
  %v122 = vmul.f32 %v51, %v83
  %v123 = vmul.f32 %v52, %v83
  %v124 = vmul.f32 %v53, %v83
  %v125 = vmul.f32 %v54, %v83
  %v126 = vmul.f32 %v55, %v83
  %v127 = vmul.f32 %v56, %v83
  %v128 = vmul.f32 %v57, %v83
  %v129 = vmul.f32 %v58, %v83
  %v130 = vmul.f32 %v59, %v83
  %v131 = vmul.f32 %v60, %v83
  %v132 = vmul.f32 %v61, %v83
  %v133 = vmul.f32 %v62, %v83
  %v134 = vmul.f32 %v63, %v83
  %v135 = vmul.f32 %v64, %v83
  %v136 = vmul.f32 %v65, %v83
  %v137 = vmul.f32 %v66, %v83
  %v138 = vmul.f32 %v67, %v83
  %v139 = vmul.f32 %v68, %v83
  %v140 = vmul.f32 %v69, %v83
  %v141 = vmul.f32 %v70, %v83
  %v142 = vmul.f32 %v71, %v83
  %v143 = vmul.f32 %v72, %v83
  %v144 = vmul.f32 %v73, %v83
  %v145 = vmul.f32 %v74, %v83
  %v146 = vmul.f32 %v75, %v83
  %v147 = vmul.f32 %v76, %v83
  %v148 = vmul.f32 %v77, %v83
  %v149 = vld [vmem:[%s2] sm:$0x1]
  %v151 = vlaneseq
  %v152 = vshrl.u32 %v151, 7
  %v153 = vsub.s32 0, %v152
  %v154 = vrot.slane %v149, %v153
  %v156 = vadd.f32 %v85, %v154
  %v157 = vadd.f32 %v86, %v154
  %v158 = vadd.f32 %v87, %v154
  %v159 = vadd.f32 %v88, %v154
  %v160 = vadd.f32 %v89, %v154
  %v161 = vadd.f32 %v90, %v154
  %v162 = vadd.f32 %v91, %v154
  %v163 = vadd.f32 %v92, %v154
  %v164 = vadd.f32 %v93, %v154
  %v165 = vadd.f32 %v94, %v154
  %v166 = vadd.f32 %v95, %v154
  %v167 = vadd.f32 %v96, %v154
  %v168 = vadd.f32 %v97, %v154
  %v169 = vadd.f32 %v98, %v154
  %v170 = vadd.f32 %v99, %v154
  %v171 = vadd.f32 %v100, %v154
  %v172 = vadd.f32 %v101, %v154
  %v173 = vadd.f32 %v102, %v154
  %v174 = vadd.f32 %v103, %v154
  %v175 = vadd.f32 %v104, %v154
  %v176 = vadd.f32 %v105, %v154
  %v177 = vadd.f32 %v106, %v154
  %v178 = vadd.f32 %v107, %v154
  %v179 = vadd.f32 %v108, %v154
  %v180 = vadd.f32 %v109, %v154
  %v181 = vadd.f32 %v110, %v154
  %v182 = vadd.f32 %v111, %v154
  %v183 = vadd.f32 %v112, %v154
  %v184 = vadd.f32 %v113, %v154
  %v185 = vadd.f32 %v114, %v154
  %v186 = vadd.f32 %v115, %v154
  %v187 = vadd.f32 %v116, %v154
  %v188 = vadd.f32 %v117, %v154
  %v189 = vadd.f32 %v118, %v154
  %v190 = vadd.f32 %v119, %v154
  %v191 = vadd.f32 %v120, %v154
  %v192 = vadd.f32 %v121, %v154
  %v193 = vadd.f32 %v122, %v154
  %v194 = vadd.f32 %v123, %v154
  %v195 = vadd.f32 %v124, %v154
  %v196 = vadd.f32 %v125, %v154
  %v197 = vadd.f32 %v126, %v154
  %v198 = vadd.f32 %v127, %v154
  %v199 = vadd.f32 %v128, %v154
  %v200 = vadd.f32 %v129, %v154
  %v201 = vadd.f32 %v130, %v154
  %v202 = vadd.f32 %v131, %v154
  %v203 = vadd.f32 %v132, %v154
  %v204 = vadd.f32 %v133, %v154
  %v205 = vadd.f32 %v134, %v154
  %v206 = vadd.f32 %v135, %v154
  %v207 = vadd.f32 %v136, %v154
  %v208 = vadd.f32 %v137, %v154
  %v209 = vadd.f32 %v138, %v154
  %v210 = vadd.f32 %v139, %v154
  %v211 = vadd.f32 %v140, %v154
  %v212 = vadd.f32 %v141, %v154
  %v213 = vadd.f32 %v142, %v154
  %v214 = vadd.f32 %v143, %v154
  %v215 = vadd.f32 %v144, %v154
  %v216 = vadd.f32 %v145, %v154
  %v217 = vadd.f32 %v146, %v154
  %v218 = vadd.f32 %v147, %v154
  %v219 = vadd.f32 %v148, %v154
  %vm220 = vcmp.ge.f32.partialorder %v156, 0.0
  %vm221 = vcmp.ge.f32.partialorder %v157, 0.0
  %vm222 = vcmp.ge.f32.partialorder %v158, 0.0
  %vm223 = vcmp.ge.f32.partialorder %v159, 0.0
  %vm224 = vcmp.ge.f32.partialorder %v160, 0.0
  %vm225 = vcmp.ge.f32.partialorder %v161, 0.0
  %vm226 = vcmp.ge.f32.partialorder %v162, 0.0
  %vm227 = vcmp.ge.f32.partialorder %v163, 0.0
  %vm228 = vcmp.ge.f32.partialorder %v164, 0.0
  %vm229 = vcmp.ge.f32.partialorder %v165, 0.0
  %vm230 = vcmp.ge.f32.partialorder %v166, 0.0
  %vm231 = vcmp.ge.f32.partialorder %v167, 0.0
  %vm232 = vcmp.ge.f32.partialorder %v168, 0.0
  %vm233 = vcmp.ge.f32.partialorder %v169, 0.0
  %vm234 = vcmp.ge.f32.partialorder %v170, 0.0
  %vm235 = vcmp.ge.f32.partialorder %v171, 0.0
  %vm236 = vcmp.ge.f32.partialorder %v172, 0.0
  %vm237 = vcmp.ge.f32.partialorder %v173, 0.0
  %vm238 = vcmp.ge.f32.partialorder %v174, 0.0
  %vm239 = vcmp.ge.f32.partialorder %v175, 0.0
  %vm240 = vcmp.ge.f32.partialorder %v176, 0.0
  %vm241 = vcmp.ge.f32.partialorder %v177, 0.0
  %vm242 = vcmp.ge.f32.partialorder %v178, 0.0
  %vm243 = vcmp.ge.f32.partialorder %v179, 0.0
  %vm244 = vcmp.ge.f32.partialorder %v180, 0.0
  %vm245 = vcmp.ge.f32.partialorder %v181, 0.0
  %vm246 = vcmp.ge.f32.partialorder %v182, 0.0
  %vm247 = vcmp.ge.f32.partialorder %v183, 0.0
  %vm248 = vcmp.ge.f32.partialorder %v184, 0.0
  %vm249 = vcmp.ge.f32.partialorder %v185, 0.0
  %vm250 = vcmp.ge.f32.partialorder %v186, 0.0
  %vm251 = vcmp.ge.f32.partialorder %v187, 0.0
  %vm252 = vcmp.ge.f32.partialorder %v188, 0.0
  %vm253 = vcmp.ge.f32.partialorder %v189, 0.0
  %vm254 = vcmp.ge.f32.partialorder %v190, 0.0
  %vm255 = vcmp.ge.f32.partialorder %v191, 0.0
  %vm256 = vcmp.ge.f32.partialorder %v192, 0.0
  %vm257 = vcmp.ge.f32.partialorder %v193, 0.0
  %vm258 = vcmp.ge.f32.partialorder %v194, 0.0
  %vm259 = vcmp.ge.f32.partialorder %v195, 0.0
  %vm260 = vcmp.ge.f32.partialorder %v196, 0.0
  %vm261 = vcmp.ge.f32.partialorder %v197, 0.0
  %vm262 = vcmp.ge.f32.partialorder %v198, 0.0
  %vm263 = vcmp.ge.f32.partialorder %v199, 0.0
  %vm264 = vcmp.ge.f32.partialorder %v200, 0.0
  %vm265 = vcmp.ge.f32.partialorder %v201, 0.0
  %vm266 = vcmp.ge.f32.partialorder %v202, 0.0
  %vm267 = vcmp.ge.f32.partialorder %v203, 0.0
  %vm268 = vcmp.ge.f32.partialorder %v204, 0.0
  %vm269 = vcmp.ge.f32.partialorder %v205, 0.0
  %vm270 = vcmp.ge.f32.partialorder %v206, 0.0
  %vm271 = vcmp.ge.f32.partialorder %v207, 0.0
  %vm272 = vcmp.ge.f32.partialorder %v208, 0.0
  %vm273 = vcmp.ge.f32.partialorder %v209, 0.0
  %vm274 = vcmp.ge.f32.partialorder %v210, 0.0
  %vm275 = vcmp.ge.f32.partialorder %v211, 0.0
  %vm276 = vcmp.ge.f32.partialorder %v212, 0.0
  %vm277 = vcmp.ge.f32.partialorder %v213, 0.0
  %vm278 = vcmp.ge.f32.partialorder %v214, 0.0
  %vm279 = vcmp.ge.f32.partialorder %v215, 0.0
  %vm280 = vcmp.ge.f32.partialorder %v216, 0.0
  %vm281 = vcmp.ge.f32.partialorder %v217, 0.0
  %vm282 = vcmp.ge.f32.partialorder %v218, 0.0
  %vm283 = vcmp.ge.f32.partialorder %v219, 0.0
  %v284 = vmul.f32 %v156, 0.2
  %v285 = vmul.f32 %v157, 0.2
  %v286 = vmul.f32 %v158, 0.2
  %v287 = vmul.f32 %v159, 0.2
  %v288 = vmul.f32 %v160, 0.2
  %v289 = vmul.f32 %v161, 0.2
  %v290 = vmul.f32 %v162, 0.2
  %v291 = vmul.f32 %v163, 0.2
  %v292 = vmul.f32 %v164, 0.2
  %v293 = vmul.f32 %v165, 0.2
  %v294 = vmul.f32 %v166, 0.2
  %v295 = vmul.f32 %v167, 0.2
  %v296 = vmul.f32 %v168, 0.2
  %v297 = vmul.f32 %v169, 0.2
  %v298 = vmul.f32 %v170, 0.2
  %v299 = vmul.f32 %v171, 0.2
  %v300 = vmul.f32 %v172, 0.2
  %v301 = vmul.f32 %v173, 0.2
  %v302 = vmul.f32 %v174, 0.2
  %v303 = vmul.f32 %v175, 0.2
  %v304 = vmul.f32 %v176, 0.2
  %v305 = vmul.f32 %v177, 0.2
  %v306 = vmul.f32 %v178, 0.2
  %v307 = vmul.f32 %v179, 0.2
  %v308 = vmul.f32 %v180, 0.2
  %v309 = vmul.f32 %v181, 0.2
  %v310 = vmul.f32 %v182, 0.2
  %v311 = vmul.f32 %v183, 0.2
  %v312 = vmul.f32 %v184, 0.2
  %v313 = vmul.f32 %v185, 0.2
  %v314 = vmul.f32 %v186, 0.2
  %v315 = vmul.f32 %v187, 0.2
  %v316 = vmul.f32 %v188, 0.2
  %v317 = vmul.f32 %v189, 0.2
  %v318 = vmul.f32 %v190, 0.2
  %v319 = vmul.f32 %v191, 0.2
  %v320 = vmul.f32 %v192, 0.2
  %v321 = vmul.f32 %v193, 0.2
  %v322 = vmul.f32 %v194, 0.2
  %v323 = vmul.f32 %v195, 0.2
  %v324 = vmul.f32 %v196, 0.2
  %v325 = vmul.f32 %v197, 0.2
  %v326 = vmul.f32 %v198, 0.2
  %v327 = vmul.f32 %v199, 0.2
  %v328 = vmul.f32 %v200, 0.2
  %v329 = vmul.f32 %v201, 0.2
  %v330 = vmul.f32 %v202, 0.2
  %v331 = vmul.f32 %v203, 0.2
  %v332 = vmul.f32 %v204, 0.2
  %v333 = vmul.f32 %v205, 0.2
  %v334 = vmul.f32 %v206, 0.2
  %v335 = vmul.f32 %v207, 0.2
  %v336 = vmul.f32 %v208, 0.2
  %v337 = vmul.f32 %v209, 0.2
  %v338 = vmul.f32 %v210, 0.2
  %v339 = vmul.f32 %v211, 0.2
  %v340 = vmul.f32 %v212, 0.2
  %v341 = vmul.f32 %v213, 0.2
  %v342 = vmul.f32 %v214, 0.2
  %v343 = vmul.f32 %v215, 0.2
  %v344 = vmul.f32 %v216, 0.2
  %v345 = vmul.f32 %v217, 0.2
  %v346 = vmul.f32 %v218, 0.2
  %v347 = vmul.f32 %v219, 0.2
  %v348 = vsel %vm220, %v156, %v284
  %v349 = vsel %vm221, %v157, %v285
  %v350 = vsel %vm222, %v158, %v286
  %v351 = vsel %vm223, %v159, %v287
  %v352 = vsel %vm224, %v160, %v288
  %v353 = vsel %vm225, %v161, %v289
  %v354 = vsel %vm226, %v162, %v290
  %v355 = vsel %vm227, %v163, %v291
  %v356 = vsel %vm228, %v164, %v292
  %v357 = vsel %vm229, %v165, %v293
  %v358 = vsel %vm230, %v166, %v294
  %v359 = vsel %vm231, %v167, %v295
  %v360 = vsel %vm232, %v168, %v296
  %v361 = vsel %vm233, %v169, %v297
  %v362 = vsel %vm234, %v170, %v298
  %v363 = vsel %vm235, %v171, %v299
  %v364 = vsel %vm236, %v172, %v300
  %v365 = vsel %vm237, %v173, %v301
  %v366 = vsel %vm238, %v174, %v302
  %v367 = vsel %vm239, %v175, %v303
  %v368 = vsel %vm240, %v176, %v304
  %v369 = vsel %vm241, %v177, %v305
  %v370 = vsel %vm242, %v178, %v306
  %v371 = vsel %vm243, %v179, %v307
  %v372 = vsel %vm244, %v180, %v308
  %v373 = vsel %vm245, %v181, %v309
  %v374 = vsel %vm246, %v182, %v310
  %v375 = vsel %vm247, %v183, %v311
  %v376 = vsel %vm248, %v184, %v312
  %v377 = vsel %vm249, %v185, %v313
  %v378 = vsel %vm250, %v186, %v314
  %v379 = vsel %vm251, %v187, %v315
  %v380 = vsel %vm252, %v188, %v316
  %v381 = vsel %vm253, %v189, %v317
  %v382 = vsel %vm254, %v190, %v318
  %v383 = vsel %vm255, %v191, %v319
  %v384 = vsel %vm256, %v192, %v320
  %v385 = vsel %vm257, %v193, %v321
  %v386 = vsel %vm258, %v194, %v322
  %v387 = vsel %vm259, %v195, %v323
  %v388 = vsel %vm260, %v196, %v324
  %v389 = vsel %vm261, %v197, %v325
  %v390 = vsel %vm262, %v198, %v326
  %v391 = vsel %vm263, %v199, %v327
  %v392 = vsel %vm264, %v200, %v328
  %v393 = vsel %vm265, %v201, %v329
  %v394 = vsel %vm266, %v202, %v330
  %v395 = vsel %vm267, %v203, %v331
  %v396 = vsel %vm268, %v204, %v332
  %v397 = vsel %vm269, %v205, %v333
  %v398 = vsel %vm270, %v206, %v334
  %v399 = vsel %vm271, %v207, %v335
  %v400 = vsel %vm272, %v208, %v336
  %v401 = vsel %vm273, %v209, %v337
  %v402 = vsel %vm274, %v210, %v338
  %v403 = vsel %vm275, %v211, %v339
  %v404 = vsel %vm276, %v212, %v340
  %v405 = vsel %vm277, %v213, %v341
  %v406 = vsel %vm278, %v214, %v342
  %v407 = vsel %vm279, %v215, %v343
  %v408 = vsel %vm280, %v216, %v344
  %v409 = vsel %vm281, %v217, %v345
  %v410 = vsel %vm282, %v218, %v346
  %v411 = vsel %vm283, %v219, %v347
  %v412 = vpack.c.bf16 %v349, %v348
  %v413 = vpack.c.bf16 %v351, %v350
  %v414 = vpack.c.bf16 %v353, %v352
  %v415 = vpack.c.bf16 %v355, %v354
  %v416 = vpack.c.bf16 %v357, %v356
  %v417 = vpack.c.bf16 %v359, %v358
  %v418 = vpack.c.bf16 %v361, %v360
  %v419 = vpack.c.bf16 %v363, %v362
  %v420 = vpack.c.bf16 %v365, %v364
  %v421 = vpack.c.bf16 %v367, %v366
  %v422 = vpack.c.bf16 %v369, %v368
  %v423 = vpack.c.bf16 %v371, %v370
  %v424 = vpack.c.bf16 %v373, %v372
  %v425 = vpack.c.bf16 %v375, %v374
  %v426 = vpack.c.bf16 %v377, %v376
  %v427 = vpack.c.bf16 %v379, %v378
  %v428 = vpack.c.bf16 %v381, %v380
  %v429 = vpack.c.bf16 %v383, %v382
  %v430 = vpack.c.bf16 %v385, %v384
  %v431 = vpack.c.bf16 %v387, %v386
  %v432 = vpack.c.bf16 %v389, %v388
  %v433 = vpack.c.bf16 %v391, %v390
  %v434 = vpack.c.bf16 %v393, %v392
  %v435 = vpack.c.bf16 %v395, %v394
  %v436 = vpack.c.bf16 %v397, %v396
  %v437 = vpack.c.bf16 %v399, %v398
  %v438 = vpack.c.bf16 %v401, %v400
  %v439 = vpack.c.bf16 %v403, %v402
  %v440 = vpack.c.bf16 %v405, %v404
  %v441 = vpack.c.bf16 %v407, %v406
  %v442 = vpack.c.bf16 %v409, %v408
  %v443 = vpack.c.bf16 %v411, %v410
  %v476 = vunpack.c.l.b16 %v412
  %v477 = vunpack.c.h.b16 %v412
  %v478 = vunpack.c.l.b16 %v413
  %v479 = vunpack.c.h.b16 %v413
  %v480 = vunpack.c.l.b16 %v414
  %v481 = vunpack.c.h.b16 %v414
  %v482 = vunpack.c.l.b16 %v415
  %v483 = vunpack.c.h.b16 %v415
  %v484 = vunpack.c.l.b16 %v416
  %v485 = vunpack.c.h.b16 %v416
  %v486 = vunpack.c.l.b16 %v417
  %v487 = vunpack.c.h.b16 %v417
  %v488 = vunpack.c.l.b16 %v418
  %v489 = vunpack.c.h.b16 %v418
  %v490 = vunpack.c.l.b16 %v419
  %v491 = vunpack.c.h.b16 %v419
  %v492 = vunpack.c.l.b16 %v420
  %v493 = vunpack.c.h.b16 %v420
  %v494 = vunpack.c.l.b16 %v421
  %v495 = vunpack.c.h.b16 %v421
  %v496 = vunpack.c.l.b16 %v422
  %v497 = vunpack.c.h.b16 %v422
  %v498 = vunpack.c.l.b16 %v423
  %v499 = vunpack.c.h.b16 %v423
  %v500 = vunpack.c.l.b16 %v424
  %v501 = vunpack.c.h.b16 %v424
  %v502 = vunpack.c.l.b16 %v425
  %v503 = vunpack.c.h.b16 %v425
  %v504 = vunpack.c.l.b16 %v426
  %v505 = vunpack.c.h.b16 %v426
  %v506 = vunpack.c.l.b16 %v427
  %v507 = vunpack.c.h.b16 %v427
  %v508 = vunpack.c.l.b16 %v428
  %v509 = vunpack.c.h.b16 %v428
  %v510 = vunpack.c.l.b16 %v429
  %v511 = vunpack.c.h.b16 %v429
  %v512 = vunpack.c.l.b16 %v430
  %v513 = vunpack.c.h.b16 %v430
  %v514 = vunpack.c.l.b16 %v431
  %v515 = vunpack.c.h.b16 %v431
  %v516 = vunpack.c.l.b16 %v432
  %v517 = vunpack.c.h.b16 %v432
  %v518 = vunpack.c.l.b16 %v433
  %v519 = vunpack.c.h.b16 %v433
  %v520 = vunpack.c.l.b16 %v434
  %v521 = vunpack.c.h.b16 %v434
  %v522 = vunpack.c.l.b16 %v435
  %v523 = vunpack.c.h.b16 %v435
  %v524 = vunpack.c.l.b16 %v436
  %v525 = vunpack.c.h.b16 %v436
  %v526 = vunpack.c.l.b16 %v437
  %v527 = vunpack.c.h.b16 %v437
  %v528 = vunpack.c.l.b16 %v438
  %v529 = vunpack.c.h.b16 %v438
  %v530 = vunpack.c.l.b16 %v439
  %v531 = vunpack.c.h.b16 %v439
  %v532 = vunpack.c.l.b16 %v440
  %v533 = vunpack.c.h.b16 %v440
  %v534 = vunpack.c.l.b16 %v441
  %v535 = vunpack.c.h.b16 %v441
  %v536 = vunpack.c.l.b16 %v442
  %v537 = vunpack.c.h.b16 %v442
  %v538 = vunpack.c.l.b16 %v443
  %v539 = vunpack.c.h.b16 %v443
  %v540 = vpack.c.b16 %v476, %v476
  %v541 = vpack.c.b16 %v477, %v477
  %v542 = vpack.c.b16 %v478, %v478
  %v543 = vpack.c.b16 %v479, %v479
  %v544 = vpack.c.b16 %v480, %v480
  %v545 = vpack.c.b16 %v481, %v481
  %v546 = vpack.c.b16 %v482, %v482
  %v547 = vpack.c.b16 %v483, %v483
  %v548 = vpack.c.b16 %v484, %v484
  %v549 = vpack.c.b16 %v485, %v485
  %v550 = vpack.c.b16 %v486, %v486
  %v551 = vpack.c.b16 %v487, %v487
  %v552 = vpack.c.b16 %v488, %v488
  %v553 = vpack.c.b16 %v489, %v489
  %v554 = vpack.c.b16 %v490, %v490
  %v555 = vpack.c.b16 %v491, %v491
  %v556 = vpack.c.b16 %v492, %v492
  %v557 = vpack.c.b16 %v493, %v493
  %v558 = vpack.c.b16 %v494, %v494
  %v559 = vpack.c.b16 %v495, %v495
  %v560 = vpack.c.b16 %v496, %v496
  %v561 = vpack.c.b16 %v497, %v497
  %v562 = vpack.c.b16 %v498, %v498
  %v563 = vpack.c.b16 %v499, %v499
  %v564 = vpack.c.b16 %v500, %v500
  %v565 = vpack.c.b16 %v501, %v501
  %v566 = vpack.c.b16 %v502, %v502
  %v567 = vpack.c.b16 %v503, %v503
  %v568 = vpack.c.b16 %v504, %v504
  %v569 = vpack.c.b16 %v505, %v505
  %v570 = vpack.c.b16 %v506, %v506
  %v571 = vpack.c.b16 %v507, %v507
  %v572 = vpack.c.b16 %v508, %v508
  %v573 = vpack.c.b16 %v509, %v509
  %v574 = vpack.c.b16 %v510, %v510
  %v575 = vpack.c.b16 %v511, %v511
  %v576 = vpack.c.b16 %v512, %v512
  %v577 = vpack.c.b16 %v513, %v513
  %v578 = vpack.c.b16 %v514, %v514
  %v579 = vpack.c.b16 %v515, %v515
  %v580 = vpack.c.b16 %v516, %v516
  %v581 = vpack.c.b16 %v517, %v517
  %v582 = vpack.c.b16 %v518, %v518
  %v583 = vpack.c.b16 %v519, %v519
  %v584 = vpack.c.b16 %v520, %v520
  %v585 = vpack.c.b16 %v521, %v521
  %v586 = vpack.c.b16 %v522, %v522
  %v587 = vpack.c.b16 %v523, %v523
  %v588 = vpack.c.b16 %v524, %v524
  %v589 = vpack.c.b16 %v525, %v525
  %v590 = vpack.c.b16 %v526, %v526
  %v591 = vpack.c.b16 %v527, %v527
  %v592 = vpack.c.b16 %v528, %v528
  %v593 = vpack.c.b16 %v529, %v529
  %v594 = vpack.c.b16 %v530, %v530
  %v595 = vpack.c.b16 %v531, %v531
  %v596 = vpack.c.b16 %v532, %v532
  %v597 = vpack.c.b16 %v533, %v533
  %v598 = vpack.c.b16 %v534, %v534
  %v599 = vpack.c.b16 %v535, %v535
  %v600 = vpack.c.b16 %v536, %v536
  %v601 = vpack.c.b16 %v537, %v537
  %v602 = vpack.c.b16 %v538, %v538
  %v603 = vpack.c.b16 %v539, %v539
  %vm668 = vcmask 257024
  %669 = vst.msk [vmem:[%s3] sm:$0xf] %vm668, %v540
  %670 = vst.msk [vmem:[%s3 + $0x4] sm:$0xf] %vm668, %v541
  %671 = vst.msk [vmem:[%s3 + $0x8] sm:$0xf] %vm668, %v542
  %672 = vst.msk [vmem:[%s3 + $0xc] sm:$0xf] %vm668, %v543
  %673 = vst.msk [vmem:[%s3 + $0x10] sm:$0xf] %vm668, %v544
  %674 = vst.msk [vmem:[%s3 + $0x14] sm:$0xf] %vm668, %v545
  %675 = vst.msk [vmem:[%s3 + $0x18] sm:$0xf] %vm668, %v546
  %676 = vst.msk [vmem:[%s3 + $0x1c] sm:$0xf] %vm668, %v547
  %677 = vst.msk [vmem:[%s3 + $0x20] sm:$0xf] %vm668, %v548
  %678 = vst.msk [vmem:[%s3 + $0x24] sm:$0xf] %vm668, %v549
  %679 = vst.msk [vmem:[%s3 + $0x28] sm:$0xf] %vm668, %v550
  %680 = vst.msk [vmem:[%s3 + $0x2c] sm:$0xf] %vm668, %v551
  %681 = vst.msk [vmem:[%s3 + $0x30] sm:$0xf] %vm668, %v552
  %682 = vst.msk [vmem:[%s3 + $0x34] sm:$0xf] %vm668, %v553
  %683 = vst.msk [vmem:[%s3 + $0x38] sm:$0xf] %vm668, %v554
  %684 = vst.msk [vmem:[%s3 + $0x3c] sm:$0xf] %vm668, %v555
  %685 = vst.msk [vmem:[%s3 + $0x40] sm:$0xf] %vm668, %v556
  %686 = vst.msk [vmem:[%s3 + $0x44] sm:$0xf] %vm668, %v557
  %687 = vst.msk [vmem:[%s3 + $0x48] sm:$0xf] %vm668, %v558
  %688 = vst.msk [vmem:[%s3 + $0x4c] sm:$0xf] %vm668, %v559
  %689 = vst.msk [vmem:[%s3 + $0x50] sm:$0xf] %vm668, %v560
  %690 = vst.msk [vmem:[%s3 + $0x54] sm:$0xf] %vm668, %v561
  %691 = vst.msk [vmem:[%s3 + $0x58] sm:$0xf] %vm668, %v562
  %692 = vst.msk [vmem:[%s3 + $0x5c] sm:$0xf] %vm668, %v563
  %693 = vst.msk [vmem:[%s3 + $0x60] sm:$0xf] %vm668, %v564
  %694 = vst.msk [vmem:[%s3 + $0x64] sm:$0xf] %vm668, %v565
  %695 = vst.msk [vmem:[%s3 + $0x68] sm:$0xf] %vm668, %v566
  %696 = vst.msk [vmem:[%s3 + $0x6c] sm:$0xf] %vm668, %v567
  %697 = vst.msk [vmem:[%s3 + $0x70] sm:$0xf] %vm668, %v568
  %698 = vst.msk [vmem:[%s3 + $0x74] sm:$0xf] %vm668, %v569
  %699 = vst.msk [vmem:[%s3 + $0x78] sm:$0xf] %vm668, %v570
  %700 = vst.msk [vmem:[%s3 + $0x7c] sm:$0xf] %vm668, %v571
  %701 = vst.msk [vmem:[%s3 + $0x80] sm:$0xf] %vm668, %v572
  %702 = vst.msk [vmem:[%s3 + $0x84] sm:$0xf] %vm668, %v573
  %703 = vst.msk [vmem:[%s3 + $0x88] sm:$0xf] %vm668, %v574
  %704 = vst.msk [vmem:[%s3 + $0x8c] sm:$0xf] %vm668, %v575
  %705 = vst.msk [vmem:[%s3 + $0x90] sm:$0xf] %vm668, %v576
  %706 = vst.msk [vmem:[%s3 + $0x94] sm:$0xf] %vm668, %v577
  %707 = vst.msk [vmem:[%s3 + $0x98] sm:$0xf] %vm668, %v578
  %708 = vst.msk [vmem:[%s3 + $0x9c] sm:$0xf] %vm668, %v579
  %709 = vst.msk [vmem:[%s3 + $0xa0] sm:$0xf] %vm668, %v580
  %710 = vst.msk [vmem:[%s3 + $0xa4] sm:$0xf] %vm668, %v581
  %711 = vst.msk [vmem:[%s3 + $0xa8] sm:$0xf] %vm668, %v582
  %712 = vst.msk [vmem:[%s3 + $0xac] sm:$0xf] %vm668, %v583
  %713 = vst.msk [vmem:[%s3 + $0xb0] sm:$0xf] %vm668, %v584
  %714 = vst.msk [vmem:[%s3 + $0xb4] sm:$0xf] %vm668, %v585
  %715 = vst.msk [vmem:[%s3 + $0xb8] sm:$0xf] %vm668, %v586
  %716 = vst.msk [vmem:[%s3 + $0xbc] sm:$0xf] %vm668, %v587
  %717 = vst.msk [vmem:[%s3 + $0xc0] sm:$0xf] %vm668, %v588
  %718 = vst.msk [vmem:[%s3 + $0xc4] sm:$0xf] %vm668, %v589
  %719 = vst.msk [vmem:[%s3 + $0xc8] sm:$0xf] %vm668, %v590
  %720 = vst.msk [vmem:[%s3 + $0xcc] sm:$0xf] %vm668, %v591
  %721 = vst.msk [vmem:[%s3 + $0xd0] sm:$0xf] %vm668, %v592
  %722 = vst.msk [vmem:[%s3 + $0xd4] sm:$0xf] %vm668, %v593
  %723 = vst.msk [vmem:[%s3 + $0xd8] sm:$0xf] %vm668, %v594
  %724 = vst.msk [vmem:[%s3 + $0xdc] sm:$0xf] %vm668, %v595
  %725 = vst.msk [vmem:[%s3 + $0xe0] sm:$0xf] %vm668, %v596
  %726 = vst.msk [vmem:[%s3 + $0xe4] sm:$0xf] %vm668, %v597
  %727 = vst.msk [vmem:[%s3 + $0xe8] sm:$0xf] %vm668, %v598
  %728 = vst.msk [vmem:[%s3 + $0xec] sm:$0xf] %vm668, %v599
  %729 = vst.msk [vmem:[%s3 + $0xf0] sm:$0xf] %vm668, %v600
  %730 = vst.msk [vmem:[%s3 + $0xf4] sm:$0xf] %vm668, %v601
  %731 = vst.msk [vmem:[%s3 + $0xf8] sm:$0xf] %vm668, %v602
  %732 = vst.msk [vmem:[%s3 + $0xfc] sm:$0xf] %vm668, %v603
  // Predicated region
  $region14: #{discriminator_forward.12} parent=0 // pred_check
    _
  $region15: #{discriminator_forward.12} parent=0 // pred_check_branch
    %734 = sbr.rel (0) target = $region17
  $region16: #{discriminator_forward.12} parent=0 // pred_region
    _
  $region17: #{discriminator_forward.12} parent=0 // pred_fallthru
    _
  // Predicated region
  $region18: #{discriminator_forward.12} parent=0 // pred_check
    _
  $region19: #{discriminator_forward.12} parent=0 // pred_check_branch
    %736 = sbr.rel (0) target = $region21
  $region20: #{discriminator_forward.12} parent=0 // pred_region
    _
  $region21: #{discriminator_forward.12} parent=0 // pred_fallthru
    _

// kernel: discriminator_forward.13
$region0: #{discriminator_forward.13}
  #allocation0 [shape = 'u32[]', space=smem, size = 0x4, offset = 0x4, fixed_abs, tag = 'smem constant byte address 0x4 - core index']
  #allocation1 [shape = 'u32[144,128]{1,0:T(1,128)}', space=vmem, size = 0x12000, scoped, tag = 'internal scratch']
  %s0 = inlined_call_operand.vmem [shape: bf16[456,512], index: 0, kind: input, shape index: {}]
  %s1 = inlined_call_operand.vmem [shape: bf16[512,64], index: 1, kind: input, shape index: {}]
  %s2 = inlined_call_operand.vmem [shape: f32[456,64], index: 2, kind: output, shape index: {0}]
  %s3 = inlined_call_operand.vmem [shape: f32[1,64], index: 3, kind: output, shape index: {1}]
  %s4 = inlined_call_operand.vmem [shape: f32[1,64], index: 4, kind: output, shape index: {2}]
  %5 = xla_tuple %s2, %s3, %s4
  %s6 = sld [smem:[#allocation0]]
  $region38: #{discriminator_forward.13} parent=0
    _
  %s8 = ssub.s32 1, %s6
  %s9 = scalar_select 0, %s8, %s6
  // Predicated region
  $region2: #{discriminator_forward.13} parent=0 // pred_check
    _
  $region3: #{discriminator_forward.13} parent=0 // pred_check_branch
    %11 = sbr.rel (0) target = $region5
  $region4: #{discriminator_forward.13} parent=0 // pred_region
    _
  $region5: #{discriminator_forward.13} parent=0 // pred_fallthru
    _
  // Predicated region
  $region6: #{discriminator_forward.13} parent=0 // pred_check
    _
  $region7: #{discriminator_forward.13} parent=0 // pred_check_branch
    %13 = sbr.rel (0) target = $region9
  $region8: #{discriminator_forward.13} parent=0 // pred_region
    _
  $region9: #{discriminator_forward.13} parent=0 // pred_fallthru
    _
  %p15 = scmp.eq.s32.totalorder 0, 0
  // Predicated region
  $region10: #{discriminator_forward.13} parent=0 // pred_check
    %p16 = pneg %p15
  $region11: #{discriminator_forward.13} parent=0 // pred_check_branch
    %18 = sbr.rel (%p16) target = $region13
  $region12: #{discriminator_forward.13} parent=0 // pred_region
    %vm19 = vcmask 516096
    %20 = vst.msk [vmem:[%s3] sm:$0x1] %vm19, 0.0
    %21 = vst.msk [vmem:[%s4] sm:$0x1] %vm19, 0.0
  $region13: #{discriminator_forward.13} parent=0 // pred_fallthru
    _
  %v22 = vld [vmem:[%s0] sm:$0xff]
  %v23 = vld [vmem:[%s0 + $0x8] sm:$0xff]
  %v24 = vld [vmem:[%s0 + $0x10] sm:$0xff]
  %v25 = vld [vmem:[%s0 + $0x18] sm:$0xff]
  %v26 = vld [vmem:[%s0 + $0x20] sm:$0xff]
  %v27 = vld [vmem:[%s0 + $0x28] sm:$0xff]
  %v28 = vld [vmem:[%s0 + $0x30] sm:$0xff]
  %v29 = vld [vmem:[%s0 + $0x38] sm:$0xff]
  %v30 = vld [vmem:[%s0 + $0x40] sm:$0xff]
  %v31 = vld [vmem:[%s0 + $0x48] sm:$0xff]
  %v32 = vld [vmem:[%s0 + $0x50] sm:$0xff]
  %v33 = vld [vmem:[%s0 + $0x58] sm:$0xff]
  %v34 = vld [vmem:[%s0 + $0x60] sm:$0xff]
  %v35 = vld [vmem:[%s0 + $0x68] sm:$0xff]
  %v36 = vld [vmem:[%s0 + $0x70] sm:$0xff]
  %v37 = vld [vmem:[%s0 + $0x78] sm:$0xff]
  %v38 = vld [vmem:[%s0 + $0x80] sm:$0xff]
  %v39 = vld [vmem:[%s0 + $0x88] sm:$0xff]
  %v40 = vld [vmem:[%s0 + $0x90] sm:$0xff]
  %v41 = vld [vmem:[%s0 + $0x98] sm:$0xff]
  %v42 = vld [vmem:[%s0 + $0xa0] sm:$0xff]
  %v43 = vld [vmem:[%s0 + $0xa8] sm:$0xff]
  %v44 = vld [vmem:[%s0 + $0xb0] sm:$0xff]
  %v45 = vld [vmem:[%s0 + $0xb8] sm:$0xff]
  %v46 = vld [vmem:[%s0 + $0xc0] sm:$0xff]
  %v47 = vld [vmem:[%s0 + $0xc8] sm:$0xff]
  %v48 = vld [vmem:[%s0 + $0xd0] sm:$0xff]
  %v49 = vld [vmem:[%s0 + $0xd8] sm:$0xff]
  %v50 = vld [vmem:[%s0 + $0xe0] sm:$0xff]
  %v51 = vld [vmem:[%s0 + $0xe8] sm:$0xff]
  %v52 = vld [vmem:[%s0 + $0xf0] sm:$0xff]
  %v53 = vld [vmem:[%s0 + $0xf8] sm:$0xff]
  %v54 = vld [vmem:[%s0 + $0x100] sm:$0xff]
  %v55 = vld [vmem:[%s0 + $0x108] sm:$0xff]
  %v56 = vld [vmem:[%s0 + $0x110] sm:$0xff]
  %v57 = vld [vmem:[%s0 + $0x118] sm:$0xff]
  %v58 = vld [vmem:[%s0 + $0x120] sm:$0xff]
  %v59 = vld [vmem:[%s0 + $0x128] sm:$0xff]
  %v60 = vld [vmem:[%s0 + $0x130] sm:$0xff]
  %v61 = vld [vmem:[%s0 + $0x138] sm:$0xff]
  %v62 = vld [vmem:[%s0 + $0x140] sm:$0xff]
  %v63 = vld [vmem:[%s0 + $0x148] sm:$0xff]
  %v64 = vld [vmem:[%s0 + $0x150] sm:$0xff]
  %v65 = vld [vmem:[%s0 + $0x158] sm:$0xff]
  %v66 = vld [vmem:[%s0 + $0x160] sm:$0xff]
  %v67 = vld [vmem:[%s0 + $0x168] sm:$0xff]
  %v68 = vld [vmem:[%s0 + $0x170] sm:$0xff]
  %v69 = vld [vmem:[%s0 + $0x178] sm:$0xff]
  %v70 = vld [vmem:[%s0 + $0x180] sm:$0xff]
  %v71 = vld [vmem:[%s0 + $0x188] sm:$0xff]
  %v72 = vld [vmem:[%s0 + $0x190] sm:$0xff]
  %v73 = vld [vmem:[%s0 + $0x198] sm:$0xff]
  %v74 = vld [vmem:[%s0 + $0x1a0] sm:$0xff]
  %v75 = vld [vmem:[%s0 + $0x1a8] sm:$0xff]
  %v76 = vld [vmem:[%s0 + $0x1b0] sm:$0xff]
  %v77 = vld [vmem:[%s0 + $0x1b8] sm:$0xff]
  %v78 = vld [vmem:[%s0 + $0x1c0] sm:$0xff]
  %v79 = vld [vmem:[%s0 + $0x1c8] sm:$0xff]
  %v80 = vld [vmem:[%s0 + $0x1d0] sm:$0xff]
  %v81 = vld [vmem:[%s0 + $0x1d8] sm:$0xff]
  %v82 = vld [vmem:[%s0 + $0x1e0] sm:$0xff]
  %v83 = vld [vmem:[%s0 + $0x1e8] sm:$0xff]
  %v84 = vld [vmem:[%s0 + $0x1f0] sm:$0xff]
  %v85 = vld [vmem:[%s0 + $0x1f8] sm:$0xff]
  %v86 = vld [vmem:[%s0 + $0x200] sm:$0xff]
  %v87 = vld [vmem:[%s0 + $0x208] sm:$0xff]
  %v88 = vld [vmem:[%s0 + $0x210] sm:$0xff]
  %v89 = vld [vmem:[%s0 + $0x218] sm:$0xff]
  %v90 = vld [vmem:[%s0 + $0x220] sm:$0xff]
  %v91 = vld [vmem:[%s0 + $0x228] sm:$0xff]
  %v92 = vld [vmem:[%s0 + $0x230] sm:$0xff]
  %v93 = vld [vmem:[%s0 + $0x238] sm:$0xff]
  %v94 = vld [vmem:[%s0 + $0x240] sm:$0xff]
  %v95 = vld [vmem:[%s0 + $0x248] sm:$0xff]
  %v96 = vld [vmem:[%s0 + $0x250] sm:$0xff]
  %v97 = vld [vmem:[%s0 + $0x258] sm:$0xff]
  %v98 = vld [vmem:[%s0 + $0x260] sm:$0xff]
  %v99 = vld [vmem:[%s0 + $0x268] sm:$0xff]
  %v100 = vld [vmem:[%s0 + $0x270] sm:$0xff]
  %v101 = vld [vmem:[%s0 + $0x278] sm:$0xff]
  %v102 = vld [vmem:[%s0 + $0x280] sm:$0xff]
  %v103 = vld [vmem:[%s0 + $0x288] sm:$0xff]
  %v104 = vld [vmem:[%s0 + $0x290] sm:$0xff]
  %v105 = vld [vmem:[%s0 + $0x298] sm:$0xff]
  %v106 = vld [vmem:[%s0 + $0x2a0] sm:$0xff]
  %v107 = vld [vmem:[%s0 + $0x2a8] sm:$0xff]
  %v108 = vld [vmem:[%s0 + $0x2b0] sm:$0xff]
  %v109 = vld [vmem:[%s0 + $0x2b8] sm:$0xff]
  %v110 = vld [vmem:[%s0 + $0x2c0] sm:$0xff]
  %v111 = vld [vmem:[%s0 + $0x2c8] sm:$0xff]
  %v112 = vld [vmem:[%s0 + $0x2d0] sm:$0xff]
  %v113 = vld [vmem:[%s0 + $0x2d8] sm:$0xff]
  %v114 = vld [vmem:[%s0 + $0x2e0] sm:$0xff]
  %v115 = vld [vmem:[%s0 + $0x2e8] sm:$0xff]
  %v116 = vld [vmem:[%s0 + $0x2f0] sm:$0xff]
  %v117 = vld [vmem:[%s0 + $0x2f8] sm:$0xff]
  %v118 = vld [vmem:[%s0 + $0x300] sm:$0xff]
  %v119 = vld [vmem:[%s0 + $0x308] sm:$0xff]
  %v120 = vld [vmem:[%s0 + $0x310] sm:$0xff]
  %v121 = vld [vmem:[%s0 + $0x318] sm:$0xff]
  %v122 = vld [vmem:[%s0 + $0x320] sm:$0xff]
  %v123 = vld [vmem:[%s0 + $0x328] sm:$0xff]
  %v124 = vld [vmem:[%s0 + $0x330] sm:$0xff]
  %v125 = vld [vmem:[%s0 + $0x338] sm:$0xff]
  %v126 = vld [vmem:[%s0 + $0x340] sm:$0xff]
  %v127 = vld [vmem:[%s0 + $0x348] sm:$0xff]
  %v128 = vld [vmem:[%s0 + $0x350] sm:$0xff]
  %v129 = vld [vmem:[%s0 + $0x358] sm:$0xff]
  %v130 = vld [vmem:[%s0 + $0x360] sm:$0xff]
  %v131 = vld [vmem:[%s0 + $0x368] sm:$0xff]
  %v132 = vld [vmem:[%s0 + $0x370] sm:$0xff]
  %v133 = vld [vmem:[%s0 + $0x378] sm:$0xff]
  %v134 = vld [vmem:[%s0 + $0x380] sm:$0xff]
  %v135 = vld [vmem:[%s0 + $0x388] sm:$0xff]
  %v136 = vld [vmem:[%s1] sm:$0xf]
  %v137 = vld [vmem:[%s1 + $0x4] sm:$0xf]
  %v138 = vld [vmem:[%s1 + $0x8] sm:$0xf]
  %v139 = vld [vmem:[%s1 + $0xc] sm:$0xf]
  %v140 = vld [vmem:[%s1 + $0x10] sm:$0xf]
  %v141 = vld [vmem:[%s1 + $0x14] sm:$0xf]
  %v142 = vld [vmem:[%s1 + $0x18] sm:$0xf]
  %v143 = vld [vmem:[%s1 + $0x1c] sm:$0xf]
  %v144 = vld [vmem:[%s1 + $0x20] sm:$0xf]
  %v145 = vld [vmem:[%s1 + $0x24] sm:$0xf]
  %v146 = vld [vmem:[%s1 + $0x28] sm:$0xf]
  %v147 = vld [vmem:[%s1 + $0x2c] sm:$0xf]
  %v148 = vld [vmem:[%s1 + $0x30] sm:$0xf]
  %v149 = vld [vmem:[%s1 + $0x34] sm:$0xf]
  %v150 = vld [vmem:[%s1 + $0x38] sm:$0xf]
  %v151 = vld [vmem:[%s1 + $0x3c] sm:$0xf]
  %v152 = vld [vmem:[%s1 + $0x40] sm:$0xf]
  %v153 = vld [vmem:[%s1 + $0x44] sm:$0xf]
  %v154 = vld [vmem:[%s1 + $0x48] sm:$0xf]
  %v155 = vld [vmem:[%s1 + $0x4c] sm:$0xf]
  %v156 = vld [vmem:[%s1 + $0x50] sm:$0xf]
  %v157 = vld [vmem:[%s1 + $0x54] sm:$0xf]
  %v158 = vld [vmem:[%s1 + $0x58] sm:$0xf]
  %v159 = vld [vmem:[%s1 + $0x5c] sm:$0xf]
  %v160 = vld [vmem:[%s1 + $0x60] sm:$0xf]
  %v161 = vld [vmem:[%s1 + $0x64] sm:$0xf]
  %v162 = vld [vmem:[%s1 + $0x68] sm:$0xf]
  %v163 = vld [vmem:[%s1 + $0x6c] sm:$0xf]
  %v164 = vld [vmem:[%s1 + $0x70] sm:$0xf]
  %v165 = vld [vmem:[%s1 + $0x74] sm:$0xf]
  %v166 = vld [vmem:[%s1 + $0x78] sm:$0xf]
  %v167 = vld [vmem:[%s1 + $0x7c] sm:$0xf]
  %v168 = vld [vmem:[%s1 + $0x80] sm:$0xf]
  %v169 = vld [vmem:[%s1 + $0x84] sm:$0xf]
  %v170 = vld [vmem:[%s1 + $0x88] sm:$0xf]
  %v171 = vld [vmem:[%s1 + $0x8c] sm:$0xf]
  %v172 = vld [vmem:[%s1 + $0x90] sm:$0xf]
  %v173 = vld [vmem:[%s1 + $0x94] sm:$0xf]
  %v174 = vld [vmem:[%s1 + $0x98] sm:$0xf]
  %v175 = vld [vmem:[%s1 + $0x9c] sm:$0xf]
  %v176 = vld [vmem:[%s1 + $0xa0] sm:$0xf]
  %v177 = vld [vmem:[%s1 + $0xa4] sm:$0xf]
  %v178 = vld [vmem:[%s1 + $0xa8] sm:$0xf]
  %v179 = vld [vmem:[%s1 + $0xac] sm:$0xf]
  %v180 = vld [vmem:[%s1 + $0xb0] sm:$0xf]
  %v181 = vld [vmem:[%s1 + $0xb4] sm:$0xf]
  %v182 = vld [vmem:[%s1 + $0xb8] sm:$0xf]
  %v183 = vld [vmem:[%s1 + $0xbc] sm:$0xf]
  %v184 = vld [vmem:[%s1 + $0xc0] sm:$0xf]
  %v185 = vld [vmem:[%s1 + $0xc4] sm:$0xf]
  %v186 = vld [vmem:[%s1 + $0xc8] sm:$0xf]
  %v187 = vld [vmem:[%s1 + $0xcc] sm:$0xf]
  %v188 = vld [vmem:[%s1 + $0xd0] sm:$0xf]
  %v189 = vld [vmem:[%s1 + $0xd4] sm:$0xf]
  %v190 = vld [vmem:[%s1 + $0xd8] sm:$0xf]
  %v191 = vld [vmem:[%s1 + $0xdc] sm:$0xf]
  %v192 = vld [vmem:[%s1 + $0xe0] sm:$0xf]
  %v193 = vld [vmem:[%s1 + $0xe4] sm:$0xf]
  %v194 = vld [vmem:[%s1 + $0xe8] sm:$0xf]
  %v195 = vld [vmem:[%s1 + $0xec] sm:$0xf]
  %v196 = vld [vmem:[%s1 + $0xf0] sm:$0xf]
  %v197 = vld [vmem:[%s1 + $0xf4] sm:$0xf]
  %v198 = vld [vmem:[%s1 + $0xf8] sm:$0xf]
  %v199 = vld [vmem:[%s1 + $0xfc] sm:$0xf]
  %v314 = vunpack.c.l.b16 %v22
  %v315 = vunpack.c.h.b16 %v22
  %v316 = vunpack.c.l.b16 %v23
  %v317 = vunpack.c.h.b16 %v23
  %v318 = vunpack.c.l.b16 %v24
  %v319 = vunpack.c.h.b16 %v24
  %v320 = vunpack.c.l.b16 %v25
  %v321 = vunpack.c.h.b16 %v25
  %v322 = vunpack.c.l.b16 %v26
  %v323 = vunpack.c.h.b16 %v26
  %v324 = vunpack.c.l.b16 %v27
  %v325 = vunpack.c.h.b16 %v27
  %v326 = vunpack.c.l.b16 %v28
  %v327 = vunpack.c.h.b16 %v28
  %v328 = vunpack.c.l.b16 %v29
  %v329 = vunpack.c.h.b16 %v29
  %v330 = vunpack.c.l.b16 %v30
  %v331 = vunpack.c.h.b16 %v30
  %v332 = vunpack.c.l.b16 %v31
  %v333 = vunpack.c.h.b16 %v31
  %v334 = vunpack.c.l.b16 %v32
  %v335 = vunpack.c.h.b16 %v32
  %v336 = vunpack.c.l.b16 %v33
  %v337 = vunpack.c.h.b16 %v33
  %v338 = vunpack.c.l.b16 %v34
  %v339 = vunpack.c.h.b16 %v34
  %v340 = vunpack.c.l.b16 %v35
  %v341 = vunpack.c.h.b16 %v35
  %v342 = vunpack.c.l.b16 %v36
  %v343 = vunpack.c.h.b16 %v36
  %v344 = vunpack.c.l.b16 %v37
  %v345 = vunpack.c.h.b16 %v37
  %v346 = vunpack.c.l.b16 %v38
  %v347 = vunpack.c.h.b16 %v38
  %v348 = vunpack.c.l.b16 %v39
  %v349 = vunpack.c.h.b16 %v39
  %v350 = vunpack.c.l.b16 %v40
  %v351 = vunpack.c.h.b16 %v40
  %v352 = vunpack.c.l.b16 %v41
  %v353 = vunpack.c.h.b16 %v41
  %v354 = vunpack.c.l.b16 %v42
  %v355 = vunpack.c.h.b16 %v42
  %v356 = vunpack.c.l.b16 %v43
  %v357 = vunpack.c.h.b16 %v43
  %v358 = vunpack.c.l.b16 %v44
  %v359 = vunpack.c.h.b16 %v44
  %v360 = vunpack.c.l.b16 %v45
  %v361 = vunpack.c.h.b16 %v45
  %v362 = vunpack.c.l.b16 %v46
  %v363 = vunpack.c.h.b16 %v46
  %v364 = vunpack.c.l.b16 %v47
  %v365 = vunpack.c.h.b16 %v47
  %v366 = vunpack.c.l.b16 %v48
  %v367 = vunpack.c.h.b16 %v48
  %v368 = vunpack.c.l.b16 %v49
  %v369 = vunpack.c.h.b16 %v49
  %v370 = vunpack.c.l.b16 %v50
  %v371 = vunpack.c.h.b16 %v50
  %v372 = vunpack.c.l.b16 %v51
  %v373 = vunpack.c.h.b16 %v51
  %v374 = vunpack.c.l.b16 %v52
  %v375 = vunpack.c.h.b16 %v52
  %v376 = vunpack.c.l.b16 %v53
  %v377 = vunpack.c.h.b16 %v53
  %v378 = vunpack.c.l.b16 %v54
  %v379 = vunpack.c.h.b16 %v54
  %v380 = vunpack.c.l.b16 %v55
  %v381 = vunpack.c.h.b16 %v55
  %v382 = vunpack.c.l.b16 %v56
  %v383 = vunpack.c.h.b16 %v56
  %v384 = vunpack.c.l.b16 %v57
  %v385 = vunpack.c.h.b16 %v57
  %v386 = vunpack.c.l.b16 %v58
  %v387 = vunpack.c.h.b16 %v58
  %v388 = vunpack.c.l.b16 %v59
  %v389 = vunpack.c.h.b16 %v59
  %v390 = vunpack.c.l.b16 %v60
  %v391 = vunpack.c.h.b16 %v60
  %v392 = vunpack.c.l.b16 %v61
  %v393 = vunpack.c.h.b16 %v61
  %v394 = vunpack.c.l.b16 %v62
  %v395 = vunpack.c.h.b16 %v62
  %v396 = vunpack.c.l.b16 %v63
  %v397 = vunpack.c.h.b16 %v63
  %v398 = vunpack.c.l.b16 %v64
  %v399 = vunpack.c.h.b16 %v64
  %v400 = vunpack.c.l.b16 %v65
  %v401 = vunpack.c.h.b16 %v65
  %v402 = vunpack.c.l.b16 %v66
  %v403 = vunpack.c.h.b16 %v66
  %v404 = vunpack.c.l.b16 %v67
  %v405 = vunpack.c.h.b16 %v67
  %v406 = vunpack.c.l.b16 %v68
  %v407 = vunpack.c.h.b16 %v68
  %v408 = vunpack.c.l.b16 %v69
  %v409 = vunpack.c.h.b16 %v69
  %v410 = vunpack.c.l.b16 %v70
  %v411 = vunpack.c.h.b16 %v70
  %v412 = vunpack.c.l.b16 %v71
  %v413 = vunpack.c.h.b16 %v71
  %v414 = vunpack.c.l.b16 %v72
  %v415 = vunpack.c.h.b16 %v72
  %v416 = vunpack.c.l.b16 %v73
  %v417 = vunpack.c.h.b16 %v73
  %v418 = vunpack.c.l.b16 %v74
  %v419 = vunpack.c.h.b16 %v74
  %v420 = vunpack.c.l.b16 %v75
  %v421 = vunpack.c.h.b16 %v75
  %v422 = vunpack.c.l.b16 %v76
  %v423 = vunpack.c.h.b16 %v76
  %v424 = vunpack.c.l.b16 %v77
  %v425 = vunpack.c.h.b16 %v77
  %v426 = vunpack.c.l.b16 %v78
  %v427 = vunpack.c.h.b16 %v78
  %v428 = vunpack.c.l.b16 %v79
  %v429 = vunpack.c.h.b16 %v79
  %v430 = vunpack.c.l.b16 %v80
  %v431 = vunpack.c.h.b16 %v80
  %v432 = vunpack.c.l.b16 %v81
  %v433 = vunpack.c.h.b16 %v81
  %v434 = vunpack.c.l.b16 %v82
  %v435 = vunpack.c.h.b16 %v82
  %v436 = vunpack.c.l.b16 %v83
  %v437 = vunpack.c.h.b16 %v83
  %v438 = vunpack.c.l.b16 %v84
  %v439 = vunpack.c.h.b16 %v84
  %v440 = vunpack.c.l.b16 %v85
  %v441 = vunpack.c.h.b16 %v85
  %v442 = vunpack.c.l.b16 %v86
  %v443 = vunpack.c.h.b16 %v86
  %v444 = vunpack.c.l.b16 %v87
  %v445 = vunpack.c.h.b16 %v87
  %v446 = vunpack.c.l.b16 %v88
  %v447 = vunpack.c.h.b16 %v88
  %v448 = vunpack.c.l.b16 %v89
  %v449 = vunpack.c.h.b16 %v89
  %v450 = vunpack.c.l.b16 %v90
  %v451 = vunpack.c.h.b16 %v90
  %v452 = vunpack.c.l.b16 %v91
  %v453 = vunpack.c.h.b16 %v91
  %v454 = vunpack.c.l.b16 %v92
  %v455 = vunpack.c.h.b16 %v92
  %v456 = vunpack.c.l.b16 %v93
  %v457 = vunpack.c.h.b16 %v93
  %v458 = vunpack.c.l.b16 %v94
  %v459 = vunpack.c.h.b16 %v94
  %v460 = vunpack.c.l.b16 %v95
  %v461 = vunpack.c.h.b16 %v95
  %v462 = vunpack.c.l.b16 %v96
  %v463 = vunpack.c.h.b16 %v96
  %v464 = vunpack.c.l.b16 %v97
  %v465 = vunpack.c.h.b16 %v97
  %v466 = vunpack.c.l.b16 %v98
  %v467 = vunpack.c.h.b16 %v98
  %v468 = vunpack.c.l.b16 %v99
  %v469 = vunpack.c.h.b16 %v99
  %v470 = vunpack.c.l.b16 %v100
  %v471 = vunpack.c.h.b16 %v100
  %v472 = vunpack.c.l.b16 %v101
  %v473 = vunpack.c.h.b16 %v101
  %v474 = vunpack.c.l.b16 %v102
  %v475 = vunpack.c.h.b16 %v102
  %v476 = vunpack.c.l.b16 %v103
  %v477 = vunpack.c.h.b16 %v103
  %v478 = vunpack.c.l.b16 %v104
  %v479 = vunpack.c.h.b16 %v104
  %v480 = vunpack.c.l.b16 %v105
  %v481 = vunpack.c.h.b16 %v105
  %v482 = vunpack.c.l.b16 %v106
  %v483 = vunpack.c.h.b16 %v106
  %v484 = vunpack.c.l.b16 %v107
  %v485 = vunpack.c.h.b16 %v107
  %v486 = vunpack.c.l.b16 %v108
  %v487 = vunpack.c.h.b16 %v108
  %v488 = vunpack.c.l.b16 %v109
  %v489 = vunpack.c.h.b16 %v109
  %v490 = vunpack.c.l.b16 %v110
  %v491 = vunpack.c.h.b16 %v110
  %v492 = vunpack.c.l.b16 %v111
  %v493 = vunpack.c.h.b16 %v111
  %v494 = vunpack.c.l.b16 %v112
  %v495 = vunpack.c.h.b16 %v112
  %v496 = vunpack.c.l.b16 %v113
  %v497 = vunpack.c.h.b16 %v113
  %v498 = vunpack.c.l.b16 %v114
  %v499 = vunpack.c.h.b16 %v114
  %v500 = vunpack.c.l.b16 %v115
  %v501 = vunpack.c.h.b16 %v115
  %v502 = vunpack.c.l.b16 %v116
  %v503 = vunpack.c.h.b16 %v116
  %v504 = vunpack.c.l.b16 %v117
  %v505 = vunpack.c.h.b16 %v117
  %v506 = vunpack.c.l.b16 %v118
  %v507 = vunpack.c.h.b16 %v118
  %v508 = vunpack.c.l.b16 %v119
  %v509 = vunpack.c.h.b16 %v119
  %v510 = vunpack.c.l.b16 %v120
  %v511 = vunpack.c.h.b16 %v120
  %v512 = vunpack.c.l.b16 %v121
  %v513 = vunpack.c.h.b16 %v121
  %v514 = vunpack.c.l.b16 %v122
  %v515 = vunpack.c.h.b16 %v122
  %v516 = vunpack.c.l.b16 %v123
  %v517 = vunpack.c.h.b16 %v123
  %v518 = vunpack.c.l.b16 %v124
  %v519 = vunpack.c.h.b16 %v124
  %v520 = vunpack.c.l.b16 %v125
  %v521 = vunpack.c.h.b16 %v125
  %v522 = vunpack.c.l.b16 %v126
  %v523 = vunpack.c.h.b16 %v126
  %v524 = vunpack.c.l.b16 %v127
  %v525 = vunpack.c.h.b16 %v127
  %v526 = vunpack.c.l.b16 %v128
  %v527 = vunpack.c.h.b16 %v128
  %v528 = vunpack.c.l.b16 %v129
  %v529 = vunpack.c.h.b16 %v129
  %v530 = vunpack.c.l.b16 %v130
  %v531 = vunpack.c.h.b16 %v130
  %v532 = vunpack.c.l.b16 %v131
  %v533 = vunpack.c.h.b16 %v131
  %v534 = vunpack.c.l.b16 %v132
  %v535 = vunpack.c.h.b16 %v132
  %v536 = vunpack.c.l.b16 %v133
  %v537 = vunpack.c.h.b16 %v133
  %v538 = vunpack.c.l.b16 %v134
  %v539 = vunpack.c.h.b16 %v134
  %v540 = vunpack.c.l.b16 %v135
  %v541 = vunpack.c.h.b16 %v135
  %v542 = vpack.c.b16 %v318, %v314
  %v543 = vpack.c.b16 %v319, %v315
  %v544 = vpack.c.b16 %v320, %v316
  %v545 = vpack.c.b16 %v321, %v317
  %v546 = vpack.c.b16 %v326, %v322
  %v547 = vpack.c.b16 %v327, %v323
  %v548 = vpack.c.b16 %v328, %v324
  %v549 = vpack.c.b16 %v329, %v325
  %v550 = vpack.c.b16 %v334, %v330
  %v551 = vpack.c.b16 %v335, %v331
  %v552 = vpack.c.b16 %v336, %v332
  %v553 = vpack.c.b16 %v337, %v333
  %v554 = vpack.c.b16 %v342, %v338
  %v555 = vpack.c.b16 %v343, %v339
  %v556 = vpack.c.b16 %v344, %v340
  %v557 = vpack.c.b16 %v345, %v341
  %v558 = vpack.c.b16 %v350, %v346
  %v559 = vpack.c.b16 %v351, %v347
  %v560 = vpack.c.b16 %v352, %v348
  %v561 = vpack.c.b16 %v353, %v349
  %v562 = vpack.c.b16 %v358, %v354
  %v563 = vpack.c.b16 %v359, %v355
  %v564 = vpack.c.b16 %v360, %v356
  %v565 = vpack.c.b16 %v361, %v357
  %v566 = vpack.c.b16 %v366, %v362
  %v567 = vpack.c.b16 %v367, %v363
  %v568 = vpack.c.b16 %v368, %v364
  %v569 = vpack.c.b16 %v369, %v365
  %v570 = vpack.c.b16 %v374, %v370
  %v571 = vpack.c.b16 %v375, %v371
  %v572 = vpack.c.b16 %v376, %v372
  %v573 = vpack.c.b16 %v377, %v373
  %v574 = vpack.c.b16 %v382, %v378
  %v575 = vpack.c.b16 %v383, %v379
  %v576 = vpack.c.b16 %v384, %v380
  %v577 = vpack.c.b16 %v385, %v381
  %v578 = vpack.c.b16 %v390, %v386
  %v579 = vpack.c.b16 %v391, %v387
  %v580 = vpack.c.b16 %v392, %v388
  %v581 = vpack.c.b16 %v393, %v389
  %v582 = vpack.c.b16 %v398, %v394
  %v583 = vpack.c.b16 %v399, %v395
  %v584 = vpack.c.b16 %v400, %v396
  %v585 = vpack.c.b16 %v401, %v397
  %v586 = vpack.c.b16 %v406, %v402
  %v587 = vpack.c.b16 %v407, %v403
  %v588 = vpack.c.b16 %v408, %v404
  %v589 = vpack.c.b16 %v409, %v405
  %v590 = vpack.c.b16 %v414, %v410
  %v591 = vpack.c.b16 %v415, %v411
  %v592 = vpack.c.b16 %v416, %v412
  %v593 = vpack.c.b16 %v417, %v413
  %v594 = vpack.c.b16 %v422, %v418
  %v595 = vpack.c.b16 %v423, %v419
  %v596 = vpack.c.b16 %v424, %v420
  %v597 = vpack.c.b16 %v425, %v421
  %v598 = vpack.c.b16 %v430, %v426
  %v599 = vpack.c.b16 %v431, %v427
  %v600 = vpack.c.b16 %v432, %v428
  %v601 = vpack.c.b16 %v433, %v429
  %v602 = vpack.c.b16 %v438, %v434
  %v603 = vpack.c.b16 %v439, %v435
  %v604 = vpack.c.b16 %v440, %v436
  %v605 = vpack.c.b16 %v441, %v437
  %v606 = vpack.c.b16 %v446, %v442
  %v607 = vpack.c.b16 %v447, %v443
  %v608 = vpack.c.b16 %v448, %v444
  %v609 = vpack.c.b16 %v449, %v445
  %v610 = vpack.c.b16 %v454, %v450
  %v611 = vpack.c.b16 %v455, %v451
  %v612 = vpack.c.b16 %v456, %v452
  %v613 = vpack.c.b16 %v457, %v453
  %v614 = vpack.c.b16 %v462, %v458
  %v615 = vpack.c.b16 %v463, %v459
  %v616 = vpack.c.b16 %v464, %v460
  %v617 = vpack.c.b16 %v465, %v461
  %v618 = vpack.c.b16 %v470, %v466
  %v619 = vpack.c.b16 %v471, %v467
  %v620 = vpack.c.b16 %v472, %v468
  %v621 = vpack.c.b16 %v473, %v469
  %v622 = vpack.c.b16 %v478, %v474
  %v623 = vpack.c.b16 %v479, %v475
  %v624 = vpack.c.b16 %v480, %v476
  %v625 = vpack.c.b16 %v481, %v477
  %v626 = vpack.c.b16 %v486, %v482
  %v627 = vpack.c.b16 %v487, %v483
  %v628 = vpack.c.b16 %v488, %v484
  %v629 = vpack.c.b16 %v489, %v485
  %v630 = vpack.c.b16 %v494, %v490
  %v631 = vpack.c.b16 %v495, %v491
  %v632 = vpack.c.b16 %v496, %v492
  %v633 = vpack.c.b16 %v497, %v493
  %v634 = vpack.c.b16 %v502, %v498
  %v635 = vpack.c.b16 %v503, %v499
  %v636 = vpack.c.b16 %v504, %v500
  %v637 = vpack.c.b16 %v505, %v501
  %v638 = vpack.c.b16 %v510, %v506
  %v639 = vpack.c.b16 %v511, %v507
  %v640 = vpack.c.b16 %v512, %v508
  %v641 = vpack.c.b16 %v513, %v509
  %v642 = vpack.c.b16 %v518, %v514
  %v643 = vpack.c.b16 %v519, %v515
  %v644 = vpack.c.b16 %v520, %v516
  %v645 = vpack.c.b16 %v521, %v517
  %v646 = vpack.c.b16 %v526, %v522
  %v647 = vpack.c.b16 %v527, %v523
  %v648 = vpack.c.b16 %v528, %v524
  %v649 = vpack.c.b16 %v529, %v525
  %v650 = vpack.c.b16 %v534, %v530
  %v651 = vpack.c.b16 %v535, %v531
  %v652 = vpack.c.b16 %v536, %v532
  %v653 = vpack.c.b16 %v537, %v533
  %v654 = vpack.c.b16 %v538, %v538
  %v655 = vpack.c.b16 %v539, %v539
  %v656 = vpack.c.b16 %v540, %v540
  %v657 = vpack.c.b16 %v541, %v541
  %v838 = vunpack.c.l.b16 %v136
  %v839 = vunpack.c.l.b16 %v137
  %v840 = vunpack.c.l.b16 %v138
  %v841 = vunpack.c.l.b16 %v139
  %v842 = vunpack.c.l.b16 %v140
  %v843 = vunpack.c.l.b16 %v141
  %v844 = vunpack.c.l.b16 %v142
  %v845 = vunpack.c.l.b16 %v143
  %v846 = vunpack.c.l.b16 %v144
  %v847 = vunpack.c.l.b16 %v145
  %v848 = vunpack.c.l.b16 %v146
  %v849 = vunpack.c.l.b16 %v147
  %v850 = vunpack.c.l.b16 %v148
  %v851 = vunpack.c.l.b16 %v149
  %v852 = vunpack.c.l.b16 %v150
  %v853 = vunpack.c.l.b16 %v151
  %v854 = vunpack.c.l.b16 %v152
  %v855 = vunpack.c.l.b16 %v153
  %v856 = vunpack.c.l.b16 %v154
  %v857 = vunpack.c.l.b16 %v155
  %v858 = vunpack.c.l.b16 %v156
  %v859 = vunpack.c.l.b16 %v157
  %v860 = vunpack.c.l.b16 %v158
  %v861 = vunpack.c.l.b16 %v159
  %v862 = vunpack.c.l.b16 %v160
  %v863 = vunpack.c.l.b16 %v161
  %v864 = vunpack.c.l.b16 %v162
  %v865 = vunpack.c.l.b16 %v163
  %v866 = vunpack.c.l.b16 %v164
  %v867 = vunpack.c.l.b16 %v165
  %v868 = vunpack.c.l.b16 %v166
  %v869 = vunpack.c.l.b16 %v167
  %v870 = vunpack.c.l.b16 %v168
  %v871 = vunpack.c.l.b16 %v169
  %v872 = vunpack.c.l.b16 %v170
  %v873 = vunpack.c.l.b16 %v171
  %v874 = vunpack.c.l.b16 %v172
  %v875 = vunpack.c.l.b16 %v173
  %v876 = vunpack.c.l.b16 %v174
  %v877 = vunpack.c.l.b16 %v175
  %v878 = vunpack.c.l.b16 %v176
  %v879 = vunpack.c.l.b16 %v177
  %v880 = vunpack.c.l.b16 %v178
  %v881 = vunpack.c.l.b16 %v179
  %v882 = vunpack.c.l.b16 %v180
  %v883 = vunpack.c.l.b16 %v181
  %v884 = vunpack.c.l.b16 %v182
  %v885 = vunpack.c.l.b16 %v183
  %v886 = vunpack.c.l.b16 %v184
  %v887 = vunpack.c.l.b16 %v185
  %v888 = vunpack.c.l.b16 %v186
  %v889 = vunpack.c.l.b16 %v187
  %v890 = vunpack.c.l.b16 %v188
  %v891 = vunpack.c.l.b16 %v189
  %v892 = vunpack.c.l.b16 %v190
  %v893 = vunpack.c.l.b16 %v191
  %v894 = vunpack.c.l.b16 %v192
  %v895 = vunpack.c.l.b16 %v193
  %v896 = vunpack.c.l.b16 %v194
  %v897 = vunpack.c.l.b16 %v195
  %v898 = vunpack.c.l.b16 %v196
  %v899 = vunpack.c.l.b16 %v197
  %v900 = vunpack.c.l.b16 %v198
  %v901 = vunpack.c.l.b16 %v199
  %v902 = vpack.c.b16 %v839, %v838
  %v903 = vpack.c.b16 %v841, %v840
  %v904 = vpack.c.b16 %v843, %v842
  %v905 = vpack.c.b16 %v845, %v844
  %v906 = vpack.c.b16 %v847, %v846
  %v907 = vpack.c.b16 %v849, %v848
  %v908 = vpack.c.b16 %v851, %v850
  %v909 = vpack.c.b16 %v853, %v852
  %v910 = vpack.c.b16 %v855, %v854
  %v911 = vpack.c.b16 %v857, %v856
  %v912 = vpack.c.b16 %v859, %v858
  %v913 = vpack.c.b16 %v861, %v860
  %v914 = vpack.c.b16 %v863, %v862
  %v915 = vpack.c.b16 %v865, %v864
  %v916 = vpack.c.b16 %v867, %v866
  %v917 = vpack.c.b16 %v869, %v868
  %v918 = vpack.c.b16 %v871, %v870
  %v919 = vpack.c.b16 %v873, %v872
  %v920 = vpack.c.b16 %v875, %v874
  %v921 = vpack.c.b16 %v877, %v876
  %v922 = vpack.c.b16 %v879, %v878
  %v923 = vpack.c.b16 %v881, %v880
  %v924 = vpack.c.b16 %v883, %v882
  %v925 = vpack.c.b16 %v885, %v884
  %v926 = vpack.c.b16 %v887, %v886
  %v927 = vpack.c.b16 %v889, %v888
  %v928 = vpack.c.b16 %v891, %v890
  %v929 = vpack.c.b16 %v893, %v892
  %v930 = vpack.c.b16 %v895, %v894
  %v931 = vpack.c.b16 %v897, %v896
  %v932 = vpack.c.b16 %v899, %v898
  %v933 = vpack.c.b16 %v901, %v900
  %966 = vmatprep.subr.bf16.mxu0 0
  %967 = vmatpush1.bf16.msra.mxu0 %v902
  %968 = vmatprep.subr.bf16.mxu0 0
  %969 = vmatpush1.bf16.msra.mxu0 %v903
  %970 = vmatprep.subr.bf16.mxu0 0
  %971 = vmatpush1.bf16.msra.mxu0 %v904
  %972 = vmatprep.subr.bf16.mxu0 0
  %973 = vmatpush1.bf16.msra.mxu0 %v905
  %974 = vmatprep.subr.bf16.mxu0 0
  %975 = vmatpush1.bf16.msra.mxu0 %v906
  %976 = vmatprep.subr.bf16.mxu0 0
  %977 = vmatpush1.bf16.msra.mxu0 %v907
  %978 = vmatprep.subr.bf16.mxu0 0
  %979 = vmatpush1.bf16.msra.mxu0 %v908
  %980 = vmatprep.subr.bf16.mxu0 0
  %981 = vmatpush1.bf16.msra.mxu0 %v909
  %982 = vmatprep.subr.bf16.mxu0 0
  %983 = vmatpush1.bf16.msra.mxu0 %v910
  %984 = vmatprep.subr.bf16.mxu0 0
  %985 = vmatpush1.bf16.msra.mxu0 %v911
  %986 = vmatprep.subr.bf16.mxu0 0
  %987 = vmatpush1.bf16.msra.mxu0 %v912
  %988 = vmatprep.subr.bf16.mxu0 0
  %989 = vmatpush1.bf16.msra.mxu0 %v913
  %990 = vmatprep.subr.bf16.mxu0 0
  %991 = vmatpush1.bf16.msra.mxu0 %v914
  %992 = vmatprep.subr.bf16.mxu0 0
  %993 = vmatpush1.bf16.msra.mxu0 %v915
  %994 = vmatprep.subr.bf16.mxu0 0
  %995 = vmatpush1.bf16.msra.mxu0 %v916
  %996 = vmatprep.subr.bf16.mxu0 0
  %997 = vmatpush1.bf16.msra.mxu0 %v917
  %998 = vmatprep.mubr.bf16.mxu0 %v543
  %999 = vmatmul.mubr.bf16.gmra.mrb[0].mxu0 %v542
  %v1000 = vpop.f32.mrb[0].mxu0
  %v1001 = vadd.f32 0.0, %v1000
  %v1002 = vpop.f32.mrb[0].mxu0
  %v1003 = vpop.f32.mrb[0].mxu0
  %v1004 = vadd.f32 0.0, %v1003
  %v1005 = vpop.f32.mrb[0].mxu0
  %1006 = vmatprep.mubr.bf16.mxu0 %v547
  %1007 = vmatmul.mubr.bf16.gmra.mrb[0].mxu0 %v546
  %v1008 = vpop.f32.mrb[0].mxu0
  %v1009 = vadd.f32 0.0, %v1008
  %v1010 = vpop.f32.mrb[0].mxu0
  %v1011 = vpop.f32.mrb[0].mxu0
  %v1012 = vadd.f32 0.0, %v1011
  %v1013 = vpop.f32.mrb[0].mxu0
  %1014 = vmatprep.mubr.bf16.mxu0 %v551
  %1015 = vmatmul.mubr.bf16.gmra.mrb[0].mxu0 %v550
  %v1016 = vpop.f32.mrb[0].mxu0
  %v1017 = vadd.f32 0.0, %v1016
  %v1018 = vpop.f32.mrb[0].mxu0
  %v1019 = vpop.f32.mrb[0].mxu0
  %v1020 = vadd.f32 0.0, %v1019
  %v1021 = vpop.f32.mrb[0].mxu0
  %1022 = vmatprep.mubr.bf16.mxu0 %v555
  %1023 = vmatmul.mubr.bf16.gmra.mrb[0].mxu0 %v554
  %v1024 = vpop.f32.mrb[0].mxu0
  %v1025 = vadd.f32 0.0, %v1024
  %v1026 = vpop.f32.mrb[0].mxu0
  %v1027 = vpop.f32.mrb[0].mxu0
  %v1028 = vadd.f32 0.0, %v1027
  %v1029 = vpop.f32.mrb[0].mxu0
  %1030 = vmatprep.mubr.bf16.mxu0 %v559
  %1031 = vmatmul.mubr.bf16.gmra.mrb[0].mxu0 %v558
  %v1032 = vpop.f32.mrb[0].mxu0
  %v1033 = vadd.f32 0.0, %v1032
  %v1034 = vpop.f32.mrb[0].mxu0
  %v1035 = vpop.f32.mrb[0].mxu0
  %v1036 = vadd.f32 0.0, %v1035
  %v1037 = vpop.f32.mrb[0].mxu0
  %1038 = vmatprep.mubr.bf16.mxu0 %v563
  %1039 = vmatmul.mubr.bf16.gmra.mrb[0].mxu0 %v562
  %v1040 = vpop.f32.mrb[0].mxu0
  %v1041 = vadd.f32 0.0, %v1040
  %v1042 = vpop.f32.mrb[0].mxu0
  %v1043 = vpop.f32.mrb[0].mxu0
  %v1044 = vadd.f32 0.0, %v1043
  %v1045 = vpop.f32.mrb[0].mxu0
  %1046 = vmatprep.mubr.bf16.mxu0 %v567
  %1047 = vmatmul.mubr.bf16.gmra.mrb[0].mxu0 %v566
  %v1048 = vpop.f32.mrb[0].mxu0
  %v1049 = vadd.f32 0.0, %v1048
  %v1050 = vpop.f32.mrb[0].mxu0
  %v1051 = vpop.f32.mrb[0].mxu0
  %v1052 = vadd.f32 0.0, %v1051
  %v1053 = vpop.f32.mrb[0].mxu0
  %1054 = vmatprep.mubr.bf16.mxu0 %v571
  %1055 = vmatmul.mubr.bf16.gmra.mrb[0].mxu0 %v570
  %v1056 = vpop.f32.mrb[0].mxu0
  %v1057 = vadd.f32 0.0, %v1056
  %v1058 = vpop.f32.mrb[0].mxu0
  %v1059 = vpop.f32.mrb[0].mxu0
  %v1060 = vadd.f32 0.0, %v1059
  %v1061 = vpop.f32.mrb[0].mxu0
  %1062 = vmatprep.mubr.bf16.mxu0 %v575
  %1063 = vmatmul.mubr.bf16.gmra.mrb[0].mxu0 %v574
  %v1064 = vpop.f32.mrb[0].mxu0
  %v1065 = vadd.f32 0.0, %v1064
  %v1066 = vpop.f32.mrb[0].mxu0
  %v1067 = vpop.f32.mrb[0].mxu0
  %v1068 = vadd.f32 0.0, %v1067
  %v1069 = vpop.f32.mrb[0].mxu0
  %1070 = vmatprep.mubr.bf16.mxu0 %v579
  %1071 = vmatmul.mubr.bf16.gmra.mrb[0].mxu0 %v578
  %v1072 = vpop.f32.mrb[0].mxu0
  %v1073 = vadd.f32 0.0, %v1072
  %v1074 = vpop.f32.mrb[0].mxu0
  %v1075 = vpop.f32.mrb[0].mxu0
  %v1076 = vadd.f32 0.0, %v1075
  %v1077 = vpop.f32.mrb[0].mxu0
  %1078 = vmatprep.mubr.bf16.mxu0 %v583
  %1079 = vmatmul.mubr.bf16.gmra.mrb[0].mxu0 %v582
  %v1080 = vpop.f32.mrb[0].mxu0
  %v1081 = vadd.f32 0.0, %v1080
  %v1082 = vpop.f32.mrb[0].mxu0
  %v1083 = vpop.f32.mrb[0].mxu0
  %v1084 = vadd.f32 0.0, %v1083
  %v1085 = vpop.f32.mrb[0].mxu0
  %1086 = vmatprep.mubr.bf16.mxu0 %v587
  %1087 = vmatmul.mubr.bf16.gmra.mrb[0].mxu0 %v586
  %v1088 = vpop.f32.mrb[0].mxu0
  %v1089 = vadd.f32 0.0, %v1088
  %v1090 = vpop.f32.mrb[0].mxu0
  %v1091 = vpop.f32.mrb[0].mxu0
  %v1092 = vadd.f32 0.0, %v1091
  %v1093 = vpop.f32.mrb[0].mxu0
  %1094 = vmatprep.mubr.bf16.mxu0 %v591
  %1095 = vmatmul.mubr.bf16.gmra.mrb[0].mxu0 %v590
  %v1096 = vpop.f32.mrb[0].mxu0
  %v1097 = vadd.f32 0.0, %v1096
  %v1098 = vpop.f32.mrb[0].mxu0
  %v1099 = vpop.f32.mrb[0].mxu0
  %v1100 = vadd.f32 0.0, %v1099
  %v1101 = vpop.f32.mrb[0].mxu0
  %1102 = vmatprep.mubr.bf16.mxu0 %v595
  %1103 = vmatmul.mubr.bf16.gmra.mrb[0].mxu0 %v594
  %v1104 = vpop.f32.mrb[0].mxu0
  %v1105 = vadd.f32 0.0, %v1104
  %v1106 = vpop.f32.mrb[0].mxu0
  %v1107 = vpop.f32.mrb[0].mxu0
  %v1108 = vadd.f32 0.0, %v1107
  %v1109 = vpop.f32.mrb[0].mxu0
  %1110 = vmatprep.mubr.bf16.mxu0 %v599
  %1111 = vmatmul.mubr.bf16.gmra.mrb[0].mxu0 %v598
  %v1112 = vpop.f32.mrb[0].mxu0
  %v1113 = vadd.f32 0.0, %v1112
  %v1114 = vpop.f32.mrb[0].mxu0
  %v1115 = vpop.f32.mrb[0].mxu0
  %v1116 = vadd.f32 0.0, %v1115
  %v1117 = vpop.f32.mrb[0].mxu0
  %1118 = vmatprep.mubr.bf16.mxu0 %v603
  %1119 = vmatmul.mubr.bf16.gmra.mrb[0].mxu0 %v602
  %v1120 = vpop.f32.mrb[0].mxu0
  %v1121 = vadd.f32 0.0, %v1120
  %v1122 = vpop.f32.mrb[0].mxu0
  %v1123 = vpop.f32.mrb[0].mxu0
  %v1124 = vadd.f32 0.0, %v1123
  %v1125 = vpop.f32.mrb[0].mxu0
  %1126 = vmatprep.mubr.bf16.mxu0 %v607
  %1127 = vmatmul.mubr.bf16.gmra.mrb[0].mxu0 %v606
  %v1128 = vpop.f32.mrb[0].mxu0
  %v1129 = vadd.f32 0.0, %v1128
  %v1130 = vpop.f32.mrb[0].mxu0
  %v1131 = vpop.f32.mrb[0].mxu0
  %v1132 = vadd.f32 0.0, %v1131
  %v1133 = vpop.f32.mrb[0].mxu0
  %1134 = vmatprep.mubr.bf16.mxu0 %v611
  %1135 = vmatmul.mubr.bf16.gmra.mrb[0].mxu0 %v610
  %v1136 = vpop.f32.mrb[0].mxu0
  %v1137 = vadd.f32 0.0, %v1136
  %v1138 = vpop.f32.mrb[0].mxu0
  %v1139 = vpop.f32.mrb[0].mxu0
  %v1140 = vadd.f32 0.0, %v1139
  %v1141 = vpop.f32.mrb[0].mxu0
  %1142 = vmatprep.mubr.bf16.mxu0 %v615
  %1143 = vmatmul.mubr.bf16.gmra.mrb[0].mxu0 %v614
  %v1144 = vpop.f32.mrb[0].mxu0
  %v1145 = vadd.f32 0.0, %v1144
  %v1146 = vpop.f32.mrb[0].mxu0
  %v1147 = vpop.f32.mrb[0].mxu0
  %v1148 = vadd.f32 0.0, %v1147
  %v1149 = vpop.f32.mrb[0].mxu0
  %1150 = vmatprep.mubr.bf16.mxu0 %v619
  %1151 = vmatmul.mubr.bf16.gmra.mrb[0].mxu0 %v618
  %v1152 = vpop.f32.mrb[0].mxu0
  %v1153 = vadd.f32 0.0, %v1152
  %v1154 = vpop.f32.mrb[0].mxu0
  %v1155 = vpop.f32.mrb[0].mxu0
  %v1156 = vadd.f32 0.0, %v1155
  %v1157 = vpop.f32.mrb[0].mxu0
  %1158 = vmatprep.mubr.bf16.mxu0 %v623
  %1159 = vmatmul.mubr.bf16.gmra.mrb[0].mxu0 %v622
  %v1160 = vpop.f32.mrb[0].mxu0
  %v1161 = vadd.f32 0.0, %v1160
  %v1162 = vpop.f32.mrb[0].mxu0
  %v1163 = vpop.f32.mrb[0].mxu0
  %v1164 = vadd.f32 0.0, %v1163
  %v1165 = vpop.f32.mrb[0].mxu0
  %1166 = vmatprep.mubr.bf16.mxu0 %v627
  %1167 = vmatmul.mubr.bf16.gmra.mrb[0].mxu0 %v626
  %v1168 = vpop.f32.mrb[0].mxu0
  %v1169 = vadd.f32 0.0, %v1168
  %v1170 = vpop.f32.mrb[0].mxu0
  %v1171 = vpop.f32.mrb[0].mxu0
  %v1172 = vadd.f32 0.0, %v1171
  %v1173 = vpop.f32.mrb[0].mxu0
  %1174 = vmatprep.mubr.bf16.mxu0 %v631
  %1175 = vmatmul.mubr.bf16.gmra.mrb[0].mxu0 %v630
  %v1176 = vpop.f32.mrb[0].mxu0
  %v1177 = vadd.f32 0.0, %v1176
  %v1178 = vpop.f32.mrb[0].mxu0
  %v1179 = vpop.f32.mrb[0].mxu0
  %v1180 = vadd.f32 0.0, %v1179
  %v1181 = vpop.f32.mrb[0].mxu0
  %1182 = vmatprep.mubr.bf16.mxu0 %v635
  %1183 = vmatmul.mubr.bf16.gmra.mrb[0].mxu0 %v634
  %v1184 = vpop.f32.mrb[0].mxu0
  %v1185 = vadd.f32 0.0, %v1184
  %v1186 = vpop.f32.mrb[0].mxu0
  %v1187 = vpop.f32.mrb[0].mxu0
  %v1188 = vadd.f32 0.0, %v1187
  %v1189 = vpop.f32.mrb[0].mxu0
  %1190 = vmatprep.mubr.bf16.mxu0 %v639
  %1191 = vmatmul.mubr.bf16.gmra.mrb[0].mxu0 %v638
  %v1192 = vpop.f32.mrb[0].mxu0
  %v1193 = vadd.f32 0.0, %v1192
  %v1194 = vpop.f32.mrb[0].mxu0
  %v1195 = vpop.f32.mrb[0].mxu0
  %v1196 = vadd.f32 0.0, %v1195
  %v1197 = vpop.f32.mrb[0].mxu0
  %1198 = vmatprep.mubr.bf16.mxu0 %v643
  %1199 = vmatmul.mubr.bf16.gmra.mrb[0].mxu0 %v642
  %v1200 = vpop.f32.mrb[0].mxu0
  %v1201 = vadd.f32 0.0, %v1200
  %v1202 = vpop.f32.mrb[0].mxu0
  %v1203 = vpop.f32.mrb[0].mxu0
  %v1204 = vadd.f32 0.0, %v1203
  %v1205 = vpop.f32.mrb[0].mxu0
  %1206 = vmatprep.mubr.bf16.mxu0 %v647
  %1207 = vmatmul.mubr.bf16.gmra.mrb[0].mxu0 %v646
  %v1208 = vpop.f32.mrb[0].mxu0
  %v1209 = vadd.f32 0.0, %v1208
  %v1210 = vpop.f32.mrb[0].mxu0
  %v1211 = vpop.f32.mrb[0].mxu0
  %v1212 = vadd.f32 0.0, %v1211
  %v1213 = vpop.f32.mrb[0].mxu0
  %1214 = vmatprep.mubr.bf16.mxu0 %v651
  %1215 = vmatmul.mubr.bf16.gmra.mrb[0].mxu0 %v650
  %v1216 = vpop.f32.mrb[0].mxu0
  %v1217 = vadd.f32 0.0, %v1216
  %v1218 = vpop.f32.mrb[0].mxu0
  %v1219 = vpop.f32.mrb[0].mxu0
  %v1220 = vadd.f32 0.0, %v1219
  %v1221 = vpop.f32.mrb[0].mxu0
  %1222 = vmatprep.mubr.bf16.mxu0 %v655
  %1223 = vmatmul.mubr.bf16.gmra.mrb[0].mxu0 %v654
  %v1224 = vpop.f32.mrb[0].mxu0
  %v1225 = vadd.f32 0.0, %v1224
  %v1226 = vpop.f32.mrb[0].mxu0
  %v1227 = vpop.f32.mrb[0].mxu0
  %v1228 = vpop.f32.mrb[0].mxu0
  %1229 = vdwg.mxu0
  %1230 = vmatprep.subr.bf16.mxu0 0
  %1231 = vmatpush1.bf16.msra.mxu0 %v918
  %1232 = vmatprep.subr.bf16.mxu0 0
  %1233 = vmatpush1.bf16.msra.mxu0 %v919
  %1234 = vmatprep.subr.bf16.mxu0 0
  %1235 = vmatpush1.bf16.msra.mxu0 %v920
  %1236 = vmatprep.subr.bf16.mxu0 0
  %1237 = vmatpush1.bf16.msra.mxu0 %v921
  %1238 = vmatprep.subr.bf16.mxu0 0
  %1239 = vmatpush1.bf16.msra.mxu0 %v922
  %1240 = vmatprep.subr.bf16.mxu0 0
  %1241 = vmatpush1.bf16.msra.mxu0 %v923
  %1242 = vmatprep.subr.bf16.mxu0 0
  %1243 = vmatpush1.bf16.msra.mxu0 %v924
  %1244 = vmatprep.subr.bf16.mxu0 0
  %1245 = vmatpush1.bf16.msra.mxu0 %v925
  %1246 = vmatprep.subr.bf16.mxu0 0
  %1247 = vmatpush1.bf16.msra.mxu0 %v926
  %1248 = vmatprep.subr.bf16.mxu0 0
  %1249 = vmatpush1.bf16.msra.mxu0 %v927
  %1250 = vmatprep.subr.bf16.mxu0 0
  %1251 = vmatpush1.bf16.msra.mxu0 %v928
  %1252 = vmatprep.subr.bf16.mxu0 0
  %1253 = vmatpush1.bf16.msra.mxu0 %v929
  %1254 = vmatprep.subr.bf16.mxu0 0
  %1255 = vmatpush1.bf16.msra.mxu0 %v930
  %1256 = vmatprep.subr.bf16.mxu0 0
  %1257 = vmatpush1.bf16.msra.mxu0 %v931
  %1258 = vmatprep.subr.bf16.mxu0 0
  %1259 = vmatpush1.bf16.msra.mxu0 %v932
  %1260 = vmatprep.subr.bf16.mxu0 0
  %1261 = vmatpush1.bf16.msra.mxu0 %v933
  %1262 = vmatprep.mubr.bf16.mxu0 %v545
  %1263 = vmatmul.mubr.bf16.gmra.mrb[0].mxu0 %v544
  %v1264 = vpop.f32.mrb[0].mxu0
  %v1265 = vadd.f32 %v1001, %v1264
  %v1266 = vpop.f32.mrb[0].mxu0
  %v1267 = vpop.f32.mrb[0].mxu0
  %v1268 = vadd.f32 %v1004, %v1267
  %v1269 = vpop.f32.mrb[0].mxu0
  %1270 = vmatprep.mubr.bf16.mxu0 %v549
  %1271 = vmatmul.mubr.bf16.gmra.mrb[0].mxu0 %v548
  %v1272 = vpop.f32.mrb[0].mxu0
  %v1273 = vadd.f32 %v1009, %v1272
  %v1274 = vpop.f32.mrb[0].mxu0
  %v1275 = vpop.f32.mrb[0].mxu0
  %v1276 = vadd.f32 %v1012, %v1275
  %v1277 = vpop.f32.mrb[0].mxu0
  %1278 = vmatprep.mubr.bf16.mxu0 %v553
  %1279 = vmatmul.mubr.bf16.gmra.mrb[0].mxu0 %v552
  %v1280 = vpop.f32.mrb[0].mxu0
  %v1281 = vadd.f32 %v1017, %v1280
  %v1282 = vpop.f32.mrb[0].mxu0
  %v1283 = vpop.f32.mrb[0].mxu0
  %v1284 = vadd.f32 %v1020, %v1283
  %v1285 = vpop.f32.mrb[0].mxu0
  %1286 = vmatprep.mubr.bf16.mxu0 %v557
  %1287 = vmatmul.mubr.bf16.gmra.mrb[0].mxu0 %v556
  %v1288 = vpop.f32.mrb[0].mxu0
  %v1289 = vadd.f32 %v1025, %v1288
  %v1290 = vpop.f32.mrb[0].mxu0
  %v1291 = vpop.f32.mrb[0].mxu0
  %v1292 = vadd.f32 %v1028, %v1291
  %v1293 = vpop.f32.mrb[0].mxu0
  %1294 = vmatprep.mubr.bf16.mxu0 %v561
  %1295 = vmatmul.mubr.bf16.gmra.mrb[0].mxu0 %v560
  %v1296 = vpop.f32.mrb[0].mxu0
  %v1297 = vadd.f32 %v1033, %v1296
  %v1298 = vpop.f32.mrb[0].mxu0
  %v1299 = vpop.f32.mrb[0].mxu0
  %v1300 = vadd.f32 %v1036, %v1299
  %v1301 = vpop.f32.mrb[0].mxu0
  %1302 = vmatprep.mubr.bf16.mxu0 %v565
  %1303 = vmatmul.mubr.bf16.gmra.mrb[0].mxu0 %v564
  %v1304 = vpop.f32.mrb[0].mxu0
  %v1305 = vadd.f32 %v1041, %v1304
  %v1306 = vpop.f32.mrb[0].mxu0
  %v1307 = vpop.f32.mrb[0].mxu0
  %v1308 = vadd.f32 %v1044, %v1307
  %v1309 = vpop.f32.mrb[0].mxu0
  %1310 = vmatprep.mubr.bf16.mxu0 %v569
  %1311 = vmatmul.mubr.bf16.gmra.mrb[0].mxu0 %v568
  %v1312 = vpop.f32.mrb[0].mxu0
  %v1313 = vadd.f32 %v1049, %v1312
  %v1314 = vpop.f32.mrb[0].mxu0
  %v1315 = vpop.f32.mrb[0].mxu0
  %v1316 = vadd.f32 %v1052, %v1315
  %v1317 = vpop.f32.mrb[0].mxu0
  %1318 = vmatprep.mubr.bf16.mxu0 %v573
  %1319 = vmatmul.mubr.bf16.gmra.mrb[0].mxu0 %v572
  %v1320 = vpop.f32.mrb[0].mxu0
  %v1321 = vadd.f32 %v1057, %v1320
  %v1322 = vpop.f32.mrb[0].mxu0
  %v1323 = vpop.f32.mrb[0].mxu0
  %v1324 = vadd.f32 %v1060, %v1323
  %v1325 = vpop.f32.mrb[0].mxu0
  %1326 = vmatprep.mubr.bf16.mxu0 %v577
  %1327 = vmatmul.mubr.bf16.gmra.mrb[0].mxu0 %v576
  %v1328 = vpop.f32.mrb[0].mxu0
  %v1329 = vadd.f32 %v1065, %v1328
  %v1330 = vpop.f32.mrb[0].mxu0
  %v1331 = vpop.f32.mrb[0].mxu0
  %v1332 = vadd.f32 %v1068, %v1331
  %v1333 = vpop.f32.mrb[0].mxu0
  %1334 = vmatprep.mubr.bf16.mxu0 %v581
  %1335 = vmatmul.mubr.bf16.gmra.mrb[0].mxu0 %v580
  %v1336 = vpop.f32.mrb[0].mxu0
  %v1337 = vadd.f32 %v1073, %v1336
  %v1338 = vpop.f32.mrb[0].mxu0
  %v1339 = vpop.f32.mrb[0].mxu0
  %v1340 = vadd.f32 %v1076, %v1339
  %v1341 = vpop.f32.mrb[0].mxu0
  %1342 = vmatprep.mubr.bf16.mxu0 %v585
  %1343 = vmatmul.mubr.bf16.gmra.mrb[0].mxu0 %v584
  %v1344 = vpop.f32.mrb[0].mxu0
  %v1345 = vadd.f32 %v1081, %v1344
  %v1346 = vpop.f32.mrb[0].mxu0
  %v1347 = vpop.f32.mrb[0].mxu0
  %v1348 = vadd.f32 %v1084, %v1347
  %v1349 = vpop.f32.mrb[0].mxu0
  %1350 = vmatprep.mubr.bf16.mxu0 %v589
  %1351 = vmatmul.mubr.bf16.gmra.mrb[0].mxu0 %v588
  %v1352 = vpop.f32.mrb[0].mxu0
  %v1353 = vadd.f32 %v1089, %v1352
  %v1354 = vpop.f32.mrb[0].mxu0
  %v1355 = vpop.f32.mrb[0].mxu0
  %v1356 = vadd.f32 %v1092, %v1355
  %v1357 = vpop.f32.mrb[0].mxu0
  %1358 = vmatprep.mubr.bf16.mxu0 %v593
  %1359 = vmatmul.mubr.bf16.gmra.mrb[0].mxu0 %v592
  %v1360 = vpop.f32.mrb[0].mxu0
  %v1361 = vadd.f32 %v1097, %v1360
  %v1362 = vpop.f32.mrb[0].mxu0
  %v1363 = vpop.f32.mrb[0].mxu0
  %v1364 = vadd.f32 %v1100, %v1363
  %v1365 = vpop.f32.mrb[0].mxu0
  %1366 = vmatprep.mubr.bf16.mxu0 %v597
  %1367 = vmatmul.mubr.bf16.gmra.mrb[0].mxu0 %v596
  %v1368 = vpop.f32.mrb[0].mxu0
  %v1369 = vadd.f32 %v1105, %v1368
  %v1370 = vpop.f32.mrb[0].mxu0
  %v1371 = vpop.f32.mrb[0].mxu0
  %v1372 = vadd.f32 %v1108, %v1371
  %v1373 = vpop.f32.mrb[0].mxu0
  %1374 = vmatprep.mubr.bf16.mxu0 %v601
  %1375 = vmatmul.mubr.bf16.gmra.mrb[0].mxu0 %v600
  %v1376 = vpop.f32.mrb[0].mxu0
  %v1377 = vadd.f32 %v1113, %v1376
  %v1378 = vpop.f32.mrb[0].mxu0
  %v1379 = vpop.f32.mrb[0].mxu0
  %v1380 = vadd.f32 %v1116, %v1379
  %v1381 = vpop.f32.mrb[0].mxu0
  %1382 = vmatprep.mubr.bf16.mxu0 %v605
  %1383 = vmatmul.mubr.bf16.gmra.mrb[0].mxu0 %v604
  %v1384 = vpop.f32.mrb[0].mxu0
  %v1385 = vadd.f32 %v1121, %v1384
  %v1386 = vpop.f32.mrb[0].mxu0
  %v1387 = vpop.f32.mrb[0].mxu0
  %v1388 = vadd.f32 %v1124, %v1387
  %v1389 = vpop.f32.mrb[0].mxu0
  %1390 = vmatprep.mubr.bf16.mxu0 %v609
  %1391 = vmatmul.mubr.bf16.gmra.mrb[0].mxu0 %v608
  %v1392 = vpop.f32.mrb[0].mxu0
  %v1393 = vadd.f32 %v1129, %v1392
  %v1394 = vpop.f32.mrb[0].mxu0
  %v1395 = vpop.f32.mrb[0].mxu0
  %v1396 = vadd.f32 %v1132, %v1395
  %v1397 = vpop.f32.mrb[0].mxu0
  %1398 = vmatprep.mubr.bf16.mxu0 %v613
  %1399 = vmatmul.mubr.bf16.gmra.mrb[0].mxu0 %v612
  %v1400 = vpop.f32.mrb[0].mxu0
  %v1401 = vadd.f32 %v1137, %v1400
  %v1402 = vpop.f32.mrb[0].mxu0
  %v1403 = vpop.f32.mrb[0].mxu0
  %v1404 = vadd.f32 %v1140, %v1403
  %v1405 = vpop.f32.mrb[0].mxu0
  %1406 = vmatprep.mubr.bf16.mxu0 %v617
  %1407 = vmatmul.mubr.bf16.gmra.mrb[0].mxu0 %v616
  %v1408 = vpop.f32.mrb[0].mxu0
  %v1409 = vadd.f32 %v1145, %v1408
  %v1410 = vpop.f32.mrb[0].mxu0
  %v1411 = vpop.f32.mrb[0].mxu0
  %v1412 = vadd.f32 %v1148, %v1411
  %v1413 = vpop.f32.mrb[0].mxu0
  %1414 = vmatprep.mubr.bf16.mxu0 %v621
  %1415 = vmatmul.mubr.bf16.gmra.mrb[0].mxu0 %v620
  %v1416 = vpop.f32.mrb[0].mxu0
  %v1417 = vadd.f32 %v1153, %v1416
  %v1418 = vpop.f32.mrb[0].mxu0
  %v1419 = vpop.f32.mrb[0].mxu0
  %v1420 = vadd.f32 %v1156, %v1419
  %v1421 = vpop.f32.mrb[0].mxu0
  %1422 = vmatprep.mubr.bf16.mxu0 %v625
  %1423 = vmatmul.mubr.bf16.gmra.mrb[0].mxu0 %v624
  %v1424 = vpop.f32.mrb[0].mxu0
  %v1425 = vadd.f32 %v1161, %v1424
  %v1426 = vpop.f32.mrb[0].mxu0
  %v1427 = vpop.f32.mrb[0].mxu0
  %v1428 = vadd.f32 %v1164, %v1427
  %v1429 = vpop.f32.mrb[0].mxu0
  %1430 = vmatprep.mubr.bf16.mxu0 %v629
  %1431 = vmatmul.mubr.bf16.gmra.mrb[0].mxu0 %v628
  %v1432 = vpop.f32.mrb[0].mxu0
  %v1433 = vadd.f32 %v1169, %v1432
  %v1434 = vpop.f32.mrb[0].mxu0
  %v1435 = vpop.f32.mrb[0].mxu0
  %v1436 = vadd.f32 %v1172, %v1435
  %v1437 = vpop.f32.mrb[0].mxu0
  %1438 = vmatprep.mubr.bf16.mxu0 %v633
  %1439 = vmatmul.mubr.bf16.gmra.mrb[0].mxu0 %v632
  %v1440 = vpop.f32.mrb[0].mxu0
  %v1441 = vadd.f32 %v1177, %v1440
  %v1442 = vpop.f32.mrb[0].mxu0
  %v1443 = vpop.f32.mrb[0].mxu0
  %v1444 = vadd.f32 %v1180, %v1443
  %v1445 = vpop.f32.mrb[0].mxu0
  %1446 = vmatprep.mubr.bf16.mxu0 %v637
  %1447 = vmatmul.mubr.bf16.gmra.mrb[0].mxu0 %v636
  %v1448 = vpop.f32.mrb[0].mxu0
  %v1449 = vadd.f32 %v1185, %v1448
  %v1450 = vpop.f32.mrb[0].mxu0
  %v1451 = vpop.f32.mrb[0].mxu0
  %v1452 = vadd.f32 %v1188, %v1451
  %v1453 = vpop.f32.mrb[0].mxu0
  %1454 = vmatprep.mubr.bf16.mxu0 %v641
  %1455 = vmatmul.mubr.bf16.gmra.mrb[0].mxu0 %v640
  %v1456 = vpop.f32.mrb[0].mxu0
  %v1457 = vadd.f32 %v1193, %v1456
  %v1458 = vpop.f32.mrb[0].mxu0
  %v1459 = vpop.f32.mrb[0].mxu0
  %v1460 = vadd.f32 %v1196, %v1459
  %v1461 = vpop.f32.mrb[0].mxu0
  %1462 = vmatprep.mubr.bf16.mxu0 %v645
  %1463 = vmatmul.mubr.bf16.gmra.mrb[0].mxu0 %v644
  %v1464 = vpop.f32.mrb[0].mxu0
  %v1465 = vadd.f32 %v1201, %v1464
  %v1466 = vpop.f32.mrb[0].mxu0
  %v1467 = vpop.f32.mrb[0].mxu0
  %v1468 = vadd.f32 %v1204, %v1467
  %v1469 = vpop.f32.mrb[0].mxu0
  %1470 = vmatprep.mubr.bf16.mxu0 %v649
  %1471 = vmatmul.mubr.bf16.gmra.mrb[0].mxu0 %v648
  %v1472 = vpop.f32.mrb[0].mxu0
  %v1473 = vadd.f32 %v1209, %v1472
  %v1474 = vpop.f32.mrb[0].mxu0
  %v1475 = vpop.f32.mrb[0].mxu0
  %v1476 = vadd.f32 %v1212, %v1475
  %v1477 = vpop.f32.mrb[0].mxu0
  %1478 = vmatprep.mubr.bf16.mxu0 %v653
  %1479 = vmatmul.mubr.bf16.gmra.mrb[0].mxu0 %v652
  %v1480 = vpop.f32.mrb[0].mxu0
  %v1481 = vadd.f32 %v1217, %v1480
  %v1482 = vpop.f32.mrb[0].mxu0
  %v1483 = vpop.f32.mrb[0].mxu0
  %v1484 = vadd.f32 %v1220, %v1483
  %v1485 = vpop.f32.mrb[0].mxu0
  %1486 = vmatprep.mubr.bf16.mxu0 %v657
  %1487 = vmatmul.mubr.bf16.gmra.mrb[0].mxu0 %v656
  %v1488 = vpop.f32.mrb[0].mxu0
  %v1489 = vadd.f32 %v1225, %v1488
  %v1490 = vpop.f32.mrb[0].mxu0
  %v1491 = vpop.f32.mrb[0].mxu0
  %v1492 = vpop.f32.mrb[0].mxu0
  %1493 = vdwg.mxu0
  %vm1494 = vcmask 523264
  %1495 = vst.msk [vmem:[%s2] sm:$0xff] %vm1494, %v1265
  %1496 = vst.msk [vmem:[%s2 + $0x8] sm:$0xff] %vm1494, %v1268
  %1497 = vst.msk [vmem:[%s2 + $0x10] sm:$0xff] %vm1494, %v1273
  %1498 = vst.msk [vmem:[%s2 + $0x18] sm:$0xff] %vm1494, %v1276
  %1499 = vst.msk [vmem:[%s2 + $0x20] sm:$0xff] %vm1494, %v1281
  %1500 = vst.msk [vmem:[%s2 + $0x28] sm:$0xff] %vm1494, %v1284
  %1501 = vst.msk [vmem:[%s2 + $0x30] sm:$0xff] %vm1494, %v1289
  %1502 = vst.msk [vmem:[%s2 + $0x38] sm:$0xff] %vm1494, %v1292
  %1503 = vst.msk [vmem:[%s2 + $0x40] sm:$0xff] %vm1494, %v1297
  %1504 = vst.msk [vmem:[%s2 + $0x48] sm:$0xff] %vm1494, %v1300
  %1505 = vst.msk [vmem:[%s2 + $0x50] sm:$0xff] %vm1494, %v1305
  %1506 = vst.msk [vmem:[%s2 + $0x58] sm:$0xff] %vm1494, %v1308
  %1507 = vst.msk [vmem:[%s2 + $0x60] sm:$0xff] %vm1494, %v1313
  %1508 = vst.msk [vmem:[%s2 + $0x68] sm:$0xff] %vm1494, %v1316
  %1509 = vst.msk [vmem:[%s2 + $0x70] sm:$0xff] %vm1494, %v1321
  %1510 = vst.msk [vmem:[%s2 + $0x78] sm:$0xff] %vm1494, %v1324
  %1511 = vst.msk [vmem:[%s2 + $0x80] sm:$0xff] %vm1494, %v1329
  %1512 = vst.msk [vmem:[%s2 + $0x88] sm:$0xff] %vm1494, %v1332
  %1513 = vst.msk [vmem:[%s2 + $0x90] sm:$0xff] %vm1494, %v1337
  %1514 = vst.msk [vmem:[%s2 + $0x98] sm:$0xff] %vm1494, %v1340
  %1515 = vst.msk [vmem:[%s2 + $0xa0] sm:$0xff] %vm1494, %v1345
  %1516 = vst.msk [vmem:[%s2 + $0xa8] sm:$0xff] %vm1494, %v1348
  %1517 = vst.msk [vmem:[%s2 + $0xb0] sm:$0xff] %vm1494, %v1353
  %1518 = vst.msk [vmem:[%s2 + $0xb8] sm:$0xff] %vm1494, %v1356
  %1519 = vst.msk [vmem:[%s2 + $0xc0] sm:$0xff] %vm1494, %v1361
  %1520 = vst.msk [vmem:[%s2 + $0xc8] sm:$0xff] %vm1494, %v1364
  %1521 = vst.msk [vmem:[%s2 + $0xd0] sm:$0xff] %vm1494, %v1369
  %1522 = vst.msk [vmem:[%s2 + $0xd8] sm:$0xff] %vm1494, %v1372
  %1523 = vst.msk [vmem:[%s2 + $0xe0] sm:$0xff] %vm1494, %v1377
  %1524 = vst.msk [vmem:[%s2 + $0xe8] sm:$0xff] %vm1494, %v1380
  %1525 = vst.msk [vmem:[%s2 + $0xf0] sm:$0xff] %vm1494, %v1385
  %1526 = vst.msk [vmem:[%s2 + $0xf8] sm:$0xff] %vm1494, %v1388
  %1527 = vst.msk [vmem:[%s2 + $0x100] sm:$0xff] %vm1494, %v1393
  %1528 = vst.msk [vmem:[%s2 + $0x108] sm:$0xff] %vm1494, %v1396
  %1529 = vst.msk [vmem:[%s2 + $0x110] sm:$0xff] %vm1494, %v1401
  %1530 = vst.msk [vmem:[%s2 + $0x118] sm:$0xff] %vm1494, %v1404
  %1531 = vst.msk [vmem:[%s2 + $0x120] sm:$0xff] %vm1494, %v1409
  %1532 = vst.msk [vmem:[%s2 + $0x128] sm:$0xff] %vm1494, %v1412
  %1533 = vst.msk [vmem:[%s2 + $0x130] sm:$0xff] %vm1494, %v1417
  %1534 = vst.msk [vmem:[%s2 + $0x138] sm:$0xff] %vm1494, %v1420
  %1535 = vst.msk [vmem:[%s2 + $0x140] sm:$0xff] %vm1494, %v1425
  %1536 = vst.msk [vmem:[%s2 + $0x148] sm:$0xff] %vm1494, %v1428
  %1537 = vst.msk [vmem:[%s2 + $0x150] sm:$0xff] %vm1494, %v1433
  %1538 = vst.msk [vmem:[%s2 + $0x158] sm:$0xff] %vm1494, %v1436
  %1539 = vst.msk [vmem:[%s2 + $0x160] sm:$0xff] %vm1494, %v1441
  %1540 = vst.msk [vmem:[%s2 + $0x168] sm:$0xff] %vm1494, %v1444
  %1541 = vst.msk [vmem:[%s2 + $0x170] sm:$0xff] %vm1494, %v1449
  %1542 = vst.msk [vmem:[%s2 + $0x178] sm:$0xff] %vm1494, %v1452
  %1543 = vst.msk [vmem:[%s2 + $0x180] sm:$0xff] %vm1494, %v1457
  %1544 = vst.msk [vmem:[%s2 + $0x188] sm:$0xff] %vm1494, %v1460
  %1545 = vst.msk [vmem:[%s2 + $0x190] sm:$0xff] %vm1494, %v1465
  %1546 = vst.msk [vmem:[%s2 + $0x198] sm:$0xff] %vm1494, %v1468
  %1547 = vst.msk [vmem:[%s2 + $0x1a0] sm:$0xff] %vm1494, %v1473
  %1548 = vst.msk [vmem:[%s2 + $0x1a8] sm:$0xff] %vm1494, %v1476
  %1549 = vst.msk [vmem:[%s2 + $0x1b0] sm:$0xff] %vm1494, %v1481
  %1550 = vst.msk [vmem:[%s2 + $0x1b8] sm:$0xff] %vm1494, %v1484
  %1551 = vst.msk [vmem:[%s2 + $0x1c0] sm:$0xff] %vm1494, %v1489
  %v1552 = vld [vmem:[%s3] sm:$0x1]
  %v1553 = vsel %vm1494, %v1265, 0.0
  %v1554 = vsel %vm1494, %v1268, 0.0
  %v1555 = vadd.f32 %v1553, %v1554
  %v1556 = vsel %vm1494, %v1273, 0.0
  %v1557 = vadd.f32 %v1555, %v1556
  %v1558 = vsel %vm1494, %v1276, 0.0
  %v1559 = vadd.f32 %v1557, %v1558
  %v1560 = vsel %vm1494, %v1281, 0.0
  %v1561 = vadd.f32 %v1559, %v1560
  %v1562 = vsel %vm1494, %v1284, 0.0
  %v1563 = vadd.f32 %v1561, %v1562
  %v1564 = vsel %vm1494, %v1289, 0.0
  %v1565 = vadd.f32 %v1563, %v1564
  %v1566 = vsel %vm1494, %v1292, 0.0
  %v1567 = vadd.f32 %v1565, %v1566
  %v1568 = vsel %vm1494, %v1297, 0.0
  %v1569 = vadd.f32 %v1567, %v1568
  %v1570 = vsel %vm1494, %v1300, 0.0
  %v1571 = vadd.f32 %v1569, %v1570
  %v1572 = vsel %vm1494, %v1305, 0.0
  %v1573 = vadd.f32 %v1571, %v1572
  %v1574 = vsel %vm1494, %v1308, 0.0
  %v1575 = vadd.f32 %v1573, %v1574
  %v1576 = vsel %vm1494, %v1313, 0.0
  %v1577 = vadd.f32 %v1575, %v1576
  %v1578 = vsel %vm1494, %v1316, 0.0
  %v1579 = vadd.f32 %v1577, %v1578
  %v1580 = vsel %vm1494, %v1321, 0.0
  %v1581 = vadd.f32 %v1579, %v1580
  %v1582 = vsel %vm1494, %v1324, 0.0
  %v1583 = vadd.f32 %v1581, %v1582
  %v1584 = vsel %vm1494, %v1329, 0.0
  %v1585 = vadd.f32 %v1583, %v1584
  %v1586 = vsel %vm1494, %v1332, 0.0
  %v1587 = vadd.f32 %v1585, %v1586
  %v1588 = vsel %vm1494, %v1337, 0.0
  %v1589 = vadd.f32 %v1587, %v1588
  %v1590 = vsel %vm1494, %v1340, 0.0
  %v1591 = vadd.f32 %v1589, %v1590
  %v1592 = vsel %vm1494, %v1345, 0.0
  %v1593 = vadd.f32 %v1591, %v1592
  %v1594 = vsel %vm1494, %v1348, 0.0
  %v1595 = vadd.f32 %v1593, %v1594
  %v1596 = vsel %vm1494, %v1353, 0.0
  %v1597 = vadd.f32 %v1595, %v1596
  %v1598 = vsel %vm1494, %v1356, 0.0
  %v1599 = vadd.f32 %v1597, %v1598
  %v1600 = vsel %vm1494, %v1361, 0.0
  %v1601 = vadd.f32 %v1599, %v1600
  %v1602 = vsel %vm1494, %v1364, 0.0
  %v1603 = vadd.f32 %v1601, %v1602
  %v1604 = vsel %vm1494, %v1369, 0.0
  %v1605 = vadd.f32 %v1603, %v1604
  %v1606 = vsel %vm1494, %v1372, 0.0
  %v1607 = vadd.f32 %v1605, %v1606
  %v1608 = vsel %vm1494, %v1377, 0.0
  %v1609 = vadd.f32 %v1607, %v1608
  %v1610 = vsel %vm1494, %v1380, 0.0
  %v1611 = vadd.f32 %v1609, %v1610
  %v1612 = vsel %vm1494, %v1385, 0.0
  %v1613 = vadd.f32 %v1611, %v1612
  %v1614 = vsel %vm1494, %v1388, 0.0
  %v1615 = vadd.f32 %v1613, %v1614
  %v1616 = vsel %vm1494, %v1393, 0.0
  %v1617 = vadd.f32 %v1615, %v1616
  %v1618 = vsel %vm1494, %v1396, 0.0
  %v1619 = vadd.f32 %v1617, %v1618
  %v1620 = vsel %vm1494, %v1401, 0.0
  %v1621 = vadd.f32 %v1619, %v1620
  %v1622 = vsel %vm1494, %v1404, 0.0
  %v1623 = vadd.f32 %v1621, %v1622
  %v1624 = vsel %vm1494, %v1409, 0.0
  %v1625 = vadd.f32 %v1623, %v1624
  %v1626 = vsel %vm1494, %v1412, 0.0
  %v1627 = vadd.f32 %v1625, %v1626
  %v1628 = vsel %vm1494, %v1417, 0.0
  %v1629 = vadd.f32 %v1627, %v1628
  %v1630 = vsel %vm1494, %v1420, 0.0
  %v1631 = vadd.f32 %v1629, %v1630
  %v1632 = vsel %vm1494, %v1425, 0.0
  %v1633 = vadd.f32 %v1631, %v1632
  %v1634 = vsel %vm1494, %v1428, 0.0
  %v1635 = vadd.f32 %v1633, %v1634
  %v1636 = vsel %vm1494, %v1433, 0.0
  %v1637 = vadd.f32 %v1635, %v1636
  %v1638 = vsel %vm1494, %v1436, 0.0
  %v1639 = vadd.f32 %v1637, %v1638
  %v1640 = vsel %vm1494, %v1441, 0.0
  %v1641 = vadd.f32 %v1639, %v1640
  %v1642 = vsel %vm1494, %v1444, 0.0
  %v1643 = vadd.f32 %v1641, %v1642
  %v1644 = vsel %vm1494, %v1449, 0.0
  %v1645 = vadd.f32 %v1643, %v1644
  %v1646 = vsel %vm1494, %v1452, 0.0
  %v1647 = vadd.f32 %v1645, %v1646
  %v1648 = vsel %vm1494, %v1457, 0.0
  %v1649 = vadd.f32 %v1647, %v1648
  %v1650 = vsel %vm1494, %v1460, 0.0
  %v1651 = vadd.f32 %v1649, %v1650
  %v1652 = vsel %vm1494, %v1465, 0.0
  %v1653 = vadd.f32 %v1651, %v1652
  %v1654 = vsel %vm1494, %v1468, 0.0
  %v1655 = vadd.f32 %v1653, %v1654
  %v1656 = vsel %vm1494, %v1473, 0.0
  %v1657 = vadd.f32 %v1655, %v1656
  %v1658 = vsel %vm1494, %v1476, 0.0
  %v1659 = vadd.f32 %v1657, %v1658
  %v1660 = vsel %vm1494, %v1481, 0.0
  %v1661 = vadd.f32 %v1659, %v1660
  %v1662 = vsel %vm1494, %v1484, 0.0
  %v1663 = vadd.f32 %v1661, %v1662
  %v1664 = vsel %vm1494, %v1489, 0.0
  %v1665 = vadd.f32 %v1663, %v1664
  %v1666 = vrot.slane %v1665, 4
  %v1667 = vadd.f32 %v1665, %v1666
  %v1668 = vrot.slane %v1667, 2
  %v1669 = vadd.f32 %v1667, %v1668
  %v1670 = vrot.slane %v1669, 1
  %v1671 = vadd.f32 %v1669, %v1670
  %v1672 = vadd.f32 %v1552, %v1671
  %vm1673 = vcmask 516096
  %1674 = vst.msk [vmem:[%s3] sm:$0x1] %vm1673, %v1672
  %v1675 = vld [vmem:[%s4] sm:$0x1]
  %v1676 = vmul.f32 %v1265, %v1265
  %v1677 = vmul.f32 %v1268, %v1268
  %v1678 = vmul.f32 %v1273, %v1273
  %v1679 = vmul.f32 %v1276, %v1276
  %v1680 = vmul.f32 %v1281, %v1281
  %v1681 = vmul.f32 %v1284, %v1284
  %v1682 = vmul.f32 %v1289, %v1289
  %v1683 = vmul.f32 %v1292, %v1292
  %v1684 = vmul.f32 %v1297, %v1297
  %v1685 = vmul.f32 %v1300, %v1300
  %v1686 = vmul.f32 %v1305, %v1305
  %v1687 = vmul.f32 %v1308, %v1308
  %v1688 = vmul.f32 %v1313, %v1313
  %v1689 = vmul.f32 %v1316, %v1316
  %v1690 = vmul.f32 %v1321, %v1321
  %v1691 = vmul.f32 %v1324, %v1324
  %v1692 = vmul.f32 %v1329, %v1329
  %v1693 = vmul.f32 %v1332, %v1332
  %v1694 = vmul.f32 %v1337, %v1337
  %v1695 = vmul.f32 %v1340, %v1340
  %v1696 = vmul.f32 %v1345, %v1345
  %v1697 = vmul.f32 %v1348, %v1348
  %v1698 = vmul.f32 %v1353, %v1353
  %v1699 = vmul.f32 %v1356, %v1356
  %v1700 = vmul.f32 %v1361, %v1361
  %v1701 = vmul.f32 %v1364, %v1364
  %v1702 = vmul.f32 %v1369, %v1369
  %v1703 = vmul.f32 %v1372, %v1372
  %v1704 = vmul.f32 %v1377, %v1377
  %v1705 = vmul.f32 %v1380, %v1380
  %v1706 = vmul.f32 %v1385, %v1385
  %v1707 = vmul.f32 %v1388, %v1388
  %v1708 = vmul.f32 %v1393, %v1393
  %v1709 = vmul.f32 %v1396, %v1396
  %v1710 = vmul.f32 %v1401, %v1401
  %v1711 = vmul.f32 %v1404, %v1404
  %v1712 = vmul.f32 %v1409, %v1409
  %v1713 = vmul.f32 %v1412, %v1412
  %v1714 = vmul.f32 %v1417, %v1417
  %v1715 = vmul.f32 %v1420, %v1420
  %v1716 = vmul.f32 %v1425, %v1425
  %v1717 = vmul.f32 %v1428, %v1428
  %v1718 = vmul.f32 %v1433, %v1433
  %v1719 = vmul.f32 %v1436, %v1436
  %v1720 = vmul.f32 %v1441, %v1441
  %v1721 = vmul.f32 %v1444, %v1444
  %v1722 = vmul.f32 %v1449, %v1449
  %v1723 = vmul.f32 %v1452, %v1452
  %v1724 = vmul.f32 %v1457, %v1457
  %v1725 = vmul.f32 %v1460, %v1460
  %v1726 = vmul.f32 %v1465, %v1465
  %v1727 = vmul.f32 %v1468, %v1468
  %v1728 = vmul.f32 %v1473, %v1473
  %v1729 = vmul.f32 %v1476, %v1476
  %v1730 = vmul.f32 %v1481, %v1481
  %v1731 = vmul.f32 %v1484, %v1484
  %v1732 = vmul.f32 %v1489, %v1489
  %v1733 = vsel %vm1494, %v1676, 0.0
  %v1734 = vsel %vm1494, %v1677, 0.0
  %v1735 = vadd.f32 %v1733, %v1734
  %v1736 = vsel %vm1494, %v1678, 0.0
  %v1737 = vadd.f32 %v1735, %v1736
  %v1738 = vsel %vm1494, %v1679, 0.0
  %v1739 = vadd.f32 %v1737, %v1738
  %v1740 = vsel %vm1494, %v1680, 0.0
  %v1741 = vadd.f32 %v1739, %v1740
  %v1742 = vsel %vm1494, %v1681, 0.0
  %v1743 = vadd.f32 %v1741, %v1742
  %v1744 = vsel %vm1494, %v1682, 0.0
  %v1745 = vadd.f32 %v1743, %v1744
  %v1746 = vsel %vm1494, %v1683, 0.0
  %v1747 = vadd.f32 %v1745, %v1746
  %v1748 = vsel %vm1494, %v1684, 0.0
  %v1749 = vadd.f32 %v1747, %v1748
  %v1750 = vsel %vm1494, %v1685, 0.0
  %v1751 = vadd.f32 %v1749, %v1750
  %v1752 = vsel %vm1494, %v1686, 0.0
  %v1753 = vadd.f32 %v1751, %v1752
  %v1754 = vsel %vm1494, %v1687, 0.0
  %v1755 = vadd.f32 %v1753, %v1754
  %v1756 = vsel %vm1494, %v1688, 0.0
  %v1757 = vadd.f32 %v1755, %v1756
  %v1758 = vsel %vm1494, %v1689, 0.0
  %v1759 = vadd.f32 %v1757, %v1758
  %v1760 = vsel %vm1494, %v1690, 0.0
  %v1761 = vadd.f32 %v1759, %v1760
  %v1762 = vsel %vm1494, %v1691, 0.0
  %v1763 = vadd.f32 %v1761, %v1762
  %v1764 = vsel %vm1494, %v1692, 0.0
  %v1765 = vadd.f32 %v1763, %v1764
  %v1766 = vsel %vm1494, %v1693, 0.0
  %v1767 = vadd.f32 %v1765, %v1766
  %v1768 = vsel %vm1494, %v1694, 0.0
  %v1769 = vadd.f32 %v1767, %v1768
  %v1770 = vsel %vm1494, %v1695, 0.0
  %v1771 = vadd.f32 %v1769, %v1770
  %v1772 = vsel %vm1494, %v1696, 0.0
  %v1773 = vadd.f32 %v1771, %v1772
  %v1774 = vsel %vm1494, %v1697, 0.0
  %v1775 = vadd.f32 %v1773, %v1774
  %v1776 = vsel %vm1494, %v1698, 0.0
  %v1777 = vadd.f32 %v1775, %v1776
  %v1778 = vsel %vm1494, %v1699, 0.0
  %v1779 = vadd.f32 %v1777, %v1778
  %v1780 = vsel %vm1494, %v1700, 0.0
  %v1781 = vadd.f32 %v1779, %v1780
  %v1782 = vsel %vm1494, %v1701, 0.0
  %v1783 = vadd.f32 %v1781, %v1782
  %v1784 = vsel %vm1494, %v1702, 0.0
  %v1785 = vadd.f32 %v1783, %v1784
  %v1786 = vsel %vm1494, %v1703, 0.0
  %v1787 = vadd.f32 %v1785, %v1786
  %v1788 = vsel %vm1494, %v1704, 0.0
  %v1789 = vadd.f32 %v1787, %v1788
  %v1790 = vsel %vm1494, %v1705, 0.0
  %v1791 = vadd.f32 %v1789, %v1790
  %v1792 = vsel %vm1494, %v1706, 0.0
  %v1793 = vadd.f32 %v1791, %v1792
  %v1794 = vsel %vm1494, %v1707, 0.0
  %v1795 = vadd.f32 %v1793, %v1794
  %v1796 = vsel %vm1494, %v1708, 0.0
  %v1797 = vadd.f32 %v1795, %v1796
  %v1798 = vsel %vm1494, %v1709, 0.0
  %v1799 = vadd.f32 %v1797, %v1798
  %v1800 = vsel %vm1494, %v1710, 0.0
  %v1801 = vadd.f32 %v1799, %v1800
  %v1802 = vsel %vm1494, %v1711, 0.0
  %v1803 = vadd.f32 %v1801, %v1802
  %v1804 = vsel %vm1494, %v1712, 0.0
  %v1805 = vadd.f32 %v1803, %v1804
  %v1806 = vsel %vm1494, %v1713, 0.0
  %v1807 = vadd.f32 %v1805, %v1806
  %v1808 = vsel %vm1494, %v1714, 0.0
  %v1809 = vadd.f32 %v1807, %v1808
  %v1810 = vsel %vm1494, %v1715, 0.0
  %v1811 = vadd.f32 %v1809, %v1810
  %v1812 = vsel %vm1494, %v1716, 0.0
  %v1813 = vadd.f32 %v1811, %v1812
  %v1814 = vsel %vm1494, %v1717, 0.0
  %v1815 = vadd.f32 %v1813, %v1814
  %v1816 = vsel %vm1494, %v1718, 0.0
  %v1817 = vadd.f32 %v1815, %v1816
  %v1818 = vsel %vm1494, %v1719, 0.0
  %v1819 = vadd.f32 %v1817, %v1818
  %v1820 = vsel %vm1494, %v1720, 0.0
  %v1821 = vadd.f32 %v1819, %v1820
  %v1822 = vsel %vm1494, %v1721, 0.0
  %v1823 = vadd.f32 %v1821, %v1822
  %v1824 = vsel %vm1494, %v1722, 0.0
  %v1825 = vadd.f32 %v1823, %v1824
  %v1826 = vsel %vm1494, %v1723, 0.0
  %v1827 = vadd.f32 %v1825, %v1826
  %v1828 = vsel %vm1494, %v1724, 0.0
  %v1829 = vadd.f32 %v1827, %v1828
  %v1830 = vsel %vm1494, %v1725, 0.0
  %v1831 = vadd.f32 %v1829, %v1830
  %v1832 = vsel %vm1494, %v1726, 0.0
  %v1833 = vadd.f32 %v1831, %v1832
  %v1834 = vsel %vm1494, %v1727, 0.0
  %v1835 = vadd.f32 %v1833, %v1834
  %v1836 = vsel %vm1494, %v1728, 0.0
  %v1837 = vadd.f32 %v1835, %v1836
  %v1838 = vsel %vm1494, %v1729, 0.0
  %v1839 = vadd.f32 %v1837, %v1838
  %v1840 = vsel %vm1494, %v1730, 0.0
  %v1841 = vadd.f32 %v1839, %v1840
  %v1842 = vsel %vm1494, %v1731, 0.0
  %v1843 = vadd.f32 %v1841, %v1842
  %v1844 = vsel %vm1494, %v1732, 0.0
  %v1845 = vadd.f32 %v1843, %v1844
  %v1846 = vrot.slane %v1845, 4
  %v1847 = vadd.f32 %v1845, %v1846
  %v1848 = vrot.slane %v1847, 2
  %v1849 = vadd.f32 %v1847, %v1848
  %v1850 = vrot.slane %v1849, 1
  %v1851 = vadd.f32 %v1849, %v1850
  %v1852 = vadd.f32 %v1675, %v1851
  %1853 = vst.msk [vmem:[%s4] sm:$0x1] %vm1673, %v1852
  // Predicated region
  $region14: #{discriminator_forward.13} parent=0 // pred_check
    _
  $region15: #{discriminator_forward.13} parent=0 // pred_check_branch
    %1855 = sbr.rel (0) target = $region17
  $region16: #{discriminator_forward.13} parent=0 // pred_region
    _
  $region17: #{discriminator_forward.13} parent=0 // pred_fallthru
    _
  // Predicated region
  $region18: #{discriminator_forward.13} parent=0 // pred_check
    _
  $region19: #{discriminator_forward.13} parent=0 // pred_check_branch
    %1857 = sbr.rel (0) target = $region21
  $region20: #{discriminator_forward.13} parent=0 // pred_region
    _
  $region21: #{discriminator_forward.13} parent=0 // pred_fallthru
    _
  // Predicated region
  $region22: #{discriminator_forward.13} parent=0 // pred_check
    _
  $region23: #{discriminator_forward.13} parent=0 // pred_check_branch
    %1859 = sbr.rel (0) target = $region25
  $region24: #{discriminator_forward.13} parent=0 // pred_region
    _
  $region25: #{discriminator_forward.13} parent=0 // pred_fallthru
    _
  // Predicated region
  $region26: #{discriminator_forward.13} parent=0 // pred_check
    _
  $region27: #{discriminator_forward.13} parent=0 // pred_check_branch
    %1861 = sbr.rel (0) target = $region29
  $region28: #{discriminator_forward.13} parent=0 // pred_region
    _
  $region29: #{discriminator_forward.13} parent=0 // pred_fallthru
    _
  // Predicated region
  $region30: #{discriminator_forward.13} parent=0 // pred_check
    _
  $region31: #{discriminator_forward.13} parent=0 // pred_check_branch
    %1863 = sbr.rel (0) target = $region33
  $region32: #{discriminator_forward.13} parent=0 // pred_region
    _
  $region33: #{discriminator_forward.13} parent=0 // pred_fallthru
    _
  // Predicated region
  $region34: #{discriminator_forward.13} parent=0 // pred_check
    _
  $region35: #{discriminator_forward.13} parent=0 // pred_check_branch
    %1865 = sbr.rel (0) target = $region37
  $region36: #{discriminator_forward.13} parent=0 // pred_region
    _
  $region37: #{discriminator_forward.13} parent=0 // pred_fallthru
    _

// kernel: discriminator_forward.14
$region0: #{discriminator_forward.14}
  #allocation0 [shape = 'u32[]', space=smem, size = 0x4, offset = 0x4, fixed_abs, tag = 'smem constant byte address 0x4 - core index']
  #allocation1 [shape = 'u32[144,128]{1,0:T(1,128)}', space=vmem, size = 0x12000, scoped, tag = 'internal scratch']
  %s0 = inlined_call_operand.vmem [shape: f32[456,64], index: 0, kind: input, shape index: {}]
  %s1 = inlined_call_operand.vmem [shape: f32[1,64], index: 1, kind: input, shape index: {}]
  %s2 = inlined_call_operand.vmem [shape: f32[1,64], index: 2, kind: input, shape index: {}]
  %s3 = inlined_call_operand.vmem [shape: bf16[456,64], index: 3, kind: output, shape index: {}]
  %s4 = sld [smem:[#allocation0]]
  $region22: #{discriminator_forward.14} parent=0
    _
  %s6 = ssub.s32 1, %s4
  %s7 = scalar_select 0, %s6, %s4
  // Predicated region
  $region2: #{discriminator_forward.14} parent=0 // pred_check
    _
  $region3: #{discriminator_forward.14} parent=0 // pred_check_branch
    %9 = sbr.rel (0) target = $region5
  $region4: #{discriminator_forward.14} parent=0 // pred_region
    _
  $region5: #{discriminator_forward.14} parent=0 // pred_fallthru
    _
  // Predicated region
  $region6: #{discriminator_forward.14} parent=0 // pred_check
    _
  $region7: #{discriminator_forward.14} parent=0 // pred_check_branch
    %11 = sbr.rel (0) target = $region9
  $region8: #{discriminator_forward.14} parent=0 // pred_region
    _
  $region9: #{discriminator_forward.14} parent=0 // pred_fallthru
    _
  // Predicated region
  $region10: #{discriminator_forward.14} parent=0 // pred_check
    _
  $region11: #{discriminator_forward.14} parent=0 // pred_check_branch
    %13 = sbr.rel (0) target = $region13
  $region12: #{discriminator_forward.14} parent=0 // pred_region
    _
  $region13: #{discriminator_forward.14} parent=0 // pred_fallthru
    _
  %v14 = vld [vmem:[%s0] sm:$0xff]
  %v15 = vld [vmem:[%s0 + $0x8] sm:$0xff]
  %v16 = vld [vmem:[%s0 + $0x10] sm:$0xff]
  %v17 = vld [vmem:[%s0 + $0x18] sm:$0xff]
  %v18 = vld [vmem:[%s0 + $0x20] sm:$0xff]
  %v19 = vld [vmem:[%s0 + $0x28] sm:$0xff]
  %v20 = vld [vmem:[%s0 + $0x30] sm:$0xff]
  %v21 = vld [vmem:[%s0 + $0x38] sm:$0xff]
  %v22 = vld [vmem:[%s0 + $0x40] sm:$0xff]
  %v23 = vld [vmem:[%s0 + $0x48] sm:$0xff]
  %v24 = vld [vmem:[%s0 + $0x50] sm:$0xff]
  %v25 = vld [vmem:[%s0 + $0x58] sm:$0xff]
  %v26 = vld [vmem:[%s0 + $0x60] sm:$0xff]
  %v27 = vld [vmem:[%s0 + $0x68] sm:$0xff]
  %v28 = vld [vmem:[%s0 + $0x70] sm:$0xff]
  %v29 = vld [vmem:[%s0 + $0x78] sm:$0xff]
  %v30 = vld [vmem:[%s0 + $0x80] sm:$0xff]
  %v31 = vld [vmem:[%s0 + $0x88] sm:$0xff]
  %v32 = vld [vmem:[%s0 + $0x90] sm:$0xff]
  %v33 = vld [vmem:[%s0 + $0x98] sm:$0xff]
  %v34 = vld [vmem:[%s0 + $0xa0] sm:$0xff]
  %v35 = vld [vmem:[%s0 + $0xa8] sm:$0xff]
  %v36 = vld [vmem:[%s0 + $0xb0] sm:$0xff]
  %v37 = vld [vmem:[%s0 + $0xb8] sm:$0xff]
  %v38 = vld [vmem:[%s0 + $0xc0] sm:$0xff]
  %v39 = vld [vmem:[%s0 + $0xc8] sm:$0xff]
  %v40 = vld [vmem:[%s0 + $0xd0] sm:$0xff]
  %v41 = vld [vmem:[%s0 + $0xd8] sm:$0xff]
  %v42 = vld [vmem:[%s0 + $0xe0] sm:$0xff]
  %v43 = vld [vmem:[%s0 + $0xe8] sm:$0xff]
  %v44 = vld [vmem:[%s0 + $0xf0] sm:$0xff]
  %v45 = vld [vmem:[%s0 + $0xf8] sm:$0xff]
  %v46 = vld [vmem:[%s0 + $0x100] sm:$0xff]
  %v47 = vld [vmem:[%s0 + $0x108] sm:$0xff]
  %v48 = vld [vmem:[%s0 + $0x110] sm:$0xff]
  %v49 = vld [vmem:[%s0 + $0x118] sm:$0xff]
  %v50 = vld [vmem:[%s0 + $0x120] sm:$0xff]
  %v51 = vld [vmem:[%s0 + $0x128] sm:$0xff]
  %v52 = vld [vmem:[%s0 + $0x130] sm:$0xff]
  %v53 = vld [vmem:[%s0 + $0x138] sm:$0xff]
  %v54 = vld [vmem:[%s0 + $0x140] sm:$0xff]
  %v55 = vld [vmem:[%s0 + $0x148] sm:$0xff]
  %v56 = vld [vmem:[%s0 + $0x150] sm:$0xff]
  %v57 = vld [vmem:[%s0 + $0x158] sm:$0xff]
  %v58 = vld [vmem:[%s0 + $0x160] sm:$0xff]
  %v59 = vld [vmem:[%s0 + $0x168] sm:$0xff]
  %v60 = vld [vmem:[%s0 + $0x170] sm:$0xff]
  %v61 = vld [vmem:[%s0 + $0x178] sm:$0xff]
  %v62 = vld [vmem:[%s0 + $0x180] sm:$0xff]
  %v63 = vld [vmem:[%s0 + $0x188] sm:$0xff]
  %v64 = vld [vmem:[%s0 + $0x190] sm:$0xff]
  %v65 = vld [vmem:[%s0 + $0x198] sm:$0xff]
  %v66 = vld [vmem:[%s0 + $0x1a0] sm:$0xff]
  %v67 = vld [vmem:[%s0 + $0x1a8] sm:$0xff]
  %v68 = vld [vmem:[%s0 + $0x1b0] sm:$0xff]
  %v69 = vld [vmem:[%s0 + $0x1b8] sm:$0xff]
  %v70 = vld [vmem:[%s0 + $0x1c0] sm:$0xff]
  %v71 = vld [vmem:[%s1] sm:$0x1]
  %v73 = vlaneseq
  %v74 = vshrl.u32 %v73, 7
  %v75 = vsub.s32 0, %v74
  %v76 = vrot.slane %v71, %v75
  %v78 = vmul.f32 %v14, %v76
  %v79 = vmul.f32 %v15, %v76
  %v80 = vmul.f32 %v16, %v76
  %v81 = vmul.f32 %v17, %v76
  %v82 = vmul.f32 %v18, %v76
  %v83 = vmul.f32 %v19, %v76
  %v84 = vmul.f32 %v20, %v76
  %v85 = vmul.f32 %v21, %v76
  %v86 = vmul.f32 %v22, %v76
  %v87 = vmul.f32 %v23, %v76
  %v88 = vmul.f32 %v24, %v76
  %v89 = vmul.f32 %v25, %v76
  %v90 = vmul.f32 %v26, %v76
  %v91 = vmul.f32 %v27, %v76
  %v92 = vmul.f32 %v28, %v76
  %v93 = vmul.f32 %v29, %v76
  %v94 = vmul.f32 %v30, %v76
  %v95 = vmul.f32 %v31, %v76
  %v96 = vmul.f32 %v32, %v76
  %v97 = vmul.f32 %v33, %v76
  %v98 = vmul.f32 %v34, %v76
  %v99 = vmul.f32 %v35, %v76
  %v100 = vmul.f32 %v36, %v76
  %v101 = vmul.f32 %v37, %v76
  %v102 = vmul.f32 %v38, %v76
  %v103 = vmul.f32 %v39, %v76
  %v104 = vmul.f32 %v40, %v76
  %v105 = vmul.f32 %v41, %v76
  %v106 = vmul.f32 %v42, %v76
  %v107 = vmul.f32 %v43, %v76
  %v108 = vmul.f32 %v44, %v76
  %v109 = vmul.f32 %v45, %v76
  %v110 = vmul.f32 %v46, %v76
  %v111 = vmul.f32 %v47, %v76
  %v112 = vmul.f32 %v48, %v76
  %v113 = vmul.f32 %v49, %v76
  %v114 = vmul.f32 %v50, %v76
  %v115 = vmul.f32 %v51, %v76
  %v116 = vmul.f32 %v52, %v76
  %v117 = vmul.f32 %v53, %v76
  %v118 = vmul.f32 %v54, %v76
  %v119 = vmul.f32 %v55, %v76
  %v120 = vmul.f32 %v56, %v76
  %v121 = vmul.f32 %v57, %v76
  %v122 = vmul.f32 %v58, %v76
  %v123 = vmul.f32 %v59, %v76
  %v124 = vmul.f32 %v60, %v76
  %v125 = vmul.f32 %v61, %v76
  %v126 = vmul.f32 %v62, %v76
  %v127 = vmul.f32 %v63, %v76
  %v128 = vmul.f32 %v64, %v76
  %v129 = vmul.f32 %v65, %v76
  %v130 = vmul.f32 %v66, %v76
  %v131 = vmul.f32 %v67, %v76
  %v132 = vmul.f32 %v68, %v76
  %v133 = vmul.f32 %v69, %v76
  %v134 = vmul.f32 %v70, %v76
  %v135 = vld [vmem:[%s2] sm:$0x1]
  %v137 = vlaneseq
  %v138 = vshrl.u32 %v137, 7
  %v139 = vsub.s32 0, %v138
  %v140 = vrot.slane %v135, %v139
  %v142 = vadd.f32 %v78, %v140
  %v143 = vadd.f32 %v79, %v140
  %v144 = vadd.f32 %v80, %v140
  %v145 = vadd.f32 %v81, %v140
  %v146 = vadd.f32 %v82, %v140
  %v147 = vadd.f32 %v83, %v140
  %v148 = vadd.f32 %v84, %v140
  %v149 = vadd.f32 %v85, %v140
  %v150 = vadd.f32 %v86, %v140
  %v151 = vadd.f32 %v87, %v140
  %v152 = vadd.f32 %v88, %v140
  %v153 = vadd.f32 %v89, %v140
  %v154 = vadd.f32 %v90, %v140
  %v155 = vadd.f32 %v91, %v140
  %v156 = vadd.f32 %v92, %v140
  %v157 = vadd.f32 %v93, %v140
  %v158 = vadd.f32 %v94, %v140
  %v159 = vadd.f32 %v95, %v140
  %v160 = vadd.f32 %v96, %v140
  %v161 = vadd.f32 %v97, %v140
  %v162 = vadd.f32 %v98, %v140
  %v163 = vadd.f32 %v99, %v140
  %v164 = vadd.f32 %v100, %v140
  %v165 = vadd.f32 %v101, %v140
  %v166 = vadd.f32 %v102, %v140
  %v167 = vadd.f32 %v103, %v140
  %v168 = vadd.f32 %v104, %v140
  %v169 = vadd.f32 %v105, %v140
  %v170 = vadd.f32 %v106, %v140
  %v171 = vadd.f32 %v107, %v140
  %v172 = vadd.f32 %v108, %v140
  %v173 = vadd.f32 %v109, %v140
  %v174 = vadd.f32 %v110, %v140
  %v175 = vadd.f32 %v111, %v140
  %v176 = vadd.f32 %v112, %v140
  %v177 = vadd.f32 %v113, %v140
  %v178 = vadd.f32 %v114, %v140
  %v179 = vadd.f32 %v115, %v140
  %v180 = vadd.f32 %v116, %v140
  %v181 = vadd.f32 %v117, %v140
  %v182 = vadd.f32 %v118, %v140
  %v183 = vadd.f32 %v119, %v140
  %v184 = vadd.f32 %v120, %v140
  %v185 = vadd.f32 %v121, %v140
  %v186 = vadd.f32 %v122, %v140
  %v187 = vadd.f32 %v123, %v140
  %v188 = vadd.f32 %v124, %v140
  %v189 = vadd.f32 %v125, %v140
  %v190 = vadd.f32 %v126, %v140
  %v191 = vadd.f32 %v127, %v140
  %v192 = vadd.f32 %v128, %v140
  %v193 = vadd.f32 %v129, %v140
  %v194 = vadd.f32 %v130, %v140
  %v195 = vadd.f32 %v131, %v140
  %v196 = vadd.f32 %v132, %v140
  %v197 = vadd.f32 %v133, %v140
  %v198 = vadd.f32 %v134, %v140
  %vm199 = vcmp.ge.f32.partialorder %v142, 0.0
  %vm200 = vcmp.ge.f32.partialorder %v143, 0.0
  %vm201 = vcmp.ge.f32.partialorder %v144, 0.0
  %vm202 = vcmp.ge.f32.partialorder %v145, 0.0
  %vm203 = vcmp.ge.f32.partialorder %v146, 0.0
  %vm204 = vcmp.ge.f32.partialorder %v147, 0.0
  %vm205 = vcmp.ge.f32.partialorder %v148, 0.0
  %vm206 = vcmp.ge.f32.partialorder %v149, 0.0
  %vm207 = vcmp.ge.f32.partialorder %v150, 0.0
  %vm208 = vcmp.ge.f32.partialorder %v151, 0.0
  %vm209 = vcmp.ge.f32.partialorder %v152, 0.0
  %vm210 = vcmp.ge.f32.partialorder %v153, 0.0
  %vm211 = vcmp.ge.f32.partialorder %v154, 0.0
  %vm212 = vcmp.ge.f32.partialorder %v155, 0.0
  %vm213 = vcmp.ge.f32.partialorder %v156, 0.0
  %vm214 = vcmp.ge.f32.partialorder %v157, 0.0
  %vm215 = vcmp.ge.f32.partialorder %v158, 0.0
  %vm216 = vcmp.ge.f32.partialorder %v159, 0.0
  %vm217 = vcmp.ge.f32.partialorder %v160, 0.0
  %vm218 = vcmp.ge.f32.partialorder %v161, 0.0
  %vm219 = vcmp.ge.f32.partialorder %v162, 0.0
  %vm220 = vcmp.ge.f32.partialorder %v163, 0.0
  %vm221 = vcmp.ge.f32.partialorder %v164, 0.0
  %vm222 = vcmp.ge.f32.partialorder %v165, 0.0
  %vm223 = vcmp.ge.f32.partialorder %v166, 0.0
  %vm224 = vcmp.ge.f32.partialorder %v167, 0.0
  %vm225 = vcmp.ge.f32.partialorder %v168, 0.0
  %vm226 = vcmp.ge.f32.partialorder %v169, 0.0
  %vm227 = vcmp.ge.f32.partialorder %v170, 0.0
  %vm228 = vcmp.ge.f32.partialorder %v171, 0.0
  %vm229 = vcmp.ge.f32.partialorder %v172, 0.0
  %vm230 = vcmp.ge.f32.partialorder %v173, 0.0
  %vm231 = vcmp.ge.f32.partialorder %v174, 0.0
  %vm232 = vcmp.ge.f32.partialorder %v175, 0.0
  %vm233 = vcmp.ge.f32.partialorder %v176, 0.0
  %vm234 = vcmp.ge.f32.partialorder %v177, 0.0
  %vm235 = vcmp.ge.f32.partialorder %v178, 0.0
  %vm236 = vcmp.ge.f32.partialorder %v179, 0.0
  %vm237 = vcmp.ge.f32.partialorder %v180, 0.0
  %vm238 = vcmp.ge.f32.partialorder %v181, 0.0
  %vm239 = vcmp.ge.f32.partialorder %v182, 0.0
  %vm240 = vcmp.ge.f32.partialorder %v183, 0.0
  %vm241 = vcmp.ge.f32.partialorder %v184, 0.0
  %vm242 = vcmp.ge.f32.partialorder %v185, 0.0
  %vm243 = vcmp.ge.f32.partialorder %v186, 0.0
  %vm244 = vcmp.ge.f32.partialorder %v187, 0.0
  %vm245 = vcmp.ge.f32.partialorder %v188, 0.0
  %vm246 = vcmp.ge.f32.partialorder %v189, 0.0
  %vm247 = vcmp.ge.f32.partialorder %v190, 0.0
  %vm248 = vcmp.ge.f32.partialorder %v191, 0.0
  %vm249 = vcmp.ge.f32.partialorder %v192, 0.0
  %vm250 = vcmp.ge.f32.partialorder %v193, 0.0
  %vm251 = vcmp.ge.f32.partialorder %v194, 0.0
  %vm252 = vcmp.ge.f32.partialorder %v195, 0.0
  %vm253 = vcmp.ge.f32.partialorder %v196, 0.0
  %vm254 = vcmp.ge.f32.partialorder %v197, 0.0
  %vm255 = vcmp.ge.f32.partialorder %v198, 0.0
  %v256 = vmul.f32 %v142, 0.2
  %v257 = vmul.f32 %v143, 0.2
  %v258 = vmul.f32 %v144, 0.2
  %v259 = vmul.f32 %v145, 0.2
  %v260 = vmul.f32 %v146, 0.2
  %v261 = vmul.f32 %v147, 0.2
  %v262 = vmul.f32 %v148, 0.2
  %v263 = vmul.f32 %v149, 0.2
  %v264 = vmul.f32 %v150, 0.2
  %v265 = vmul.f32 %v151, 0.2
  %v266 = vmul.f32 %v152, 0.2
  %v267 = vmul.f32 %v153, 0.2
  %v268 = vmul.f32 %v154, 0.2
  %v269 = vmul.f32 %v155, 0.2
  %v270 = vmul.f32 %v156, 0.2
  %v271 = vmul.f32 %v157, 0.2
  %v272 = vmul.f32 %v158, 0.2
  %v273 = vmul.f32 %v159, 0.2
  %v274 = vmul.f32 %v160, 0.2
  %v275 = vmul.f32 %v161, 0.2
  %v276 = vmul.f32 %v162, 0.2
  %v277 = vmul.f32 %v163, 0.2
  %v278 = vmul.f32 %v164, 0.2
  %v279 = vmul.f32 %v165, 0.2
  %v280 = vmul.f32 %v166, 0.2
  %v281 = vmul.f32 %v167, 0.2
  %v282 = vmul.f32 %v168, 0.2
  %v283 = vmul.f32 %v169, 0.2
  %v284 = vmul.f32 %v170, 0.2
  %v285 = vmul.f32 %v171, 0.2
  %v286 = vmul.f32 %v172, 0.2
  %v287 = vmul.f32 %v173, 0.2
  %v288 = vmul.f32 %v174, 0.2
  %v289 = vmul.f32 %v175, 0.2
  %v290 = vmul.f32 %v176, 0.2
  %v291 = vmul.f32 %v177, 0.2
  %v292 = vmul.f32 %v178, 0.2
  %v293 = vmul.f32 %v179, 0.2
  %v294 = vmul.f32 %v180, 0.2
  %v295 = vmul.f32 %v181, 0.2
  %v296 = vmul.f32 %v182, 0.2
  %v297 = vmul.f32 %v183, 0.2
  %v298 = vmul.f32 %v184, 0.2
  %v299 = vmul.f32 %v185, 0.2
  %v300 = vmul.f32 %v186, 0.2
  %v301 = vmul.f32 %v187, 0.2
  %v302 = vmul.f32 %v188, 0.2
  %v303 = vmul.f32 %v189, 0.2
  %v304 = vmul.f32 %v190, 0.2
  %v305 = vmul.f32 %v191, 0.2
  %v306 = vmul.f32 %v192, 0.2
  %v307 = vmul.f32 %v193, 0.2
  %v308 = vmul.f32 %v194, 0.2
  %v309 = vmul.f32 %v195, 0.2
  %v310 = vmul.f32 %v196, 0.2
  %v311 = vmul.f32 %v197, 0.2
  %v312 = vmul.f32 %v198, 0.2
  %v313 = vsel %vm199, %v142, %v256
  %v314 = vsel %vm200, %v143, %v257
  %v315 = vsel %vm201, %v144, %v258
  %v316 = vsel %vm202, %v145, %v259
  %v317 = vsel %vm203, %v146, %v260
  %v318 = vsel %vm204, %v147, %v261
  %v319 = vsel %vm205, %v148, %v262
  %v320 = vsel %vm206, %v149, %v263
  %v321 = vsel %vm207, %v150, %v264
  %v322 = vsel %vm208, %v151, %v265
  %v323 = vsel %vm209, %v152, %v266
  %v324 = vsel %vm210, %v153, %v267
  %v325 = vsel %vm211, %v154, %v268
  %v326 = vsel %vm212, %v155, %v269
  %v327 = vsel %vm213, %v156, %v270
  %v328 = vsel %vm214, %v157, %v271
  %v329 = vsel %vm215, %v158, %v272
  %v330 = vsel %vm216, %v159, %v273
  %v331 = vsel %vm217, %v160, %v274
  %v332 = vsel %vm218, %v161, %v275
  %v333 = vsel %vm219, %v162, %v276
  %v334 = vsel %vm220, %v163, %v277
  %v335 = vsel %vm221, %v164, %v278
  %v336 = vsel %vm222, %v165, %v279
  %v337 = vsel %vm223, %v166, %v280
  %v338 = vsel %vm224, %v167, %v281
  %v339 = vsel %vm225, %v168, %v282
  %v340 = vsel %vm226, %v169, %v283
  %v341 = vsel %vm227, %v170, %v284
  %v342 = vsel %vm228, %v171, %v285
  %v343 = vsel %vm229, %v172, %v286
  %v344 = vsel %vm230, %v173, %v287
  %v345 = vsel %vm231, %v174, %v288
  %v346 = vsel %vm232, %v175, %v289
  %v347 = vsel %vm233, %v176, %v290
  %v348 = vsel %vm234, %v177, %v291
  %v349 = vsel %vm235, %v178, %v292
  %v350 = vsel %vm236, %v179, %v293
  %v351 = vsel %vm237, %v180, %v294
  %v352 = vsel %vm238, %v181, %v295
  %v353 = vsel %vm239, %v182, %v296
  %v354 = vsel %vm240, %v183, %v297
  %v355 = vsel %vm241, %v184, %v298
  %v356 = vsel %vm242, %v185, %v299
  %v357 = vsel %vm243, %v186, %v300
  %v358 = vsel %vm244, %v187, %v301
  %v359 = vsel %vm245, %v188, %v302
  %v360 = vsel %vm246, %v189, %v303
  %v361 = vsel %vm247, %v190, %v304
  %v362 = vsel %vm248, %v191, %v305
  %v363 = vsel %vm249, %v192, %v306
  %v364 = vsel %vm250, %v193, %v307
  %v365 = vsel %vm251, %v194, %v308
  %v366 = vsel %vm252, %v195, %v309
  %v367 = vsel %vm253, %v196, %v310
  %v368 = vsel %vm254, %v197, %v311
  %v369 = vsel %vm255, %v198, %v312
  %v370 = vpack.c.bf16 %v314, %v313
  %v371 = vpack.c.bf16 %v316, %v315
  %v372 = vpack.c.bf16 %v318, %v317
  %v373 = vpack.c.bf16 %v320, %v319
  %v374 = vpack.c.bf16 %v322, %v321
  %v375 = vpack.c.bf16 %v324, %v323
  %v376 = vpack.c.bf16 %v326, %v325
  %v377 = vpack.c.bf16 %v328, %v327
  %v378 = vpack.c.bf16 %v330, %v329
  %v379 = vpack.c.bf16 %v332, %v331
  %v380 = vpack.c.bf16 %v334, %v333
  %v381 = vpack.c.bf16 %v336, %v335
  %v382 = vpack.c.bf16 %v338, %v337
  %v383 = vpack.c.bf16 %v340, %v339
  %v384 = vpack.c.bf16 %v342, %v341
  %v385 = vpack.c.bf16 %v344, %v343
  %v386 = vpack.c.bf16 %v346, %v345
  %v387 = vpack.c.bf16 %v348, %v347
  %v388 = vpack.c.bf16 %v350, %v349
  %v389 = vpack.c.bf16 %v352, %v351
  %v390 = vpack.c.bf16 %v354, %v353
  %v391 = vpack.c.bf16 %v356, %v355
  %v392 = vpack.c.bf16 %v358, %v357
  %v393 = vpack.c.bf16 %v360, %v359
  %v394 = vpack.c.bf16 %v362, %v361
  %v395 = vpack.c.bf16 %v364, %v363
  %v396 = vpack.c.bf16 %v366, %v365
  %v397 = vpack.c.bf16 %v368, %v367
  %v398 = vpack.c.bf16 %v369, %v369
  %v428 = vunpack.c.l.b16 %v370
  %v429 = vunpack.c.h.b16 %v370
  %v430 = vunpack.c.l.b16 %v371
  %v431 = vunpack.c.h.b16 %v371
  %v432 = vunpack.c.l.b16 %v372
  %v433 = vunpack.c.h.b16 %v372
  %v434 = vunpack.c.l.b16 %v373
  %v435 = vunpack.c.h.b16 %v373
  %v436 = vunpack.c.l.b16 %v374
  %v437 = vunpack.c.h.b16 %v374
  %v438 = vunpack.c.l.b16 %v375
  %v439 = vunpack.c.h.b16 %v375
  %v440 = vunpack.c.l.b16 %v376
  %v441 = vunpack.c.h.b16 %v376
  %v442 = vunpack.c.l.b16 %v377
  %v443 = vunpack.c.h.b16 %v377
  %v444 = vunpack.c.l.b16 %v378
  %v445 = vunpack.c.h.b16 %v378
  %v446 = vunpack.c.l.b16 %v379
  %v447 = vunpack.c.h.b16 %v379
  %v448 = vunpack.c.l.b16 %v380
  %v449 = vunpack.c.h.b16 %v380
  %v450 = vunpack.c.l.b16 %v381
  %v451 = vunpack.c.h.b16 %v381
  %v452 = vunpack.c.l.b16 %v382
  %v453 = vunpack.c.h.b16 %v382
  %v454 = vunpack.c.l.b16 %v383
  %v455 = vunpack.c.h.b16 %v383
  %v456 = vunpack.c.l.b16 %v384
  %v457 = vunpack.c.h.b16 %v384
  %v458 = vunpack.c.l.b16 %v385
  %v459 = vunpack.c.h.b16 %v385
  %v460 = vunpack.c.l.b16 %v386
  %v461 = vunpack.c.h.b16 %v386
  %v462 = vunpack.c.l.b16 %v387
  %v463 = vunpack.c.h.b16 %v387
  %v464 = vunpack.c.l.b16 %v388
  %v465 = vunpack.c.h.b16 %v388
  %v466 = vunpack.c.l.b16 %v389
  %v467 = vunpack.c.h.b16 %v389
  %v468 = vunpack.c.l.b16 %v390
  %v469 = vunpack.c.h.b16 %v390
  %v470 = vunpack.c.l.b16 %v391
  %v471 = vunpack.c.h.b16 %v391
  %v472 = vunpack.c.l.b16 %v392
  %v473 = vunpack.c.h.b16 %v392
  %v474 = vunpack.c.l.b16 %v393
  %v475 = vunpack.c.h.b16 %v393
  %v476 = vunpack.c.l.b16 %v394
  %v477 = vunpack.c.h.b16 %v394
  %v478 = vunpack.c.l.b16 %v395
  %v479 = vunpack.c.h.b16 %v395
  %v480 = vunpack.c.l.b16 %v396
  %v481 = vunpack.c.h.b16 %v396
  %v482 = vunpack.c.l.b16 %v397
  %v483 = vunpack.c.h.b16 %v397
  %v484 = vunpack.c.l.b16 %v398
  %v485 = vpack.c.b16 %v428, %v428
  %v486 = vpack.c.b16 %v429, %v429
  %v487 = vpack.c.b16 %v430, %v430
  %v488 = vpack.c.b16 %v431, %v431
  %v489 = vpack.c.b16 %v432, %v432
  %v490 = vpack.c.b16 %v433, %v433
  %v491 = vpack.c.b16 %v434, %v434
  %v492 = vpack.c.b16 %v435, %v435
  %v493 = vpack.c.b16 %v436, %v436
  %v494 = vpack.c.b16 %v437, %v437
  %v495 = vpack.c.b16 %v438, %v438
  %v496 = vpack.c.b16 %v439, %v439
  %v497 = vpack.c.b16 %v440, %v440
  %v498 = vpack.c.b16 %v441, %v441
  %v499 = vpack.c.b16 %v442, %v442
  %v500 = vpack.c.b16 %v443, %v443
  %v501 = vpack.c.b16 %v444, %v444
  %v502 = vpack.c.b16 %v445, %v445
  %v503 = vpack.c.b16 %v446, %v446
  %v504 = vpack.c.b16 %v447, %v447
  %v505 = vpack.c.b16 %v448, %v448
  %v506 = vpack.c.b16 %v449, %v449
  %v507 = vpack.c.b16 %v450, %v450
  %v508 = vpack.c.b16 %v451, %v451
  %v509 = vpack.c.b16 %v452, %v452
  %v510 = vpack.c.b16 %v453, %v453
  %v511 = vpack.c.b16 %v454, %v454
  %v512 = vpack.c.b16 %v455, %v455
  %v513 = vpack.c.b16 %v456, %v456
  %v514 = vpack.c.b16 %v457, %v457
  %v515 = vpack.c.b16 %v458, %v458
  %v516 = vpack.c.b16 %v459, %v459
  %v517 = vpack.c.b16 %v460, %v460
  %v518 = vpack.c.b16 %v461, %v461
  %v519 = vpack.c.b16 %v462, %v462
  %v520 = vpack.c.b16 %v463, %v463
  %v521 = vpack.c.b16 %v464, %v464
  %v522 = vpack.c.b16 %v465, %v465
  %v523 = vpack.c.b16 %v466, %v466
  %v524 = vpack.c.b16 %v467, %v467
  %v525 = vpack.c.b16 %v468, %v468
  %v526 = vpack.c.b16 %v469, %v469
  %v527 = vpack.c.b16 %v470, %v470
  %v528 = vpack.c.b16 %v471, %v471
  %v529 = vpack.c.b16 %v472, %v472
  %v530 = vpack.c.b16 %v473, %v473
  %v531 = vpack.c.b16 %v474, %v474
  %v532 = vpack.c.b16 %v475, %v475
  %v533 = vpack.c.b16 %v476, %v476
  %v534 = vpack.c.b16 %v477, %v477
  %v535 = vpack.c.b16 %v478, %v478
  %v536 = vpack.c.b16 %v479, %v479
  %v537 = vpack.c.b16 %v480, %v480
  %v538 = vpack.c.b16 %v481, %v481
  %v539 = vpack.c.b16 %v482, %v482
  %v540 = vpack.c.b16 %v483, %v483
  %v541 = vpack.c.b16 %v484, %v484
  %vm599 = vcmask 519168
  %600 = vst.msk [vmem:[%s3] sm:$0xf] %vm599, %v485
  %601 = vst.msk [vmem:[%s3 + $0x4] sm:$0xf] %vm599, %v486
  %602 = vst.msk [vmem:[%s3 + $0x8] sm:$0xf] %vm599, %v487
  %603 = vst.msk [vmem:[%s3 + $0xc] sm:$0xf] %vm599, %v488
  %604 = vst.msk [vmem:[%s3 + $0x10] sm:$0xf] %vm599, %v489
  %605 = vst.msk [vmem:[%s3 + $0x14] sm:$0xf] %vm599, %v490
  %606 = vst.msk [vmem:[%s3 + $0x18] sm:$0xf] %vm599, %v491
  %607 = vst.msk [vmem:[%s3 + $0x1c] sm:$0xf] %vm599, %v492
  %608 = vst.msk [vmem:[%s3 + $0x20] sm:$0xf] %vm599, %v493
  %609 = vst.msk [vmem:[%s3 + $0x24] sm:$0xf] %vm599, %v494
  %610 = vst.msk [vmem:[%s3 + $0x28] sm:$0xf] %vm599, %v495
  %611 = vst.msk [vmem:[%s3 + $0x2c] sm:$0xf] %vm599, %v496
  %612 = vst.msk [vmem:[%s3 + $0x30] sm:$0xf] %vm599, %v497
  %613 = vst.msk [vmem:[%s3 + $0x34] sm:$0xf] %vm599, %v498
  %614 = vst.msk [vmem:[%s3 + $0x38] sm:$0xf] %vm599, %v499
  %615 = vst.msk [vmem:[%s3 + $0x3c] sm:$0xf] %vm599, %v500
  %616 = vst.msk [vmem:[%s3 + $0x40] sm:$0xf] %vm599, %v501
  %617 = vst.msk [vmem:[%s3 + $0x44] sm:$0xf] %vm599, %v502
  %618 = vst.msk [vmem:[%s3 + $0x48] sm:$0xf] %vm599, %v503
  %619 = vst.msk [vmem:[%s3 + $0x4c] sm:$0xf] %vm599, %v504
  %620 = vst.msk [vmem:[%s3 + $0x50] sm:$0xf] %vm599, %v505
  %621 = vst.msk [vmem:[%s3 + $0x54] sm:$0xf] %vm599, %v506
  %622 = vst.msk [vmem:[%s3 + $0x58] sm:$0xf] %vm599, %v507
  %623 = vst.msk [vmem:[%s3 + $0x5c] sm:$0xf] %vm599, %v508
  %624 = vst.msk [vmem:[%s3 + $0x60] sm:$0xf] %vm599, %v509
  %625 = vst.msk [vmem:[%s3 + $0x64] sm:$0xf] %vm599, %v510
  %626 = vst.msk [vmem:[%s3 + $0x68] sm:$0xf] %vm599, %v511
  %627 = vst.msk [vmem:[%s3 + $0x6c] sm:$0xf] %vm599, %v512
  %628 = vst.msk [vmem:[%s3 + $0x70] sm:$0xf] %vm599, %v513
  %629 = vst.msk [vmem:[%s3 + $0x74] sm:$0xf] %vm599, %v514
  %630 = vst.msk [vmem:[%s3 + $0x78] sm:$0xf] %vm599, %v515
  %631 = vst.msk [vmem:[%s3 + $0x7c] sm:$0xf] %vm599, %v516
  %632 = vst.msk [vmem:[%s3 + $0x80] sm:$0xf] %vm599, %v517
  %633 = vst.msk [vmem:[%s3 + $0x84] sm:$0xf] %vm599, %v518
  %634 = vst.msk [vmem:[%s3 + $0x88] sm:$0xf] %vm599, %v519
  %635 = vst.msk [vmem:[%s3 + $0x8c] sm:$0xf] %vm599, %v520
  %636 = vst.msk [vmem:[%s3 + $0x90] sm:$0xf] %vm599, %v521
  %637 = vst.msk [vmem:[%s3 + $0x94] sm:$0xf] %vm599, %v522
  %638 = vst.msk [vmem:[%s3 + $0x98] sm:$0xf] %vm599, %v523
  %639 = vst.msk [vmem:[%s3 + $0x9c] sm:$0xf] %vm599, %v524
  %640 = vst.msk [vmem:[%s3 + $0xa0] sm:$0xf] %vm599, %v525
  %641 = vst.msk [vmem:[%s3 + $0xa4] sm:$0xf] %vm599, %v526
  %642 = vst.msk [vmem:[%s3 + $0xa8] sm:$0xf] %vm599, %v527
  %643 = vst.msk [vmem:[%s3 + $0xac] sm:$0xf] %vm599, %v528
  %644 = vst.msk [vmem:[%s3 + $0xb0] sm:$0xf] %vm599, %v529
  %645 = vst.msk [vmem:[%s3 + $0xb4] sm:$0xf] %vm599, %v530
  %646 = vst.msk [vmem:[%s3 + $0xb8] sm:$0xf] %vm599, %v531
  %647 = vst.msk [vmem:[%s3 + $0xbc] sm:$0xf] %vm599, %v532
  %648 = vst.msk [vmem:[%s3 + $0xc0] sm:$0xf] %vm599, %v533
  %649 = vst.msk [vmem:[%s3 + $0xc4] sm:$0xf] %vm599, %v534
  %650 = vst.msk [vmem:[%s3 + $0xc8] sm:$0xf] %vm599, %v535
  %651 = vst.msk [vmem:[%s3 + $0xcc] sm:$0xf] %vm599, %v536
  %652 = vst.msk [vmem:[%s3 + $0xd0] sm:$0xf] %vm599, %v537
  %653 = vst.msk [vmem:[%s3 + $0xd4] sm:$0xf] %vm599, %v538
  %654 = vst.msk [vmem:[%s3 + $0xd8] sm:$0xf] %vm599, %v539
  %655 = vst.msk [vmem:[%s3 + $0xdc] sm:$0xf] %vm599, %v540
  %656 = vst.msk [vmem:[%s3 + $0xe0] sm:$0xf] %vm599, %v541
  // Predicated region
  $region14: #{discriminator_forward.14} parent=0 // pred_check
    _
  $region15: #{discriminator_forward.14} parent=0 // pred_check_branch
    %658 = sbr.rel (0) target = $region17
  $region16: #{discriminator_forward.14} parent=0 // pred_region
    _
  $region17: #{discriminator_forward.14} parent=0 // pred_fallthru
    _
  // Predicated region
  $region18: #{discriminator_forward.14} parent=0 // pred_check
    _
  $region19: #{discriminator_forward.14} parent=0 // pred_check_branch
    %660 = sbr.rel (0) target = $region21
  $region20: #{discriminator_forward.14} parent=0 // pred_region
    _
  $region21: #{discriminator_forward.14} parent=0 // pred_fallthru
    _

// kernel: discriminator_forward.15
$region0: #{discriminator_forward.15}
  #allocation0 [shape = 'u32[]', space=smem, size = 0x4, offset = 0x4, fixed_abs, tag = 'smem constant byte address 0x4 - core index']
  #allocation1 [shape = 'u32[144,128]{1,0:T(1,128)}', space=vmem, size = 0x12000, scoped, tag = 'internal scratch']
  %s0 = inlined_call_operand.vmem [shape: bf16[392,1024], index: 0, kind: input, shape index: {}]
  %s1 = inlined_call_operand.vmem [shape: bf16[1024,128], index: 1, kind: input, shape index: {}]
  %s2 = inlined_call_operand.vmem [shape: f32[1,128], index: 2, kind: input, shape index: {}]
  %s3 = inlined_call_operand.vmem [shape: f32[392,128], index: 3, kind: output, shape index: {}]
  %s4 = sld [smem:[#allocation0]]
  $region22: #{discriminator_forward.15} parent=0
    _
  %s6 = ssub.s32 1, %s4
  %s7 = scalar_select 0, %s6, %s4
  // Predicated region
  $region2: #{discriminator_forward.15} parent=0 // pred_check
    _
  $region3: #{discriminator_forward.15} parent=0 // pred_check_branch
    %9 = sbr.rel (0) target = $region5
  $region4: #{discriminator_forward.15} parent=0 // pred_region
    _
  $region5: #{discriminator_forward.15} parent=0 // pred_fallthru
    _
  // Predicated region
  $region6: #{discriminator_forward.15} parent=0 // pred_check
    _
  $region7: #{discriminator_forward.15} parent=0 // pred_check_branch
    %11 = sbr.rel (0) target = $region9
  $region8: #{discriminator_forward.15} parent=0 // pred_region
    _
  $region9: #{discriminator_forward.15} parent=0 // pred_fallthru
    _
  // Predicated region
  $region10: #{discriminator_forward.15} parent=0 // pred_check
    _
  $region11: #{discriminator_forward.15} parent=0 // pred_check_branch
    %13 = sbr.rel (0) target = $region13
  $region12: #{discriminator_forward.15} parent=0 // pred_region
    _
  $region13: #{discriminator_forward.15} parent=0 // pred_fallthru
    _
  %v15 = vld [vmem:[%s0] sm:$0xff]
  %v16 = vld [vmem:[%s0 + $0x8] sm:$0xff]
  %v17 = vld [vmem:[%s0 + $0x10] sm:$0xff]
  %v18 = vld [vmem:[%s0 + $0x18] sm:$0xff]
  %v19 = vld [vmem:[%s0 + $0x20] sm:$0xff]
  %v20 = vld [vmem:[%s0 + $0x28] sm:$0xff]
  %v21 = vld [vmem:[%s0 + $0x30] sm:$0xff]
  %v22 = vld [vmem:[%s0 + $0x38] sm:$0xff]
  %v23 = vld [vmem:[%s0 + $0x40] sm:$0xff]
  %v24 = vld [vmem:[%s0 + $0x48] sm:$0xff]
  %v25 = vld [vmem:[%s0 + $0x50] sm:$0xff]
  %v26 = vld [vmem:[%s0 + $0x58] sm:$0xff]
  %v27 = vld [vmem:[%s0 + $0x60] sm:$0xff]
  %v28 = vld [vmem:[%s0 + $0x68] sm:$0xff]
  %v29 = vld [vmem:[%s0 + $0x70] sm:$0xff]
  %v30 = vld [vmem:[%s0 + $0x78] sm:$0xff]
  %v31 = vld [vmem:[%s0 + $0x80] sm:$0xff]
  %v32 = vld [vmem:[%s0 + $0x88] sm:$0xff]
  %v33 = vld [vmem:[%s0 + $0x90] sm:$0xff]
  %v34 = vld [vmem:[%s0 + $0x98] sm:$0xff]
  %v35 = vld [vmem:[%s0 + $0xa0] sm:$0xff]
  %v36 = vld [vmem:[%s0 + $0xa8] sm:$0xff]
  %v37 = vld [vmem:[%s0 + $0xb0] sm:$0xff]
  %v38 = vld [vmem:[%s0 + $0xb8] sm:$0xff]
  %v39 = vld [vmem:[%s0 + $0xc0] sm:$0xff]
  %v40 = vld [vmem:[%s0 + $0xc8] sm:$0xff]
  %v41 = vld [vmem:[%s0 + $0xd0] sm:$0xff]
  %v42 = vld [vmem:[%s0 + $0xd8] sm:$0xff]
  %v43 = vld [vmem:[%s0 + $0xe0] sm:$0xff]
  %v44 = vld [vmem:[%s0 + $0xe8] sm:$0xff]
  %v45 = vld [vmem:[%s0 + $0xf0] sm:$0xff]
  %v46 = vld [vmem:[%s0 + $0xf8] sm:$0xff]
  %v47 = vld [vmem:[%s0 + $0x100] sm:$0xff]
  %v48 = vld [vmem:[%s0 + $0x108] sm:$0xff]
  %v49 = vld [vmem:[%s0 + $0x110] sm:$0xff]
  %v50 = vld [vmem:[%s0 + $0x118] sm:$0xff]
  %v51 = vld [vmem:[%s0 + $0x120] sm:$0xff]
  %v52 = vld [vmem:[%s0 + $0x128] sm:$0xff]
  %v53 = vld [vmem:[%s0 + $0x130] sm:$0xff]
  %v54 = vld [vmem:[%s0 + $0x138] sm:$0xff]
  %v55 = vld [vmem:[%s0 + $0x140] sm:$0xff]
  %v56 = vld [vmem:[%s0 + $0x148] sm:$0xff]
  %v57 = vld [vmem:[%s0 + $0x150] sm:$0xff]
  %v58 = vld [vmem:[%s0 + $0x158] sm:$0xff]
  %v59 = vld [vmem:[%s0 + $0x160] sm:$0xff]
  %v60 = vld [vmem:[%s0 + $0x168] sm:$0xff]
  %v61 = vld [vmem:[%s0 + $0x170] sm:$0xff]
  %v62 = vld [vmem:[%s0 + $0x178] sm:$0xff]
  %v63 = vld [vmem:[%s0 + $0x180] sm:$0xff]
  %v64 = vld [vmem:[%s0 + $0x188] sm:$0xff]
  %v65 = vld [vmem:[%s0 + $0x190] sm:$0xff]
  %v66 = vld [vmem:[%s0 + $0x198] sm:$0xff]
  %v67 = vld [vmem:[%s0 + $0x1a0] sm:$0xff]
  %v68 = vld [vmem:[%s0 + $0x1a8] sm:$0xff]
  %v69 = vld [vmem:[%s0 + $0x1b0] sm:$0xff]
  %v70 = vld [vmem:[%s0 + $0x1b8] sm:$0xff]
  %v71 = vld [vmem:[%s0 + $0x1c0] sm:$0xff]
  %v72 = vld [vmem:[%s0 + $0x1c8] sm:$0xff]
  %v73 = vld [vmem:[%s0 + $0x1d0] sm:$0xff]
  %v74 = vld [vmem:[%s0 + $0x1d8] sm:$0xff]
  %v75 = vld [vmem:[%s0 + $0x1e0] sm:$0xff]
  %v76 = vld [vmem:[%s0 + $0x1e8] sm:$0xff]
  %v77 = vld [vmem:[%s0 + $0x1f0] sm:$0xff]
  %v78 = vld [vmem:[%s0 + $0x1f8] sm:$0xff]
  %v79 = vld [vmem:[%s0 + $0x200] sm:$0xff]
  %v80 = vld [vmem:[%s0 + $0x208] sm:$0xff]
  %v81 = vld [vmem:[%s0 + $0x210] sm:$0xff]
  %v82 = vld [vmem:[%s0 + $0x218] sm:$0xff]
  %v83 = vld [vmem:[%s0 + $0x220] sm:$0xff]
  %v84 = vld [vmem:[%s0 + $0x228] sm:$0xff]
  %v85 = vld [vmem:[%s0 + $0x230] sm:$0xff]
  %v86 = vld [vmem:[%s0 + $0x238] sm:$0xff]
  %v87 = vld [vmem:[%s0 + $0x240] sm:$0xff]
  %v88 = vld [vmem:[%s0 + $0x248] sm:$0xff]
  %v89 = vld [vmem:[%s0 + $0x250] sm:$0xff]
  %v90 = vld [vmem:[%s0 + $0x258] sm:$0xff]
  %v91 = vld [vmem:[%s0 + $0x260] sm:$0xff]
  %v92 = vld [vmem:[%s0 + $0x268] sm:$0xff]
  %v93 = vld [vmem:[%s0 + $0x270] sm:$0xff]
  %v94 = vld [vmem:[%s0 + $0x278] sm:$0xff]
  %v95 = vld [vmem:[%s0 + $0x280] sm:$0xff]
  %v96 = vld [vmem:[%s0 + $0x288] sm:$0xff]
  %v97 = vld [vmem:[%s0 + $0x290] sm:$0xff]
  %v98 = vld [vmem:[%s0 + $0x298] sm:$0xff]
  %v99 = vld [vmem:[%s0 + $0x2a0] sm:$0xff]
  %v100 = vld [vmem:[%s0 + $0x2a8] sm:$0xff]
  %v101 = vld [vmem:[%s0 + $0x2b0] sm:$0xff]
  %v102 = vld [vmem:[%s0 + $0x2b8] sm:$0xff]
  %v103 = vld [vmem:[%s0 + $0x2c0] sm:$0xff]
  %v104 = vld [vmem:[%s0 + $0x2c8] sm:$0xff]
  %v105 = vld [vmem:[%s0 + $0x2d0] sm:$0xff]
  %v106 = vld [vmem:[%s0 + $0x2d8] sm:$0xff]
  %v107 = vld [vmem:[%s0 + $0x2e0] sm:$0xff]
  %v108 = vld [vmem:[%s0 + $0x2e8] sm:$0xff]
  %v109 = vld [vmem:[%s0 + $0x2f0] sm:$0xff]
  %v110 = vld [vmem:[%s0 + $0x2f8] sm:$0xff]
  %v111 = vld [vmem:[%s0 + $0x300] sm:$0xff]
  %v112 = vld [vmem:[%s0 + $0x308] sm:$0xff]
  %v113 = vld [vmem:[%s0 + $0x310] sm:$0xff]
  %v114 = vld [vmem:[%s0 + $0x318] sm:$0xff]
  %v115 = vld [vmem:[%s0 + $0x320] sm:$0xff]
  %v116 = vld [vmem:[%s0 + $0x328] sm:$0xff]
  %v117 = vld [vmem:[%s0 + $0x330] sm:$0xff]
  %v118 = vld [vmem:[%s0 + $0x338] sm:$0xff]
  %v119 = vld [vmem:[%s0 + $0x340] sm:$0xff]
  %v120 = vld [vmem:[%s0 + $0x348] sm:$0xff]
  %v121 = vld [vmem:[%s0 + $0x350] sm:$0xff]
  %v122 = vld [vmem:[%s0 + $0x358] sm:$0xff]
  %v123 = vld [vmem:[%s0 + $0x360] sm:$0xff]
  %v124 = vld [vmem:[%s0 + $0x368] sm:$0xff]
  %v125 = vld [vmem:[%s0 + $0x370] sm:$0xff]
  %v126 = vld [vmem:[%s0 + $0x378] sm:$0xff]
  %v127 = vld [vmem:[%s0 + $0x380] sm:$0xff]
  %v128 = vld [vmem:[%s0 + $0x388] sm:$0xff]
  %v129 = vld [vmem:[%s0 + $0x390] sm:$0xff]
  %v130 = vld [vmem:[%s0 + $0x398] sm:$0xff]
  %v131 = vld [vmem:[%s0 + $0x3a0] sm:$0xff]
  %v132 = vld [vmem:[%s0 + $0x3a8] sm:$0xff]
  %v133 = vld [vmem:[%s0 + $0x3b0] sm:$0xff]
  %v134 = vld [vmem:[%s0 + $0x3b8] sm:$0xff]
  %v135 = vld [vmem:[%s0 + $0x3c0] sm:$0xff]
  %v136 = vld [vmem:[%s0 + $0x3c8] sm:$0xff]
  %v137 = vld [vmem:[%s0 + $0x3d0] sm:$0xff]
  %v138 = vld [vmem:[%s0 + $0x3d8] sm:$0xff]
  %v139 = vld [vmem:[%s0 + $0x3e0] sm:$0xff]
  %v140 = vld [vmem:[%s0 + $0x3e8] sm:$0xff]
  %v141 = vld [vmem:[%s0 + $0x3f0] sm:$0xff]
  %v142 = vld [vmem:[%s0 + $0x3f8] sm:$0xff]
  %v143 = vld [vmem:[%s0 + $0x400] sm:$0xff]
  %v144 = vld [vmem:[%s0 + $0x408] sm:$0xff]
  %v145 = vld [vmem:[%s0 + $0x410] sm:$0xff]
  %v146 = vld [vmem:[%s0 + $0x418] sm:$0xff]
  %v147 = vld [vmem:[%s0 + $0x420] sm:$0xff]
  %v148 = vld [vmem:[%s0 + $0x428] sm:$0xff]
  %v149 = vld [vmem:[%s0 + $0x430] sm:$0xff]
  %v150 = vld [vmem:[%s0 + $0x438] sm:$0xff]
  %v151 = vld [vmem:[%s0 + $0x440] sm:$0xff]
  %v152 = vld [vmem:[%s0 + $0x448] sm:$0xff]
  %v153 = vld [vmem:[%s0 + $0x450] sm:$0xff]
  %v154 = vld [vmem:[%s0 + $0x458] sm:$0xff]
  %v155 = vld [vmem:[%s0 + $0x460] sm:$0xff]
  %v156 = vld [vmem:[%s0 + $0x468] sm:$0xff]
  %v157 = vld [vmem:[%s0 + $0x470] sm:$0xff]
  %v158 = vld [vmem:[%s0 + $0x478] sm:$0xff]
  %v159 = vld [vmem:[%s0 + $0x480] sm:$0xff]
  %v160 = vld [vmem:[%s0 + $0x488] sm:$0xff]
  %v161 = vld [vmem:[%s0 + $0x490] sm:$0xff]
  %v162 = vld [vmem:[%s0 + $0x498] sm:$0xff]
  %v163 = vld [vmem:[%s0 + $0x4a0] sm:$0xff]
  %v164 = vld [vmem:[%s0 + $0x4a8] sm:$0xff]
  %v165 = vld [vmem:[%s0 + $0x4b0] sm:$0xff]
  %v166 = vld [vmem:[%s0 + $0x4b8] sm:$0xff]
  %v167 = vld [vmem:[%s0 + $0x4c0] sm:$0xff]
  %v168 = vld [vmem:[%s0 + $0x4c8] sm:$0xff]
  %v169 = vld [vmem:[%s0 + $0x4d0] sm:$0xff]
  %v170 = vld [vmem:[%s0 + $0x4d8] sm:$0xff]
  %v171 = vld [vmem:[%s0 + $0x4e0] sm:$0xff]
  %v172 = vld [vmem:[%s0 + $0x4e8] sm:$0xff]
  %v173 = vld [vmem:[%s0 + $0x4f0] sm:$0xff]
  %v174 = vld [vmem:[%s0 + $0x4f8] sm:$0xff]
  %v175 = vld [vmem:[%s0 + $0x500] sm:$0xff]
  %v176 = vld [vmem:[%s0 + $0x508] sm:$0xff]
  %v177 = vld [vmem:[%s0 + $0x510] sm:$0xff]
  %v178 = vld [vmem:[%s0 + $0x518] sm:$0xff]
  %v179 = vld [vmem:[%s0 + $0x520] sm:$0xff]
  %v180 = vld [vmem:[%s0 + $0x528] sm:$0xff]
  %v181 = vld [vmem:[%s0 + $0x530] sm:$0xff]
  %v182 = vld [vmem:[%s0 + $0x538] sm:$0xff]
  %v183 = vld [vmem:[%s0 + $0x540] sm:$0xff]
  %v184 = vld [vmem:[%s0 + $0x548] sm:$0xff]
  %v185 = vld [vmem:[%s0 + $0x550] sm:$0xff]
  %v186 = vld [vmem:[%s0 + $0x558] sm:$0xff]
  %v187 = vld [vmem:[%s0 + $0x560] sm:$0xff]
  %v188 = vld [vmem:[%s0 + $0x568] sm:$0xff]
  %v189 = vld [vmem:[%s0 + $0x570] sm:$0xff]
  %v190 = vld [vmem:[%s0 + $0x578] sm:$0xff]
  %v191 = vld [vmem:[%s0 + $0x580] sm:$0xff]
  %v192 = vld [vmem:[%s0 + $0x588] sm:$0xff]
  %v193 = vld [vmem:[%s0 + $0x590] sm:$0xff]
  %v194 = vld [vmem:[%s0 + $0x598] sm:$0xff]
  %v195 = vld [vmem:[%s0 + $0x5a0] sm:$0xff]
  %v196 = vld [vmem:[%s0 + $0x5a8] sm:$0xff]
  %v197 = vld [vmem:[%s0 + $0x5b0] sm:$0xff]
  %v198 = vld [vmem:[%s0 + $0x5b8] sm:$0xff]
  %v199 = vld [vmem:[%s0 + $0x5c0] sm:$0xff]
  %v200 = vld [vmem:[%s0 + $0x5c8] sm:$0xff]
  %v201 = vld [vmem:[%s0 + $0x5d0] sm:$0xff]
  %v202 = vld [vmem:[%s0 + $0x5d8] sm:$0xff]
  %v203 = vld [vmem:[%s0 + $0x5e0] sm:$0xff]
  %v204 = vld [vmem:[%s0 + $0x5e8] sm:$0xff]
  %v205 = vld [vmem:[%s0 + $0x5f0] sm:$0xff]
  %v206 = vld [vmem:[%s0 + $0x5f8] sm:$0xff]
  %v207 = vld [vmem:[%s0 + $0x600] sm:$0xff]
  %v208 = vld [vmem:[%s0 + $0x608] sm:$0xff]
  %v209 = vld [vmem:[%s0 + $0x610] sm:$0xff]
  %v210 = vld [vmem:[%s0 + $0x618] sm:$0xff]
  %v211 = vld [vmem:[%s1] sm:$0xf]
  %v212 = vld [vmem:[%s1 + $0x4] sm:$0xf]
  %v213 = vld [vmem:[%s1 + $0x8] sm:$0xf]
  %v214 = vld [vmem:[%s1 + $0xc] sm:$0xf]
  %v215 = vld [vmem:[%s1 + $0x10] sm:$0xf]
  %v216 = vld [vmem:[%s1 + $0x14] sm:$0xf]
  %v217 = vld [vmem:[%s1 + $0x18] sm:$0xf]
  %v218 = vld [vmem:[%s1 + $0x1c] sm:$0xf]
  %v219 = vld [vmem:[%s1 + $0x20] sm:$0xf]
  %v220 = vld [vmem:[%s1 + $0x24] sm:$0xf]
  %v221 = vld [vmem:[%s1 + $0x28] sm:$0xf]
  %v222 = vld [vmem:[%s1 + $0x2c] sm:$0xf]
  %v223 = vld [vmem:[%s1 + $0x30] sm:$0xf]
  %v224 = vld [vmem:[%s1 + $0x34] sm:$0xf]
  %v225 = vld [vmem:[%s1 + $0x38] sm:$0xf]
  %v226 = vld [vmem:[%s1 + $0x3c] sm:$0xf]
  %v227 = vld [vmem:[%s1 + $0x40] sm:$0xf]
  %v228 = vld [vmem:[%s1 + $0x44] sm:$0xf]
  %v229 = vld [vmem:[%s1 + $0x48] sm:$0xf]
  %v230 = vld [vmem:[%s1 + $0x4c] sm:$0xf]
  %v231 = vld [vmem:[%s1 + $0x50] sm:$0xf]
  %v232 = vld [vmem:[%s1 + $0x54] sm:$0xf]
  %v233 = vld [vmem:[%s1 + $0x58] sm:$0xf]
  %v234 = vld [vmem:[%s1 + $0x5c] sm:$0xf]
  %v235 = vld [vmem:[%s1 + $0x60] sm:$0xf]
  %v236 = vld [vmem:[%s1 + $0x64] sm:$0xf]
  %v237 = vld [vmem:[%s1 + $0x68] sm:$0xf]
  %v238 = vld [vmem:[%s1 + $0x6c] sm:$0xf]
  %v239 = vld [vmem:[%s1 + $0x70] sm:$0xf]
  %v240 = vld [vmem:[%s1 + $0x74] sm:$0xf]
  %v241 = vld [vmem:[%s1 + $0x78] sm:$0xf]
  %v242 = vld [vmem:[%s1 + $0x7c] sm:$0xf]
  %v243 = vld [vmem:[%s1 + $0x80] sm:$0xf]
  %v244 = vld [vmem:[%s1 + $0x84] sm:$0xf]
  %v245 = vld [vmem:[%s1 + $0x88] sm:$0xf]
  %v246 = vld [vmem:[%s1 + $0x8c] sm:$0xf]
  %v247 = vld [vmem:[%s1 + $0x90] sm:$0xf]
  %v248 = vld [vmem:[%s1 + $0x94] sm:$0xf]
  %v249 = vld [vmem:[%s1 + $0x98] sm:$0xf]
  %v250 = vld [vmem:[%s1 + $0x9c] sm:$0xf]
  %v251 = vld [vmem:[%s1 + $0xa0] sm:$0xf]
  %v252 = vld [vmem:[%s1 + $0xa4] sm:$0xf]
  %v253 = vld [vmem:[%s1 + $0xa8] sm:$0xf]
  %v254 = vld [vmem:[%s1 + $0xac] sm:$0xf]
  %v255 = vld [vmem:[%s1 + $0xb0] sm:$0xf]
  %v256 = vld [vmem:[%s1 + $0xb4] sm:$0xf]
  %v257 = vld [vmem:[%s1 + $0xb8] sm:$0xf]
  %v258 = vld [vmem:[%s1 + $0xbc] sm:$0xf]
  %v259 = vld [vmem:[%s1 + $0xc0] sm:$0xf]
  %v260 = vld [vmem:[%s1 + $0xc4] sm:$0xf]
  %v261 = vld [vmem:[%s1 + $0xc8] sm:$0xf]
  %v262 = vld [vmem:[%s1 + $0xcc] sm:$0xf]
  %v263 = vld [vmem:[%s1 + $0xd0] sm:$0xf]
  %v264 = vld [vmem:[%s1 + $0xd4] sm:$0xf]
  %v265 = vld [vmem:[%s1 + $0xd8] sm:$0xf]
  %v266 = vld [vmem:[%s1 + $0xdc] sm:$0xf]
  %v267 = vld [vmem:[%s1 + $0xe0] sm:$0xf]
  %v268 = vld [vmem:[%s1 + $0xe4] sm:$0xf]
  %v269 = vld [vmem:[%s1 + $0xe8] sm:$0xf]
  %v270 = vld [vmem:[%s1 + $0xec] sm:$0xf]
  %v271 = vld [vmem:[%s1 + $0xf0] sm:$0xf]
  %v272 = vld [vmem:[%s1 + $0xf4] sm:$0xf]
  %v273 = vld [vmem:[%s1 + $0xf8] sm:$0xf]
  %v274 = vld [vmem:[%s1 + $0xfc] sm:$0xf]
  %v275 = vld [vmem:[%s1 + $0x100] sm:$0xf]
  %v276 = vld [vmem:[%s1 + $0x104] sm:$0xf]
  %v277 = vld [vmem:[%s1 + $0x108] sm:$0xf]
  %v278 = vld [vmem:[%s1 + $0x10c] sm:$0xf]
  %v279 = vld [vmem:[%s1 + $0x110] sm:$0xf]
  %v280 = vld [vmem:[%s1 + $0x114] sm:$0xf]
  %v281 = vld [vmem:[%s1 + $0x118] sm:$0xf]
  %v282 = vld [vmem:[%s1 + $0x11c] sm:$0xf]
  %v283 = vld [vmem:[%s1 + $0x120] sm:$0xf]
  %v284 = vld [vmem:[%s1 + $0x124] sm:$0xf]
  %v285 = vld [vmem:[%s1 + $0x128] sm:$0xf]
  %v286 = vld [vmem:[%s1 + $0x12c] sm:$0xf]
  %v287 = vld [vmem:[%s1 + $0x130] sm:$0xf]
  %v288 = vld [vmem:[%s1 + $0x134] sm:$0xf]
  %v289 = vld [vmem:[%s1 + $0x138] sm:$0xf]
  %v290 = vld [vmem:[%s1 + $0x13c] sm:$0xf]
  %v291 = vld [vmem:[%s1 + $0x140] sm:$0xf]
  %v292 = vld [vmem:[%s1 + $0x144] sm:$0xf]
  %v293 = vld [vmem:[%s1 + $0x148] sm:$0xf]
  %v294 = vld [vmem:[%s1 + $0x14c] sm:$0xf]
  %v295 = vld [vmem:[%s1 + $0x150] sm:$0xf]
  %v296 = vld [vmem:[%s1 + $0x154] sm:$0xf]
  %v297 = vld [vmem:[%s1 + $0x158] sm:$0xf]
  %v298 = vld [vmem:[%s1 + $0x15c] sm:$0xf]
  %v299 = vld [vmem:[%s1 + $0x160] sm:$0xf]
  %v300 = vld [vmem:[%s1 + $0x164] sm:$0xf]
  %v301 = vld [vmem:[%s1 + $0x168] sm:$0xf]
  %v302 = vld [vmem:[%s1 + $0x16c] sm:$0xf]
  %v303 = vld [vmem:[%s1 + $0x170] sm:$0xf]
  %v304 = vld [vmem:[%s1 + $0x174] sm:$0xf]
  %v305 = vld [vmem:[%s1 + $0x178] sm:$0xf]
  %v306 = vld [vmem:[%s1 + $0x17c] sm:$0xf]
  %v307 = vld [vmem:[%s1 + $0x180] sm:$0xf]
  %v308 = vld [vmem:[%s1 + $0x184] sm:$0xf]
  %v309 = vld [vmem:[%s1 + $0x188] sm:$0xf]
  %v310 = vld [vmem:[%s1 + $0x18c] sm:$0xf]
  %v311 = vld [vmem:[%s1 + $0x190] sm:$0xf]
  %v312 = vld [vmem:[%s1 + $0x194] sm:$0xf]
  %v313 = vld [vmem:[%s1 + $0x198] sm:$0xf]
  %v314 = vld [vmem:[%s1 + $0x19c] sm:$0xf]
  %v315 = vld [vmem:[%s1 + $0x1a0] sm:$0xf]
  %v316 = vld [vmem:[%s1 + $0x1a4] sm:$0xf]
  %v317 = vld [vmem:[%s1 + $0x1a8] sm:$0xf]
  %v318 = vld [vmem:[%s1 + $0x1ac] sm:$0xf]
  %v319 = vld [vmem:[%s1 + $0x1b0] sm:$0xf]
  %v320 = vld [vmem:[%s1 + $0x1b4] sm:$0xf]
  %v321 = vld [vmem:[%s1 + $0x1b8] sm:$0xf]
  %v322 = vld [vmem:[%s1 + $0x1bc] sm:$0xf]
  %v323 = vld [vmem:[%s1 + $0x1c0] sm:$0xf]
  %v324 = vld [vmem:[%s1 + $0x1c4] sm:$0xf]
  %v325 = vld [vmem:[%s1 + $0x1c8] sm:$0xf]
  %v326 = vld [vmem:[%s1 + $0x1cc] sm:$0xf]
  %v327 = vld [vmem:[%s1 + $0x1d0] sm:$0xf]
  %v328 = vld [vmem:[%s1 + $0x1d4] sm:$0xf]
  %v329 = vld [vmem:[%s1 + $0x1d8] sm:$0xf]
  %v330 = vld [vmem:[%s1 + $0x1dc] sm:$0xf]
  %v331 = vld [vmem:[%s1 + $0x1e0] sm:$0xf]
  %v332 = vld [vmem:[%s1 + $0x1e4] sm:$0xf]
  %v333 = vld [vmem:[%s1 + $0x1e8] sm:$0xf]
  %v334 = vld [vmem:[%s1 + $0x1ec] sm:$0xf]
  %v335 = vld [vmem:[%s1 + $0x1f0] sm:$0xf]
  %v336 = vld [vmem:[%s1 + $0x1f4] sm:$0xf]
  %v337 = vld [vmem:[%s1 + $0x1f8] sm:$0xf]
  %v338 = vld [vmem:[%s1 + $0x1fc] sm:$0xf]
  %v339 = vld [vmem:[%s2] sm:$0x1]
  %v341 = vlaneseq
  %v342 = vshrl.u32 %v341, 7
  %v343 = vsub.s32 0, %v342
  %v344 = vrot.slane %v339, %v343
  %v542 = vunpack.c.l.b16 %v15
  %v543 = vunpack.c.h.b16 %v15
  %v544 = vunpack.c.l.b16 %v16
  %v545 = vunpack.c.h.b16 %v16
  %v546 = vunpack.c.l.b16 %v17
  %v547 = vunpack.c.h.b16 %v17
  %v548 = vunpack.c.l.b16 %v18
  %v549 = vunpack.c.h.b16 %v18
  %v550 = vunpack.c.l.b16 %v19
  %v551 = vunpack.c.h.b16 %v19
  %v552 = vunpack.c.l.b16 %v20
  %v553 = vunpack.c.h.b16 %v20
  %v554 = vunpack.c.l.b16 %v21
  %v555 = vunpack.c.h.b16 %v21
  %v556 = vunpack.c.l.b16 %v22
  %v557 = vunpack.c.h.b16 %v22
  %v558 = vunpack.c.l.b16 %v23
  %v559 = vunpack.c.h.b16 %v23
  %v560 = vunpack.c.l.b16 %v24
  %v561 = vunpack.c.h.b16 %v24
  %v562 = vunpack.c.l.b16 %v25
  %v563 = vunpack.c.h.b16 %v25
  %v564 = vunpack.c.l.b16 %v26
  %v565 = vunpack.c.h.b16 %v26
  %v566 = vunpack.c.l.b16 %v27
  %v567 = vunpack.c.h.b16 %v27
  %v568 = vunpack.c.l.b16 %v28
  %v569 = vunpack.c.h.b16 %v28
  %v570 = vunpack.c.l.b16 %v29
  %v571 = vunpack.c.h.b16 %v29
  %v572 = vunpack.c.l.b16 %v30
  %v573 = vunpack.c.h.b16 %v30
  %v574 = vunpack.c.l.b16 %v31
  %v575 = vunpack.c.h.b16 %v31
  %v576 = vunpack.c.l.b16 %v32
  %v577 = vunpack.c.h.b16 %v32
  %v578 = vunpack.c.l.b16 %v33
  %v579 = vunpack.c.h.b16 %v33
  %v580 = vunpack.c.l.b16 %v34
  %v581 = vunpack.c.h.b16 %v34
  %v582 = vunpack.c.l.b16 %v35
  %v583 = vunpack.c.h.b16 %v35
  %v584 = vunpack.c.l.b16 %v36
  %v585 = vunpack.c.h.b16 %v36
  %v586 = vunpack.c.l.b16 %v37
  %v587 = vunpack.c.h.b16 %v37
  %v588 = vunpack.c.l.b16 %v38
  %v589 = vunpack.c.h.b16 %v38
  %v590 = vunpack.c.l.b16 %v39
  %v591 = vunpack.c.h.b16 %v39
  %v592 = vunpack.c.l.b16 %v40
  %v593 = vunpack.c.h.b16 %v40
  %v594 = vunpack.c.l.b16 %v41
  %v595 = vunpack.c.h.b16 %v41
  %v596 = vunpack.c.l.b16 %v42
  %v597 = vunpack.c.h.b16 %v42
  %v598 = vunpack.c.l.b16 %v43
  %v599 = vunpack.c.h.b16 %v43
  %v600 = vunpack.c.l.b16 %v44
  %v601 = vunpack.c.h.b16 %v44
  %v602 = vunpack.c.l.b16 %v45
  %v603 = vunpack.c.h.b16 %v45
  %v604 = vunpack.c.l.b16 %v46
  %v605 = vunpack.c.h.b16 %v46
  %v606 = vunpack.c.l.b16 %v47
  %v607 = vunpack.c.h.b16 %v47
  %v608 = vunpack.c.l.b16 %v48
  %v609 = vunpack.c.h.b16 %v48
  %v610 = vunpack.c.l.b16 %v49
  %v611 = vunpack.c.h.b16 %v49
  %v612 = vunpack.c.l.b16 %v50
  %v613 = vunpack.c.h.b16 %v50
  %v614 = vunpack.c.l.b16 %v51
  %v615 = vunpack.c.h.b16 %v51
  %v616 = vunpack.c.l.b16 %v52
  %v617 = vunpack.c.h.b16 %v52
  %v618 = vunpack.c.l.b16 %v53
  %v619 = vunpack.c.h.b16 %v53
  %v620 = vunpack.c.l.b16 %v54
  %v621 = vunpack.c.h.b16 %v54
  %v622 = vunpack.c.l.b16 %v55
  %v623 = vunpack.c.h.b16 %v55
  %v624 = vunpack.c.l.b16 %v56
  %v625 = vunpack.c.h.b16 %v56
  %v626 = vunpack.c.l.b16 %v57
  %v627 = vunpack.c.h.b16 %v57
  %v628 = vunpack.c.l.b16 %v58
  %v629 = vunpack.c.h.b16 %v58
  %v630 = vunpack.c.l.b16 %v59
  %v631 = vunpack.c.h.b16 %v59
  %v632 = vunpack.c.l.b16 %v60
  %v633 = vunpack.c.h.b16 %v60
  %v634 = vunpack.c.l.b16 %v61
  %v635 = vunpack.c.h.b16 %v61
  %v636 = vunpack.c.l.b16 %v62
  %v637 = vunpack.c.h.b16 %v62
  %v638 = vunpack.c.l.b16 %v63
  %v639 = vunpack.c.h.b16 %v63
  %v640 = vunpack.c.l.b16 %v64
  %v641 = vunpack.c.h.b16 %v64
  %v642 = vunpack.c.l.b16 %v65
  %v643 = vunpack.c.h.b16 %v65
  %v644 = vunpack.c.l.b16 %v66
  %v645 = vunpack.c.h.b16 %v66
  %v646 = vunpack.c.l.b16 %v67
  %v647 = vunpack.c.h.b16 %v67
  %v648 = vunpack.c.l.b16 %v68
  %v649 = vunpack.c.h.b16 %v68
  %v650 = vunpack.c.l.b16 %v69
  %v651 = vunpack.c.h.b16 %v69
  %v652 = vunpack.c.l.b16 %v70
  %v653 = vunpack.c.h.b16 %v70
  %v654 = vunpack.c.l.b16 %v71
  %v655 = vunpack.c.h.b16 %v71
  %v656 = vunpack.c.l.b16 %v72
  %v657 = vunpack.c.h.b16 %v72
  %v658 = vunpack.c.l.b16 %v73
  %v659 = vunpack.c.h.b16 %v73
  %v660 = vunpack.c.l.b16 %v74
  %v661 = vunpack.c.h.b16 %v74
  %v662 = vunpack.c.l.b16 %v75
  %v663 = vunpack.c.h.b16 %v75
  %v664 = vunpack.c.l.b16 %v76
  %v665 = vunpack.c.h.b16 %v76
  %v666 = vunpack.c.l.b16 %v77
  %v667 = vunpack.c.h.b16 %v77
  %v668 = vunpack.c.l.b16 %v78
  %v669 = vunpack.c.h.b16 %v78
  %v670 = vunpack.c.l.b16 %v79
  %v671 = vunpack.c.h.b16 %v79
  %v672 = vunpack.c.l.b16 %v80
  %v673 = vunpack.c.h.b16 %v80
  %v674 = vunpack.c.l.b16 %v81
  %v675 = vunpack.c.h.b16 %v81
  %v676 = vunpack.c.l.b16 %v82
  %v677 = vunpack.c.h.b16 %v82
  %v678 = vunpack.c.l.b16 %v83
  %v679 = vunpack.c.h.b16 %v83
  %v680 = vunpack.c.l.b16 %v84
  %v681 = vunpack.c.h.b16 %v84
  %v682 = vunpack.c.l.b16 %v85
  %v683 = vunpack.c.h.b16 %v85
  %v684 = vunpack.c.l.b16 %v86
  %v685 = vunpack.c.h.b16 %v86
  %v686 = vunpack.c.l.b16 %v87
  %v687 = vunpack.c.h.b16 %v87
  %v688 = vunpack.c.l.b16 %v88
  %v689 = vunpack.c.h.b16 %v88
  %v690 = vunpack.c.l.b16 %v89
  %v691 = vunpack.c.h.b16 %v89
  %v692 = vunpack.c.l.b16 %v90
  %v693 = vunpack.c.h.b16 %v90
  %v694 = vunpack.c.l.b16 %v91
  %v695 = vunpack.c.h.b16 %v91
  %v696 = vunpack.c.l.b16 %v92
  %v697 = vunpack.c.h.b16 %v92
  %v698 = vunpack.c.l.b16 %v93
  %v699 = vunpack.c.h.b16 %v93
  %v700 = vunpack.c.l.b16 %v94
  %v701 = vunpack.c.h.b16 %v94
  %v702 = vunpack.c.l.b16 %v95
  %v703 = vunpack.c.h.b16 %v95
  %v704 = vunpack.c.l.b16 %v96
  %v705 = vunpack.c.h.b16 %v96
  %v706 = vunpack.c.l.b16 %v97
  %v707 = vunpack.c.h.b16 %v97
  %v708 = vunpack.c.l.b16 %v98
  %v709 = vunpack.c.h.b16 %v98
  %v710 = vunpack.c.l.b16 %v99
  %v711 = vunpack.c.h.b16 %v99
  %v712 = vunpack.c.l.b16 %v100
  %v713 = vunpack.c.h.b16 %v100
  %v714 = vunpack.c.l.b16 %v101
  %v715 = vunpack.c.h.b16 %v101
  %v716 = vunpack.c.l.b16 %v102
  %v717 = vunpack.c.h.b16 %v102
  %v718 = vunpack.c.l.b16 %v103
  %v719 = vunpack.c.h.b16 %v103
  %v720 = vunpack.c.l.b16 %v104
  %v721 = vunpack.c.h.b16 %v104
  %v722 = vunpack.c.l.b16 %v105
  %v723 = vunpack.c.h.b16 %v105
  %v724 = vunpack.c.l.b16 %v106
  %v725 = vunpack.c.h.b16 %v106
  %v726 = vunpack.c.l.b16 %v107
  %v727 = vunpack.c.h.b16 %v107
  %v728 = vunpack.c.l.b16 %v108
  %v729 = vunpack.c.h.b16 %v108
  %v730 = vunpack.c.l.b16 %v109
  %v731 = vunpack.c.h.b16 %v109
  %v732 = vunpack.c.l.b16 %v110
  %v733 = vunpack.c.h.b16 %v110
  %v734 = vunpack.c.l.b16 %v111
  %v735 = vunpack.c.h.b16 %v111
  %v736 = vunpack.c.l.b16 %v112
  %v737 = vunpack.c.h.b16 %v112
  %v738 = vunpack.c.l.b16 %v113
  %v739 = vunpack.c.h.b16 %v113
  %v740 = vunpack.c.l.b16 %v114
  %v741 = vunpack.c.h.b16 %v114
  %v742 = vunpack.c.l.b16 %v115
  %v743 = vunpack.c.h.b16 %v115
  %v744 = vunpack.c.l.b16 %v116
  %v745 = vunpack.c.h.b16 %v116
  %v746 = vunpack.c.l.b16 %v117
  %v747 = vunpack.c.h.b16 %v117
  %v748 = vunpack.c.l.b16 %v118
  %v749 = vunpack.c.h.b16 %v118
  %v750 = vunpack.c.l.b16 %v119
  %v751 = vunpack.c.h.b16 %v119
  %v752 = vunpack.c.l.b16 %v120
  %v753 = vunpack.c.h.b16 %v120
  %v754 = vunpack.c.l.b16 %v121
  %v755 = vunpack.c.h.b16 %v121
  %v756 = vunpack.c.l.b16 %v122
  %v757 = vunpack.c.h.b16 %v122
  %v758 = vunpack.c.l.b16 %v123
  %v759 = vunpack.c.h.b16 %v123
  %v760 = vunpack.c.l.b16 %v124
  %v761 = vunpack.c.h.b16 %v124
  %v762 = vunpack.c.l.b16 %v125
  %v763 = vunpack.c.h.b16 %v125
  %v764 = vunpack.c.l.b16 %v126
  %v765 = vunpack.c.h.b16 %v126
  %v766 = vunpack.c.l.b16 %v127
  %v767 = vunpack.c.h.b16 %v127
  %v768 = vunpack.c.l.b16 %v128
  %v769 = vunpack.c.h.b16 %v128
  %v770 = vunpack.c.l.b16 %v129
  %v771 = vunpack.c.h.b16 %v129
  %v772 = vunpack.c.l.b16 %v130
  %v773 = vunpack.c.h.b16 %v130
  %v774 = vunpack.c.l.b16 %v131
  %v775 = vunpack.c.h.b16 %v131
  %v776 = vunpack.c.l.b16 %v132
  %v777 = vunpack.c.h.b16 %v132
  %v778 = vunpack.c.l.b16 %v133
  %v779 = vunpack.c.h.b16 %v133
  %v780 = vunpack.c.l.b16 %v134
  %v781 = vunpack.c.h.b16 %v134
  %v782 = vunpack.c.l.b16 %v135
  %v783 = vunpack.c.h.b16 %v135
  %v784 = vunpack.c.l.b16 %v136
  %v785 = vunpack.c.h.b16 %v136
  %v786 = vunpack.c.l.b16 %v137
  %v787 = vunpack.c.h.b16 %v137
  %v788 = vunpack.c.l.b16 %v138
  %v789 = vunpack.c.h.b16 %v138
  %v790 = vunpack.c.l.b16 %v139
  %v791 = vunpack.c.h.b16 %v139
  %v792 = vunpack.c.l.b16 %v140
  %v793 = vunpack.c.h.b16 %v140
  %v794 = vunpack.c.l.b16 %v141
  %v795 = vunpack.c.h.b16 %v141
  %v796 = vunpack.c.l.b16 %v142
  %v797 = vunpack.c.h.b16 %v142
  %v798 = vunpack.c.l.b16 %v143
  %v799 = vunpack.c.h.b16 %v143
  %v800 = vunpack.c.l.b16 %v144
  %v801 = vunpack.c.h.b16 %v144
  %v802 = vunpack.c.l.b16 %v145
  %v803 = vunpack.c.h.b16 %v145
  %v804 = vunpack.c.l.b16 %v146
  %v805 = vunpack.c.h.b16 %v146
  %v806 = vunpack.c.l.b16 %v147
  %v807 = vunpack.c.h.b16 %v147
  %v808 = vunpack.c.l.b16 %v148
  %v809 = vunpack.c.h.b16 %v148
  %v810 = vunpack.c.l.b16 %v149
  %v811 = vunpack.c.h.b16 %v149
  %v812 = vunpack.c.l.b16 %v150
  %v813 = vunpack.c.h.b16 %v150
  %v814 = vunpack.c.l.b16 %v151
  %v815 = vunpack.c.h.b16 %v151
  %v816 = vunpack.c.l.b16 %v152
  %v817 = vunpack.c.h.b16 %v152
  %v818 = vunpack.c.l.b16 %v153
  %v819 = vunpack.c.h.b16 %v153
  %v820 = vunpack.c.l.b16 %v154
  %v821 = vunpack.c.h.b16 %v154
  %v822 = vunpack.c.l.b16 %v155
  %v823 = vunpack.c.h.b16 %v155
  %v824 = vunpack.c.l.b16 %v156
  %v825 = vunpack.c.h.b16 %v156
  %v826 = vunpack.c.l.b16 %v157
  %v827 = vunpack.c.h.b16 %v157
  %v828 = vunpack.c.l.b16 %v158
  %v829 = vunpack.c.h.b16 %v158
  %v830 = vunpack.c.l.b16 %v159
  %v831 = vunpack.c.h.b16 %v159
  %v832 = vunpack.c.l.b16 %v160
  %v833 = vunpack.c.h.b16 %v160
  %v834 = vunpack.c.l.b16 %v161
  %v835 = vunpack.c.h.b16 %v161
  %v836 = vunpack.c.l.b16 %v162
  %v837 = vunpack.c.h.b16 %v162
  %v838 = vunpack.c.l.b16 %v163
  %v839 = vunpack.c.h.b16 %v163
  %v840 = vunpack.c.l.b16 %v164
  %v841 = vunpack.c.h.b16 %v164
  %v842 = vunpack.c.l.b16 %v165
  %v843 = vunpack.c.h.b16 %v165
  %v844 = vunpack.c.l.b16 %v166
  %v845 = vunpack.c.h.b16 %v166
  %v846 = vunpack.c.l.b16 %v167
  %v847 = vunpack.c.h.b16 %v167
  %v848 = vunpack.c.l.b16 %v168
  %v849 = vunpack.c.h.b16 %v168
  %v850 = vunpack.c.l.b16 %v169
  %v851 = vunpack.c.h.b16 %v169
  %v852 = vunpack.c.l.b16 %v170
  %v853 = vunpack.c.h.b16 %v170
  %v854 = vunpack.c.l.b16 %v171
  %v855 = vunpack.c.h.b16 %v171
  %v856 = vunpack.c.l.b16 %v172
  %v857 = vunpack.c.h.b16 %v172
  %v858 = vunpack.c.l.b16 %v173
  %v859 = vunpack.c.h.b16 %v173
  %v860 = vunpack.c.l.b16 %v174
  %v861 = vunpack.c.h.b16 %v174
  %v862 = vunpack.c.l.b16 %v175
  %v863 = vunpack.c.h.b16 %v175
  %v864 = vunpack.c.l.b16 %v176
  %v865 = vunpack.c.h.b16 %v176
  %v866 = vunpack.c.l.b16 %v177
  %v867 = vunpack.c.h.b16 %v177
  %v868 = vunpack.c.l.b16 %v178
  %v869 = vunpack.c.h.b16 %v178
  %v870 = vunpack.c.l.b16 %v179
  %v871 = vunpack.c.h.b16 %v179
  %v872 = vunpack.c.l.b16 %v180
  %v873 = vunpack.c.h.b16 %v180
  %v874 = vunpack.c.l.b16 %v181
  %v875 = vunpack.c.h.b16 %v181
  %v876 = vunpack.c.l.b16 %v182
  %v877 = vunpack.c.h.b16 %v182
  %v878 = vunpack.c.l.b16 %v183
  %v879 = vunpack.c.h.b16 %v183
  %v880 = vunpack.c.l.b16 %v184
  %v881 = vunpack.c.h.b16 %v184
  %v882 = vunpack.c.l.b16 %v185
  %v883 = vunpack.c.h.b16 %v185
  %v884 = vunpack.c.l.b16 %v186
  %v885 = vunpack.c.h.b16 %v186
  %v886 = vunpack.c.l.b16 %v187
  %v887 = vunpack.c.h.b16 %v187
  %v888 = vunpack.c.l.b16 %v188
  %v889 = vunpack.c.h.b16 %v188
  %v890 = vunpack.c.l.b16 %v189
  %v891 = vunpack.c.h.b16 %v189
  %v892 = vunpack.c.l.b16 %v190
  %v893 = vunpack.c.h.b16 %v190
  %v894 = vunpack.c.l.b16 %v191
  %v895 = vunpack.c.h.b16 %v191
  %v896 = vunpack.c.l.b16 %v192
  %v897 = vunpack.c.h.b16 %v192
  %v898 = vunpack.c.l.b16 %v193
  %v899 = vunpack.c.h.b16 %v193
  %v900 = vunpack.c.l.b16 %v194
  %v901 = vunpack.c.h.b16 %v194
  %v902 = vunpack.c.l.b16 %v195
  %v903 = vunpack.c.h.b16 %v195
  %v904 = vunpack.c.l.b16 %v196
  %v905 = vunpack.c.h.b16 %v196
  %v906 = vunpack.c.l.b16 %v197
  %v907 = vunpack.c.h.b16 %v197
  %v908 = vunpack.c.l.b16 %v198
  %v909 = vunpack.c.h.b16 %v198
  %v910 = vunpack.c.l.b16 %v199
  %v911 = vunpack.c.h.b16 %v199
  %v912 = vunpack.c.l.b16 %v200
  %v913 = vunpack.c.h.b16 %v200
  %v914 = vunpack.c.l.b16 %v201
  %v915 = vunpack.c.h.b16 %v201
  %v916 = vunpack.c.l.b16 %v202
  %v917 = vunpack.c.h.b16 %v202
  %v918 = vunpack.c.l.b16 %v203
  %v919 = vunpack.c.h.b16 %v203
  %v920 = vunpack.c.l.b16 %v204
  %v921 = vunpack.c.h.b16 %v204
  %v922 = vunpack.c.l.b16 %v205
  %v923 = vunpack.c.h.b16 %v205
  %v924 = vunpack.c.l.b16 %v206
  %v925 = vunpack.c.h.b16 %v206
  %v926 = vunpack.c.l.b16 %v207
  %v927 = vunpack.c.h.b16 %v207
  %v928 = vunpack.c.l.b16 %v208
  %v929 = vunpack.c.h.b16 %v208
  %v930 = vunpack.c.l.b16 %v209
  %v931 = vunpack.c.h.b16 %v209
  %v932 = vunpack.c.l.b16 %v210
  %v933 = vunpack.c.h.b16 %v210
  %v934 = vpack.c.b16 %v550, %v542
  %v935 = vpack.c.b16 %v551, %v543
  %v936 = vpack.c.b16 %v552, %v544
  %v937 = vpack.c.b16 %v553, %v545
  %v938 = vpack.c.b16 %v554, %v546
  %v939 = vpack.c.b16 %v555, %v547
  %v940 = vpack.c.b16 %v556, %v548
  %v941 = vpack.c.b16 %v557, %v549
  %v942 = vpack.c.b16 %v566, %v558
  %v943 = vpack.c.b16 %v567, %v559
  %v944 = vpack.c.b16 %v568, %v560
  %v945 = vpack.c.b16 %v569, %v561
  %v946 = vpack.c.b16 %v570, %v562
  %v947 = vpack.c.b16 %v571, %v563
  %v948 = vpack.c.b16 %v572, %v564
  %v949 = vpack.c.b16 %v573, %v565
  %v950 = vpack.c.b16 %v582, %v574
  %v951 = vpack.c.b16 %v583, %v575
  %v952 = vpack.c.b16 %v584, %v576
  %v953 = vpack.c.b16 %v585, %v577
  %v954 = vpack.c.b16 %v586, %v578
  %v955 = vpack.c.b16 %v587, %v579
  %v956 = vpack.c.b16 %v588, %v580
  %v957 = vpack.c.b16 %v589, %v581
  %v958 = vpack.c.b16 %v598, %v590
  %v959 = vpack.c.b16 %v599, %v591
  %v960 = vpack.c.b16 %v600, %v592
  %v961 = vpack.c.b16 %v601, %v593
  %v962 = vpack.c.b16 %v602, %v594
  %v963 = vpack.c.b16 %v603, %v595
  %v964 = vpack.c.b16 %v604, %v596
  %v965 = vpack.c.b16 %v605, %v597
  %v966 = vpack.c.b16 %v614, %v606
  %v967 = vpack.c.b16 %v615, %v607
  %v968 = vpack.c.b16 %v616, %v608
  %v969 = vpack.c.b16 %v617, %v609
  %v970 = vpack.c.b16 %v618, %v610
  %v971 = vpack.c.b16 %v619, %v611
  %v972 = vpack.c.b16 %v620, %v612
  %v973 = vpack.c.b16 %v621, %v613
  %v974 = vpack.c.b16 %v630, %v622
  %v975 = vpack.c.b16 %v631, %v623
  %v976 = vpack.c.b16 %v632, %v624
  %v977 = vpack.c.b16 %v633, %v625
  %v978 = vpack.c.b16 %v634, %v626
  %v979 = vpack.c.b16 %v635, %v627
  %v980 = vpack.c.b16 %v636, %v628
  %v981 = vpack.c.b16 %v637, %v629
  %v982 = vpack.c.b16 %v646, %v638
  %v983 = vpack.c.b16 %v647, %v639
  %v984 = vpack.c.b16 %v648, %v640
  %v985 = vpack.c.b16 %v649, %v641
  %v986 = vpack.c.b16 %v650, %v642
  %v987 = vpack.c.b16 %v651, %v643
  %v988 = vpack.c.b16 %v652, %v644
  %v989 = vpack.c.b16 %v653, %v645
  %v990 = vpack.c.b16 %v662, %v654
  %v991 = vpack.c.b16 %v663, %v655
  %v992 = vpack.c.b16 %v664, %v656
  %v993 = vpack.c.b16 %v665, %v657
  %v994 = vpack.c.b16 %v666, %v658
  %v995 = vpack.c.b16 %v667, %v659
  %v996 = vpack.c.b16 %v668, %v660
  %v997 = vpack.c.b16 %v669, %v661
  %v998 = vpack.c.b16 %v678, %v670
  %v999 = vpack.c.b16 %v679, %v671
  %v1000 = vpack.c.b16 %v680, %v672
  %v1001 = vpack.c.b16 %v681, %v673
  %v1002 = vpack.c.b16 %v682, %v674
  %v1003 = vpack.c.b16 %v683, %v675
  %v1004 = vpack.c.b16 %v684, %v676
  %v1005 = vpack.c.b16 %v685, %v677
  %v1006 = vpack.c.b16 %v694, %v686
  %v1007 = vpack.c.b16 %v695, %v687
  %v1008 = vpack.c.b16 %v696, %v688
  %v1009 = vpack.c.b16 %v697, %v689
  %v1010 = vpack.c.b16 %v698, %v690
  %v1011 = vpack.c.b16 %v699, %v691
  %v1012 = vpack.c.b16 %v700, %v692
  %v1013 = vpack.c.b16 %v701, %v693
  %v1014 = vpack.c.b16 %v710, %v702
  %v1015 = vpack.c.b16 %v711, %v703
  %v1016 = vpack.c.b16 %v712, %v704
  %v1017 = vpack.c.b16 %v713, %v705
  %v1018 = vpack.c.b16 %v714, %v706
  %v1019 = vpack.c.b16 %v715, %v707
  %v1020 = vpack.c.b16 %v716, %v708
  %v1021 = vpack.c.b16 %v717, %v709
  %v1022 = vpack.c.b16 %v726, %v718
  %v1023 = vpack.c.b16 %v727, %v719
  %v1024 = vpack.c.b16 %v728, %v720
  %v1025 = vpack.c.b16 %v729, %v721
  %v1026 = vpack.c.b16 %v730, %v722
  %v1027 = vpack.c.b16 %v731, %v723
  %v1028 = vpack.c.b16 %v732, %v724
  %v1029 = vpack.c.b16 %v733, %v725
  %v1030 = vpack.c.b16 %v742, %v734
  %v1031 = vpack.c.b16 %v743, %v735
  %v1032 = vpack.c.b16 %v744, %v736
  %v1033 = vpack.c.b16 %v745, %v737
  %v1034 = vpack.c.b16 %v746, %v738
  %v1035 = vpack.c.b16 %v747, %v739
  %v1036 = vpack.c.b16 %v748, %v740
  %v1037 = vpack.c.b16 %v749, %v741
  %v1038 = vpack.c.b16 %v758, %v750
  %v1039 = vpack.c.b16 %v759, %v751
  %v1040 = vpack.c.b16 %v760, %v752
  %v1041 = vpack.c.b16 %v761, %v753
  %v1042 = vpack.c.b16 %v762, %v754
  %v1043 = vpack.c.b16 %v763, %v755
  %v1044 = vpack.c.b16 %v764, %v756
  %v1045 = vpack.c.b16 %v765, %v757
  %v1046 = vpack.c.b16 %v774, %v766
  %v1047 = vpack.c.b16 %v775, %v767
  %v1048 = vpack.c.b16 %v776, %v768
  %v1049 = vpack.c.b16 %v777, %v769
  %v1050 = vpack.c.b16 %v778, %v770
  %v1051 = vpack.c.b16 %v779, %v771
  %v1052 = vpack.c.b16 %v780, %v772
  %v1053 = vpack.c.b16 %v781, %v773
  %v1054 = vpack.c.b16 %v790, %v782
  %v1055 = vpack.c.b16 %v791, %v783
  %v1056 = vpack.c.b16 %v792, %v784
  %v1057 = vpack.c.b16 %v793, %v785
  %v1058 = vpack.c.b16 %v794, %v786
  %v1059 = vpack.c.b16 %v795, %v787
  %v1060 = vpack.c.b16 %v796, %v788
  %v1061 = vpack.c.b16 %v797, %v789
  %v1062 = vpack.c.b16 %v806, %v798
  %v1063 = vpack.c.b16 %v807, %v799
  %v1064 = vpack.c.b16 %v808, %v800
  %v1065 = vpack.c.b16 %v809, %v801
  %v1066 = vpack.c.b16 %v810, %v802
  %v1067 = vpack.c.b16 %v811, %v803
  %v1068 = vpack.c.b16 %v812, %v804
  %v1069 = vpack.c.b16 %v813, %v805
  %v1070 = vpack.c.b16 %v822, %v814
  %v1071 = vpack.c.b16 %v823, %v815
  %v1072 = vpack.c.b16 %v824, %v816
  %v1073 = vpack.c.b16 %v825, %v817
  %v1074 = vpack.c.b16 %v826, %v818
  %v1075 = vpack.c.b16 %v827, %v819
  %v1076 = vpack.c.b16 %v828, %v820
  %v1077 = vpack.c.b16 %v829, %v821
  %v1078 = vpack.c.b16 %v838, %v830
  %v1079 = vpack.c.b16 %v839, %v831
  %v1080 = vpack.c.b16 %v840, %v832
  %v1081 = vpack.c.b16 %v841, %v833
  %v1082 = vpack.c.b16 %v842, %v834
  %v1083 = vpack.c.b16 %v843, %v835
  %v1084 = vpack.c.b16 %v844, %v836
  %v1085 = vpack.c.b16 %v845, %v837
  %v1086 = vpack.c.b16 %v854, %v846
  %v1087 = vpack.c.b16 %v855, %v847
  %v1088 = vpack.c.b16 %v856, %v848
  %v1089 = vpack.c.b16 %v857, %v849
  %v1090 = vpack.c.b16 %v858, %v850
  %v1091 = vpack.c.b16 %v859, %v851
  %v1092 = vpack.c.b16 %v860, %v852
  %v1093 = vpack.c.b16 %v861, %v853
  %v1094 = vpack.c.b16 %v870, %v862
  %v1095 = vpack.c.b16 %v871, %v863
  %v1096 = vpack.c.b16 %v872, %v864
  %v1097 = vpack.c.b16 %v873, %v865
  %v1098 = vpack.c.b16 %v874, %v866
  %v1099 = vpack.c.b16 %v875, %v867
  %v1100 = vpack.c.b16 %v876, %v868
  %v1101 = vpack.c.b16 %v877, %v869
  %v1102 = vpack.c.b16 %v886, %v878
  %v1103 = vpack.c.b16 %v887, %v879
  %v1104 = vpack.c.b16 %v888, %v880
  %v1105 = vpack.c.b16 %v889, %v881
  %v1106 = vpack.c.b16 %v890, %v882
  %v1107 = vpack.c.b16 %v891, %v883
  %v1108 = vpack.c.b16 %v892, %v884
  %v1109 = vpack.c.b16 %v893, %v885
  %v1110 = vpack.c.b16 %v902, %v894
  %v1111 = vpack.c.b16 %v903, %v895
  %v1112 = vpack.c.b16 %v904, %v896
  %v1113 = vpack.c.b16 %v905, %v897
  %v1114 = vpack.c.b16 %v906, %v898
  %v1115 = vpack.c.b16 %v907, %v899
  %v1116 = vpack.c.b16 %v908, %v900
  %v1117 = vpack.c.b16 %v909, %v901
  %v1118 = vpack.c.b16 %v918, %v910
  %v1119 = vpack.c.b16 %v919, %v911
  %v1120 = vpack.c.b16 %v920, %v912
  %v1121 = vpack.c.b16 %v921, %v913
  %v1122 = vpack.c.b16 %v922, %v914
  %v1123 = vpack.c.b16 %v923, %v915
  %v1124 = vpack.c.b16 %v924, %v916
  %v1125 = vpack.c.b16 %v925, %v917
  %v1126 = vpack.c.b16 %v926, %v926
  %v1127 = vpack.c.b16 %v927, %v927
  %v1128 = vpack.c.b16 %v928, %v928
  %v1129 = vpack.c.b16 %v929, %v929
  %v1130 = vpack.c.b16 %v930, %v930
  %v1131 = vpack.c.b16 %v931, %v931
  %v1132 = vpack.c.b16 %v932, %v932
  %v1133 = vpack.c.b16 %v933, %v933
  %v1462 = vunpack.c.l.b16 %v211
  %v1463 = vunpack.c.l.b16 %v212
  %v1464 = vunpack.c.l.b16 %v213
  %v1465 = vunpack.c.l.b16 %v214
  %v1466 = vunpack.c.l.b16 %v215
  %v1467 = vunpack.c.l.b16 %v216
  %v1468 = vunpack.c.l.b16 %v217
  %v1469 = vunpack.c.l.b16 %v218
  %v1470 = vunpack.c.l.b16 %v219
  %v1471 = vunpack.c.l.b16 %v220
  %v1472 = vunpack.c.l.b16 %v221
  %v1473 = vunpack.c.l.b16 %v222
  %v1474 = vunpack.c.l.b16 %v223
  %v1475 = vunpack.c.l.b16 %v224
  %v1476 = vunpack.c.l.b16 %v225
  %v1477 = vunpack.c.l.b16 %v226
  %v1478 = vunpack.c.l.b16 %v227
  %v1479 = vunpack.c.l.b16 %v228
  %v1480 = vunpack.c.l.b16 %v229
  %v1481 = vunpack.c.l.b16 %v230
  %v1482 = vunpack.c.l.b16 %v231
  %v1483 = vunpack.c.l.b16 %v232
  %v1484 = vunpack.c.l.b16 %v233
  %v1485 = vunpack.c.l.b16 %v234
  %v1486 = vunpack.c.l.b16 %v235
  %v1487 = vunpack.c.l.b16 %v236
  %v1488 = vunpack.c.l.b16 %v237
  %v1489 = vunpack.c.l.b16 %v238
  %v1490 = vunpack.c.l.b16 %v239
  %v1491 = vunpack.c.l.b16 %v240
  %v1492 = vunpack.c.l.b16 %v241
  %v1493 = vunpack.c.l.b16 %v242
  %v1494 = vunpack.c.l.b16 %v243
  %v1495 = vunpack.c.l.b16 %v244
  %v1496 = vunpack.c.l.b16 %v245
  %v1497 = vunpack.c.l.b16 %v246
  %v1498 = vunpack.c.l.b16 %v247
  %v1499 = vunpack.c.l.b16 %v248
  %v1500 = vunpack.c.l.b16 %v249
  %v1501 = vunpack.c.l.b16 %v250
  %v1502 = vunpack.c.l.b16 %v251
  %v1503 = vunpack.c.l.b16 %v252
  %v1504 = vunpack.c.l.b16 %v253
  %v1505 = vunpack.c.l.b16 %v254
  %v1506 = vunpack.c.l.b16 %v255
  %v1507 = vunpack.c.l.b16 %v256
  %v1508 = vunpack.c.l.b16 %v257
  %v1509 = vunpack.c.l.b16 %v258
  %v1510 = vunpack.c.l.b16 %v259
  %v1511 = vunpack.c.l.b16 %v260
  %v1512 = vunpack.c.l.b16 %v261
  %v1513 = vunpack.c.l.b16 %v262
  %v1514 = vunpack.c.l.b16 %v263
  %v1515 = vunpack.c.l.b16 %v264
  %v1516 = vunpack.c.l.b16 %v265
  %v1517 = vunpack.c.l.b16 %v266
  %v1518 = vunpack.c.l.b16 %v267
  %v1519 = vunpack.c.l.b16 %v268
  %v1520 = vunpack.c.l.b16 %v269
  %v1521 = vunpack.c.l.b16 %v270
  %v1522 = vunpack.c.l.b16 %v271
  %v1523 = vunpack.c.l.b16 %v272
  %v1524 = vunpack.c.l.b16 %v273
  %v1525 = vunpack.c.l.b16 %v274
  %v1526 = vunpack.c.l.b16 %v275
  %v1527 = vunpack.c.l.b16 %v276
  %v1528 = vunpack.c.l.b16 %v277
  %v1529 = vunpack.c.l.b16 %v278
  %v1530 = vunpack.c.l.b16 %v279
  %v1531 = vunpack.c.l.b16 %v280
  %v1532 = vunpack.c.l.b16 %v281
  %v1533 = vunpack.c.l.b16 %v282
  %v1534 = vunpack.c.l.b16 %v283
  %v1535 = vunpack.c.l.b16 %v284
  %v1536 = vunpack.c.l.b16 %v285
  %v1537 = vunpack.c.l.b16 %v286
  %v1538 = vunpack.c.l.b16 %v287
  %v1539 = vunpack.c.l.b16 %v288
  %v1540 = vunpack.c.l.b16 %v289
  %v1541 = vunpack.c.l.b16 %v290
  %v1542 = vunpack.c.l.b16 %v291
  %v1543 = vunpack.c.l.b16 %v292
  %v1544 = vunpack.c.l.b16 %v293
  %v1545 = vunpack.c.l.b16 %v294
  %v1546 = vunpack.c.l.b16 %v295
  %v1547 = vunpack.c.l.b16 %v296
  %v1548 = vunpack.c.l.b16 %v297
  %v1549 = vunpack.c.l.b16 %v298
  %v1550 = vunpack.c.l.b16 %v299
  %v1551 = vunpack.c.l.b16 %v300
  %v1552 = vunpack.c.l.b16 %v301
  %v1553 = vunpack.c.l.b16 %v302
  %v1554 = vunpack.c.l.b16 %v303
  %v1555 = vunpack.c.l.b16 %v304
  %v1556 = vunpack.c.l.b16 %v305
  %v1557 = vunpack.c.l.b16 %v306
  %v1558 = vunpack.c.l.b16 %v307
  %v1559 = vunpack.c.l.b16 %v308
  %v1560 = vunpack.c.l.b16 %v309
  %v1561 = vunpack.c.l.b16 %v310
  %v1562 = vunpack.c.l.b16 %v311
  %v1563 = vunpack.c.l.b16 %v312
  %v1564 = vunpack.c.l.b16 %v313
  %v1565 = vunpack.c.l.b16 %v314
  %v1566 = vunpack.c.l.b16 %v315
  %v1567 = vunpack.c.l.b16 %v316
  %v1568 = vunpack.c.l.b16 %v317
  %v1569 = vunpack.c.l.b16 %v318
  %v1570 = vunpack.c.l.b16 %v319
  %v1571 = vunpack.c.l.b16 %v320
  %v1572 = vunpack.c.l.b16 %v321
  %v1573 = vunpack.c.l.b16 %v322
  %v1574 = vunpack.c.l.b16 %v323
  %v1575 = vunpack.c.l.b16 %v324
  %v1576 = vunpack.c.l.b16 %v325
  %v1577 = vunpack.c.l.b16 %v326
  %v1578 = vunpack.c.l.b16 %v327
  %v1579 = vunpack.c.l.b16 %v328
  %v1580 = vunpack.c.l.b16 %v329
  %v1581 = vunpack.c.l.b16 %v330
  %v1582 = vunpack.c.l.b16 %v331
  %v1583 = vunpack.c.l.b16 %v332
  %v1584 = vunpack.c.l.b16 %v333
  %v1585 = vunpack.c.l.b16 %v334
  %v1586 = vunpack.c.l.b16 %v335
  %v1587 = vunpack.c.l.b16 %v336
  %v1588 = vunpack.c.l.b16 %v337
  %v1589 = vunpack.c.l.b16 %v338
  %v1590 = vpack.c.b16 %v1463, %v1462
  %v1591 = vpack.c.b16 %v1465, %v1464
  %v1592 = vpack.c.b16 %v1467, %v1466
  %v1593 = vpack.c.b16 %v1469, %v1468
  %v1594 = vpack.c.b16 %v1471, %v1470
  %v1595 = vpack.c.b16 %v1473, %v1472
  %v1596 = vpack.c.b16 %v1475, %v1474
  %v1597 = vpack.c.b16 %v1477, %v1476
  %v1598 = vpack.c.b16 %v1479, %v1478
  %v1599 = vpack.c.b16 %v1481, %v1480
  %v1600 = vpack.c.b16 %v1483, %v1482
  %v1601 = vpack.c.b16 %v1485, %v1484
  %v1602 = vpack.c.b16 %v1487, %v1486
  %v1603 = vpack.c.b16 %v1489, %v1488
  %v1604 = vpack.c.b16 %v1491, %v1490
  %v1605 = vpack.c.b16 %v1493, %v1492
  %v1606 = vpack.c.b16 %v1495, %v1494
  %v1607 = vpack.c.b16 %v1497, %v1496
  %v1608 = vpack.c.b16 %v1499, %v1498
  %v1609 = vpack.c.b16 %v1501, %v1500
  %v1610 = vpack.c.b16 %v1503, %v1502
  %v1611 = vpack.c.b16 %v1505, %v1504
  %v1612 = vpack.c.b16 %v1507, %v1506
  %v1613 = vpack.c.b16 %v1509, %v1508
  %v1614 = vpack.c.b16 %v1511, %v1510
  %v1615 = vpack.c.b16 %v1513, %v1512
  %v1616 = vpack.c.b16 %v1515, %v1514
  %v1617 = vpack.c.b16 %v1517, %v1516
  %v1618 = vpack.c.b16 %v1519, %v1518
  %v1619 = vpack.c.b16 %v1521, %v1520
  %v1620 = vpack.c.b16 %v1523, %v1522
  %v1621 = vpack.c.b16 %v1525, %v1524
  %v1622 = vpack.c.b16 %v1527, %v1526
  %v1623 = vpack.c.b16 %v1529, %v1528
  %v1624 = vpack.c.b16 %v1531, %v1530
  %v1625 = vpack.c.b16 %v1533, %v1532
  %v1626 = vpack.c.b16 %v1535, %v1534
  %v1627 = vpack.c.b16 %v1537, %v1536
  %v1628 = vpack.c.b16 %v1539, %v1538
  %v1629 = vpack.c.b16 %v1541, %v1540
  %v1630 = vpack.c.b16 %v1543, %v1542
  %v1631 = vpack.c.b16 %v1545, %v1544
  %v1632 = vpack.c.b16 %v1547, %v1546
  %v1633 = vpack.c.b16 %v1549, %v1548
  %v1634 = vpack.c.b16 %v1551, %v1550
  %v1635 = vpack.c.b16 %v1553, %v1552
  %v1636 = vpack.c.b16 %v1555, %v1554
  %v1637 = vpack.c.b16 %v1557, %v1556
  %v1638 = vpack.c.b16 %v1559, %v1558
  %v1639 = vpack.c.b16 %v1561, %v1560
  %v1640 = vpack.c.b16 %v1563, %v1562
  %v1641 = vpack.c.b16 %v1565, %v1564
  %v1642 = vpack.c.b16 %v1567, %v1566
  %v1643 = vpack.c.b16 %v1569, %v1568
  %v1644 = vpack.c.b16 %v1571, %v1570
  %v1645 = vpack.c.b16 %v1573, %v1572
  %v1646 = vpack.c.b16 %v1575, %v1574
  %v1647 = vpack.c.b16 %v1577, %v1576
  %v1648 = vpack.c.b16 %v1579, %v1578
  %v1649 = vpack.c.b16 %v1581, %v1580
  %v1650 = vpack.c.b16 %v1583, %v1582
  %v1651 = vpack.c.b16 %v1585, %v1584
  %v1652 = vpack.c.b16 %v1587, %v1586
  %v1653 = vpack.c.b16 %v1589, %v1588
  %1718 = vmatprep.subr.bf16.mxu0 0
  %1719 = vmatpush1.bf16.msra.mxu0 %v1590
  %1720 = vmatprep.subr.bf16.mxu0 0
  %1721 = vmatpush1.bf16.msra.mxu0 %v1591
  %1722 = vmatprep.subr.bf16.mxu0 0
  %1723 = vmatpush1.bf16.msra.mxu0 %v1592
  %1724 = vmatprep.subr.bf16.mxu0 0
  %1725 = vmatpush1.bf16.msra.mxu0 %v1593
  %1726 = vmatprep.subr.bf16.mxu0 0
  %1727 = vmatpush1.bf16.msra.mxu0 %v1594
  %1728 = vmatprep.subr.bf16.mxu0 0
  %1729 = vmatpush1.bf16.msra.mxu0 %v1595
  %1730 = vmatprep.subr.bf16.mxu0 0
  %1731 = vmatpush1.bf16.msra.mxu0 %v1596
  %1732 = vmatprep.subr.bf16.mxu0 0
  %1733 = vmatpush1.bf16.msra.mxu0 %v1597
  %1734 = vmatprep.subr.bf16.mxu0 0
  %1735 = vmatpush1.bf16.msra.mxu0 %v1598
  %1736 = vmatprep.subr.bf16.mxu0 0
  %1737 = vmatpush1.bf16.msra.mxu0 %v1599
  %1738 = vmatprep.subr.bf16.mxu0 0
  %1739 = vmatpush1.bf16.msra.mxu0 %v1600
  %1740 = vmatprep.subr.bf16.mxu0 0
  %1741 = vmatpush1.bf16.msra.mxu0 %v1601
  %1742 = vmatprep.subr.bf16.mxu0 0
  %1743 = vmatpush1.bf16.msra.mxu0 %v1602
  %1744 = vmatprep.subr.bf16.mxu0 0
  %1745 = vmatpush1.bf16.msra.mxu0 %v1603
  %1746 = vmatprep.subr.bf16.mxu0 0
  %1747 = vmatpush1.bf16.msra.mxu0 %v1604
  %1748 = vmatprep.subr.bf16.mxu0 0
  %1749 = vmatpush1.bf16.msra.mxu0 %v1605
  %1750 = vmatprep.mubr.bf16.mxu0 %v935
  %1751 = vmatmul.mubr.bf16.gmra.mrb[0].mxu0 %v934
  %v1752 = vpop.f32.mrb[0].mxu0
  %v1753 = vadd.f32 %v344, %v1752
  %v1754 = vpop.f32.mrb[0].mxu0
  %v1755 = vpop.f32.mrb[0].mxu0
  %v1756 = vadd.f32 %v344, %v1755
  %v1757 = vpop.f32.mrb[0].mxu0
  %1758 = vmatprep.mubr.bf16.mxu0 %v943
  %1759 = vmatmul.mubr.bf16.gmra.mrb[0].mxu0 %v942
  %v1760 = vpop.f32.mrb[0].mxu0
  %v1761 = vadd.f32 %v344, %v1760
  %v1762 = vpop.f32.mrb[0].mxu0
  %v1763 = vpop.f32.mrb[0].mxu0
  %v1764 = vadd.f32 %v344, %v1763
  %v1765 = vpop.f32.mrb[0].mxu0
  %1766 = vmatprep.mubr.bf16.mxu0 %v951
  %1767 = vmatmul.mubr.bf16.gmra.mrb[0].mxu0 %v950
  %v1768 = vpop.f32.mrb[0].mxu0
  %v1769 = vadd.f32 %v344, %v1768
  %v1770 = vpop.f32.mrb[0].mxu0
  %v1771 = vpop.f32.mrb[0].mxu0
  %v1772 = vadd.f32 %v344, %v1771
  %v1773 = vpop.f32.mrb[0].mxu0
  %1774 = vmatprep.mubr.bf16.mxu0 %v959
  %1775 = vmatmul.mubr.bf16.gmra.mrb[0].mxu0 %v958
  %v1776 = vpop.f32.mrb[0].mxu0
  %v1777 = vadd.f32 %v344, %v1776
  %v1778 = vpop.f32.mrb[0].mxu0
  %v1779 = vpop.f32.mrb[0].mxu0
  %v1780 = vadd.f32 %v344, %v1779
  %v1781 = vpop.f32.mrb[0].mxu0
  %1782 = vmatprep.mubr.bf16.mxu0 %v967
  %1783 = vmatmul.mubr.bf16.gmra.mrb[0].mxu0 %v966
  %v1784 = vpop.f32.mrb[0].mxu0
  %v1785 = vadd.f32 %v344, %v1784
  %v1786 = vpop.f32.mrb[0].mxu0
  %v1787 = vpop.f32.mrb[0].mxu0
  %v1788 = vadd.f32 %v344, %v1787
  %v1789 = vpop.f32.mrb[0].mxu0
  %1790 = vmatprep.mubr.bf16.mxu0 %v975
  %1791 = vmatmul.mubr.bf16.gmra.mrb[0].mxu0 %v974
  %v1792 = vpop.f32.mrb[0].mxu0
  %v1793 = vadd.f32 %v344, %v1792
  %v1794 = vpop.f32.mrb[0].mxu0
  %v1795 = vpop.f32.mrb[0].mxu0
  %v1796 = vadd.f32 %v344, %v1795
  %v1797 = vpop.f32.mrb[0].mxu0
  %1798 = vmatprep.mubr.bf16.mxu0 %v983
  %1799 = vmatmul.mubr.bf16.gmra.mrb[0].mxu0 %v982
  %v1800 = vpop.f32.mrb[0].mxu0
  %v1801 = vadd.f32 %v344, %v1800
  %v1802 = vpop.f32.mrb[0].mxu0
  %v1803 = vpop.f32.mrb[0].mxu0
  %v1804 = vadd.f32 %v344, %v1803
  %v1805 = vpop.f32.mrb[0].mxu0
  %1806 = vmatprep.mubr.bf16.mxu0 %v991
  %1807 = vmatmul.mubr.bf16.gmra.mrb[0].mxu0 %v990
  %v1808 = vpop.f32.mrb[0].mxu0
  %v1809 = vadd.f32 %v344, %v1808
  %v1810 = vpop.f32.mrb[0].mxu0
  %v1811 = vpop.f32.mrb[0].mxu0
  %v1812 = vadd.f32 %v344, %v1811
  %v1813 = vpop.f32.mrb[0].mxu0
  %1814 = vmatprep.mubr.bf16.mxu0 %v999
  %1815 = vmatmul.mubr.bf16.gmra.mrb[0].mxu0 %v998
  %v1816 = vpop.f32.mrb[0].mxu0
  %v1817 = vadd.f32 %v344, %v1816
  %v1818 = vpop.f32.mrb[0].mxu0
  %v1819 = vpop.f32.mrb[0].mxu0
  %v1820 = vadd.f32 %v344, %v1819
  %v1821 = vpop.f32.mrb[0].mxu0
  %1822 = vmatprep.mubr.bf16.mxu0 %v1007
  %1823 = vmatmul.mubr.bf16.gmra.mrb[0].mxu0 %v1006
  %v1824 = vpop.f32.mrb[0].mxu0
  %v1825 = vadd.f32 %v344, %v1824
  %v1826 = vpop.f32.mrb[0].mxu0
  %v1827 = vpop.f32.mrb[0].mxu0
  %v1828 = vadd.f32 %v344, %v1827
  %v1829 = vpop.f32.mrb[0].mxu0
  %1830 = vmatprep.mubr.bf16.mxu0 %v1015
  %1831 = vmatmul.mubr.bf16.gmra.mrb[0].mxu0 %v1014
  %v1832 = vpop.f32.mrb[0].mxu0
  %v1833 = vadd.f32 %v344, %v1832
  %v1834 = vpop.f32.mrb[0].mxu0
  %v1835 = vpop.f32.mrb[0].mxu0
  %v1836 = vadd.f32 %v344, %v1835
  %v1837 = vpop.f32.mrb[0].mxu0
  %1838 = vmatprep.mubr.bf16.mxu0 %v1023
  %1839 = vmatmul.mubr.bf16.gmra.mrb[0].mxu0 %v1022
  %v1840 = vpop.f32.mrb[0].mxu0
  %v1841 = vadd.f32 %v344, %v1840
  %v1842 = vpop.f32.mrb[0].mxu0
  %v1843 = vpop.f32.mrb[0].mxu0
  %v1844 = vadd.f32 %v344, %v1843
  %v1845 = vpop.f32.mrb[0].mxu0
  %1846 = vmatprep.mubr.bf16.mxu0 %v1031
  %1847 = vmatmul.mubr.bf16.gmra.mrb[0].mxu0 %v1030
  %v1848 = vpop.f32.mrb[0].mxu0
  %v1849 = vadd.f32 %v344, %v1848
  %v1850 = vpop.f32.mrb[0].mxu0
  %v1851 = vpop.f32.mrb[0].mxu0
  %v1852 = vadd.f32 %v344, %v1851
  %v1853 = vpop.f32.mrb[0].mxu0
  %1854 = vmatprep.mubr.bf16.mxu0 %v1039
  %1855 = vmatmul.mubr.bf16.gmra.mrb[0].mxu0 %v1038
  %v1856 = vpop.f32.mrb[0].mxu0
  %v1857 = vadd.f32 %v344, %v1856
  %v1858 = vpop.f32.mrb[0].mxu0
  %v1859 = vpop.f32.mrb[0].mxu0
  %v1860 = vadd.f32 %v344, %v1859
  %v1861 = vpop.f32.mrb[0].mxu0
  %1862 = vmatprep.mubr.bf16.mxu0 %v1047
  %1863 = vmatmul.mubr.bf16.gmra.mrb[0].mxu0 %v1046
  %v1864 = vpop.f32.mrb[0].mxu0
  %v1865 = vadd.f32 %v344, %v1864
  %v1866 = vpop.f32.mrb[0].mxu0
  %v1867 = vpop.f32.mrb[0].mxu0
  %v1868 = vadd.f32 %v344, %v1867
  %v1869 = vpop.f32.mrb[0].mxu0
  %1870 = vmatprep.mubr.bf16.mxu0 %v1055
  %1871 = vmatmul.mubr.bf16.gmra.mrb[0].mxu0 %v1054
  %v1872 = vpop.f32.mrb[0].mxu0
  %v1873 = vadd.f32 %v344, %v1872
  %v1874 = vpop.f32.mrb[0].mxu0
  %v1875 = vpop.f32.mrb[0].mxu0
  %v1876 = vadd.f32 %v344, %v1875
  %v1877 = vpop.f32.mrb[0].mxu0
  %1878 = vmatprep.mubr.bf16.mxu0 %v1063
  %1879 = vmatmul.mubr.bf16.gmra.mrb[0].mxu0 %v1062
  %v1880 = vpop.f32.mrb[0].mxu0
  %v1881 = vadd.f32 %v344, %v1880
  %v1882 = vpop.f32.mrb[0].mxu0
  %v1883 = vpop.f32.mrb[0].mxu0
  %v1884 = vadd.f32 %v344, %v1883
  %v1885 = vpop.f32.mrb[0].mxu0
  %1886 = vmatprep.mubr.bf16.mxu0 %v1071
  %1887 = vmatmul.mubr.bf16.gmra.mrb[0].mxu0 %v1070
  %v1888 = vpop.f32.mrb[0].mxu0
  %v1889 = vadd.f32 %v344, %v1888
  %v1890 = vpop.f32.mrb[0].mxu0
  %v1891 = vpop.f32.mrb[0].mxu0
  %v1892 = vadd.f32 %v344, %v1891
  %v1893 = vpop.f32.mrb[0].mxu0
  %1894 = vmatprep.mubr.bf16.mxu0 %v1079
  %1895 = vmatmul.mubr.bf16.gmra.mrb[0].mxu0 %v1078
  %v1896 = vpop.f32.mrb[0].mxu0
  %v1897 = vadd.f32 %v344, %v1896
  %v1898 = vpop.f32.mrb[0].mxu0
  %v1899 = vpop.f32.mrb[0].mxu0
  %v1900 = vadd.f32 %v344, %v1899
  %v1901 = vpop.f32.mrb[0].mxu0
  %1902 = vmatprep.mubr.bf16.mxu0 %v1087
  %1903 = vmatmul.mubr.bf16.gmra.mrb[0].mxu0 %v1086
  %v1904 = vpop.f32.mrb[0].mxu0
  %v1905 = vadd.f32 %v344, %v1904
  %v1906 = vpop.f32.mrb[0].mxu0
  %v1907 = vpop.f32.mrb[0].mxu0
  %v1908 = vadd.f32 %v344, %v1907
  %v1909 = vpop.f32.mrb[0].mxu0
  %1910 = vmatprep.mubr.bf16.mxu0 %v1095
  %1911 = vmatmul.mubr.bf16.gmra.mrb[0].mxu0 %v1094
  %v1912 = vpop.f32.mrb[0].mxu0
  %v1913 = vadd.f32 %v344, %v1912
  %v1914 = vpop.f32.mrb[0].mxu0
  %v1915 = vpop.f32.mrb[0].mxu0
  %v1916 = vadd.f32 %v344, %v1915
  %v1917 = vpop.f32.mrb[0].mxu0
  %1918 = vmatprep.mubr.bf16.mxu0 %v1103
  %1919 = vmatmul.mubr.bf16.gmra.mrb[0].mxu0 %v1102
  %v1920 = vpop.f32.mrb[0].mxu0
  %v1921 = vadd.f32 %v344, %v1920
  %v1922 = vpop.f32.mrb[0].mxu0
  %v1923 = vpop.f32.mrb[0].mxu0
  %v1924 = vadd.f32 %v344, %v1923
  %v1925 = vpop.f32.mrb[0].mxu0
  %1926 = vmatprep.mubr.bf16.mxu0 %v1111
  %1927 = vmatmul.mubr.bf16.gmra.mrb[0].mxu0 %v1110
  %v1928 = vpop.f32.mrb[0].mxu0
  %v1929 = vadd.f32 %v344, %v1928
  %v1930 = vpop.f32.mrb[0].mxu0
  %v1931 = vpop.f32.mrb[0].mxu0
  %v1932 = vadd.f32 %v344, %v1931
  %v1933 = vpop.f32.mrb[0].mxu0
  %1934 = vmatprep.mubr.bf16.mxu0 %v1119
  %1935 = vmatmul.mubr.bf16.gmra.mrb[0].mxu0 %v1118
  %v1936 = vpop.f32.mrb[0].mxu0
  %v1937 = vadd.f32 %v344, %v1936
  %v1938 = vpop.f32.mrb[0].mxu0
  %v1939 = vpop.f32.mrb[0].mxu0
  %v1940 = vadd.f32 %v344, %v1939
  %v1941 = vpop.f32.mrb[0].mxu0
  %1942 = vmatprep.mubr.bf16.mxu0 %v1127
  %1943 = vmatmul.mubr.bf16.gmra.mrb[0].mxu0 %v1126
  %v1944 = vpop.f32.mrb[0].mxu0
  %v1945 = vadd.f32 %v344, %v1944
  %v1946 = vpop.f32.mrb[0].mxu0
  %v1947 = vpop.f32.mrb[0].mxu0
  %v1948 = vpop.f32.mrb[0].mxu0
  %1949 = vdwg.mxu0
  %1950 = vmatprep.subr.bf16.mxu0 0
  %1951 = vmatpush1.bf16.msra.mxu0 %v1606
  %1952 = vmatprep.subr.bf16.mxu0 0
  %1953 = vmatpush1.bf16.msra.mxu0 %v1607
  %1954 = vmatprep.subr.bf16.mxu0 0
  %1955 = vmatpush1.bf16.msra.mxu0 %v1608
  %1956 = vmatprep.subr.bf16.mxu0 0
  %1957 = vmatpush1.bf16.msra.mxu0 %v1609
  %1958 = vmatprep.subr.bf16.mxu0 0
  %1959 = vmatpush1.bf16.msra.mxu0 %v1610
  %1960 = vmatprep.subr.bf16.mxu0 0
  %1961 = vmatpush1.bf16.msra.mxu0 %v1611
  %1962 = vmatprep.subr.bf16.mxu0 0
  %1963 = vmatpush1.bf16.msra.mxu0 %v1612
  %1964 = vmatprep.subr.bf16.mxu0 0
  %1965 = vmatpush1.bf16.msra.mxu0 %v1613
  %1966 = vmatprep.subr.bf16.mxu0 0
  %1967 = vmatpush1.bf16.msra.mxu0 %v1614
  %1968 = vmatprep.subr.bf16.mxu0 0
  %1969 = vmatpush1.bf16.msra.mxu0 %v1615
  %1970 = vmatprep.subr.bf16.mxu0 0
  %1971 = vmatpush1.bf16.msra.mxu0 %v1616
  %1972 = vmatprep.subr.bf16.mxu0 0
  %1973 = vmatpush1.bf16.msra.mxu0 %v1617
  %1974 = vmatprep.subr.bf16.mxu0 0
  %1975 = vmatpush1.bf16.msra.mxu0 %v1618
  %1976 = vmatprep.subr.bf16.mxu0 0
  %1977 = vmatpush1.bf16.msra.mxu0 %v1619
  %1978 = vmatprep.subr.bf16.mxu0 0
  %1979 = vmatpush1.bf16.msra.mxu0 %v1620
  %1980 = vmatprep.subr.bf16.mxu0 0
  %1981 = vmatpush1.bf16.msra.mxu0 %v1621
  %1982 = vmatprep.mubr.bf16.mxu0 %v937
  %1983 = vmatmul.mubr.bf16.gmra.mrb[0].mxu0 %v936
  %v1984 = vpop.f32.mrb[0].mxu0
  %v1985 = vadd.f32 %v1753, %v1984
  %v1986 = vpop.f32.mrb[0].mxu0
  %v1987 = vpop.f32.mrb[0].mxu0
  %v1988 = vadd.f32 %v1756, %v1987
  %v1989 = vpop.f32.mrb[0].mxu0
  %1990 = vmatprep.mubr.bf16.mxu0 %v945
  %1991 = vmatmul.mubr.bf16.gmra.mrb[0].mxu0 %v944
  %v1992 = vpop.f32.mrb[0].mxu0
  %v1993 = vadd.f32 %v1761, %v1992
  %v1994 = vpop.f32.mrb[0].mxu0
  %v1995 = vpop.f32.mrb[0].mxu0
  %v1996 = vadd.f32 %v1764, %v1995
  %v1997 = vpop.f32.mrb[0].mxu0
  %1998 = vmatprep.mubr.bf16.mxu0 %v953
  %1999 = vmatmul.mubr.bf16.gmra.mrb[0].mxu0 %v952
  %v2000 = vpop.f32.mrb[0].mxu0
  %v2001 = vadd.f32 %v1769, %v2000
  %v2002 = vpop.f32.mrb[0].mxu0
  %v2003 = vpop.f32.mrb[0].mxu0
  %v2004 = vadd.f32 %v1772, %v2003
  %v2005 = vpop.f32.mrb[0].mxu0
  %2006 = vmatprep.mubr.bf16.mxu0 %v961
  %2007 = vmatmul.mubr.bf16.gmra.mrb[0].mxu0 %v960
  %v2008 = vpop.f32.mrb[0].mxu0
  %v2009 = vadd.f32 %v1777, %v2008
  %v2010 = vpop.f32.mrb[0].mxu0
  %v2011 = vpop.f32.mrb[0].mxu0
  %v2012 = vadd.f32 %v1780, %v2011
  %v2013 = vpop.f32.mrb[0].mxu0
  %2014 = vmatprep.mubr.bf16.mxu0 %v969
  %2015 = vmatmul.mubr.bf16.gmra.mrb[0].mxu0 %v968
  %v2016 = vpop.f32.mrb[0].mxu0
  %v2017 = vadd.f32 %v1785, %v2016
  %v2018 = vpop.f32.mrb[0].mxu0
  %v2019 = vpop.f32.mrb[0].mxu0
  %v2020 = vadd.f32 %v1788, %v2019
  %v2021 = vpop.f32.mrb[0].mxu0
  %2022 = vmatprep.mubr.bf16.mxu0 %v977
  %2023 = vmatmul.mubr.bf16.gmra.mrb[0].mxu0 %v976
  %v2024 = vpop.f32.mrb[0].mxu0
  %v2025 = vadd.f32 %v1793, %v2024
  %v2026 = vpop.f32.mrb[0].mxu0
  %v2027 = vpop.f32.mrb[0].mxu0
  %v2028 = vadd.f32 %v1796, %v2027
  %v2029 = vpop.f32.mrb[0].mxu0
  %2030 = vmatprep.mubr.bf16.mxu0 %v985
  %2031 = vmatmul.mubr.bf16.gmra.mrb[0].mxu0 %v984
  %v2032 = vpop.f32.mrb[0].mxu0
  %v2033 = vadd.f32 %v1801, %v2032
  %v2034 = vpop.f32.mrb[0].mxu0
  %v2035 = vpop.f32.mrb[0].mxu0
  %v2036 = vadd.f32 %v1804, %v2035
  %v2037 = vpop.f32.mrb[0].mxu0
  %2038 = vmatprep.mubr.bf16.mxu0 %v993
  %2039 = vmatmul.mubr.bf16.gmra.mrb[0].mxu0 %v992
  %v2040 = vpop.f32.mrb[0].mxu0
  %v2041 = vadd.f32 %v1809, %v2040
  %v2042 = vpop.f32.mrb[0].mxu0
  %v2043 = vpop.f32.mrb[0].mxu0
  %v2044 = vadd.f32 %v1812, %v2043
  %v2045 = vpop.f32.mrb[0].mxu0
  %2046 = vmatprep.mubr.bf16.mxu0 %v1001
  %2047 = vmatmul.mubr.bf16.gmra.mrb[0].mxu0 %v1000
  %v2048 = vpop.f32.mrb[0].mxu0
  %v2049 = vadd.f32 %v1817, %v2048
  %v2050 = vpop.f32.mrb[0].mxu0
  %v2051 = vpop.f32.mrb[0].mxu0
  %v2052 = vadd.f32 %v1820, %v2051
  %v2053 = vpop.f32.mrb[0].mxu0
  %2054 = vmatprep.mubr.bf16.mxu0 %v1009
  %2055 = vmatmul.mubr.bf16.gmra.mrb[0].mxu0 %v1008
  %v2056 = vpop.f32.mrb[0].mxu0
  %v2057 = vadd.f32 %v1825, %v2056
  %v2058 = vpop.f32.mrb[0].mxu0
  %v2059 = vpop.f32.mrb[0].mxu0
  %v2060 = vadd.f32 %v1828, %v2059
  %v2061 = vpop.f32.mrb[0].mxu0
  %2062 = vmatprep.mubr.bf16.mxu0 %v1017
  %2063 = vmatmul.mubr.bf16.gmra.mrb[0].mxu0 %v1016
  %v2064 = vpop.f32.mrb[0].mxu0
  %v2065 = vadd.f32 %v1833, %v2064
  %v2066 = vpop.f32.mrb[0].mxu0
  %v2067 = vpop.f32.mrb[0].mxu0
  %v2068 = vadd.f32 %v1836, %v2067
  %v2069 = vpop.f32.mrb[0].mxu0
  %2070 = vmatprep.mubr.bf16.mxu0 %v1025
  %2071 = vmatmul.mubr.bf16.gmra.mrb[0].mxu0 %v1024
  %v2072 = vpop.f32.mrb[0].mxu0
  %v2073 = vadd.f32 %v1841, %v2072
  %v2074 = vpop.f32.mrb[0].mxu0
  %v2075 = vpop.f32.mrb[0].mxu0
  %v2076 = vadd.f32 %v1844, %v2075
  %v2077 = vpop.f32.mrb[0].mxu0
  %2078 = vmatprep.mubr.bf16.mxu0 %v1033
  %2079 = vmatmul.mubr.bf16.gmra.mrb[0].mxu0 %v1032
  %v2080 = vpop.f32.mrb[0].mxu0
  %v2081 = vadd.f32 %v1849, %v2080
  %v2082 = vpop.f32.mrb[0].mxu0
  %v2083 = vpop.f32.mrb[0].mxu0
  %v2084 = vadd.f32 %v1852, %v2083
  %v2085 = vpop.f32.mrb[0].mxu0
  %2086 = vmatprep.mubr.bf16.mxu0 %v1041
  %2087 = vmatmul.mubr.bf16.gmra.mrb[0].mxu0 %v1040
  %v2088 = vpop.f32.mrb[0].mxu0
  %v2089 = vadd.f32 %v1857, %v2088
  %v2090 = vpop.f32.mrb[0].mxu0
  %v2091 = vpop.f32.mrb[0].mxu0
  %v2092 = vadd.f32 %v1860, %v2091
  %v2093 = vpop.f32.mrb[0].mxu0
  %2094 = vmatprep.mubr.bf16.mxu0 %v1049
  %2095 = vmatmul.mubr.bf16.gmra.mrb[0].mxu0 %v1048
  %v2096 = vpop.f32.mrb[0].mxu0
  %v2097 = vadd.f32 %v1865, %v2096
  %v2098 = vpop.f32.mrb[0].mxu0
  %v2099 = vpop.f32.mrb[0].mxu0
  %v2100 = vadd.f32 %v1868, %v2099
  %v2101 = vpop.f32.mrb[0].mxu0
  %2102 = vmatprep.mubr.bf16.mxu0 %v1057
  %2103 = vmatmul.mubr.bf16.gmra.mrb[0].mxu0 %v1056
  %v2104 = vpop.f32.mrb[0].mxu0
  %v2105 = vadd.f32 %v1873, %v2104
  %v2106 = vpop.f32.mrb[0].mxu0
  %v2107 = vpop.f32.mrb[0].mxu0
  %v2108 = vadd.f32 %v1876, %v2107
  %v2109 = vpop.f32.mrb[0].mxu0
  %2110 = vmatprep.mubr.bf16.mxu0 %v1065
  %2111 = vmatmul.mubr.bf16.gmra.mrb[0].mxu0 %v1064
  %v2112 = vpop.f32.mrb[0].mxu0
  %v2113 = vadd.f32 %v1881, %v2112
  %v2114 = vpop.f32.mrb[0].mxu0
  %v2115 = vpop.f32.mrb[0].mxu0
  %v2116 = vadd.f32 %v1884, %v2115
  %v2117 = vpop.f32.mrb[0].mxu0
  %2118 = vmatprep.mubr.bf16.mxu0 %v1073
  %2119 = vmatmul.mubr.bf16.gmra.mrb[0].mxu0 %v1072
  %v2120 = vpop.f32.mrb[0].mxu0
  %v2121 = vadd.f32 %v1889, %v2120
  %v2122 = vpop.f32.mrb[0].mxu0
  %v2123 = vpop.f32.mrb[0].mxu0
  %v2124 = vadd.f32 %v1892, %v2123
  %v2125 = vpop.f32.mrb[0].mxu0
  %2126 = vmatprep.mubr.bf16.mxu0 %v1081
  %2127 = vmatmul.mubr.bf16.gmra.mrb[0].mxu0 %v1080
  %v2128 = vpop.f32.mrb[0].mxu0
  %v2129 = vadd.f32 %v1897, %v2128
  %v2130 = vpop.f32.mrb[0].mxu0
  %v2131 = vpop.f32.mrb[0].mxu0
  %v2132 = vadd.f32 %v1900, %v2131
  %v2133 = vpop.f32.mrb[0].mxu0
  %2134 = vmatprep.mubr.bf16.mxu0 %v1089
  %2135 = vmatmul.mubr.bf16.gmra.mrb[0].mxu0 %v1088
  %v2136 = vpop.f32.mrb[0].mxu0
  %v2137 = vadd.f32 %v1905, %v2136
  %v2138 = vpop.f32.mrb[0].mxu0
  %v2139 = vpop.f32.mrb[0].mxu0
  %v2140 = vadd.f32 %v1908, %v2139
  %v2141 = vpop.f32.mrb[0].mxu0
  %2142 = vmatprep.mubr.bf16.mxu0 %v1097
  %2143 = vmatmul.mubr.bf16.gmra.mrb[0].mxu0 %v1096
  %v2144 = vpop.f32.mrb[0].mxu0
  %v2145 = vadd.f32 %v1913, %v2144
  %v2146 = vpop.f32.mrb[0].mxu0
  %v2147 = vpop.f32.mrb[0].mxu0
  %v2148 = vadd.f32 %v1916, %v2147
  %v2149 = vpop.f32.mrb[0].mxu0
  %2150 = vmatprep.mubr.bf16.mxu0 %v1105
  %2151 = vmatmul.mubr.bf16.gmra.mrb[0].mxu0 %v1104
  %v2152 = vpop.f32.mrb[0].mxu0
  %v2153 = vadd.f32 %v1921, %v2152
  %v2154 = vpop.f32.mrb[0].mxu0
  %v2155 = vpop.f32.mrb[0].mxu0
  %v2156 = vadd.f32 %v1924, %v2155
  %v2157 = vpop.f32.mrb[0].mxu0
  %2158 = vmatprep.mubr.bf16.mxu0 %v1113
  %2159 = vmatmul.mubr.bf16.gmra.mrb[0].mxu0 %v1112
  %v2160 = vpop.f32.mrb[0].mxu0
  %v2161 = vadd.f32 %v1929, %v2160
  %v2162 = vpop.f32.mrb[0].mxu0
  %v2163 = vpop.f32.mrb[0].mxu0
  %v2164 = vadd.f32 %v1932, %v2163
  %v2165 = vpop.f32.mrb[0].mxu0
  %2166 = vmatprep.mubr.bf16.mxu0 %v1121
  %2167 = vmatmul.mubr.bf16.gmra.mrb[0].mxu0 %v1120
  %v2168 = vpop.f32.mrb[0].mxu0
  %v2169 = vadd.f32 %v1937, %v2168
  %v2170 = vpop.f32.mrb[0].mxu0
  %v2171 = vpop.f32.mrb[0].mxu0
  %v2172 = vadd.f32 %v1940, %v2171
  %v2173 = vpop.f32.mrb[0].mxu0
  %2174 = vmatprep.mubr.bf16.mxu0 %v1129
  %2175 = vmatmul.mubr.bf16.gmra.mrb[0].mxu0 %v1128
  %v2176 = vpop.f32.mrb[0].mxu0
  %v2177 = vadd.f32 %v1945, %v2176
  %v2178 = vpop.f32.mrb[0].mxu0
  %v2179 = vpop.f32.mrb[0].mxu0
  %v2180 = vpop.f32.mrb[0].mxu0
  %2181 = vdwg.mxu0
  %2182 = vmatprep.subr.bf16.mxu0 0
  %2183 = vmatpush1.bf16.msra.mxu0 %v1622
  %2184 = vmatprep.subr.bf16.mxu0 0
  %2185 = vmatpush1.bf16.msra.mxu0 %v1623
  %2186 = vmatprep.subr.bf16.mxu0 0
  %2187 = vmatpush1.bf16.msra.mxu0 %v1624
  %2188 = vmatprep.subr.bf16.mxu0 0
  %2189 = vmatpush1.bf16.msra.mxu0 %v1625
  %2190 = vmatprep.subr.bf16.mxu0 0
  %2191 = vmatpush1.bf16.msra.mxu0 %v1626
  %2192 = vmatprep.subr.bf16.mxu0 0
  %2193 = vmatpush1.bf16.msra.mxu0 %v1627
  %2194 = vmatprep.subr.bf16.mxu0 0
  %2195 = vmatpush1.bf16.msra.mxu0 %v1628
  %2196 = vmatprep.subr.bf16.mxu0 0
  %2197 = vmatpush1.bf16.msra.mxu0 %v1629
  %2198 = vmatprep.subr.bf16.mxu0 0
  %2199 = vmatpush1.bf16.msra.mxu0 %v1630
  %2200 = vmatprep.subr.bf16.mxu0 0
  %2201 = vmatpush1.bf16.msra.mxu0 %v1631
  %2202 = vmatprep.subr.bf16.mxu0 0
  %2203 = vmatpush1.bf16.msra.mxu0 %v1632
  %2204 = vmatprep.subr.bf16.mxu0 0
  %2205 = vmatpush1.bf16.msra.mxu0 %v1633
  %2206 = vmatprep.subr.bf16.mxu0 0
  %2207 = vmatpush1.bf16.msra.mxu0 %v1634
  %2208 = vmatprep.subr.bf16.mxu0 0
  %2209 = vmatpush1.bf16.msra.mxu0 %v1635
  %2210 = vmatprep.subr.bf16.mxu0 0
  %2211 = vmatpush1.bf16.msra.mxu0 %v1636
  %2212 = vmatprep.subr.bf16.mxu0 0
  %2213 = vmatpush1.bf16.msra.mxu0 %v1637
  %2214 = vmatprep.mubr.bf16.mxu0 %v939
  %2215 = vmatmul.mubr.bf16.gmra.mrb[0].mxu0 %v938
  %v2216 = vpop.f32.mrb[0].mxu0
  %v2217 = vadd.f32 %v1985, %v2216
  %v2218 = vpop.f32.mrb[0].mxu0
  %v2219 = vpop.f32.mrb[0].mxu0
  %v2220 = vadd.f32 %v1988, %v2219
  %v2221 = vpop.f32.mrb[0].mxu0
  %2222 = vmatprep.mubr.bf16.mxu0 %v947
  %2223 = vmatmul.mubr.bf16.gmra.mrb[0].mxu0 %v946
  %v2224 = vpop.f32.mrb[0].mxu0
  %v2225 = vadd.f32 %v1993, %v2224
  %v2226 = vpop.f32.mrb[0].mxu0
  %v2227 = vpop.f32.mrb[0].mxu0
  %v2228 = vadd.f32 %v1996, %v2227
  %v2229 = vpop.f32.mrb[0].mxu0
  %2230 = vmatprep.mubr.bf16.mxu0 %v955
  %2231 = vmatmul.mubr.bf16.gmra.mrb[0].mxu0 %v954
  %v2232 = vpop.f32.mrb[0].mxu0
  %v2233 = vadd.f32 %v2001, %v2232
  %v2234 = vpop.f32.mrb[0].mxu0
  %v2235 = vpop.f32.mrb[0].mxu0
  %v2236 = vadd.f32 %v2004, %v2235
  %v2237 = vpop.f32.mrb[0].mxu0
  %2238 = vmatprep.mubr.bf16.mxu0 %v963
  %2239 = vmatmul.mubr.bf16.gmra.mrb[0].mxu0 %v962
  %v2240 = vpop.f32.mrb[0].mxu0
  %v2241 = vadd.f32 %v2009, %v2240
  %v2242 = vpop.f32.mrb[0].mxu0
  %v2243 = vpop.f32.mrb[0].mxu0
  %v2244 = vadd.f32 %v2012, %v2243
  %v2245 = vpop.f32.mrb[0].mxu0
  %2246 = vmatprep.mubr.bf16.mxu0 %v971
  %2247 = vmatmul.mubr.bf16.gmra.mrb[0].mxu0 %v970
  %v2248 = vpop.f32.mrb[0].mxu0
  %v2249 = vadd.f32 %v2017, %v2248
  %v2250 = vpop.f32.mrb[0].mxu0
  %v2251 = vpop.f32.mrb[0].mxu0
  %v2252 = vadd.f32 %v2020, %v2251
  %v2253 = vpop.f32.mrb[0].mxu0
  %2254 = vmatprep.mubr.bf16.mxu0 %v979
  %2255 = vmatmul.mubr.bf16.gmra.mrb[0].mxu0 %v978
  %v2256 = vpop.f32.mrb[0].mxu0
  %v2257 = vadd.f32 %v2025, %v2256
  %v2258 = vpop.f32.mrb[0].mxu0
  %v2259 = vpop.f32.mrb[0].mxu0
  %v2260 = vadd.f32 %v2028, %v2259
  %v2261 = vpop.f32.mrb[0].mxu0
  %2262 = vmatprep.mubr.bf16.mxu0 %v987
  %2263 = vmatmul.mubr.bf16.gmra.mrb[0].mxu0 %v986
  %v2264 = vpop.f32.mrb[0].mxu0
  %v2265 = vadd.f32 %v2033, %v2264
  %v2266 = vpop.f32.mrb[0].mxu0
  %v2267 = vpop.f32.mrb[0].mxu0
  %v2268 = vadd.f32 %v2036, %v2267
  %v2269 = vpop.f32.mrb[0].mxu0
  %2270 = vmatprep.mubr.bf16.mxu0 %v995
  %2271 = vmatmul.mubr.bf16.gmra.mrb[0].mxu0 %v994
  %v2272 = vpop.f32.mrb[0].mxu0
  %v2273 = vadd.f32 %v2041, %v2272
  %v2274 = vpop.f32.mrb[0].mxu0
  %v2275 = vpop.f32.mrb[0].mxu0
  %v2276 = vadd.f32 %v2044, %v2275
  %v2277 = vpop.f32.mrb[0].mxu0
  %2278 = vmatprep.mubr.bf16.mxu0 %v1003
  %2279 = vmatmul.mubr.bf16.gmra.mrb[0].mxu0 %v1002
  %v2280 = vpop.f32.mrb[0].mxu0
  %v2281 = vadd.f32 %v2049, %v2280
  %v2282 = vpop.f32.mrb[0].mxu0
  %v2283 = vpop.f32.mrb[0].mxu0
  %v2284 = vadd.f32 %v2052, %v2283
  %v2285 = vpop.f32.mrb[0].mxu0
  %2286 = vmatprep.mubr.bf16.mxu0 %v1011
  %2287 = vmatmul.mubr.bf16.gmra.mrb[0].mxu0 %v1010
  %v2288 = vpop.f32.mrb[0].mxu0
  %v2289 = vadd.f32 %v2057, %v2288
  %v2290 = vpop.f32.mrb[0].mxu0
  %v2291 = vpop.f32.mrb[0].mxu0
  %v2292 = vadd.f32 %v2060, %v2291
  %v2293 = vpop.f32.mrb[0].mxu0
  %2294 = vmatprep.mubr.bf16.mxu0 %v1019
  %2295 = vmatmul.mubr.bf16.gmra.mrb[0].mxu0 %v1018
  %v2296 = vpop.f32.mrb[0].mxu0
  %v2297 = vadd.f32 %v2065, %v2296
  %v2298 = vpop.f32.mrb[0].mxu0
  %v2299 = vpop.f32.mrb[0].mxu0
  %v2300 = vadd.f32 %v2068, %v2299
  %v2301 = vpop.f32.mrb[0].mxu0
  %2302 = vmatprep.mubr.bf16.mxu0 %v1027
  %2303 = vmatmul.mubr.bf16.gmra.mrb[0].mxu0 %v1026
  %v2304 = vpop.f32.mrb[0].mxu0
  %v2305 = vadd.f32 %v2073, %v2304
  %v2306 = vpop.f32.mrb[0].mxu0
  %v2307 = vpop.f32.mrb[0].mxu0
  %v2308 = vadd.f32 %v2076, %v2307
  %v2309 = vpop.f32.mrb[0].mxu0
  %2310 = vmatprep.mubr.bf16.mxu0 %v1035
  %2311 = vmatmul.mubr.bf16.gmra.mrb[0].mxu0 %v1034
  %v2312 = vpop.f32.mrb[0].mxu0
  %v2313 = vadd.f32 %v2081, %v2312
  %v2314 = vpop.f32.mrb[0].mxu0
  %v2315 = vpop.f32.mrb[0].mxu0
  %v2316 = vadd.f32 %v2084, %v2315
  %v2317 = vpop.f32.mrb[0].mxu0
  %2318 = vmatprep.mubr.bf16.mxu0 %v1043
  %2319 = vmatmul.mubr.bf16.gmra.mrb[0].mxu0 %v1042
  %v2320 = vpop.f32.mrb[0].mxu0
  %v2321 = vadd.f32 %v2089, %v2320
  %v2322 = vpop.f32.mrb[0].mxu0
  %v2323 = vpop.f32.mrb[0].mxu0
  %v2324 = vadd.f32 %v2092, %v2323
  %v2325 = vpop.f32.mrb[0].mxu0
  %2326 = vmatprep.mubr.bf16.mxu0 %v1051
  %2327 = vmatmul.mubr.bf16.gmra.mrb[0].mxu0 %v1050
  %v2328 = vpop.f32.mrb[0].mxu0
  %v2329 = vadd.f32 %v2097, %v2328
  %v2330 = vpop.f32.mrb[0].mxu0
  %v2331 = vpop.f32.mrb[0].mxu0
  %v2332 = vadd.f32 %v2100, %v2331
  %v2333 = vpop.f32.mrb[0].mxu0
  %2334 = vmatprep.mubr.bf16.mxu0 %v1059
  %2335 = vmatmul.mubr.bf16.gmra.mrb[0].mxu0 %v1058
  %v2336 = vpop.f32.mrb[0].mxu0
  %v2337 = vadd.f32 %v2105, %v2336
  %v2338 = vpop.f32.mrb[0].mxu0
  %v2339 = vpop.f32.mrb[0].mxu0
  %v2340 = vadd.f32 %v2108, %v2339
  %v2341 = vpop.f32.mrb[0].mxu0
  %2342 = vmatprep.mubr.bf16.mxu0 %v1067
  %2343 = vmatmul.mubr.bf16.gmra.mrb[0].mxu0 %v1066
  %v2344 = vpop.f32.mrb[0].mxu0
  %v2345 = vadd.f32 %v2113, %v2344
  %v2346 = vpop.f32.mrb[0].mxu0
  %v2347 = vpop.f32.mrb[0].mxu0
  %v2348 = vadd.f32 %v2116, %v2347
  %v2349 = vpop.f32.mrb[0].mxu0
  %2350 = vmatprep.mubr.bf16.mxu0 %v1075
  %2351 = vmatmul.mubr.bf16.gmra.mrb[0].mxu0 %v1074
  %v2352 = vpop.f32.mrb[0].mxu0
  %v2353 = vadd.f32 %v2121, %v2352
  %v2354 = vpop.f32.mrb[0].mxu0
  %v2355 = vpop.f32.mrb[0].mxu0
  %v2356 = vadd.f32 %v2124, %v2355
  %v2357 = vpop.f32.mrb[0].mxu0
  %2358 = vmatprep.mubr.bf16.mxu0 %v1083
  %2359 = vmatmul.mubr.bf16.gmra.mrb[0].mxu0 %v1082
  %v2360 = vpop.f32.mrb[0].mxu0
  %v2361 = vadd.f32 %v2129, %v2360
  %v2362 = vpop.f32.mrb[0].mxu0
  %v2363 = vpop.f32.mrb[0].mxu0
  %v2364 = vadd.f32 %v2132, %v2363
  %v2365 = vpop.f32.mrb[0].mxu0
  %2366 = vmatprep.mubr.bf16.mxu0 %v1091
  %2367 = vmatmul.mubr.bf16.gmra.mrb[0].mxu0 %v1090
  %v2368 = vpop.f32.mrb[0].mxu0
  %v2369 = vadd.f32 %v2137, %v2368
  %v2370 = vpop.f32.mrb[0].mxu0
  %v2371 = vpop.f32.mrb[0].mxu0
  %v2372 = vadd.f32 %v2140, %v2371
  %v2373 = vpop.f32.mrb[0].mxu0
  %2374 = vmatprep.mubr.bf16.mxu0 %v1099
  %2375 = vmatmul.mubr.bf16.gmra.mrb[0].mxu0 %v1098
  %v2376 = vpop.f32.mrb[0].mxu0
  %v2377 = vadd.f32 %v2145, %v2376
  %v2378 = vpop.f32.mrb[0].mxu0
  %v2379 = vpop.f32.mrb[0].mxu0
  %v2380 = vadd.f32 %v2148, %v2379
  %v2381 = vpop.f32.mrb[0].mxu0
  %2382 = vmatprep.mubr.bf16.mxu0 %v1107
  %2383 = vmatmul.mubr.bf16.gmra.mrb[0].mxu0 %v1106
  %v2384 = vpop.f32.mrb[0].mxu0
  %v2385 = vadd.f32 %v2153, %v2384
  %v2386 = vpop.f32.mrb[0].mxu0
  %v2387 = vpop.f32.mrb[0].mxu0
  %v2388 = vadd.f32 %v2156, %v2387
  %v2389 = vpop.f32.mrb[0].mxu0
  %2390 = vmatprep.mubr.bf16.mxu0 %v1115
  %2391 = vmatmul.mubr.bf16.gmra.mrb[0].mxu0 %v1114
  %v2392 = vpop.f32.mrb[0].mxu0
  %v2393 = vadd.f32 %v2161, %v2392
  %v2394 = vpop.f32.mrb[0].mxu0
  %v2395 = vpop.f32.mrb[0].mxu0
  %v2396 = vadd.f32 %v2164, %v2395
  %v2397 = vpop.f32.mrb[0].mxu0
  %2398 = vmatprep.mubr.bf16.mxu0 %v1123
  %2399 = vmatmul.mubr.bf16.gmra.mrb[0].mxu0 %v1122
  %v2400 = vpop.f32.mrb[0].mxu0
  %v2401 = vadd.f32 %v2169, %v2400
  %v2402 = vpop.f32.mrb[0].mxu0
  %v2403 = vpop.f32.mrb[0].mxu0
  %v2404 = vadd.f32 %v2172, %v2403
  %v2405 = vpop.f32.mrb[0].mxu0
  %2406 = vmatprep.mubr.bf16.mxu0 %v1131
  %2407 = vmatmul.mubr.bf16.gmra.mrb[0].mxu0 %v1130
  %v2408 = vpop.f32.mrb[0].mxu0
  %v2409 = vadd.f32 %v2177, %v2408
  %v2410 = vpop.f32.mrb[0].mxu0
  %v2411 = vpop.f32.mrb[0].mxu0
  %v2412 = vpop.f32.mrb[0].mxu0
  %2413 = vdwg.mxu0
  %2414 = vmatprep.subr.bf16.mxu0 0
  %2415 = vmatpush1.bf16.msra.mxu0 %v1638
  %2416 = vmatprep.subr.bf16.mxu0 0
  %2417 = vmatpush1.bf16.msra.mxu0 %v1639
  %2418 = vmatprep.subr.bf16.mxu0 0
  %2419 = vmatpush1.bf16.msra.mxu0 %v1640
  %2420 = vmatprep.subr.bf16.mxu0 0
  %2421 = vmatpush1.bf16.msra.mxu0 %v1641
  %2422 = vmatprep.subr.bf16.mxu0 0
  %2423 = vmatpush1.bf16.msra.mxu0 %v1642
  %2424 = vmatprep.subr.bf16.mxu0 0
  %2425 = vmatpush1.bf16.msra.mxu0 %v1643
  %2426 = vmatprep.subr.bf16.mxu0 0
  %2427 = vmatpush1.bf16.msra.mxu0 %v1644
  %2428 = vmatprep.subr.bf16.mxu0 0
  %2429 = vmatpush1.bf16.msra.mxu0 %v1645
  %2430 = vmatprep.subr.bf16.mxu0 0
  %2431 = vmatpush1.bf16.msra.mxu0 %v1646
  %2432 = vmatprep.subr.bf16.mxu0 0
  %2433 = vmatpush1.bf16.msra.mxu0 %v1647
  %2434 = vmatprep.subr.bf16.mxu0 0
  %2435 = vmatpush1.bf16.msra.mxu0 %v1648
  %2436 = vmatprep.subr.bf16.mxu0 0
  %2437 = vmatpush1.bf16.msra.mxu0 %v1649
  %2438 = vmatprep.subr.bf16.mxu0 0
  %2439 = vmatpush1.bf16.msra.mxu0 %v1650
  %2440 = vmatprep.subr.bf16.mxu0 0
  %2441 = vmatpush1.bf16.msra.mxu0 %v1651
  %2442 = vmatprep.subr.bf16.mxu0 0
  %2443 = vmatpush1.bf16.msra.mxu0 %v1652
  %2444 = vmatprep.subr.bf16.mxu0 0
  %2445 = vmatpush1.bf16.msra.mxu0 %v1653
  %2446 = vmatprep.mubr.bf16.mxu0 %v941
  %2447 = vmatmul.mubr.bf16.gmra.mrb[0].mxu0 %v940
  %v2448 = vpop.f32.mrb[0].mxu0
  %v2449 = vadd.f32 %v2217, %v2448
  %v2450 = vpop.f32.mrb[0].mxu0
  %v2451 = vpop.f32.mrb[0].mxu0
  %v2452 = vadd.f32 %v2220, %v2451
  %v2453 = vpop.f32.mrb[0].mxu0
  %2454 = vmatprep.mubr.bf16.mxu0 %v949
  %2455 = vmatmul.mubr.bf16.gmra.mrb[0].mxu0 %v948
  %v2456 = vpop.f32.mrb[0].mxu0
  %v2457 = vadd.f32 %v2225, %v2456
  %v2458 = vpop.f32.mrb[0].mxu0
  %v2459 = vpop.f32.mrb[0].mxu0
  %v2460 = vadd.f32 %v2228, %v2459
  %v2461 = vpop.f32.mrb[0].mxu0
  %2462 = vmatprep.mubr.bf16.mxu0 %v957
  %2463 = vmatmul.mubr.bf16.gmra.mrb[0].mxu0 %v956
  %v2464 = vpop.f32.mrb[0].mxu0
  %v2465 = vadd.f32 %v2233, %v2464
  %v2466 = vpop.f32.mrb[0].mxu0
  %v2467 = vpop.f32.mrb[0].mxu0
  %v2468 = vadd.f32 %v2236, %v2467
  %v2469 = vpop.f32.mrb[0].mxu0
  %2470 = vmatprep.mubr.bf16.mxu0 %v965
  %2471 = vmatmul.mubr.bf16.gmra.mrb[0].mxu0 %v964
  %v2472 = vpop.f32.mrb[0].mxu0
  %v2473 = vadd.f32 %v2241, %v2472
  %v2474 = vpop.f32.mrb[0].mxu0
  %v2475 = vpop.f32.mrb[0].mxu0
  %v2476 = vadd.f32 %v2244, %v2475
  %v2477 = vpop.f32.mrb[0].mxu0
  %2478 = vmatprep.mubr.bf16.mxu0 %v973
  %2479 = vmatmul.mubr.bf16.gmra.mrb[0].mxu0 %v972
  %v2480 = vpop.f32.mrb[0].mxu0
  %v2481 = vadd.f32 %v2249, %v2480
  %v2482 = vpop.f32.mrb[0].mxu0
  %v2483 = vpop.f32.mrb[0].mxu0
  %v2484 = vadd.f32 %v2252, %v2483
  %v2485 = vpop.f32.mrb[0].mxu0
  %2486 = vmatprep.mubr.bf16.mxu0 %v981
  %2487 = vmatmul.mubr.bf16.gmra.mrb[0].mxu0 %v980
  %v2488 = vpop.f32.mrb[0].mxu0
  %v2489 = vadd.f32 %v2257, %v2488
  %v2490 = vpop.f32.mrb[0].mxu0
  %v2491 = vpop.f32.mrb[0].mxu0
  %v2492 = vadd.f32 %v2260, %v2491
  %v2493 = vpop.f32.mrb[0].mxu0
  %2494 = vmatprep.mubr.bf16.mxu0 %v989
  %2495 = vmatmul.mubr.bf16.gmra.mrb[0].mxu0 %v988
  %v2496 = vpop.f32.mrb[0].mxu0
  %v2497 = vadd.f32 %v2265, %v2496
  %v2498 = vpop.f32.mrb[0].mxu0
  %v2499 = vpop.f32.mrb[0].mxu0
  %v2500 = vadd.f32 %v2268, %v2499
  %v2501 = vpop.f32.mrb[0].mxu0
  %2502 = vmatprep.mubr.bf16.mxu0 %v997
  %2503 = vmatmul.mubr.bf16.gmra.mrb[0].mxu0 %v996
  %v2504 = vpop.f32.mrb[0].mxu0
  %v2505 = vadd.f32 %v2273, %v2504
  %v2506 = vpop.f32.mrb[0].mxu0
  %v2507 = vpop.f32.mrb[0].mxu0
  %v2508 = vadd.f32 %v2276, %v2507
  %v2509 = vpop.f32.mrb[0].mxu0
  %2510 = vmatprep.mubr.bf16.mxu0 %v1005
  %2511 = vmatmul.mubr.bf16.gmra.mrb[0].mxu0 %v1004
  %v2512 = vpop.f32.mrb[0].mxu0
  %v2513 = vadd.f32 %v2281, %v2512
  %v2514 = vpop.f32.mrb[0].mxu0
  %v2515 = vpop.f32.mrb[0].mxu0
  %v2516 = vadd.f32 %v2284, %v2515
  %v2517 = vpop.f32.mrb[0].mxu0
  %2518 = vmatprep.mubr.bf16.mxu0 %v1013
  %2519 = vmatmul.mubr.bf16.gmra.mrb[0].mxu0 %v1012
  %v2520 = vpop.f32.mrb[0].mxu0
  %v2521 = vadd.f32 %v2289, %v2520
  %v2522 = vpop.f32.mrb[0].mxu0
  %v2523 = vpop.f32.mrb[0].mxu0
  %v2524 = vadd.f32 %v2292, %v2523
  %v2525 = vpop.f32.mrb[0].mxu0
  %2526 = vmatprep.mubr.bf16.mxu0 %v1021
  %2527 = vmatmul.mubr.bf16.gmra.mrb[0].mxu0 %v1020
  %v2528 = vpop.f32.mrb[0].mxu0
  %v2529 = vadd.f32 %v2297, %v2528
  %v2530 = vpop.f32.mrb[0].mxu0
  %v2531 = vpop.f32.mrb[0].mxu0
  %v2532 = vadd.f32 %v2300, %v2531
  %v2533 = vpop.f32.mrb[0].mxu0
  %2534 = vmatprep.mubr.bf16.mxu0 %v1029
  %2535 = vmatmul.mubr.bf16.gmra.mrb[0].mxu0 %v1028
  %v2536 = vpop.f32.mrb[0].mxu0
  %v2537 = vadd.f32 %v2305, %v2536
  %v2538 = vpop.f32.mrb[0].mxu0
  %v2539 = vpop.f32.mrb[0].mxu0
  %v2540 = vadd.f32 %v2308, %v2539
  %v2541 = vpop.f32.mrb[0].mxu0
  %2542 = vmatprep.mubr.bf16.mxu0 %v1037
  %2543 = vmatmul.mubr.bf16.gmra.mrb[0].mxu0 %v1036
  %v2544 = vpop.f32.mrb[0].mxu0
  %v2545 = vadd.f32 %v2313, %v2544
  %v2546 = vpop.f32.mrb[0].mxu0
  %v2547 = vpop.f32.mrb[0].mxu0
  %v2548 = vadd.f32 %v2316, %v2547
  %v2549 = vpop.f32.mrb[0].mxu0
  %2550 = vmatprep.mubr.bf16.mxu0 %v1045
  %2551 = vmatmul.mubr.bf16.gmra.mrb[0].mxu0 %v1044
  %v2552 = vpop.f32.mrb[0].mxu0
  %v2553 = vadd.f32 %v2321, %v2552
  %v2554 = vpop.f32.mrb[0].mxu0
  %v2555 = vpop.f32.mrb[0].mxu0
  %v2556 = vadd.f32 %v2324, %v2555
  %v2557 = vpop.f32.mrb[0].mxu0
  %2558 = vmatprep.mubr.bf16.mxu0 %v1053
  %2559 = vmatmul.mubr.bf16.gmra.mrb[0].mxu0 %v1052
  %v2560 = vpop.f32.mrb[0].mxu0
  %v2561 = vadd.f32 %v2329, %v2560
  %v2562 = vpop.f32.mrb[0].mxu0
  %v2563 = vpop.f32.mrb[0].mxu0
  %v2564 = vadd.f32 %v2332, %v2563
  %v2565 = vpop.f32.mrb[0].mxu0
  %2566 = vmatprep.mubr.bf16.mxu0 %v1061
  %2567 = vmatmul.mubr.bf16.gmra.mrb[0].mxu0 %v1060
  %v2568 = vpop.f32.mrb[0].mxu0
  %v2569 = vadd.f32 %v2337, %v2568
  %v2570 = vpop.f32.mrb[0].mxu0
  %v2571 = vpop.f32.mrb[0].mxu0
  %v2572 = vadd.f32 %v2340, %v2571
  %v2573 = vpop.f32.mrb[0].mxu0
  %2574 = vmatprep.mubr.bf16.mxu0 %v1069
  %2575 = vmatmul.mubr.bf16.gmra.mrb[0].mxu0 %v1068
  %v2576 = vpop.f32.mrb[0].mxu0
  %v2577 = vadd.f32 %v2345, %v2576
  %v2578 = vpop.f32.mrb[0].mxu0
  %v2579 = vpop.f32.mrb[0].mxu0
  %v2580 = vadd.f32 %v2348, %v2579
  %v2581 = vpop.f32.mrb[0].mxu0
  %2582 = vmatprep.mubr.bf16.mxu0 %v1077
  %2583 = vmatmul.mubr.bf16.gmra.mrb[0].mxu0 %v1076
  %v2584 = vpop.f32.mrb[0].mxu0
  %v2585 = vadd.f32 %v2353, %v2584
  %v2586 = vpop.f32.mrb[0].mxu0
  %v2587 = vpop.f32.mrb[0].mxu0
  %v2588 = vadd.f32 %v2356, %v2587
  %v2589 = vpop.f32.mrb[0].mxu0
  %2590 = vmatprep.mubr.bf16.mxu0 %v1085
  %2591 = vmatmul.mubr.bf16.gmra.mrb[0].mxu0 %v1084
  %v2592 = vpop.f32.mrb[0].mxu0
  %v2593 = vadd.f32 %v2361, %v2592
  %v2594 = vpop.f32.mrb[0].mxu0
  %v2595 = vpop.f32.mrb[0].mxu0
  %v2596 = vadd.f32 %v2364, %v2595
  %v2597 = vpop.f32.mrb[0].mxu0
  %2598 = vmatprep.mubr.bf16.mxu0 %v1093
  %2599 = vmatmul.mubr.bf16.gmra.mrb[0].mxu0 %v1092
  %v2600 = vpop.f32.mrb[0].mxu0
  %v2601 = vadd.f32 %v2369, %v2600
  %v2602 = vpop.f32.mrb[0].mxu0
  %v2603 = vpop.f32.mrb[0].mxu0
  %v2604 = vadd.f32 %v2372, %v2603
  %v2605 = vpop.f32.mrb[0].mxu0
  %2606 = vmatprep.mubr.bf16.mxu0 %v1101
  %2607 = vmatmul.mubr.bf16.gmra.mrb[0].mxu0 %v1100
  %v2608 = vpop.f32.mrb[0].mxu0
  %v2609 = vadd.f32 %v2377, %v2608
  %v2610 = vpop.f32.mrb[0].mxu0
  %v2611 = vpop.f32.mrb[0].mxu0
  %v2612 = vadd.f32 %v2380, %v2611
  %v2613 = vpop.f32.mrb[0].mxu0
  %2614 = vmatprep.mubr.bf16.mxu0 %v1109
  %2615 = vmatmul.mubr.bf16.gmra.mrb[0].mxu0 %v1108
  %v2616 = vpop.f32.mrb[0].mxu0
  %v2617 = vadd.f32 %v2385, %v2616
  %v2618 = vpop.f32.mrb[0].mxu0
  %v2619 = vpop.f32.mrb[0].mxu0
  %v2620 = vadd.f32 %v2388, %v2619
  %v2621 = vpop.f32.mrb[0].mxu0
  %2622 = vmatprep.mubr.bf16.mxu0 %v1117
  %2623 = vmatmul.mubr.bf16.gmra.mrb[0].mxu0 %v1116
  %v2624 = vpop.f32.mrb[0].mxu0
  %v2625 = vadd.f32 %v2393, %v2624
  %v2626 = vpop.f32.mrb[0].mxu0
  %v2627 = vpop.f32.mrb[0].mxu0
  %v2628 = vadd.f32 %v2396, %v2627
  %v2629 = vpop.f32.mrb[0].mxu0
  %2630 = vmatprep.mubr.bf16.mxu0 %v1125
  %2631 = vmatmul.mubr.bf16.gmra.mrb[0].mxu0 %v1124
  %v2632 = vpop.f32.mrb[0].mxu0
  %v2633 = vadd.f32 %v2401, %v2632
  %v2634 = vpop.f32.mrb[0].mxu0
  %v2635 = vpop.f32.mrb[0].mxu0
  %v2636 = vadd.f32 %v2404, %v2635
  %v2637 = vpop.f32.mrb[0].mxu0
  %2638 = vmatprep.mubr.bf16.mxu0 %v1133
  %2639 = vmatmul.mubr.bf16.gmra.mrb[0].mxu0 %v1132
  %v2640 = vpop.f32.mrb[0].mxu0
  %v2641 = vadd.f32 %v2409, %v2640
  %v2642 = vpop.f32.mrb[0].mxu0
  %v2643 = vpop.f32.mrb[0].mxu0
  %v2644 = vpop.f32.mrb[0].mxu0
  %2645 = vdwg.mxu0
  %2646 = vst [vmem:[%s3] sm:$0xff] %v2449
  %2647 = vst [vmem:[%s3 + $0x8] sm:$0xff] %v2452
  %2648 = vst [vmem:[%s3 + $0x10] sm:$0xff] %v2457
  %2649 = vst [vmem:[%s3 + $0x18] sm:$0xff] %v2460
  %2650 = vst [vmem:[%s3 + $0x20] sm:$0xff] %v2465
  %2651 = vst [vmem:[%s3 + $0x28] sm:$0xff] %v2468
  %2652 = vst [vmem:[%s3 + $0x30] sm:$0xff] %v2473
  %2653 = vst [vmem:[%s3 + $0x38] sm:$0xff] %v2476
  %2654 = vst [vmem:[%s3 + $0x40] sm:$0xff] %v2481
  %2655 = vst [vmem:[%s3 + $0x48] sm:$0xff] %v2484
  %2656 = vst [vmem:[%s3 + $0x50] sm:$0xff] %v2489
  %2657 = vst [vmem:[%s3 + $0x58] sm:$0xff] %v2492
  %2658 = vst [vmem:[%s3 + $0x60] sm:$0xff] %v2497
  %2659 = vst [vmem:[%s3 + $0x68] sm:$0xff] %v2500
  %2660 = vst [vmem:[%s3 + $0x70] sm:$0xff] %v2505
  %2661 = vst [vmem:[%s3 + $0x78] sm:$0xff] %v2508
  %2662 = vst [vmem:[%s3 + $0x80] sm:$0xff] %v2513
  %2663 = vst [vmem:[%s3 + $0x88] sm:$0xff] %v2516
  %2664 = vst [vmem:[%s3 + $0x90] sm:$0xff] %v2521
  %2665 = vst [vmem:[%s3 + $0x98] sm:$0xff] %v2524
  %2666 = vst [vmem:[%s3 + $0xa0] sm:$0xff] %v2529
  %2667 = vst [vmem:[%s3 + $0xa8] sm:$0xff] %v2532
  %2668 = vst [vmem:[%s3 + $0xb0] sm:$0xff] %v2537
  %2669 = vst [vmem:[%s3 + $0xb8] sm:$0xff] %v2540
  %2670 = vst [vmem:[%s3 + $0xc0] sm:$0xff] %v2545
  %2671 = vst [vmem:[%s3 + $0xc8] sm:$0xff] %v2548
  %2672 = vst [vmem:[%s3 + $0xd0] sm:$0xff] %v2553
  %2673 = vst [vmem:[%s3 + $0xd8] sm:$0xff] %v2556
  %2674 = vst [vmem:[%s3 + $0xe0] sm:$0xff] %v2561
  %2675 = vst [vmem:[%s3 + $0xe8] sm:$0xff] %v2564
  %2676 = vst [vmem:[%s3 + $0xf0] sm:$0xff] %v2569
  %2677 = vst [vmem:[%s3 + $0xf8] sm:$0xff] %v2572
  %2678 = vst [vmem:[%s3 + $0x100] sm:$0xff] %v2577
  %2679 = vst [vmem:[%s3 + $0x108] sm:$0xff] %v2580
  %2680 = vst [vmem:[%s3 + $0x110] sm:$0xff] %v2585
  %2681 = vst [vmem:[%s3 + $0x118] sm:$0xff] %v2588
  %2682 = vst [vmem:[%s3 + $0x120] sm:$0xff] %v2593
  %2683 = vst [vmem:[%s3 + $0x128] sm:$0xff] %v2596
  %2684 = vst [vmem:[%s3 + $0x130] sm:$0xff] %v2601
  %2685 = vst [vmem:[%s3 + $0x138] sm:$0xff] %v2604
  %2686 = vst [vmem:[%s3 + $0x140] sm:$0xff] %v2609
  %2687 = vst [vmem:[%s3 + $0x148] sm:$0xff] %v2612
  %2688 = vst [vmem:[%s3 + $0x150] sm:$0xff] %v2617
  %2689 = vst [vmem:[%s3 + $0x158] sm:$0xff] %v2620
  %2690 = vst [vmem:[%s3 + $0x160] sm:$0xff] %v2625
  %2691 = vst [vmem:[%s3 + $0x168] sm:$0xff] %v2628
  %2692 = vst [vmem:[%s3 + $0x170] sm:$0xff] %v2633
  %2693 = vst [vmem:[%s3 + $0x178] sm:$0xff] %v2636
  %2694 = vst [vmem:[%s3 + $0x180] sm:$0xff] %v2641
  // Predicated region
  $region14: #{discriminator_forward.15} parent=0 // pred_check
    _
  $region15: #{discriminator_forward.15} parent=0 // pred_check_branch
    %2696 = sbr.rel (0) target = $region17
  $region16: #{discriminator_forward.15} parent=0 // pred_region
    _
  $region17: #{discriminator_forward.15} parent=0 // pred_fallthru
    _
  // Predicated region
  $region18: #{discriminator_forward.15} parent=0 // pred_check
    _
  $region19: #{discriminator_forward.15} parent=0 // pred_check_branch
    %2698 = sbr.rel (0) target = $region21
  $region20: #{discriminator_forward.15} parent=0 // pred_region
    _
  $region21: #{discriminator_forward.15} parent=0 // pred_fallthru
    _

</llo_original>
